<compile_context>
chip_gen: v7x
topology: tpu7x:2x2x1
jax: 0.10.0
libtpu: 0.0.40
codegen_flags: <defaults>
</compile_context>

<pallas_src>
import functools

import jax
import jax.numpy as jnp
from jax.experimental import pallas as pl
from jax.experimental.pallas import tpu as pltpu


# ----------------------------------------------------------------------------
# Pallas kernel: one grid step = one block-diagonal group of windows
# (channels-major layout, L = group * N tokens on the lane axis).
# ----------------------------------------------------------------------------
def _window_attn_kernel(xT_ref, wqkvT_ref, bqkvT_ref, bias_ref, wprojT_ref, bprojT_ref,
                        oT_ref, *, num_heads, head_dim, compute_dtype, approx_recip):
    H, hd = num_heads, head_dim
    C = H * hd
    L = xT_ref.shape[1]          # tokens per step = group * N (lane-dense)
    cd = compute_dtype

    # qkv projection, channels-major: (3C, C) @ (C, L) -> (3C, L), f32 accumulation.
    # Rows of wqkvT are ordered (3, H, hd), so q/k/v and heads split on the major axis.
    qkvT = jnp.dot(wqkvT_ref[...], xT_ref[...],
                   preferred_element_type=jnp.float32) + bqkvT_ref[...]
    qkvT = qkvT.astype(cd).reshape(3, H, hd, L)     # free retile: hd == sublane tile rows
    q, k, v = qkvT[0], qkvT[1], qkvT[2]             # (H, hd, L) channels-major each

    # Block-diagonal packed scores: contract the hd sublane axis of both operands — one
    # MXU-native-width pass per head, no K transpose; softmax scale is pre-folded into q.
    s = jnp.einsum("hdq,hdk->hqk", q, k, preferred_element_type=jnp.float32)  # (H, L, L)
    s = s + bias_ref[...]       # rel-pos bias on diagonal N x N blocks, -1e30 off-diagonal

    # Numerically-stable softmax in f32 over the dense L-lane axis; exp(-1e30) == 0 makes
    # the packed softmax exactly equal to the per-window softmax.
    s = s - jnp.max(s, axis=-1, keepdims=True)
    p = jnp.exp(s)
    denom = jnp.sum(p, axis=-1, keepdims=True)
    p = (p * pl.reciprocal(denom, approx=approx_recip)).astype(cd)

    # Context, channels-major (ctx^T = V @ P^T): contraction over the token lane axis of
    # both operands — head_dim never lands on the lane axis.
    ctxT = jnp.einsum("hdk,hqk->hdq", v, p, preferred_element_type=jnp.float32)  # (H,hd,L)

    # Fused output projection: free retile (H, hd, L) -> (C, L) (row order h*hd+d matches
    # proj_w's input ordering) and one (C, C) @ (C, L) matmul + bias. Lane-dense store.
    outT = jnp.dot(wprojT_ref[...], ctxT.reshape(C, L).astype(cd),
                   preferred_element_type=jnp.float32) + bprojT_ref[...]
    oT_ref[...] = outT.astype(oT_ref.dtype)

    # TODO(synk): forward(mask=...) shifted-window branch and train-mode attention dropout
    # are not implemented (mask=None inference path; dropout is identity).


# ----------------------------------------------------------------------------
# Glue: relative position index (matches the torch __init__)
# ----------------------------------------------------------------------------
def make_relative_position_index(window_size):
    coords_h = jnp.arange(window_size)
    coords_w = jnp.arange(window_size)
    coords = jnp.stack(jnp.meshgrid(coords_h, coords_w, indexing="ij"))     # (2, Wh, Ww)
    coords_flatten = coords.reshape(2, -1)                                  # (2, N)
    rel = coords_flatten[:, :, None] - coords_flatten[:, None, :]           # (2, N, N)
    rel = jnp.transpose(rel, (1, 2, 0))                                     # (N, N, 2)
    rel = rel.at[:, :, 0].add(window_size - 1)
    rel = rel.at[:, :, 1].add(window_size - 1)
    rel = rel.at[:, :, 0].multiply(2 * window_size - 1)
    return rel.sum(-1)                                                      # (N, N)


def _make_block_bias(rel_bias, group, n_tok, neg=-1e30):
    """(H, G*N, G*N): relative-position bias on diagonal blocks, `neg` off-diagonal."""
    blockdiag = jnp.kron(jnp.eye(group, dtype=jnp.float32),
                         jnp.ones((n_tok, n_tok), jnp.float32)) > 0.5
    tiled = jnp.tile(rel_bias, (1, group, group))                           # (H, L, L)
    return jnp.where(blockdiag[None], tiled, jnp.float32(neg))


def _pick_group(B_, N, lane_target, min_steps):
    """Number of windows packed block-diagonally per grid step.

    G must divide B_, G*N must be lane-dense (multiple of 128) and <= lane_target (the
    MXU-native width: 128 on v2-v5, 256 on v6e/v7x).  Prefer the largest such G that
    still leaves >= min_steps grid iterations (v7x: 2 TCs each want a pipelined loop).
    """
    cands = [g for g in range(1, B_ + 1)
             if B_ % g == 0 and (g * N) % 128 == 0 and g * N <= lane_target]
    if not cands:
        # TODO(synk): for window sizes whose token count is not 128-friendly (e.g. N=49),
        # pad tokens / M to a lane multiple and mask in-kernel instead of this
        # single-full-extent-step fallback.
        return B_
    for g in sorted(cands, reverse=True):
        if B_ // g >= min_steps:
            return g
    return min(cands)


def _const_spec(shape, single_buffer):
    """BlockSpec for an operand with a constant index map (weights / biases / bias mask)."""
    imap = {2: (lambda b: (0, 0)), 3: (lambda b: (0, 0, 0))}[len(shape)]
    if single_buffer:
        return pl.BlockSpec(shape, imap, pipeline_mode=pl.Buffered(buffer_count=1))
    return pl.BlockSpec(shape, imap)


# ----------------------------------------------------------------------------
# Wrapper: parameter layout prep (one-time glue in production) + pallas_call
# ----------------------------------------------------------------------------
def window_attention(x, params, *, window_size, num_heads, compute_dtype=jnp.bfloat16):
    B_, N, C = x.shape
    assert N == window_size * window_size
    assert C % num_heads == 0
    head_dim = C // num_heads
    assert C % 8 == 0, "channel dim must be sublane-aligned"
    scale = head_dim ** (-0.5)

    # Chip-aware sizing.
    try:
        kind = jax.devices()[0].device_kind.lower()
    except Exception:  # pragma: no cover
        kind = ""
    is_v7 = "v7" in kind
    small_mxu = any(t in kind for t in ("v2", "v3", "v4", "v5"))
    lane_target = 128 if small_mxu else 256       # MXU-native score width
    min_steps = 4 if is_v7 else 2                 # v7x: keep both TCs pipelined
    vmem_limit = (32 if is_v7 else 64) * 1024 * 1024

    group = _pick_group(B_, N, lane_target, min_steps)
    L = group * N
    num_steps = B_ // group

    # --- glue: block-diagonal relative-position bias (H, L, L) ---
    rel_idx = make_relative_position_index(window_size).reshape(-1)         # (N*N,)
    table = params["rel_pos_bias_table"].reshape(-1, num_heads)             # ((2W-1)^2, H)
    rel_bias = table[rel_idx].reshape(N, N, num_heads)
    rel_bias = jnp.transpose(rel_bias, (2, 0, 1)).astype(jnp.float32)       # (H, N, N)
    block_bias = _make_block_bias(rel_bias, group, N)                       # (H, L, L)

    # --- glue: channels-major input, transposed weights (precomputed once in production).
    # TODO(synk): keep activations channels-major end-to-end so the boundary transposes
    # (one HBM pass each) disappear from the per-call path.
    xT = x.reshape(B_ * N, C).T.astype(compute_dtype)                       # (C, B_*N)

    wqkvT = params["qkv_w"].T                                               # (3C, C), rows (3,H,hd)
    wqkvT = wqkvT.at[:C].multiply(scale)                                    # fold softmax scale into q
    bqkvT = params["qkv_b"].at[:C].multiply(scale).reshape(3 * C, 1).astype(jnp.float32)
    wqkvT = wqkvT.astype(compute_dtype)
    wprojT = params["proj_w"].T.astype(compute_dtype)                       # (C, C): outT = Wp^T @ ctxT
    bprojT = params["proj_b"].reshape(C, 1).astype(jnp.float32)

    kernel = functools.partial(
        _window_attn_kernel, num_heads=num_heads, head_dim=head_dim,
        compute_dtype=compute_dtype,
        approx_recip=(jnp.dtype(compute_dtype) != jnp.dtype(jnp.float32)))

    itemsize_cd = jnp.dtype(compute_dtype).itemsize
    flops = int(num_steps * (2 * 3 * C * C * L                 # qkv projection
                             + 4 * num_heads * head_dim * L * L  # packed scores + ctx
                             + 2 * C * C * L))                 # fused output projection
    transcendentals = int(num_steps * num_heads * L * L)
    bytes_accessed = int(B_ * N * C * (itemsize_cd + jnp.dtype(x.dtype).itemsize)
                         + (3 * C * C + C * C) * itemsize_cd
                         + (3 * C + C) * 4
                         + num_heads * L * L * 4)

    def _call(single_buffer_consts):
        grid_spec = pltpu.PrefetchScalarGridSpec(
            num_scalar_prefetch=0,
            grid=(num_steps,),
            in_specs=[
                pl.BlockSpec((C, L), lambda b: (0, b)),                     # xT (lane-dense)
                _const_spec((3 * C, C), single_buffer_consts),              # qkv weight^T
                _const_spec((3 * C, 1), single_buffer_consts),              # qkv bias
                _const_spec((num_heads, L, L), single_buffer_consts),       # block-diag bias
                _const_spec((C, C), single_buffer_consts),                  # proj weight^T
                _const_spec((C, 1), single_buffer_consts),                  # proj bias
            ],
            out_specs=pl.BlockSpec((C, L), lambda b: (0, b)),               # out^T (lane-dense)
        )
        return pl.pallas_call(
            kernel,
            out_shape=jax.ShapeDtypeStruct((C, B_ * N), x.dtype),
            grid_spec=grid_spec,
            compiler_params=pltpu.CompilerParams(
                dimension_semantics=("parallel",),
                vmem_limit_bytes=vmem_limit,
            ),
            cost_estimate=pl.CostEstimate(flops=flops, transcendentals=transcendentals,
                                          bytes_accessed=bytes_accessed),
        )(xT, wqkvT, bqkvT, block_bias, wprojT, bprojT)

    try:
        outT = _call(True)
    except Exception:
        # JAX version without BlockSpec(pipeline_mode=...) / Buffered(1): constant operands
        # fall back to the default double-buffered pipeline (correct, slightly more VMEM).
        outT = _call(False)

    return outT.T.reshape(B_, N, C)


# ----------------------------------------------------------------------------
# Pure-JAX reference (mirrors the PyTorch forward, dropout = identity, mask=None)
# ----------------------------------------------------------------------------
def window_attention_ref(x, params, *, window_size, num_heads):
    B_, N, C = x.shape
    head_dim = C // num_heads
    scale = head_dim ** (-0.5)

    qkv = x @ params["qkv_w"] + params["qkv_b"]                             # (B_, N, 3C)
    qkv = qkv.reshape(B_, N, 3, num_heads, head_dim).transpose(2, 0, 3, 1, 4)
    q, k, v = qkv[0], qkv[1], qkv[2]

    attn = jnp.einsum("bhqd,bhkd->bhqk", q, k) * scale                      # (B_, H, N, N)

    rel_idx = make_relative_position_index(window_size).reshape(-1)
    table = params["rel_pos_bias_table"].reshape(-1, num_heads)
    rel_bias = table[rel_idx].reshape(N, N, num_heads).transpose(2, 0, 1)   # (H, N, N)
    attn = attn + rel_bias[None]

    attn = jax.nn.softmax(attn, axis=-1)
    out = jnp.einsum("bhqk,bhkd->bhqd", attn, v)                            # (B_, H, N, hd)
    out = out.transpose(0, 2, 1, 3).reshape(B_, N, C)
    return out @ params["proj_w"] + params["proj_b"]


# ----------------------------------------------------------------------------
if __name__ == "__main__":
    dim = 32
    window_size = 4
    num_heads = 4
    N = window_size * window_size    # 16 tokens per window
    B_ = 64                          # windows

    key = jax.random.PRNGKey(0)
    k_x, k_qw, k_qb, k_pw, k_pb, k_t = jax.random.split(key, 6)

    x = jax.random.normal(k_x, (B_, N, dim), dtype=jnp.float32)

    # Deterministic parameter init (shapes from the reference __init__, (in, out) layout).
    # The reference initializes the bias table to zeros; use small random values so the
    # bias-add path is actually exercised.
    params = {
        "qkv_w": jax.random.normal(k_qw, (dim, 3 * dim), dtype=jnp.float32) * 0.05,
        "qkv_b": jax.random.normal(k_qb, (3 * dim,), dtype=jnp.float32) * 0.05,
        "proj_w": jax.random.normal(k_pw, (dim, dim), dtype=jnp.float32) * 0.05,
        "proj_b": jax.random.normal(k_pb, (dim,), dtype=jnp.float32) * 0.05,
        "rel_pos_bias_table": jax.random.normal(
            k_t, (2 * window_size - 1, 2 * window_size - 1, num_heads),
            dtype=jnp.float32) * 0.05,
    }

    ref = window_attention_ref(x, params, window_size=window_size, num_heads=num_heads)

    # Fast path: bf16 MXU operands, f32 accumulation / softmax, approx reciprocal.
    out = window_attention(x, params, window_size=window_size, num_heads=num_heads)
    out = jax.block_until_ready(out)
    assert out.shape == (B_, N, dim)
    assert jnp.allclose(out, ref, atol=2e-2, rtol=2e-2), "bf16 kernel mismatch vs. reference"

    # Full-precision path (exact reciprocal) for a tight correctness check.
    out_f32 = window_attention(x, params, window_size=window_size, num_heads=num_heads,
                               compute_dtype=jnp.float32)
    out_f32 = jax.block_until_ready(out_f32)
    assert jnp.allclose(out_f32, ref, atol=1e-3, rtol=1e-3), "f32 kernel mismatch vs. reference"

    print("KERNEL_OK")
</pallas_src>

<mosaic_0001>
module attributes {stable_mosaic.version = 11 : i64} {
  func.func @_window_attn_kernel(%arg0: i32, %arg1: memref<32x256xbf16, #tpu.memory_space<vmem>>, %arg2: memref<96x32xbf16, #tpu.memory_space<vmem>>, %arg3: memref<96x1xf32, #tpu.memory_space<vmem>>, %arg4: memref<4x256x256xf32, #tpu.memory_space<vmem>>, %arg5: memref<32x32xbf16, #tpu.memory_space<vmem>>, %arg6: memref<32x1xf32, #tpu.memory_space<vmem>>, %arg7: memref<32x256xf32, #tpu.memory_space<vmem>>) attributes {dimension_semantics = [#tpu.dimension_semantics<parallel>], iteration_bounds = array<i64: 4>, scalar_prefetch = 0 : i64, scratch_operands = 0 : i64, tpu.core_type = #tpu.core_type<tc>, window_params = [{transform_indices = @transform_0, window_bounds = array<i64: 32, 256>}, {pipeline_mode = #tpu.pipeline_mode<synchronous>, transform_indices = @transform_1, window_bounds = array<i64: 96, 32>}, {pipeline_mode = #tpu.pipeline_mode<synchronous>, transform_indices = @transform_2, window_bounds = array<i64: 96, 1>}, {pipeline_mode = #tpu.pipeline_mode<synchronous>, transform_indices = @transform_3, window_bounds = array<i64: 4, 256, 256>}, {pipeline_mode = #tpu.pipeline_mode<synchronous>, transform_indices = @transform_4, window_bounds = array<i64: 32, 32>}, {pipeline_mode = #tpu.pipeline_mode<synchronous>, transform_indices = @transform_5, window_bounds = array<i64: 32, 1>}, {transform_indices = @transform_6, window_bounds = array<i64: 32, 256>}]} {
    %c0 = arith.constant 0 : index
    %c0_0 = arith.constant 0 : index
    %0 = vector.load %arg2[%c0, %c0_0] : memref<96x32xbf16, #tpu.memory_space<vmem>>, vector<96x32xbf16>
    %c0_1 = arith.constant 0 : index
    %c0_2 = arith.constant 0 : index
    %1 = vector.load %arg1[%c0_1, %c0_2] : memref<32x256xbf16, #tpu.memory_space<vmem>>, vector<32x256xbf16>
    %cst = arith.constant dense<0.000000e+00> : vector<96x256xf32>
    %2 = tpu.matmul %0, %1, %cst {dimension_numbers = #tpu.dot_dimension_numbers<[1], [0], [0], [1], [0, 0, 1, 1], [], []>} : vector<96x32xbf16>, vector<32x256xbf16>, vector<96x256xf32> -> vector<96x256xf32>
    %c0_3 = arith.constant 0 : index
    %c0_4 = arith.constant 0 : index
    %3 = vector.load %arg3[%c0_3, %c0_4] : memref<96x1xf32, #tpu.memory_space<vmem>>, vector<96x1xf32>
    %4 = vector.broadcast %3 : vector<96x1xf32> to vector<96x256xf32>
    %5 = arith.addf %2, %4 : vector<96x256xf32>
    %6 = arith.truncf %5 : vector<96x256xf32> to vector<96x256xbf16>
    %7 = vector.shape_cast %6 : vector<96x256xbf16> to vector<3x4x8x256xbf16>
    %8 = vector.extract_strided_slice %7 {offsets = [0, 0, 0, 0], sizes = [1, 4, 8, 256], strides = [1, 1, 1, 1]} : vector<3x4x8x256xbf16> to vector<1x4x8x256xbf16>
    %9 = vector.shape_cast %8 : vector<1x4x8x256xbf16> to vector<4x8x256xbf16>
    %10 = vector.extract_strided_slice %7 {offsets = [1, 0, 0, 0], sizes = [1, 4, 8, 256], strides = [1, 1, 1, 1]} : vector<3x4x8x256xbf16> to vector<1x4x8x256xbf16>
    %11 = vector.shape_cast %10 : vector<1x4x8x256xbf16> to vector<4x8x256xbf16>
    %12 = vector.extract_strided_slice %7 {offsets = [2, 0, 0, 0], sizes = [1, 4, 8, 256], strides = [1, 1, 1, 1]} : vector<3x4x8x256xbf16> to vector<1x4x8x256xbf16>
    %13 = vector.shape_cast %12 : vector<1x4x8x256xbf16> to vector<4x8x256xbf16>
    "tpu.trace_start"() <{level = 10 : i32, message = "hdq,hdk->hqk"}> : () -> ()
    %cst_5 = arith.constant dense<0.000000e+00> : vector<4x256x256xf32>
    %14 = tpu.matmul %9, %11, %cst_5 {dimension_numbers = #tpu.dot_dimension_numbers<[1], [1], [2], [2], [0, 0, 0, 2, 1, 2], [0], [0]>} : vector<4x8x256xbf16>, vector<4x8x256xbf16>, vector<4x256x256xf32> -> vector<4x256x256xf32>
    "tpu.trace_stop"() : () -> ()
    %c0_6 = arith.constant 0 : index
    %c0_7 = arith.constant 0 : index
    %c0_8 = arith.constant 0 : index
    %15 = vector.load %arg4[%c0_6, %c0_7, %c0_8] : memref<4x256x256xf32, #tpu.memory_space<vmem>>, vector<4x256x256xf32>
    %16 = arith.addf %14, %15 : vector<4x256x256xf32>
    %cst_9 = arith.constant dense<0xFF800000> : vector<4x256xf32>
    %17 = vector.multi_reduction <maximumf>, %16, %cst_9 [2] : vector<4x256x256xf32> to vector<4x256xf32>
    %18 = vector.shape_cast %17 : vector<4x256xf32> to vector<4x256x1xf32>
    %19 = vector.broadcast %18 : vector<4x256x1xf32> to vector<4x256x256xf32>
    %20 = arith.subf %16, %19 : vector<4x256x256xf32>
    %21 = math.exp %20 : vector<4x256x256xf32>
    %cst_10 = arith.constant dense<0.000000e+00> : vector<4x256xf32>
    %22 = vector.multi_reduction <add>, %21, %cst_10 [2] : vector<4x256x256xf32> to vector<4x256xf32>
    %23 = vector.shape_cast %22 : vector<4x256xf32> to vector<4x256x1xf32>
    %24 = tpu.reciprocal %23 {approx = true} : vector<4x256x1xf32> -> vector<4x256x1xf32>
    %25 = vector.broadcast %24 : vector<4x256x1xf32> to vector<4x256x256xf32>
    %26 = arith.mulf %21, %25 : vector<4x256x256xf32>
    %27 = arith.truncf %26 : vector<4x256x256xf32> to vector<4x256x256xbf16>
    "tpu.trace_start"() <{level = 10 : i32, message = "hdk,hqk->hdq"}> : () -> ()
    %cst_11 = arith.constant dense<0.000000e+00> : vector<4x8x256xf32>
    %28 = tpu.matmul %13, %27, %cst_11 {dimension_numbers = #tpu.dot_dimension_numbers<[2], [2], [1], [1], [0, 0, 0, 1, 1, 1], [0], [0]>} : vector<4x8x256xbf16>, vector<4x256x256xbf16>, vector<4x8x256xf32> -> vector<4x8x256xf32>
    "tpu.trace_stop"() : () -> ()
    %c0_12 = arith.constant 0 : index
    %c0_13 = arith.constant 0 : index
    %29 = vector.load %arg5[%c0_12, %c0_13] : memref<32x32xbf16, #tpu.memory_space<vmem>>, vector<32x32xbf16>
    %30 = vector.shape_cast %28 : vector<4x8x256xf32> to vector<32x256xf32>
    %31 = arith.truncf %30 : vector<32x256xf32> to vector<32x256xbf16>
    %cst_14 = arith.constant dense<0.000000e+00> : vector<32x256xf32>
    %32 = tpu.matmul %29, %31, %cst_14 {dimension_numbers = #tpu.dot_dimension_numbers<[1], [0], [0], [1], [0, 0, 1, 1], [], []>} : vector<32x32xbf16>, vector<32x256xbf16>, vector<32x256xf32> -> vector<32x256xf32>
    %c0_15 = arith.constant 0 : index
    %c0_16 = arith.constant 0 : index
    %33 = vector.load %arg6[%c0_15, %c0_16] : memref<32x1xf32, #tpu.memory_space<vmem>>, vector<32x1xf32>
    %34 = vector.broadcast %33 : vector<32x1xf32> to vector<32x256xf32>
    %35 = arith.addf %32, %34 : vector<32x256xf32>
    %c0_17 = arith.constant 0 : index
    %c0_18 = arith.constant 0 : index
    %36 = vector.load %arg7[%c0_17, %c0_18] : memref<32x256xf32, #tpu.memory_space<vmem>>, vector<32x256xf32>
    tpu.vector_store %arg7[%c0_17, %c0_18], %35 {strides = array<i32>} : memref<32x256xf32, #tpu.memory_space<vmem>>, vector<32x256xf32>,
    return
  }
  func.func @transform_0(%arg0: i32) -> (i32, i32) {
    %c0_i32 = arith.constant 0 : i32
    %c0_i32_0 = arith.constant 0 : i32
    return %c0_i32, %arg0 : i32, i32
  }
  func.func @transform_1(%arg0: i32) -> (i32, i32) {
    %c0_i32 = arith.constant 0 : i32
    %c0_i32_0 = arith.constant 0 : i32
    %c0_i32_1 = arith.constant 0 : i32
    return %c0_i32, %c0_i32_0 : i32, i32
  }
  func.func @transform_2(%arg0: i32) -> (i32, i32) {
    %c0_i32 = arith.constant 0 : i32
    %c0_i32_0 = arith.constant 0 : i32
    %c0_i32_1 = arith.constant 0 : i32
    return %c0_i32, %c0_i32_0 : i32, i32
  }
  func.func @transform_3(%arg0: i32) -> (i32, i32, i32) {
    %c0_i32 = arith.constant 0 : i32
    %c0_i32_0 = arith.constant 0 : i32
    %c0_i32_1 = arith.constant 0 : i32
    %c0_i32_2 = arith.constant 0 : i32
    return %c0_i32, %c0_i32_0, %c0_i32_1 : i32, i32, i32
  }
  func.func @transform_4(%arg0: i32) -> (i32, i32) {
    %c0_i32 = arith.constant 0 : i32
    %c0_i32_0 = arith.constant 0 : i32
    %c0_i32_1 = arith.constant 0 : i32
    return %c0_i32, %c0_i32_0 : i32, i32
  }
  func.func @transform_5(%arg0: i32) -> (i32, i32) {
    %c0_i32 = arith.constant 0 : i32
    %c0_i32_0 = arith.constant 0 : i32
    %c0_i32_1 = arith.constant 0 : i32
    return %c0_i32, %c0_i32_0 : i32, i32
  }
  func.func @transform_6(%arg0: i32) -> (i32, i32) {
    %c0_i32 = arith.constant 0 : i32
    %c0_i32_0 = arith.constant 0 : i32
    return %c0_i32, %arg0 : i32, i32
  }
}

module attributes {stable_mosaic.version = 11 : i64} {
  func.func @_window_attn_kernel(%arg0: i32, %arg1: memref<32x256xbf16, #tpu.memory_space<vmem>>, %arg2: memref<96x32xbf16, #tpu.memory_space<vmem>>, %arg3: memref<96x1xf32, #tpu.memory_space<vmem>>, %arg4: memref<4x256x256xf32, #tpu.memory_space<vmem>>, %arg5: memref<32x32xbf16, #tpu.memory_space<vmem>>, %arg6: memref<32x1xf32, #tpu.memory_space<vmem>>, %arg7: memref<32x256xf32, #tpu.memory_space<vmem>>) attributes {dimension_semantics = [#tpu.dimension_semantics<parallel>], iteration_bounds = array<i64: 4>, scalar_prefetch = 0 : i64, scratch_operands = 0 : i64, tpu.core_type = #tpu.core_type<tc>, window_params = [{transform_indices = @transform_0, window_bounds = array<i64: 32, 256>}, {pipeline_mode = #tpu.pipeline_mode<synchronous>, transform_indices = @transform_1, window_bounds = array<i64: 96, 32>}, {pipeline_mode = #tpu.pipeline_mode<synchronous>, transform_indices = @transform_2, window_bounds = array<i64: 96, 1>}, {pipeline_mode = #tpu.pipeline_mode<synchronous>, transform_indices = @transform_3, window_bounds = array<i64: 4, 256, 256>}, {pipeline_mode = #tpu.pipeline_mode<synchronous>, transform_indices = @transform_4, window_bounds = array<i64: 32, 32>}, {pipeline_mode = #tpu.pipeline_mode<synchronous>, transform_indices = @transform_5, window_bounds = array<i64: 32, 1>}, {transform_indices = @transform_6, window_bounds = array<i64: 32, 256>}]} {
    %c0 = arith.constant 0 : index
    %c0_0 = arith.constant 0 : index
    %0 = vector.load %arg2[%c0, %c0_0] : memref<96x32xbf16, #tpu.memory_space<vmem>>, vector<96x32xbf16>
    %c0_1 = arith.constant 0 : index
    %c0_2 = arith.constant 0 : index
    %1 = vector.load %arg1[%c0_1, %c0_2] : memref<32x256xbf16, #tpu.memory_space<vmem>>, vector<32x256xbf16>
    %cst = arith.constant dense<0.000000e+00> : vector<96x256xf32>
    %2 = tpu.matmul %0, %1, %cst {dimension_numbers = #tpu.dot_dimension_numbers<[1], [0], [0], [1], [0, 0, 1, 1], [], []>} : vector<96x32xbf16>, vector<32x256xbf16>, vector<96x256xf32> -> vector<96x256xf32>
    %c0_3 = arith.constant 0 : index
    %c0_4 = arith.constant 0 : index
    %3 = vector.load %arg3[%c0_3, %c0_4] : memref<96x1xf32, #tpu.memory_space<vmem>>, vector<96x1xf32>
    %4 = vector.broadcast %3 : vector<96x1xf32> to vector<96x256xf32>
    %5 = arith.addf %2, %4 : vector<96x256xf32>
    %6 = arith.truncf %5 : vector<96x256xf32> to vector<96x256xbf16>
    %7 = vector.shape_cast %6 : vector<96x256xbf16> to vector<3x4x8x256xbf16>
    %8 = vector.extract_strided_slice %7 {offsets = [0, 0, 0, 0], sizes = [1, 4, 8, 256], strides = [1, 1, 1, 1]} : vector<3x4x8x256xbf16> to vector<1x4x8x256xbf16>
    %9 = vector.shape_cast %8 : vector<1x4x8x256xbf16> to vector<4x8x256xbf16>
    %10 = vector.extract_strided_slice %7 {offsets = [1, 0, 0, 0], sizes = [1, 4, 8, 256], strides = [1, 1, 1, 1]} : vector<3x4x8x256xbf16> to vector<1x4x8x256xbf16>
    %11 = vector.shape_cast %10 : vector<1x4x8x256xbf16> to vector<4x8x256xbf16>
    %12 = vector.extract_strided_slice %7 {offsets = [2, 0, 0, 0], sizes = [1, 4, 8, 256], strides = [1, 1, 1, 1]} : vector<3x4x8x256xbf16> to vector<1x4x8x256xbf16>
    %13 = vector.shape_cast %12 : vector<1x4x8x256xbf16> to vector<4x8x256xbf16>
    "tpu.trace_start"() <{level = 10 : i32, message = "hdq,hdk->hqk"}> : () -> ()
    %cst_5 = arith.constant dense<0.000000e+00> : vector<4x256x256xf32>
    %14 = tpu.matmul %9, %11, %cst_5 {dimension_numbers = #tpu.dot_dimension_numbers<[1], [1], [2], [2], [0, 0, 0, 2, 1, 2], [0], [0]>} : vector<4x8x256xbf16>, vector<4x8x256xbf16>, vector<4x256x256xf32> -> vector<4x256x256xf32>
    "tpu.trace_stop"() : () -> ()
    %c0_6 = arith.constant 0 : index
    %c0_7 = arith.constant 0 : index
    %c0_8 = arith.constant 0 : index
    %15 = vector.load %arg4[%c0_6, %c0_7, %c0_8] : memref<4x256x256xf32, #tpu.memory_space<vmem>>, vector<4x256x256xf32>
    %16 = arith.addf %14, %15 : vector<4x256x256xf32>
    %cst_9 = arith.constant dense<0xFF800000> : vector<4x256xf32>
    %17 = vector.multi_reduction <maximumf>, %16, %cst_9 [2] : vector<4x256x256xf32> to vector<4x256xf32>
    %18 = vector.shape_cast %17 : vector<4x256xf32> to vector<4x256x1xf32>
    %19 = vector.broadcast %18 : vector<4x256x1xf32> to vector<4x256x256xf32>
    %20 = arith.subf %16, %19 : vector<4x256x256xf32>
    %21 = math.exp %20 : vector<4x256x256xf32>
    %cst_10 = arith.constant dense<0.000000e+00> : vector<4x256xf32>
    %22 = vector.multi_reduction <add>, %21, %cst_10 [2] : vector<4x256x256xf32> to vector<4x256xf32>
    %23 = vector.shape_cast %22 : vector<4x256xf32> to vector<4x256x1xf32>
    %24 = tpu.reciprocal %23 {approx = true} : vector<4x256x1xf32> -> vector<4x256x1xf32>
    %25 = vector.broadcast %24 : vector<4x256x1xf32> to vector<4x256x256xf32>
    %26 = arith.mulf %21, %25 : vector<4x256x256xf32>
    %27 = arith.truncf %26 : vector<4x256x256xf32> to vector<4x256x256xbf16>
    "tpu.trace_start"() <{level = 10 : i32, message = "hdk,hqk->hdq"}> : () -> ()
    %cst_11 = arith.constant dense<0.000000e+00> : vector<4x8x256xf32>
    %28 = tpu.matmul %13, %27, %cst_11 {dimension_numbers = #tpu.dot_dimension_numbers<[2], [2], [1], [1], [0, 0, 0, 1, 1, 1], [0], [0]>} : vector<4x8x256xbf16>, vector<4x256x256xbf16>, vector<4x8x256xf32> -> vector<4x8x256xf32>
    "tpu.trace_stop"() : () -> ()
    %c0_12 = arith.constant 0 : index
    %c0_13 = arith.constant 0 : index
    %29 = vector.load %arg5[%c0_12, %c0_13] : memref<32x32xbf16, #tpu.memory_space<vmem>>, vector<32x32xbf16>
    %30 = vector.shape_cast %28 : vector<4x8x256xf32> to vector<32x256xf32>
    %31 = arith.truncf %30 : vector<32x256xf32> to vector<32x256xbf16>
    %cst_14 = arith.constant dense<0.000000e+00> : vector<32x256xf32>
    %32 = tpu.matmul %29, %31, %cst_14 {dimension_numbers = #tpu.dot_dimension_numbers<[1], [0], [0], [1], [0, 0, 1, 1], [], []>} : vector<32x32xbf16>, vector<32x256xbf16>, vector<32x256xf32> -> vector<32x256xf32>
    %c0_15 = arith.constant 0 : index
    %c0_16 = arith.constant 0 : index
    %33 = vector.load %arg6[%c0_15, %c0_16] : memref<32x1xf32, #tpu.memory_space<vmem>>, vector<32x1xf32>
    %34 = vector.broadcast %33 : vector<32x1xf32> to vector<32x256xf32>
    %35 = arith.addf %32, %34 : vector<32x256xf32>
    %c0_17 = arith.constant 0 : index
    %c0_18 = arith.constant 0 : index
    %36 = vector.load %arg7[%c0_17, %c0_18] : memref<32x256xf32, #tpu.memory_space<vmem>>, vector<32x256xf32>
    tpu.vector_store %arg7[%c0_17, %c0_18], %35 {strides = array<i32>} : memref<32x256xf32, #tpu.memory_space<vmem>>, vector<32x256xf32>,
    return
  }
  func.func @transform_0(%arg0: i32) -> (i32, i32) {
    %c0_i32 = arith.constant 0 : i32
    %c0_i32_0 = arith.constant 0 : i32
    return %c0_i32, %arg0 : i32, i32
  }
  func.func @transform_1(%arg0: i32) -> (i32, i32) {
    %c0_i32 = arith.constant 0 : i32
    %c0_i32_0 = arith.constant 0 : i32
    %c0_i32_1 = arith.constant 0 : i32
    return %c0_i32, %c0_i32_0 : i32, i32
  }
  func.func @transform_2(%arg0: i32) -> (i32, i32) {
    %c0_i32 = arith.constant 0 : i32
    %c0_i32_0 = arith.constant 0 : i32
    %c0_i32_1 = arith.constant 0 : i32
    return %c0_i32, %c0_i32_0 : i32, i32
  }
  func.func @transform_3(%arg0: i32) -> (i32, i32, i32) {
    %c0_i32 = arith.constant 0 : i32
    %c0_i32_0 = arith.constant 0 : i32
    %c0_i32_1 = arith.constant 0 : i32
    %c0_i32_2 = arith.constant 0 : i32
    return %c0_i32, %c0_i32_0, %c0_i32_1 : i32, i32, i32
  }
  func.func @transform_4(%arg0: i32) -> (i32, i32) {
    %c0_i32 = arith.constant 0 : i32
    %c0_i32_0 = arith.constant 0 : i32
    %c0_i32_1 = arith.constant 0 : i32
    return %c0_i32, %c0_i32_0 : i32, i32
  }
  func.func @transform_5(%arg0: i32) -> (i32, i32) {
    %c0_i32 = arith.constant 0 : i32
    %c0_i32_0 = arith.constant 0 : i32
    %c0_i32_1 = arith.constant 0 : i32
    return %c0_i32, %c0_i32_0 : i32, i32
  }
  func.func @transform_6(%arg0: i32) -> (i32, i32) {
    %c0_i32 = arith.constant 0 : i32
    %c0_i32_0 = arith.constant 0 : i32
    return %c0_i32, %arg0 : i32, i32
  }
}

</mosaic_0001>

<llo_original>
// kernel: tpu_custom_call.1
$region0: #{tpu_custom_call.1}
  #allocation0 [shape = 'u32[]', space=smem, size = 0x4, offset = 0x4, fixed_abs, tag = 'smem constant byte address 0x4 - core index']
  #allocation1 [shape = 'u32[144,128]{1,0:T(1,128)}', space=vmem, size = 0x12000, scoped, tag = 'internal scratch']
  %s0 = inlined_call_operand.hbm [shape: bf16[32,1024], index: 0, kind: input, shape index: {}]
  %s1 = inlined_call_operand.hbm [shape: bf16[96,32], index: 1, kind: input, shape index: {}]
  %s2 = inlined_call_operand.hbm [shape: f32[96,1], index: 2, kind: input, shape index: {}]
  %s3 = inlined_call_operand.hbm [shape: f32[4,256,256], index: 3, kind: input, shape index: {}]
  %s4 = inlined_call_operand.hbm [shape: bf16[32,32], index: 4, kind: input, shape index: {}]
  %s5 = inlined_call_operand.hbm [shape: f32[32,1], index: 5, kind: input, shape index: {}]
  %s6 = inlined_call_operand.hbm [shape: f32[32,1024], index: 6, kind: output, shape index: {}]
  %s7 = sld [smem:[#allocation0]]
  $region81: #{tpu_custom_call.1} parent=0
    _
  %s9 = ssub.s32 1, %s7
  %s10 = scalar_select 0, %s9, %s7
  $region1: #{tpu_custom_call.1} parent=0
    #allocation2 [shape = 'u8[32768]{0}', space=vmem, size = 0x8000, scoped, tag = 'input window, operand 0']
    #allocation3 [shape = 's32[2]{0}', space=sflag, size = 0x8, scoped, tag = 'scoped memory for tpu_custom_call.1']
    #allocation4 [shape = 's32[2]{0}', space=sflag, size = 0x8, scoped, tag = 'scoped memory for tpu_custom_call.1']
    #allocation5 [shape = 'u8[24576]{0}', space=vmem, size = 0x6000, scoped, tag = 'input window, operand 1, single buffered']
    #allocation6 [shape = 's32[1]{0}', space=sflag, size = 0x4, scoped, tag = 'scoped memory for tpu_custom_call.1']
    #allocation7 [shape = 'u8[49152]{0}', space=vmem, size = 0xc000, scoped, tag = 'input window, operand 2, single buffered']
    #allocation8 [shape = 'u8[1048576]{0}', space=vmem, size = 0x100000, scoped, tag = 'input window, operand 3, single buffered']
    #allocation9 [shape = 's32[1]{0}', space=sflag, size = 0x4, scoped, tag = 'scoped memory for tpu_custom_call.1']
    #allocation10 [shape = 'u8[8192]{0}', space=vmem, size = 0x2000, scoped, tag = 'input window, operand 4, single buffered']
    #allocation11 [shape = 'u8[16384]{0}', space=vmem, size = 0x4000, scoped, tag = 'input window, operand 5, single buffered']
    #allocation12 [shape = 's32[1]{0}', space=sflag, size = 0x4, scoped, tag = 'scoped memory for tpu_custom_call.1']
    #allocation13 [shape = 'u8[65536]{0}', space=vmem, size = 0x10000, scoped, tag = 'output window, operand 0']
    %11 = vsyncpa [#allocation3], 0
    %s12 = scalar_lea.sflag [#allocation3], 1
    %13 = vsyncpa %s12, 0
    %14 = vsyncpa [#allocation6], 0
    %15 = vsyncpa [#allocation9], 0
    %16 = vsyncpa [#allocation12], 0
    %17 = vsyncpa [#allocation4], 0
    %s18 = scalar_lea.sflag [#allocation4], 1
    %19 = vsyncpa %s18, 0
    loop: start=0, step=1, limit=6
    $region2: #{tpu_custom_call.1} parent=1 // loop_pre_header
      _
    $region3: #{tpu_custom_call.1} parent=1 // loop_header
      %s21 = sphi 0, %s25
      %p22 = scmp.ge.s32.totalorder %s21, 6
      %s31 = sphi 0, %s33
      %s34 = sphi 0, %s31
      %s35 = sphi 0, %s34
      %s51 = sphi 0, %s35
      %s55 = sphi 0, %s55
      %s57 = sphi 0, %s55
      %s58 = sphi 0, %s57
      %s72 = sphi 0, %s58
      %s76 = sphi 0, %s76
      %s78 = sphi 0, %s76
      %s79 = sphi 0, %s78
      %s93 = sphi 0, %s79
      %s97 = sphi 0, %s97
      %s99 = sphi 0, %s97
      %s100 = sphi 0, %s99
      %s114 = sphi 0, %s100
      %s118 = sphi 0, %s118
      %s120 = sphi 0, %s118
      %s121 = sphi 0, %s120
      %s135 = sphi 0, %s121
      %s139 = sphi 0, %s139
      %s141 = sphi 0, %s139
      %s142 = sphi 0, %s141
      %s156 = sphi 0, %s142
      %s162 = sphi 0, %s164
      %s165 = sphi 0, %s162
      %s166 = sphi 0, %s165
      %s182 = sphi 0, %s166
    $region4: #{tpu_custom_call.1} parent=1 // loop_header_branch
      %24 = sbr.rel (%p22) target = $region8
    $region5: #{tpu_custom_call.1} parent=1 // loop_body
      %s26 = ssub.s32 %s21, 1
      %s27 = ssub.s32 %s21, 2
      %s28 = sadd.s32 %s21, 1
      %s29 = ssub.s32 %s21, %s28
      %p30 = scmp.eq.s32.totalorder %s29, 0
      %s32 = sadd.s32 %s31, 1
      %s33 = scalar_select %p30, %s31, %s32
      %p36 = pneg %p30
      %p37 = scmp.eq.s32.totalorder %s21, 3
      %p38 = por %p36, %p37
      %p39 = scmp.ne.s32.totalorder %s31, %s34
      %p40 = scmp.eq.s32.totalorder %s21, 0
      %p41 = por %p39, %p40
      %p42 = scmp.ne.s32.totalorder %s31, %s34
      %p43 = scmp.eq.s32.totalorder %s26, 3
      %p44 = por %p42, %p43
      %p45 = scmp.ne.s32.totalorder %s34, %s35
      %p46 = scmp.eq.s32.totalorder %s26, 0
      %p47 = por %p45, %p46
      %p48 = scmp.ne.s32.totalorder %s34, %s35
      %p49 = scmp.eq.s32.totalorder %s27, 3
      %p50 = por %p48, %p49
      %p52 = scmp.ne.s32.totalorder %s35, %s51
      %p53 = scmp.eq.s32.totalorder %s27, 0
      %p54 = por %p52, %p53
      %s56 = sadd.s32 %s55, 1
      %p59 = scmp.eq.s32.totalorder %s21, 3
      %p60 = scmp.ne.s32.totalorder %s55, %s57
      %p61 = scmp.eq.s32.totalorder %s21, 0
      %p62 = por %p60, %p61
      %p63 = scmp.ne.s32.totalorder %s55, %s57
      %p64 = scmp.eq.s32.totalorder %s26, 3
      %p65 = por %p63, %p64
      %p66 = scmp.ne.s32.totalorder %s57, %s58
      %p67 = scmp.eq.s32.totalorder %s26, 0
      %p68 = por %p66, %p67
      %p69 = scmp.ne.s32.totalorder %s57, %s58
      %p70 = scmp.eq.s32.totalorder %s27, 3
      %p71 = por %p69, %p70
      %p73 = scmp.ne.s32.totalorder %s58, %s72
      %p74 = scmp.eq.s32.totalorder %s27, 0
      %p75 = por %p73, %p74
      %s77 = sadd.s32 %s76, 1
      %p80 = scmp.eq.s32.totalorder %s21, 3
      %p81 = scmp.ne.s32.totalorder %s76, %s78
      %p82 = scmp.eq.s32.totalorder %s21, 0
      %p83 = por %p81, %p82
      %p84 = scmp.ne.s32.totalorder %s76, %s78
      %p85 = scmp.eq.s32.totalorder %s26, 3
      %p86 = por %p84, %p85
      %p87 = scmp.ne.s32.totalorder %s78, %s79
      %p88 = scmp.eq.s32.totalorder %s26, 0
      %p89 = por %p87, %p88
      %p90 = scmp.ne.s32.totalorder %s78, %s79
      %p91 = scmp.eq.s32.totalorder %s27, 3
      %p92 = por %p90, %p91
      %p94 = scmp.ne.s32.totalorder %s79, %s93
      %p95 = scmp.eq.s32.totalorder %s27, 0
      %p96 = por %p94, %p95
      %s98 = sadd.s32 %s97, 1
      %p101 = scmp.eq.s32.totalorder %s21, 3
      %p102 = scmp.ne.s32.totalorder %s97, %s99
      %p103 = scmp.eq.s32.totalorder %s21, 0
      %p104 = por %p102, %p103
      %p105 = scmp.ne.s32.totalorder %s97, %s99
      %p106 = scmp.eq.s32.totalorder %s26, 3
      %p107 = por %p105, %p106
      %p108 = scmp.ne.s32.totalorder %s99, %s100
      %p109 = scmp.eq.s32.totalorder %s26, 0
      %p110 = por %p108, %p109
      %p111 = scmp.ne.s32.totalorder %s99, %s100
      %p112 = scmp.eq.s32.totalorder %s27, 3
      %p113 = por %p111, %p112
      %p115 = scmp.ne.s32.totalorder %s100, %s114
      %p116 = scmp.eq.s32.totalorder %s27, 0
      %p117 = por %p115, %p116
      %s119 = sadd.s32 %s118, 1
      %p122 = scmp.eq.s32.totalorder %s21, 3
      %p123 = scmp.ne.s32.totalorder %s118, %s120
      %p124 = scmp.eq.s32.totalorder %s21, 0
      %p125 = por %p123, %p124
      %p126 = scmp.ne.s32.totalorder %s118, %s120
      %p127 = scmp.eq.s32.totalorder %s26, 3
      %p128 = por %p126, %p127
      %p129 = scmp.ne.s32.totalorder %s120, %s121
      %p130 = scmp.eq.s32.totalorder %s26, 0
      %p131 = por %p129, %p130
      %p132 = scmp.ne.s32.totalorder %s120, %s121
      %p133 = scmp.eq.s32.totalorder %s27, 3
      %p134 = por %p132, %p133
      %p136 = scmp.ne.s32.totalorder %s121, %s135
      %p137 = scmp.eq.s32.totalorder %s27, 0
      %p138 = por %p136, %p137
      %s140 = sadd.s32 %s139, 1
      %p143 = scmp.eq.s32.totalorder %s21, 3
      %p144 = scmp.ne.s32.totalorder %s139, %s141
      %p145 = scmp.eq.s32.totalorder %s21, 0
      %p146 = por %p144, %p145
      %p147 = scmp.ne.s32.totalorder %s139, %s141
      %p148 = scmp.eq.s32.totalorder %s26, 3
      %p149 = por %p147, %p148
      %p150 = scmp.ne.s32.totalorder %s141, %s142
      %p151 = scmp.eq.s32.totalorder %s26, 0
      %p152 = por %p150, %p151
      %p153 = scmp.ne.s32.totalorder %s141, %s142
      %p154 = scmp.eq.s32.totalorder %s27, 3
      %p155 = por %p153, %p154
      %p157 = scmp.ne.s32.totalorder %s142, %s156
      %p158 = scmp.eq.s32.totalorder %s27, 0
      %p159 = por %p157, %p158
      %s160 = ssub.s32 %s21, %s28
      %p161 = scmp.eq.s32.totalorder %s160, 0
      %s163 = sadd.s32 %s162, 1
      %s164 = scalar_select %p161, %s162, %s163
      %p167 = pneg %p161
      %p168 = scmp.eq.s32.totalorder %s21, 3
      %p169 = por %p167, %p168
      %p170 = scmp.ne.s32.totalorder %s162, %s165
      %p171 = scmp.eq.s32.totalorder %s21, 0
      %p172 = por %p170, %p171
      %p173 = scmp.ne.s32.totalorder %s162, %s165
      %p174 = scmp.eq.s32.totalorder %s26, 3
      %p175 = por %p173, %p174
      %p176 = scmp.ne.s32.totalorder %s165, %s166
      %p177 = scmp.eq.s32.totalorder %s26, 0
      %p178 = por %p176, %p177
      %p179 = scmp.ne.s32.totalorder %s165, %s166
      %p180 = scmp.eq.s32.totalorder %s27, 3
      %p181 = por %p179, %p180
      %p183 = scmp.ne.s32.totalorder %s166, %s182
      %p184 = scmp.eq.s32.totalorder %s27, 0
      %p185 = por %p183, %p184
      %p186 = scmp.le.s32.totalorder 1, %s21
      %p187 = scmp.lt.s32.totalorder %s21, 5
      %p188 = pnand %p186, %p187
      %p189 = pneg %p188
      // Predicated region
      $region9: #{tpu_custom_call.1} parent=5 // pred_check
        _
      $region10: #{tpu_custom_call.1} parent=5 // pred_check_branch
        %191 = sbr.rel (%p188) target = $region12
      $region11: #{tpu_custom_call.1} parent=5 // pred_region
        %s192 = ssub.s32 %s21, 1
        // Predicated region
        $region13: #{tpu_custom_call.1} parent=11 // pred_check
          %p193 = pneg %p68
        $region14: #{tpu_custom_call.1} parent=11 // pred_check_branch
          %195 = sbr.rel (%p193) target = $region16
        $region15: #{tpu_custom_call.1} parent=11 // pred_region
          %s197 = ssub.s32 768, 768
          %198 = vsyncadd [#allocation6], %s197
          %s199 = sshll.u32 [#allocation5], 4
          %s200 = int_to_ptr.vmem [resolvable:$true] %s199
          %205 = dma.hbm_to_vmem [thread:$0]  %s1, 768, %s200, [#allocation6], 64, 64, 4
        $region16: #{tpu_custom_call.1} parent=11 // pred_fallthru
          _
        // Predicated region
        $region17: #{tpu_custom_call.1} parent=11 // pred_check
          %p206 = pneg %p89
        $region18: #{tpu_custom_call.1} parent=11 // pred_check_branch
          %208 = sbr.rel (%p206) target = $region20
        $region19: #{tpu_custom_call.1} parent=11 // pred_region
          %s210 = ssub.s32 1536, 1536
          %211 = vsyncadd [#allocation6], %s210
          %s212 = sshll.u32 [#allocation7], 4
          %s213 = int_to_ptr.vmem [resolvable:$true] %s212
          %218 = dma.hbm_to_vmem [thread:$0]  %s2, 1536, %s213, [#allocation6], 128, 128, 8
        $region20: #{tpu_custom_call.1} parent=11 // pred_fallthru
          _
        // Predicated region
        $region21: #{tpu_custom_call.1} parent=11 // pred_check
          %p219 = pneg %p110
        $region22: #{tpu_custom_call.1} parent=11 // pred_check_branch
          %221 = sbr.rel (%p219) target = $region24
        $region23: #{tpu_custom_call.1} parent=11 // pred_region
          %s223 = ssub.s32 32768, 32768
          %224 = vsyncadd [#allocation9], %s223
          %s225 = sshll.u32 [#allocation8], 4
          %s226 = int_to_ptr.vmem [resolvable:$true] %s225
          %231 = dma.hbm_to_vmem [thread:$0]  %s3, 32768, %s226, [#allocation9], 256, 256, 16
        $region24: #{tpu_custom_call.1} parent=11 // pred_fallthru
          _
        // Predicated region
        $region25: #{tpu_custom_call.1} parent=11 // pred_check
          %p232 = pneg %p131
        $region26: #{tpu_custom_call.1} parent=11 // pred_check_branch
          %234 = sbr.rel (%p232) target = $region28
        $region27: #{tpu_custom_call.1} parent=11 // pred_region
          %s236 = ssub.s32 256, 256
          %237 = vsyncadd [#allocation9], %s236
          %s238 = sshll.u32 [#allocation10], 4
          %s239 = int_to_ptr.vmem [resolvable:$true] %s238
          %244 = dma.hbm_to_vmem [thread:$0]  %s4, 256, %s239, [#allocation9], 64, 64, 4
        $region28: #{tpu_custom_call.1} parent=11 // pred_fallthru
          _
        // Predicated region
        $region29: #{tpu_custom_call.1} parent=11 // pred_check
          %p245 = pneg %p152
        $region30: #{tpu_custom_call.1} parent=11 // pred_check_branch
          %247 = sbr.rel (%p245) target = $region32
        $region31: #{tpu_custom_call.1} parent=11 // pred_region
          %s249 = ssub.s32 512, 512
          %250 = vsyncadd [#allocation12], %s249
          %s251 = sshll.u32 [#allocation11], 4
          %s252 = int_to_ptr.vmem [resolvable:$true] %s251
          %257 = dma.hbm_to_vmem [thread:$0]  %s5, 512, %s252, [#allocation12], 128, 128, 8
        $region32: #{tpu_custom_call.1} parent=11 // pred_fallthru
          _
      $region12: #{tpu_custom_call.1} parent=5 // pred_fallthru
        _
      %p258 = scmp.lt.s32.totalorder %s21, 4
      // Predicated region
      $region33: #{tpu_custom_call.1} parent=5 // pred_check
        %p259 = pneg %p258
      $region34: #{tpu_custom_call.1} parent=5 // pred_check_branch
        %261 = sbr.rel (%p259) target = $region36
      $region35: #{tpu_custom_call.1} parent=5 // pred_region
        // Predicated region
        $region37: #{tpu_custom_call.1} parent=35 // pred_check
          %p262 = pneg %p41
        $region38: #{tpu_custom_call.1} parent=35 // pred_check_branch
          %264 = sbr.rel (%p262) target = $region40
        $region39: #{tpu_custom_call.1} parent=35 // pred_region
          %s265 = sand.u32 %s31, 1
          %s266 = scalar_lea.sflag [#allocation3], %s265
          %s267 = sand.u32 %s31, 1
          %s268 = smul.addr %s267, 32
          %s269 = scalar_lea.vmem [#allocation2], %s268
          %s270 = smul.u32 2, %s21
          %s272 = ssub.s32 512, 512
          %273 = vsyncadd %s266, %s272
          %s274 = smul.addr %s270, 64
          %s275 = scalar_lea.hbm %s0, %s274
          %s276 = sshll.u32 %s269, 4
          %s277 = int_to_ptr.vmem [resolvable:$true] %s276
          %282 = dma.hbm_to_vmem [thread:$0]  %s275, 512, %s277, %s266, 512, 128, 8
        $region40: #{tpu_custom_call.1} parent=35 // pred_fallthru
          _
      $region36: #{tpu_custom_call.1} parent=5 // pred_fallthru
        _
      %p283 = scmp.le.s32.totalorder 1, %s21
      %p284 = scmp.lt.s32.totalorder %s21, 5
      %p285 = pnand %p283, %p284
      %p286 = pneg %p285
      // Predicated region
      $region41: #{tpu_custom_call.1} parent=5 // pred_check
        _
      $region42: #{tpu_custom_call.1} parent=5 // pred_check_branch
        %288 = sbr.rel (%p285) target = $region44
      $region43: #{tpu_custom_call.1} parent=5 // pred_region
        %s289 = ssub.s32 %s21, 1
        %s290 = sand.u32 %s34, 1
        %s291 = scalar_lea.sflag [#allocation3], %s290
        %s292 = sand.u32 %s34, 1
        %s293 = smul.addr %s292, 32
        %s294 = scalar_lea.vmem [#allocation2], %s293
        // Predicated region
        $region45: #{tpu_custom_call.1} parent=43 // pred_check
          %p295 = pneg %p47
        $region46: #{tpu_custom_call.1} parent=43 // pred_check_branch
          %297 = sbr.rel (%p295) target = $region48
        $region47: #{tpu_custom_call.1} parent=43 // pred_region
          %298 = dma.done %s291, 512
        $region48: #{tpu_custom_call.1} parent=43 // pred_fallthru
          _
        // Predicated region
        $region49: #{tpu_custom_call.1} parent=43 // pred_check
          %p299 = pneg %p68
        $region50: #{tpu_custom_call.1} parent=43 // pred_check_branch
          %301 = sbr.rel (%p299) target = $region52
        $region51: #{tpu_custom_call.1} parent=43 // pred_region
          %302 = dma.done [#allocation6], 768
        $region52: #{tpu_custom_call.1} parent=43 // pred_fallthru
          _
        // Predicated region
        $region53: #{tpu_custom_call.1} parent=43 // pred_check
          %p303 = pneg %p89
        $region54: #{tpu_custom_call.1} parent=43 // pred_check_branch
          %305 = sbr.rel (%p303) target = $region56
        $region55: #{tpu_custom_call.1} parent=43 // pred_region
          %306 = dma.done [#allocation6], 1536
        $region56: #{tpu_custom_call.1} parent=43 // pred_fallthru
          _
        // Predicated region
        $region57: #{tpu_custom_call.1} parent=43 // pred_check
          %p307 = pneg %p110
        $region58: #{tpu_custom_call.1} parent=43 // pred_check_branch
          %309 = sbr.rel (%p307) target = $region60
        $region59: #{tpu_custom_call.1} parent=43 // pred_region
          %310 = dma.done [#allocation9], 32768
        $region60: #{tpu_custom_call.1} parent=43 // pred_fallthru
          _
        // Predicated region
        $region61: #{tpu_custom_call.1} parent=43 // pred_check
          %p311 = pneg %p131
        $region62: #{tpu_custom_call.1} parent=43 // pred_check_branch
          %313 = sbr.rel (%p311) target = $region64
        $region63: #{tpu_custom_call.1} parent=43 // pred_region
          %314 = dma.done [#allocation9], 256
        $region64: #{tpu_custom_call.1} parent=43 // pred_fallthru
          _
        // Predicated region
        $region65: #{tpu_custom_call.1} parent=43 // pred_check
          %p315 = pneg %p152
        $region66: #{tpu_custom_call.1} parent=43 // pred_check_branch
          %317 = sbr.rel (%p315) target = $region68
        $region67: #{tpu_custom_call.1} parent=43 // pred_region
          %318 = dma.done [#allocation12], 512
        $region68: #{tpu_custom_call.1} parent=43 // pred_fallthru
          _
        %s319 = sand.u32 %s34, 1
        %s320 = scalar_lea.sflag [#allocation3], %s319
        %s321 = sand.u32 %s34, 1
        %s322 = smul.addr %s321, 32
        %s323 = scalar_lea.vmem [#allocation2], %s322
        %p324 = pneg %p47
        %p325 = pneg %p44
        %p326 = pneg %p68
        %p327 = pneg %p65
        %p328 = pneg %p89
        %p329 = pneg %p86
        %p330 = pneg %p110
        %p331 = pneg %p107
        %p332 = pneg %p131
        %p333 = pneg %p128
        %p334 = pneg %p152
        %p335 = pneg %p149
        %p336 = pneg %p178
        %p337 = pneg %p175
        %s338 = sand.u32 %s165, 1
        %s339 = scalar_lea.sflag [#allocation4], %s338
        %s340 = sand.u32 %s165, 1
        %s341 = smul.addr %s340, 64
        %s342 = scalar_lea.vmem [#allocation13], %s341
        %s343 = smul.u32 2, %s26
        %s344 = smul.u32 2, %s26
        %v346 = vld [vmem:[#allocation5] sm:$0xf]
        %v347 = vld [vmem:[#allocation5 + $0x4] sm:$0xf]
        %v348 = vld [vmem:[#allocation5 + $0x8] sm:$0xf]
        %v349 = vld [vmem:[#allocation5 + $0xc] sm:$0xf]
        %v350 = vld [vmem:[#allocation5 + $0x10] sm:$0xf]
        %v351 = vld [vmem:[#allocation5 + $0x14] sm:$0xf]
        %v352 = vld [vmem:[#allocation5 + $0x18] sm:$0xf]
        %v353 = vld [vmem:[#allocation5 + $0x1c] sm:$0xf]
        %v354 = vld [vmem:[#allocation5 + $0x20] sm:$0xf]
        %v355 = vld [vmem:[#allocation5 + $0x24] sm:$0xf]
        %v356 = vld [vmem:[#allocation5 + $0x28] sm:$0xf]
        %v357 = vld [vmem:[#allocation5 + $0x2c] sm:$0xf]
        %v358 = vld [vmem:[%s294] sm:$0xff]
        %v359 = vld [vmem:[%s294 + $0x8] sm:$0xff]
        %v360 = vld [vmem:[%s294 + $0x10] sm:$0xff]
        %v361 = vld [vmem:[%s294 + $0x18] sm:$0xff]
        %v362 = vld [vmem:[#allocation7] sm:$0xff]
        %v363 = vld [vmem:[#allocation7 + $0x8] sm:$0xff]
        %v364 = vld [vmem:[#allocation7 + $0x10] sm:$0xff]
        %v365 = vld [vmem:[#allocation7 + $0x18] sm:$0xff]
        %v366 = vld [vmem:[#allocation7 + $0x20] sm:$0xff]
        %v367 = vld [vmem:[#allocation7 + $0x28] sm:$0xff]
        %v368 = vld [vmem:[#allocation7 + $0x30] sm:$0xff]
        %v369 = vld [vmem:[#allocation7 + $0x38] sm:$0xff]
        %v370 = vld [vmem:[#allocation7 + $0x40] sm:$0xff]
        %v371 = vld [vmem:[#allocation7 + $0x48] sm:$0xff]
        %v372 = vld [vmem:[#allocation7 + $0x50] sm:$0xff]
        %v373 = vld [vmem:[#allocation7 + $0x58] sm:$0xff]
        %375 = vset.pattern.permute.xlu0 0
        %376 = vperm.xlu0 %375, %v362
        %v377 = vpop.permute.xlu0 %376
        %380 = vset.pattern.permute.xlu0 0
        %381 = vperm.xlu0 %380, %v363
        %v382 = vpop.permute.xlu0 %381
        %385 = vset.pattern.permute.xlu0 0
        %386 = vperm.xlu0 %385, %v364
        %v387 = vpop.permute.xlu0 %386
        %390 = vset.pattern.permute.xlu0 0
        %391 = vperm.xlu0 %390, %v365
        %v392 = vpop.permute.xlu0 %391
        %395 = vset.pattern.permute.xlu0 0
        %396 = vperm.xlu0 %395, %v366
        %v397 = vpop.permute.xlu0 %396
        %400 = vset.pattern.permute.xlu0 0
        %401 = vperm.xlu0 %400, %v367
        %v402 = vpop.permute.xlu0 %401
        %405 = vset.pattern.permute.xlu0 0
        %406 = vperm.xlu0 %405, %v368
        %v407 = vpop.permute.xlu0 %406
        %410 = vset.pattern.permute.xlu0 0
        %411 = vperm.xlu0 %410, %v369
        %v412 = vpop.permute.xlu0 %411
        %415 = vset.pattern.permute.xlu0 0
        %416 = vperm.xlu0 %415, %v370
        %v417 = vpop.permute.xlu0 %416
        %420 = vset.pattern.permute.xlu0 0
        %421 = vperm.xlu0 %420, %v371
        %v422 = vpop.permute.xlu0 %421
        %425 = vset.pattern.permute.xlu0 0
        %426 = vperm.xlu0 %425, %v372
        %v427 = vpop.permute.xlu0 %426
        %430 = vset.pattern.permute.xlu0 0
        %431 = vperm.xlu0 %430, %v373
        %v432 = vpop.permute.xlu0 %431
        %v446 = vunpack.c.l.b16 %v346
        %v447 = vunpack.c.l.b16 %v347
        %v448 = vunpack.c.l.b16 %v348
        %v449 = vunpack.c.l.b16 %v349
        %v450 = vunpack.c.l.b16 %v350
        %v451 = vunpack.c.l.b16 %v351
        %v452 = vunpack.c.l.b16 %v352
        %v453 = vunpack.c.l.b16 %v353
        %v454 = vunpack.c.l.b16 %v354
        %v455 = vunpack.c.l.b16 %v355
        %v456 = vunpack.c.l.b16 %v356
        %v457 = vunpack.c.l.b16 %v357
        %v458 = vpack.c.b16 %v447, %v446
        %v459 = vpack.c.b16 %v449, %v448
        %v460 = vpack.c.b16 %v451, %v450
        %v461 = vpack.c.b16 %v453, %v452
        %v462 = vpack.c.b16 %v455, %v454
        %v463 = vpack.c.b16 %v457, %v456
        %v468 = vunpack.c.l.b16 %v358
        %v469 = vunpack.c.h.b16 %v358
        %v470 = vunpack.c.l.b16 %v359
        %v471 = vunpack.c.h.b16 %v359
        %v472 = vunpack.c.l.b16 %v360
        %v473 = vunpack.c.h.b16 %v360
        %v474 = vunpack.c.l.b16 %v361
        %v475 = vunpack.c.h.b16 %v361
        %v476 = vpack.c.b16 %v470, %v468
        %v477 = vpack.c.b16 %v471, %v469
        %v478 = vpack.c.b16 %v474, %v472
        %v479 = vpack.c.b16 %v475, %v473
        %vm484 = vcmask 261120
        %v486 = vsel %vm484, %v458, 0
        %v489 = vsel %vm484, %v459, 0
        %v492 = vsel %vm484, %v460, 0
        %v495 = vsel %vm484, %v461, 0
        %v498 = vsel %vm484, %v462, 0
        %v501 = vsel %vm484, %v463, 0
        %503 = vmatprep.subr.bf16.mxu0 %v477
        %504 = vmatpush1.bf16.msra.mxu0 %v476
        %505 = vmatprep.subr.bf16.mxu0 %v479
        %506 = vmatpush1.bf16.msra.mxu0 %v478
        %507 = vmatprep.subr.bf16.mxu0 0
        %508 = vmatpush1.bf16.msra.mxu0 0
        %509 = vmatprep.subr.bf16.mxu0 0
        %510 = vmatpush1.bf16.msra.mxu0 0
        %511 = vmatprep.subr.bf16.mxu0 0
        %512 = vmatpush1.bf16.msra.mxu0 0
        %513 = vmatprep.subr.bf16.mxu0 0
        %514 = vmatpush1.bf16.msra.mxu0 0
        %515 = vmatprep.subr.bf16.mxu0 0
        %516 = vmatpush1.bf16.msra.mxu0 0
        %517 = vmatprep.subr.bf16.mxu0 0
        %518 = vmatpush1.bf16.msra.mxu0 0
        %519 = vmatprep.subr.bf16.mxu0 0
        %520 = vmatpush1.bf16.msra.mxu0 0
        %521 = vmatprep.subr.bf16.mxu0 0
        %522 = vmatpush1.bf16.msra.mxu0 0
        %523 = vmatprep.subr.bf16.mxu0 0
        %524 = vmatpush1.bf16.msra.mxu0 0
        %525 = vmatprep.subr.bf16.mxu0 0
        %526 = vmatpush1.bf16.msra.mxu0 0
        %527 = vmatprep.subr.bf16.mxu0 0
        %528 = vmatpush1.bf16.msra.mxu0 0
        %529 = vmatprep.subr.bf16.mxu0 0
        %530 = vmatpush1.bf16.msra.mxu0 0
        %531 = vmatprep.subr.bf16.mxu0 0
        %532 = vmatpush1.bf16.msra.mxu0 0
        %533 = vmatprep.subr.bf16.mxu0 0
        %534 = vmatpush1.bf16.msra.mxu0 0
        %535 = vmatprep.mubr.bf16.mxu0 0
        %536 = vmatmul.mubr.bf16.gmra.mrb[0].mxu0 %v486
        %v537 = vpop.f32.mrb[0].mxu0
        %v538 = vadd.f32 %v377, %v537
        %v539 = vpop.f32.mrb[0].mxu0
        %v540 = vadd.f32 %v377, %v539
        %v541 = vpop.f32.mrb[0].mxu0
        %v542 = vadd.f32 %v382, %v541
        %v543 = vpop.f32.mrb[0].mxu0
        %v544 = vadd.f32 %v382, %v543
        %545 = vmatprep.mubr.bf16.mxu0 0
        %546 = vmatmul.mubr.bf16.gmra.mrb[0].mxu0 %v489
        %v547 = vpop.f32.mrb[0].mxu0
        %v548 = vadd.f32 %v387, %v547
        %v549 = vpop.f32.mrb[0].mxu0
        %v550 = vadd.f32 %v387, %v549
        %v551 = vpop.f32.mrb[0].mxu0
        %v552 = vadd.f32 %v392, %v551
        %v553 = vpop.f32.mrb[0].mxu0
        %v554 = vadd.f32 %v392, %v553
        %555 = vmatprep.mubr.bf16.mxu0 0
        %556 = vmatmul.mubr.bf16.gmra.mrb[0].mxu0 %v492
        %v557 = vpop.f32.mrb[0].mxu0
        %v558 = vadd.f32 %v397, %v557
        %v559 = vpop.f32.mrb[0].mxu0
        %v560 = vadd.f32 %v397, %v559
        %v561 = vpop.f32.mrb[0].mxu0
        %v562 = vadd.f32 %v402, %v561
        %v563 = vpop.f32.mrb[0].mxu0
        %v564 = vadd.f32 %v402, %v563
        %565 = vmatprep.mubr.bf16.mxu0 0
        %566 = vmatmul.mubr.bf16.gmra.mrb[0].mxu0 %v495
        %v567 = vpop.f32.mrb[0].mxu0
        %v568 = vadd.f32 %v407, %v567
        %v569 = vpop.f32.mrb[0].mxu0
        %v570 = vadd.f32 %v407, %v569
        %v571 = vpop.f32.mrb[0].mxu0
        %v572 = vadd.f32 %v412, %v571
        %v573 = vpop.f32.mrb[0].mxu0
        %v574 = vadd.f32 %v412, %v573
        %575 = vmatprep.mubr.bf16.mxu0 0
        %576 = vmatmul.mubr.bf16.gmra.mrb[0].mxu0 %v498
        %v577 = vpop.f32.mrb[0].mxu0
        %v578 = vadd.f32 %v417, %v577
        %v579 = vpop.f32.mrb[0].mxu0
        %v580 = vadd.f32 %v417, %v579
        %v581 = vpop.f32.mrb[0].mxu0
        %v582 = vadd.f32 %v422, %v581
        %v583 = vpop.f32.mrb[0].mxu0
        %v584 = vadd.f32 %v422, %v583
        %585 = vmatprep.mubr.bf16.mxu0 0
        %586 = vmatmul.mubr.bf16.gmra.mrb[0].mxu0 %v501
        %v587 = vpop.f32.mrb[0].mxu0
        %v588 = vadd.f32 %v427, %v587
        %v589 = vpop.f32.mrb[0].mxu0
        %v590 = vadd.f32 %v427, %v589
        %v591 = vpop.f32.mrb[0].mxu0
        %v592 = vadd.f32 %v432, %v591
        %v593 = vpop.f32.mrb[0].mxu0
        %v594 = vadd.f32 %v432, %v593
        %595 = vdwg.mxu0
        %v596 = vpack.c.bf16 %v542, %v538
        %v597 = vpack.c.bf16 %v544, %v540
        %v598 = vpack.c.bf16 %v552, %v548
        %v599 = vpack.c.bf16 %v554, %v550
        %v600 = vpack.c.bf16 %v562, %v558
        %v601 = vpack.c.bf16 %v564, %v560
        %v602 = vpack.c.bf16 %v572, %v568
        %v603 = vpack.c.bf16 %v574, %v570
        %v604 = vpack.c.bf16 %v582, %v578
        %v605 = vpack.c.bf16 %v584, %v580
        %v606 = vpack.c.bf16 %v592, %v588
        %v607 = vpack.c.bf16 %v594, %v590
        %v620 = vunpack.c.l.b16 %v596
        %v621 = vunpack.c.l.b16 %v597
        %v622 = vunpack.c.h.b16 %v596
        %v623 = vunpack.c.h.b16 %v597
        %v624 = vunpack.c.l.b16 %v598
        %v625 = vunpack.c.l.b16 %v599
        %v626 = vunpack.c.h.b16 %v598
        %v627 = vunpack.c.h.b16 %v599
        %v628 = vunpack.c.l.b16 %v600
        %v629 = vunpack.c.l.b16 %v601
        %v630 = vunpack.c.h.b16 %v600
        %v631 = vunpack.c.h.b16 %v601
        %v632 = vunpack.c.l.b16 %v602
        %v633 = vunpack.c.l.b16 %v603
        %v634 = vunpack.c.h.b16 %v602
        %v635 = vunpack.c.h.b16 %v603
        %v636 = vunpack.c.l.b16 %v604
        %v637 = vunpack.c.l.b16 %v605
        %v638 = vunpack.c.h.b16 %v604
        %v639 = vunpack.c.h.b16 %v605
        %v640 = vunpack.c.l.b16 %v606
        %v641 = vunpack.c.l.b16 %v607
        %v642 = vunpack.c.h.b16 %v606
        %v643 = vunpack.c.h.b16 %v607
        %v644 = vld [vmem:[#allocation8] sm:$0xff]
        %v645 = vld [vmem:[#allocation8 + $0x8] sm:$0xff]
        %v646 = vld [vmem:[#allocation8 + $0x10] sm:$0xff]
        %v647 = vld [vmem:[#allocation8 + $0x18] sm:$0xff]
        %v648 = vld [vmem:[#allocation8 + $0x20] sm:$0xff]
        %v649 = vld [vmem:[#allocation8 + $0x28] sm:$0xff]
        %v650 = vld [vmem:[#allocation8 + $0x30] sm:$0xff]
        %v651 = vld [vmem:[#allocation8 + $0x38] sm:$0xff]
        %v652 = vld [vmem:[#allocation8 + $0x40] sm:$0xff]
        %v653 = vld [vmem:[#allocation8 + $0x48] sm:$0xff]
        %v654 = vld [vmem:[#allocation8 + $0x50] sm:$0xff]
        %v655 = vld [vmem:[#allocation8 + $0x58] sm:$0xff]
        %v656 = vld [vmem:[#allocation8 + $0x60] sm:$0xff]
        %v657 = vld [vmem:[#allocation8 + $0x68] sm:$0xff]
        %v658 = vld [vmem:[#allocation8 + $0x70] sm:$0xff]
        %v659 = vld [vmem:[#allocation8 + $0x78] sm:$0xff]
        %v660 = vld [vmem:[#allocation8 + $0x80] sm:$0xff]
        %v661 = vld [vmem:[#allocation8 + $0x88] sm:$0xff]
        %v662 = vld [vmem:[#allocation8 + $0x90] sm:$0xff]
        %v663 = vld [vmem:[#allocation8 + $0x98] sm:$0xff]
        %v664 = vld [vmem:[#allocation8 + $0xa0] sm:$0xff]
        %v665 = vld [vmem:[#allocation8 + $0xa8] sm:$0xff]
        %v666 = vld [vmem:[#allocation8 + $0xb0] sm:$0xff]
        %v667 = vld [vmem:[#allocation8 + $0xb8] sm:$0xff]
        %v668 = vld [vmem:[#allocation8 + $0xc0] sm:$0xff]
        %v669 = vld [vmem:[#allocation8 + $0xc8] sm:$0xff]
        %v670 = vld [vmem:[#allocation8 + $0xd0] sm:$0xff]
        %v671 = vld [vmem:[#allocation8 + $0xd8] sm:$0xff]
        %v672 = vld [vmem:[#allocation8 + $0xe0] sm:$0xff]
        %v673 = vld [vmem:[#allocation8 + $0xe8] sm:$0xff]
        %v674 = vld [vmem:[#allocation8 + $0xf0] sm:$0xff]
        %v675 = vld [vmem:[#allocation8 + $0xf8] sm:$0xff]
        %v676 = vld [vmem:[#allocation8 + $0x100] sm:$0xff]
        %v677 = vld [vmem:[#allocation8 + $0x108] sm:$0xff]
        %v678 = vld [vmem:[#allocation8 + $0x110] sm:$0xff]
        %v679 = vld [vmem:[#allocation8 + $0x118] sm:$0xff]
        %v680 = vld [vmem:[#allocation8 + $0x120] sm:$0xff]
        %v681 = vld [vmem:[#allocation8 + $0x128] sm:$0xff]
        %v682 = vld [vmem:[#allocation8 + $0x130] sm:$0xff]
        %v683 = vld [vmem:[#allocation8 + $0x138] sm:$0xff]
        %v684 = vld [vmem:[#allocation8 + $0x140] sm:$0xff]
        %v685 = vld [vmem:[#allocation8 + $0x148] sm:$0xff]
        %v686 = vld [vmem:[#allocation8 + $0x150] sm:$0xff]
        %v687 = vld [vmem:[#allocation8 + $0x158] sm:$0xff]
        %v688 = vld [vmem:[#allocation8 + $0x160] sm:$0xff]
        %v689 = vld [vmem:[#allocation8 + $0x168] sm:$0xff]
        %v690 = vld [vmem:[#allocation8 + $0x170] sm:$0xff]
        %v691 = vld [vmem:[#allocation8 + $0x178] sm:$0xff]
        %v692 = vld [vmem:[#allocation8 + $0x180] sm:$0xff]
        %v693 = vld [vmem:[#allocation8 + $0x188] sm:$0xff]
        %v694 = vld [vmem:[#allocation8 + $0x190] sm:$0xff]
        %v695 = vld [vmem:[#allocation8 + $0x198] sm:$0xff]
        %v696 = vld [vmem:[#allocation8 + $0x1a0] sm:$0xff]
        %v697 = vld [vmem:[#allocation8 + $0x1a8] sm:$0xff]
        %v698 = vld [vmem:[#allocation8 + $0x1b0] sm:$0xff]
        %v699 = vld [vmem:[#allocation8 + $0x1b8] sm:$0xff]
        %v700 = vld [vmem:[#allocation8 + $0x1c0] sm:$0xff]
        %v701 = vld [vmem:[#allocation8 + $0x1c8] sm:$0xff]
        %v702 = vld [vmem:[#allocation8 + $0x1d0] sm:$0xff]
        %v703 = vld [vmem:[#allocation8 + $0x1d8] sm:$0xff]
        %v704 = vld [vmem:[#allocation8 + $0x1e0] sm:$0xff]
        %v705 = vld [vmem:[#allocation8 + $0x1e8] sm:$0xff]
        %v706 = vld [vmem:[#allocation8 + $0x1f0] sm:$0xff]
        %v707 = vld [vmem:[#allocation8 + $0x1f8] sm:$0xff]
        %v708 = vld [vmem:[#allocation8 + $0x200] sm:$0xff]
        %v709 = vld [vmem:[#allocation8 + $0x208] sm:$0xff]
        %v710 = vld [vmem:[#allocation8 + $0x210] sm:$0xff]
        %v711 = vld [vmem:[#allocation8 + $0x218] sm:$0xff]
        %v712 = vld [vmem:[#allocation8 + $0x220] sm:$0xff]
        %v713 = vld [vmem:[#allocation8 + $0x228] sm:$0xff]
        %v714 = vld [vmem:[#allocation8 + $0x230] sm:$0xff]
        %v715 = vld [vmem:[#allocation8 + $0x238] sm:$0xff]
        %v716 = vld [vmem:[#allocation8 + $0x240] sm:$0xff]
        %v717 = vld [vmem:[#allocation8 + $0x248] sm:$0xff]
        %v718 = vld [vmem:[#allocation8 + $0x250] sm:$0xff]
        %v719 = vld [vmem:[#allocation8 + $0x258] sm:$0xff]
        %v720 = vld [vmem:[#allocation8 + $0x260] sm:$0xff]
        %v721 = vld [vmem:[#allocation8 + $0x268] sm:$0xff]
        %v722 = vld [vmem:[#allocation8 + $0x270] sm:$0xff]
        %v723 = vld [vmem:[#allocation8 + $0x278] sm:$0xff]
        %v724 = vld [vmem:[#allocation8 + $0x280] sm:$0xff]
        %v725 = vld [vmem:[#allocation8 + $0x288] sm:$0xff]
        %v726 = vld [vmem:[#allocation8 + $0x290] sm:$0xff]
        %v727 = vld [vmem:[#allocation8 + $0x298] sm:$0xff]
        %v728 = vld [vmem:[#allocation8 + $0x2a0] sm:$0xff]
        %v729 = vld [vmem:[#allocation8 + $0x2a8] sm:$0xff]
        %v730 = vld [vmem:[#allocation8 + $0x2b0] sm:$0xff]
        %v731 = vld [vmem:[#allocation8 + $0x2b8] sm:$0xff]
        %v732 = vld [vmem:[#allocation8 + $0x2c0] sm:$0xff]
        %v733 = vld [vmem:[#allocation8 + $0x2c8] sm:$0xff]
        %v734 = vld [vmem:[#allocation8 + $0x2d0] sm:$0xff]
        %v735 = vld [vmem:[#allocation8 + $0x2d8] sm:$0xff]
        %v736 = vld [vmem:[#allocation8 + $0x2e0] sm:$0xff]
        %v737 = vld [vmem:[#allocation8 + $0x2e8] sm:$0xff]
        %v738 = vld [vmem:[#allocation8 + $0x2f0] sm:$0xff]
        %v739 = vld [vmem:[#allocation8 + $0x2f8] sm:$0xff]
        %v740 = vld [vmem:[#allocation8 + $0x300] sm:$0xff]
        %v741 = vld [vmem:[#allocation8 + $0x308] sm:$0xff]
        %v742 = vld [vmem:[#allocation8 + $0x310] sm:$0xff]
        %v743 = vld [vmem:[#allocation8 + $0x318] sm:$0xff]
        %v744 = vld [vmem:[#allocation8 + $0x320] sm:$0xff]
        %v745 = vld [vmem:[#allocation8 + $0x328] sm:$0xff]
        %v746 = vld [vmem:[#allocation8 + $0x330] sm:$0xff]
        %v747 = vld [vmem:[#allocation8 + $0x338] sm:$0xff]
        %v748 = vld [vmem:[#allocation8 + $0x340] sm:$0xff]
        %v749 = vld [vmem:[#allocation8 + $0x348] sm:$0xff]
        %v750 = vld [vmem:[#allocation8 + $0x350] sm:$0xff]
        %v751 = vld [vmem:[#allocation8 + $0x358] sm:$0xff]
        %v752 = vld [vmem:[#allocation8 + $0x360] sm:$0xff]
        %v753 = vld [vmem:[#allocation8 + $0x368] sm:$0xff]
        %v754 = vld [vmem:[#allocation8 + $0x370] sm:$0xff]
        %v755 = vld [vmem:[#allocation8 + $0x378] sm:$0xff]
        %v756 = vld [vmem:[#allocation8 + $0x380] sm:$0xff]
        %v757 = vld [vmem:[#allocation8 + $0x388] sm:$0xff]
        %v758 = vld [vmem:[#allocation8 + $0x390] sm:$0xff]
        %v759 = vld [vmem:[#allocation8 + $0x398] sm:$0xff]
        %v760 = vld [vmem:[#allocation8 + $0x3a0] sm:$0xff]
        %v761 = vld [vmem:[#allocation8 + $0x3a8] sm:$0xff]
        %v762 = vld [vmem:[#allocation8 + $0x3b0] sm:$0xff]
        %v763 = vld [vmem:[#allocation8 + $0x3b8] sm:$0xff]
        %v764 = vld [vmem:[#allocation8 + $0x3c0] sm:$0xff]
        %v765 = vld [vmem:[#allocation8 + $0x3c8] sm:$0xff]
        %v766 = vld [vmem:[#allocation8 + $0x3d0] sm:$0xff]
        %v767 = vld [vmem:[#allocation8 + $0x3d8] sm:$0xff]
        %v768 = vld [vmem:[#allocation8 + $0x3e0] sm:$0xff]
        %v769 = vld [vmem:[#allocation8 + $0x3e8] sm:$0xff]
        %v770 = vld [vmem:[#allocation8 + $0x3f0] sm:$0xff]
        %v771 = vld [vmem:[#allocation8 + $0x3f8] sm:$0xff]
        %v772 = vld [vmem:[#allocation8 + $0x400] sm:$0xff]
        %v773 = vld [vmem:[#allocation8 + $0x408] sm:$0xff]
        %v774 = vld [vmem:[#allocation8 + $0x410] sm:$0xff]
        %v775 = vld [vmem:[#allocation8 + $0x418] sm:$0xff]
        %v776 = vld [vmem:[#allocation8 + $0x420] sm:$0xff]
        %v777 = vld [vmem:[#allocation8 + $0x428] sm:$0xff]
        %v778 = vld [vmem:[#allocation8 + $0x430] sm:$0xff]
        %v779 = vld [vmem:[#allocation8 + $0x438] sm:$0xff]
        %v780 = vld [vmem:[#allocation8 + $0x440] sm:$0xff]
        %v781 = vld [vmem:[#allocation8 + $0x448] sm:$0xff]
        %v782 = vld [vmem:[#allocation8 + $0x450] sm:$0xff]
        %v783 = vld [vmem:[#allocation8 + $0x458] sm:$0xff]
        %v784 = vld [vmem:[#allocation8 + $0x460] sm:$0xff]
        %v785 = vld [vmem:[#allocation8 + $0x468] sm:$0xff]
        %v786 = vld [vmem:[#allocation8 + $0x470] sm:$0xff]
        %v787 = vld [vmem:[#allocation8 + $0x478] sm:$0xff]
        %v788 = vld [vmem:[#allocation8 + $0x480] sm:$0xff]
        %v789 = vld [vmem:[#allocation8 + $0x488] sm:$0xff]
        %v790 = vld [vmem:[#allocation8 + $0x490] sm:$0xff]
        %v791 = vld [vmem:[#allocation8 + $0x498] sm:$0xff]
        %v792 = vld [vmem:[#allocation8 + $0x4a0] sm:$0xff]
        %v793 = vld [vmem:[#allocation8 + $0x4a8] sm:$0xff]
        %v794 = vld [vmem:[#allocation8 + $0x4b0] sm:$0xff]
        %v795 = vld [vmem:[#allocation8 + $0x4b8] sm:$0xff]
        %v796 = vld [vmem:[#allocation8 + $0x4c0] sm:$0xff]
        %v797 = vld [vmem:[#allocation8 + $0x4c8] sm:$0xff]
        %v798 = vld [vmem:[#allocation8 + $0x4d0] sm:$0xff]
        %v799 = vld [vmem:[#allocation8 + $0x4d8] sm:$0xff]
        %v800 = vld [vmem:[#allocation8 + $0x4e0] sm:$0xff]
        %v801 = vld [vmem:[#allocation8 + $0x4e8] sm:$0xff]
        %v802 = vld [vmem:[#allocation8 + $0x4f0] sm:$0xff]
        %v803 = vld [vmem:[#allocation8 + $0x4f8] sm:$0xff]
        %v804 = vld [vmem:[#allocation8 + $0x500] sm:$0xff]
        %v805 = vld [vmem:[#allocation8 + $0x508] sm:$0xff]
        %v806 = vld [vmem:[#allocation8 + $0x510] sm:$0xff]
        %v807 = vld [vmem:[#allocation8 + $0x518] sm:$0xff]
        %v808 = vld [vmem:[#allocation8 + $0x520] sm:$0xff]
        %v809 = vld [vmem:[#allocation8 + $0x528] sm:$0xff]
        %v810 = vld [vmem:[#allocation8 + $0x530] sm:$0xff]
        %v811 = vld [vmem:[#allocation8 + $0x538] sm:$0xff]
        %v812 = vld [vmem:[#allocation8 + $0x540] sm:$0xff]
        %v813 = vld [vmem:[#allocation8 + $0x548] sm:$0xff]
        %v814 = vld [vmem:[#allocation8 + $0x550] sm:$0xff]
        %v815 = vld [vmem:[#allocation8 + $0x558] sm:$0xff]
        %v816 = vld [vmem:[#allocation8 + $0x560] sm:$0xff]
        %v817 = vld [vmem:[#allocation8 + $0x568] sm:$0xff]
        %v818 = vld [vmem:[#allocation8 + $0x570] sm:$0xff]
        %v819 = vld [vmem:[#allocation8 + $0x578] sm:$0xff]
        %v820 = vld [vmem:[#allocation8 + $0x580] sm:$0xff]
        %v821 = vld [vmem:[#allocation8 + $0x588] sm:$0xff]
        %v822 = vld [vmem:[#allocation8 + $0x590] sm:$0xff]
        %v823 = vld [vmem:[#allocation8 + $0x598] sm:$0xff]
        %v824 = vld [vmem:[#allocation8 + $0x5a0] sm:$0xff]
        %v825 = vld [vmem:[#allocation8 + $0x5a8] sm:$0xff]
        %v826 = vld [vmem:[#allocation8 + $0x5b0] sm:$0xff]
        %v827 = vld [vmem:[#allocation8 + $0x5b8] sm:$0xff]
        %v828 = vld [vmem:[#allocation8 + $0x5c0] sm:$0xff]
        %v829 = vld [vmem:[#allocation8 + $0x5c8] sm:$0xff]
        %v830 = vld [vmem:[#allocation8 + $0x5d0] sm:$0xff]
        %v831 = vld [vmem:[#allocation8 + $0x5d8] sm:$0xff]
        %v832 = vld [vmem:[#allocation8 + $0x5e0] sm:$0xff]
        %v833 = vld [vmem:[#allocation8 + $0x5e8] sm:$0xff]
        %v834 = vld [vmem:[#allocation8 + $0x5f0] sm:$0xff]
        %v835 = vld [vmem:[#allocation8 + $0x5f8] sm:$0xff]
        %v836 = vld [vmem:[#allocation8 + $0x600] sm:$0xff]
        %v837 = vld [vmem:[#allocation8 + $0x608] sm:$0xff]
        %v838 = vld [vmem:[#allocation8 + $0x610] sm:$0xff]
        %v839 = vld [vmem:[#allocation8 + $0x618] sm:$0xff]
        %v840 = vld [vmem:[#allocation8 + $0x620] sm:$0xff]
        %v841 = vld [vmem:[#allocation8 + $0x628] sm:$0xff]
        %v842 = vld [vmem:[#allocation8 + $0x630] sm:$0xff]
        %v843 = vld [vmem:[#allocation8 + $0x638] sm:$0xff]
        %v844 = vld [vmem:[#allocation8 + $0x640] sm:$0xff]
        %v845 = vld [vmem:[#allocation8 + $0x648] sm:$0xff]
        %v846 = vld [vmem:[#allocation8 + $0x650] sm:$0xff]
        %v847 = vld [vmem:[#allocation8 + $0x658] sm:$0xff]
        %v848 = vld [vmem:[#allocation8 + $0x660] sm:$0xff]
        %v849 = vld [vmem:[#allocation8 + $0x668] sm:$0xff]
        %v850 = vld [vmem:[#allocation8 + $0x670] sm:$0xff]
        %v851 = vld [vmem:[#allocation8 + $0x678] sm:$0xff]
        %v852 = vld [vmem:[#allocation8 + $0x680] sm:$0xff]
        %v853 = vld [vmem:[#allocation8 + $0x688] sm:$0xff]
        %v854 = vld [vmem:[#allocation8 + $0x690] sm:$0xff]
        %v855 = vld [vmem:[#allocation8 + $0x698] sm:$0xff]
        %v856 = vld [vmem:[#allocation8 + $0x6a0] sm:$0xff]
        %v857 = vld [vmem:[#allocation8 + $0x6a8] sm:$0xff]
        %v858 = vld [vmem:[#allocation8 + $0x6b0] sm:$0xff]
        %v859 = vld [vmem:[#allocation8 + $0x6b8] sm:$0xff]
        %v860 = vld [vmem:[#allocation8 + $0x6c0] sm:$0xff]
        %v861 = vld [vmem:[#allocation8 + $0x6c8] sm:$0xff]
        %v862 = vld [vmem:[#allocation8 + $0x6d0] sm:$0xff]
        %v863 = vld [vmem:[#allocation8 + $0x6d8] sm:$0xff]
        %v864 = vld [vmem:[#allocation8 + $0x6e0] sm:$0xff]
        %v865 = vld [vmem:[#allocation8 + $0x6e8] sm:$0xff]
        %v866 = vld [vmem:[#allocation8 + $0x6f0] sm:$0xff]
        %v867 = vld [vmem:[#allocation8 + $0x6f8] sm:$0xff]
        %v868 = vld [vmem:[#allocation8 + $0x700] sm:$0xff]
        %v869 = vld [vmem:[#allocation8 + $0x708] sm:$0xff]
        %v870 = vld [vmem:[#allocation8 + $0x710] sm:$0xff]
        %v871 = vld [vmem:[#allocation8 + $0x718] sm:$0xff]
        %v872 = vld [vmem:[#allocation8 + $0x720] sm:$0xff]
        %v873 = vld [vmem:[#allocation8 + $0x728] sm:$0xff]
        %v874 = vld [vmem:[#allocation8 + $0x730] sm:$0xff]
        %v875 = vld [vmem:[#allocation8 + $0x738] sm:$0xff]
        %v876 = vld [vmem:[#allocation8 + $0x740] sm:$0xff]
        %v877 = vld [vmem:[#allocation8 + $0x748] sm:$0xff]
        %v878 = vld [vmem:[#allocation8 + $0x750] sm:$0xff]
        %v879 = vld [vmem:[#allocation8 + $0x758] sm:$0xff]
        %v880 = vld [vmem:[#allocation8 + $0x760] sm:$0xff]
        %v881 = vld [vmem:[#allocation8 + $0x768] sm:$0xff]
        %v882 = vld [vmem:[#allocation8 + $0x770] sm:$0xff]
        %v883 = vld [vmem:[#allocation8 + $0x778] sm:$0xff]
        %v884 = vld [vmem:[#allocation8 + $0x780] sm:$0xff]
        %v885 = vld [vmem:[#allocation8 + $0x788] sm:$0xff]
        %v886 = vld [vmem:[#allocation8 + $0x790] sm:$0xff]
        %v887 = vld [vmem:[#allocation8 + $0x798] sm:$0xff]
        %v888 = vld [vmem:[#allocation8 + $0x7a0] sm:$0xff]
        %v889 = vld [vmem:[#allocation8 + $0x7a8] sm:$0xff]
        %v890 = vld [vmem:[#allocation8 + $0x7b0] sm:$0xff]
        %v891 = vld [vmem:[#allocation8 + $0x7b8] sm:$0xff]
        %v892 = vld [vmem:[#allocation8 + $0x7c0] sm:$0xff]
        %v893 = vld [vmem:[#allocation8 + $0x7c8] sm:$0xff]
        %v894 = vld [vmem:[#allocation8 + $0x7d0] sm:$0xff]
        %v895 = vld [vmem:[#allocation8 + $0x7d8] sm:$0xff]
        %v896 = vld [vmem:[#allocation8 + $0x7e0] sm:$0xff]
        %v897 = vld [vmem:[#allocation8 + $0x7e8] sm:$0xff]
        %v898 = vld [vmem:[#allocation8 + $0x7f0] sm:$0xff]
        %v899 = vld [vmem:[#allocation8 + $0x7f8] sm:$0xff]
        %v900 = vpack.c.b16 %v620, %v620
        %v901 = vpack.c.b16 %v621, %v621
        %904 = vxpose.xlu0.c.b16.start [1/8] %v900, 128
        %905 = vxpose.xlu0.c.b16.cont [2/8] 0, 128
        %906 = vxpose.xlu0.c.b16.cont [3/8] 0, 128
        %907 = vxpose.xlu0.c.b16.cont [4/8] 0, 128
        %908 = vxpose.xlu0.c.b16.cont [5/8] 0, 128
        %909 = vxpose.xlu0.c.b16.cont [6/8] 0, 128
        %910 = vxpose.xlu0.c.b16.cont [7/8] 0, 128
        %911 = vxpose.xlu0.c.b16.end [8/8] 0, 128
        %v912 = vpop.trf.xlu0
        %v913 = vpop.trf.xlu0
        %v914 = vpop.trf.xlu0
        %v915 = vpop.trf.xlu0
        %v916 = vpop.trf.xlu0
        %v917 = vpop.trf.xlu0
        %v918 = vpop.trf.xlu0
        %v919 = vpop.trf.xlu0
        %920 = vxpose.xlu0.c.b16.start [1/8] %v901, 128
        %921 = vxpose.xlu0.c.b16.cont [2/8] 0, 128
        %922 = vxpose.xlu0.c.b16.cont [3/8] 0, 128
        %923 = vxpose.xlu0.c.b16.cont [4/8] 0, 128
        %924 = vxpose.xlu0.c.b16.cont [5/8] 0, 128
        %925 = vxpose.xlu0.c.b16.cont [6/8] 0, 128
        %926 = vxpose.xlu0.c.b16.cont [7/8] 0, 128
        %927 = vxpose.xlu0.c.b16.end [8/8] 0, 128
        %v928 = vpop.trf.xlu0
        %v929 = vpop.trf.xlu0
        %v930 = vpop.trf.xlu0
        %v931 = vpop.trf.xlu0
        %v932 = vpop.trf.xlu0
        %v933 = vpop.trf.xlu0
        %v934 = vpop.trf.xlu0
        %v935 = vpop.trf.xlu0
        %v936 = vpack.c.b16 %v628, %v628
        %v937 = vpack.c.b16 %v629, %v629
        %vm938 = vcmask 64512
        %v940 = vsel %vm938, %v912, 0
        %v943 = vsel %vm938, %v913, 0
        %v946 = vsel %vm938, %v914, 0
        %v949 = vsel %vm938, %v915, 0
        %v952 = vsel %vm938, %v916, 0
        %v955 = vsel %vm938, %v917, 0
        %v958 = vsel %vm938, %v918, 0
        %v961 = vsel %vm938, %v919, 0
        %v964 = vsel %vm938, %v928, 0
        %v967 = vsel %vm938, %v929, 0
        %v970 = vsel %vm938, %v930, 0
        %v973 = vsel %vm938, %v931, 0
        %v976 = vsel %vm938, %v932, 0
        %v979 = vsel %vm938, %v933, 0
        %v982 = vsel %vm938, %v934, 0
        %v985 = vsel %vm938, %v935, 0
        %vm987 = vcmask 1043456
        %v989 = vsel %vm987, %v936, 0
        %v992 = vsel %vm987, %v937, 0
        %994 = vmatprep.subr.bf16.mxu0 %v992
        %995 = vmatpush1.bf16.msra.mxu0 %v989
        %996 = vmatprep.subr.bf16.mxu0 0
        %997 = vmatpush1.bf16.msra.mxu0 0
        %998 = vmatprep.subr.bf16.mxu0 0
        %999 = vmatpush1.bf16.msra.mxu0 0
        %1000 = vmatprep.subr.bf16.mxu0 0
        %1001 = vmatpush1.bf16.msra.mxu0 0
        %1002 = vmatprep.subr.bf16.mxu0 0
        %1003 = vmatpush1.bf16.msra.mxu0 0
        %1004 = vmatprep.subr.bf16.mxu0 0
        %1005 = vmatpush1.bf16.msra.mxu0 0
        %1006 = vmatprep.subr.bf16.mxu0 0
        %1007 = vmatpush1.bf16.msra.mxu0 0
        %1008 = vmatprep.subr.bf16.mxu0 0
        %1009 = vmatpush1.bf16.msra.mxu0 0
        %1010 = vmatprep.subr.bf16.mxu0 0
        %1011 = vmatpush1.bf16.msra.mxu0 0
        %1012 = vmatprep.subr.bf16.mxu0 0
        %1013 = vmatpush1.bf16.msra.mxu0 0
        %1014 = vmatprep.subr.bf16.mxu0 0
        %1015 = vmatpush1.bf16.msra.mxu0 0
        %1016 = vmatprep.subr.bf16.mxu0 0
        %1017 = vmatpush1.bf16.msra.mxu0 0
        %1018 = vmatprep.subr.bf16.mxu0 0
        %1019 = vmatpush1.bf16.msra.mxu0 0
        %1020 = vmatprep.subr.bf16.mxu0 0
        %1021 = vmatpush1.bf16.msra.mxu0 0
        %1022 = vmatprep.subr.bf16.mxu0 0
        %1023 = vmatpush1.bf16.msra.mxu0 0
        %1024 = vmatprep.subr.bf16.mxu0 0
        %1025 = vmatpush1.bf16.msra.mxu0 0
        %1026 = vmatprep.mubr.bf16.mxu0 0
        %1027 = vmatmul.mubr.bf16.gmra.mrb[0].mxu0 %v940
        %v1028 = vpop.f32.mrb[0].mxu0
        %v1029 = vadd.f32 %v644, %v1028
        %v1030 = vpop.f32.mrb[0].mxu0
        %v1031 = vadd.f32 %v645, %v1030
        %v1032 = vpop.f32.mrb[0].mxu0
        %v1033 = vadd.f32 %v646, %v1032
        %v1034 = vpop.f32.mrb[0].mxu0
        %v1035 = vadd.f32 %v647, %v1034
        %1036 = vmatprep.mubr.bf16.mxu0 0
        %1037 = vmatmul.mubr.bf16.gmra.mrb[0].mxu0 %v943
        %v1038 = vpop.f32.mrb[0].mxu0
        %v1039 = vadd.f32 %v648, %v1038
        %v1040 = vpop.f32.mrb[0].mxu0
        %v1041 = vadd.f32 %v649, %v1040
        %v1042 = vpop.f32.mrb[0].mxu0
        %v1043 = vadd.f32 %v650, %v1042
        %v1044 = vpop.f32.mrb[0].mxu0
        %v1045 = vadd.f32 %v651, %v1044
        %1046 = vmatprep.mubr.bf16.mxu0 0
        %1047 = vmatmul.mubr.bf16.gmra.mrb[0].mxu0 %v946
        %v1048 = vpop.f32.mrb[0].mxu0
        %v1049 = vadd.f32 %v652, %v1048
        %v1050 = vpop.f32.mrb[0].mxu0
        %v1051 = vadd.f32 %v653, %v1050
        %v1052 = vpop.f32.mrb[0].mxu0
        %v1053 = vadd.f32 %v654, %v1052
        %v1054 = vpop.f32.mrb[0].mxu0
        %v1055 = vadd.f32 %v655, %v1054
        %1056 = vmatprep.mubr.bf16.mxu0 0
        %1057 = vmatmul.mubr.bf16.gmra.mrb[0].mxu0 %v949
        %v1058 = vpop.f32.mrb[0].mxu0
        %v1059 = vadd.f32 %v656, %v1058
        %v1060 = vpop.f32.mrb[0].mxu0
        %v1061 = vadd.f32 %v657, %v1060
        %v1062 = vpop.f32.mrb[0].mxu0
        %v1063 = vadd.f32 %v658, %v1062
        %v1064 = vpop.f32.mrb[0].mxu0
        %v1065 = vadd.f32 %v659, %v1064
        %1066 = vmatprep.mubr.bf16.mxu0 0
        %1067 = vmatmul.mubr.bf16.gmra.mrb[0].mxu0 %v952
        %v1068 = vpop.f32.mrb[0].mxu0
        %v1069 = vadd.f32 %v660, %v1068
        %v1070 = vpop.f32.mrb[0].mxu0
        %v1071 = vadd.f32 %v661, %v1070
        %v1072 = vpop.f32.mrb[0].mxu0
        %v1073 = vadd.f32 %v662, %v1072
        %v1074 = vpop.f32.mrb[0].mxu0
        %v1075 = vadd.f32 %v663, %v1074
        %1076 = vmatprep.mubr.bf16.mxu0 0
        %1077 = vmatmul.mubr.bf16.gmra.mrb[0].mxu0 %v955
        %v1078 = vpop.f32.mrb[0].mxu0
        %v1079 = vadd.f32 %v664, %v1078
        %v1080 = vpop.f32.mrb[0].mxu0
        %v1081 = vadd.f32 %v665, %v1080
        %v1082 = vpop.f32.mrb[0].mxu0
        %v1083 = vadd.f32 %v666, %v1082
        %v1084 = vpop.f32.mrb[0].mxu0
        %v1085 = vadd.f32 %v667, %v1084
        %1086 = vmatprep.mubr.bf16.mxu0 0
        %1087 = vmatmul.mubr.bf16.gmra.mrb[0].mxu0 %v958
        %v1088 = vpop.f32.mrb[0].mxu0
        %v1089 = vadd.f32 %v668, %v1088
        %v1090 = vpop.f32.mrb[0].mxu0
        %v1091 = vadd.f32 %v669, %v1090
        %v1092 = vpop.f32.mrb[0].mxu0
        %v1093 = vadd.f32 %v670, %v1092
        %v1094 = vpop.f32.mrb[0].mxu0
        %v1095 = vadd.f32 %v671, %v1094
        %1096 = vmatprep.mubr.bf16.mxu0 0
        %1097 = vmatmul.mubr.bf16.gmra.mrb[0].mxu0 %v961
        %v1098 = vpop.f32.mrb[0].mxu0
        %v1099 = vadd.f32 %v672, %v1098
        %v1100 = vpop.f32.mrb[0].mxu0
        %v1101 = vadd.f32 %v673, %v1100
        %v1102 = vpop.f32.mrb[0].mxu0
        %v1103 = vadd.f32 %v674, %v1102
        %v1104 = vpop.f32.mrb[0].mxu0
        %v1105 = vadd.f32 %v675, %v1104
        %1106 = vmatprep.mubr.bf16.mxu0 0
        %1107 = vmatmul.mubr.bf16.gmra.mrb[0].mxu0 %v964
        %v1108 = vpop.f32.mrb[0].mxu0
        %v1109 = vadd.f32 %v676, %v1108
        %v1110 = vpop.f32.mrb[0].mxu0
        %v1111 = vadd.f32 %v677, %v1110
        %v1112 = vpop.f32.mrb[0].mxu0
        %v1113 = vadd.f32 %v678, %v1112
        %v1114 = vpop.f32.mrb[0].mxu0
        %v1115 = vadd.f32 %v679, %v1114
        %1116 = vmatprep.mubr.bf16.mxu0 0
        %1117 = vmatmul.mubr.bf16.gmra.mrb[0].mxu0 %v967
        %v1118 = vpop.f32.mrb[0].mxu0
        %v1119 = vadd.f32 %v680, %v1118
        %v1120 = vpop.f32.mrb[0].mxu0
        %v1121 = vadd.f32 %v681, %v1120
        %v1122 = vpop.f32.mrb[0].mxu0
        %v1123 = vadd.f32 %v682, %v1122
        %v1124 = vpop.f32.mrb[0].mxu0
        %v1125 = vadd.f32 %v683, %v1124
        %1126 = vmatprep.mubr.bf16.mxu0 0
        %1127 = vmatmul.mubr.bf16.gmra.mrb[0].mxu0 %v970
        %v1128 = vpop.f32.mrb[0].mxu0
        %v1129 = vadd.f32 %v684, %v1128
        %v1130 = vpop.f32.mrb[0].mxu0
        %v1131 = vadd.f32 %v685, %v1130
        %v1132 = vpop.f32.mrb[0].mxu0
        %v1133 = vadd.f32 %v686, %v1132
        %v1134 = vpop.f32.mrb[0].mxu0
        %v1135 = vadd.f32 %v687, %v1134
        %1136 = vmatprep.mubr.bf16.mxu0 0
        %1137 = vmatmul.mubr.bf16.gmra.mrb[0].mxu0 %v973
        %v1138 = vpop.f32.mrb[0].mxu0
        %v1139 = vadd.f32 %v688, %v1138
        %v1140 = vpop.f32.mrb[0].mxu0
        %v1141 = vadd.f32 %v689, %v1140
        %v1142 = vpop.f32.mrb[0].mxu0
        %v1143 = vadd.f32 %v690, %v1142
        %v1144 = vpop.f32.mrb[0].mxu0
        %v1145 = vadd.f32 %v691, %v1144
        %1146 = vmatprep.mubr.bf16.mxu0 0
        %1147 = vmatmul.mubr.bf16.gmra.mrb[0].mxu0 %v976
        %v1148 = vpop.f32.mrb[0].mxu0
        %v1149 = vadd.f32 %v692, %v1148
        %v1150 = vpop.f32.mrb[0].mxu0
        %v1151 = vadd.f32 %v693, %v1150
        %v1152 = vpop.f32.mrb[0].mxu0
        %v1153 = vadd.f32 %v694, %v1152
        %v1154 = vpop.f32.mrb[0].mxu0
        %v1155 = vadd.f32 %v695, %v1154
        %1156 = vmatprep.mubr.bf16.mxu0 0
        %1157 = vmatmul.mubr.bf16.gmra.mrb[0].mxu0 %v979
        %v1158 = vpop.f32.mrb[0].mxu0
        %v1159 = vadd.f32 %v696, %v1158
        %v1160 = vpop.f32.mrb[0].mxu0
        %v1161 = vadd.f32 %v697, %v1160
        %v1162 = vpop.f32.mrb[0].mxu0
        %v1163 = vadd.f32 %v698, %v1162
        %v1164 = vpop.f32.mrb[0].mxu0
        %v1165 = vadd.f32 %v699, %v1164
        %1166 = vmatprep.mubr.bf16.mxu0 0
        %1167 = vmatmul.mubr.bf16.gmra.mrb[0].mxu0 %v982
        %v1168 = vpop.f32.mrb[0].mxu0
        %v1169 = vadd.f32 %v700, %v1168
        %v1170 = vpop.f32.mrb[0].mxu0
        %v1171 = vadd.f32 %v701, %v1170
        %v1172 = vpop.f32.mrb[0].mxu0
        %v1173 = vadd.f32 %v702, %v1172
        %v1174 = vpop.f32.mrb[0].mxu0
        %v1175 = vadd.f32 %v703, %v1174
        %1176 = vmatprep.mubr.bf16.mxu0 0
        %1177 = vmatmul.mubr.bf16.gmra.mrb[0].mxu0 %v985
        %v1178 = vpop.f32.mrb[0].mxu0
        %v1179 = vadd.f32 %v704, %v1178
        %v1180 = vpop.f32.mrb[0].mxu0
        %v1181 = vadd.f32 %v705, %v1180
        %v1182 = vpop.f32.mrb[0].mxu0
        %v1183 = vadd.f32 %v706, %v1182
        %v1184 = vpop.f32.mrb[0].mxu0
        %v1185 = vadd.f32 %v707, %v1184
        %1186 = vdwg.mxu0
        %v1187 = vpack.c.b16 %v622, %v622
        %v1188 = vpack.c.b16 %v623, %v623
        %1191 = vxpose.xlu0.c.b16.start [1/8] %v1187, 128
        %1192 = vxpose.xlu0.c.b16.cont [2/8] 0, 128
        %1193 = vxpose.xlu0.c.b16.cont [3/8] 0, 128
        %1194 = vxpose.xlu0.c.b16.cont [4/8] 0, 128
        %1195 = vxpose.xlu0.c.b16.cont [5/8] 0, 128
        %1196 = vxpose.xlu0.c.b16.cont [6/8] 0, 128
        %1197 = vxpose.xlu0.c.b16.cont [7/8] 0, 128
        %1198 = vxpose.xlu0.c.b16.end [8/8] 0, 128
        %v1199 = vpop.trf.xlu0
        %v1200 = vpop.trf.xlu0
        %v1201 = vpop.trf.xlu0
        %v1202 = vpop.trf.xlu0
        %v1203 = vpop.trf.xlu0
        %v1204 = vpop.trf.xlu0
        %v1205 = vpop.trf.xlu0
        %v1206 = vpop.trf.xlu0
        %1207 = vxpose.xlu0.c.b16.start [1/8] %v1188, 128
        %1208 = vxpose.xlu0.c.b16.cont [2/8] 0, 128
        %1209 = vxpose.xlu0.c.b16.cont [3/8] 0, 128
        %1210 = vxpose.xlu0.c.b16.cont [4/8] 0, 128
        %1211 = vxpose.xlu0.c.b16.cont [5/8] 0, 128
        %1212 = vxpose.xlu0.c.b16.cont [6/8] 0, 128
        %1213 = vxpose.xlu0.c.b16.cont [7/8] 0, 128
        %1214 = vxpose.xlu0.c.b16.end [8/8] 0, 128
        %v1215 = vpop.trf.xlu0
        %v1216 = vpop.trf.xlu0
        %v1217 = vpop.trf.xlu0
        %v1218 = vpop.trf.xlu0
        %v1219 = vpop.trf.xlu0
        %v1220 = vpop.trf.xlu0
        %v1221 = vpop.trf.xlu0
        %v1222 = vpop.trf.xlu0
        %v1223 = vpack.c.b16 %v630, %v630
        %v1224 = vpack.c.b16 %v631, %v631
        %v1226 = vsel %vm938, %v1199, 0
        %v1229 = vsel %vm938, %v1200, 0
        %v1232 = vsel %vm938, %v1201, 0
        %v1235 = vsel %vm938, %v1202, 0
        %v1238 = vsel %vm938, %v1203, 0
        %v1241 = vsel %vm938, %v1204, 0
        %v1244 = vsel %vm938, %v1205, 0
        %v1247 = vsel %vm938, %v1206, 0
        %v1250 = vsel %vm938, %v1215, 0
        %v1253 = vsel %vm938, %v1216, 0
        %v1256 = vsel %vm938, %v1217, 0
        %v1259 = vsel %vm938, %v1218, 0
        %v1262 = vsel %vm938, %v1219, 0
        %v1265 = vsel %vm938, %v1220, 0
        %v1268 = vsel %vm938, %v1221, 0
        %v1271 = vsel %vm938, %v1222, 0
        %v1274 = vsel %vm987, %v1223, 0
        %v1277 = vsel %vm987, %v1224, 0
        %1279 = vmatprep.subr.bf16.mxu0 %v1277
        %1280 = vmatpush1.bf16.msra.mxu0 %v1274
        %1281 = vmatprep.subr.bf16.mxu0 0
        %1282 = vmatpush1.bf16.msra.mxu0 0
        %1283 = vmatprep.subr.bf16.mxu0 0
        %1284 = vmatpush1.bf16.msra.mxu0 0
        %1285 = vmatprep.subr.bf16.mxu0 0
        %1286 = vmatpush1.bf16.msra.mxu0 0
        %1287 = vmatprep.subr.bf16.mxu0 0
        %1288 = vmatpush1.bf16.msra.mxu0 0
        %1289 = vmatprep.subr.bf16.mxu0 0
        %1290 = vmatpush1.bf16.msra.mxu0 0
        %1291 = vmatprep.subr.bf16.mxu0 0
        %1292 = vmatpush1.bf16.msra.mxu0 0
        %1293 = vmatprep.subr.bf16.mxu0 0
        %1294 = vmatpush1.bf16.msra.mxu0 0
        %1295 = vmatprep.subr.bf16.mxu0 0
        %1296 = vmatpush1.bf16.msra.mxu0 0
        %1297 = vmatprep.subr.bf16.mxu0 0
        %1298 = vmatpush1.bf16.msra.mxu0 0
        %1299 = vmatprep.subr.bf16.mxu0 0
        %1300 = vmatpush1.bf16.msra.mxu0 0
        %1301 = vmatprep.subr.bf16.mxu0 0
        %1302 = vmatpush1.bf16.msra.mxu0 0
        %1303 = vmatprep.subr.bf16.mxu0 0
        %1304 = vmatpush1.bf16.msra.mxu0 0
        %1305 = vmatprep.subr.bf16.mxu0 0
        %1306 = vmatpush1.bf16.msra.mxu0 0
        %1307 = vmatprep.subr.bf16.mxu0 0
        %1308 = vmatpush1.bf16.msra.mxu0 0
        %1309 = vmatprep.subr.bf16.mxu0 0
        %1310 = vmatpush1.bf16.msra.mxu0 0
        %1311 = vmatprep.mubr.bf16.mxu0 0
        %1312 = vmatmul.mubr.bf16.gmra.mrb[0].mxu0 %v1226
        %v1313 = vpop.f32.mrb[0].mxu0
        %v1314 = vadd.f32 %v708, %v1313
        %v1315 = vpop.f32.mrb[0].mxu0
        %v1316 = vadd.f32 %v709, %v1315
        %v1317 = vpop.f32.mrb[0].mxu0
        %v1318 = vadd.f32 %v710, %v1317
        %v1319 = vpop.f32.mrb[0].mxu0
        %v1320 = vadd.f32 %v711, %v1319
        %1321 = vmatprep.mubr.bf16.mxu0 0
        %1322 = vmatmul.mubr.bf16.gmra.mrb[0].mxu0 %v1229
        %v1323 = vpop.f32.mrb[0].mxu0
        %v1324 = vadd.f32 %v712, %v1323
        %v1325 = vpop.f32.mrb[0].mxu0
        %v1326 = vadd.f32 %v713, %v1325
        %v1327 = vpop.f32.mrb[0].mxu0
        %v1328 = vadd.f32 %v714, %v1327
        %v1329 = vpop.f32.mrb[0].mxu0
        %v1330 = vadd.f32 %v715, %v1329
        %1331 = vmatprep.mubr.bf16.mxu0 0
        %1332 = vmatmul.mubr.bf16.gmra.mrb[0].mxu0 %v1232
        %v1333 = vpop.f32.mrb[0].mxu0
        %v1334 = vadd.f32 %v716, %v1333
        %v1335 = vpop.f32.mrb[0].mxu0
        %v1336 = vadd.f32 %v717, %v1335
        %v1337 = vpop.f32.mrb[0].mxu0
        %v1338 = vadd.f32 %v718, %v1337
        %v1339 = vpop.f32.mrb[0].mxu0
        %v1340 = vadd.f32 %v719, %v1339
        %1341 = vmatprep.mubr.bf16.mxu0 0
        %1342 = vmatmul.mubr.bf16.gmra.mrb[0].mxu0 %v1235
        %v1343 = vpop.f32.mrb[0].mxu0
        %v1344 = vadd.f32 %v720, %v1343
        %v1345 = vpop.f32.mrb[0].mxu0
        %v1346 = vadd.f32 %v721, %v1345
        %v1347 = vpop.f32.mrb[0].mxu0
        %v1348 = vadd.f32 %v722, %v1347
        %v1349 = vpop.f32.mrb[0].mxu0
        %v1350 = vadd.f32 %v723, %v1349
        %1351 = vmatprep.mubr.bf16.mxu0 0
        %1352 = vmatmul.mubr.bf16.gmra.mrb[0].mxu0 %v1238
        %v1353 = vpop.f32.mrb[0].mxu0
        %v1354 = vadd.f32 %v724, %v1353
        %v1355 = vpop.f32.mrb[0].mxu0
        %v1356 = vadd.f32 %v725, %v1355
        %v1357 = vpop.f32.mrb[0].mxu0
        %v1358 = vadd.f32 %v726, %v1357
        %v1359 = vpop.f32.mrb[0].mxu0
        %v1360 = vadd.f32 %v727, %v1359
        %1361 = vmatprep.mubr.bf16.mxu0 0
        %1362 = vmatmul.mubr.bf16.gmra.mrb[0].mxu0 %v1241
        %v1363 = vpop.f32.mrb[0].mxu0
        %v1364 = vadd.f32 %v728, %v1363
        %v1365 = vpop.f32.mrb[0].mxu0
        %v1366 = vadd.f32 %v729, %v1365
        %v1367 = vpop.f32.mrb[0].mxu0
        %v1368 = vadd.f32 %v730, %v1367
        %v1369 = vpop.f32.mrb[0].mxu0
        %v1370 = vadd.f32 %v731, %v1369
        %1371 = vmatprep.mubr.bf16.mxu0 0
        %1372 = vmatmul.mubr.bf16.gmra.mrb[0].mxu0 %v1244
        %v1373 = vpop.f32.mrb[0].mxu0
        %v1374 = vadd.f32 %v732, %v1373
        %v1375 = vpop.f32.mrb[0].mxu0
        %v1376 = vadd.f32 %v733, %v1375
        %v1377 = vpop.f32.mrb[0].mxu0
        %v1378 = vadd.f32 %v734, %v1377
        %v1379 = vpop.f32.mrb[0].mxu0
        %v1380 = vadd.f32 %v735, %v1379
        %1381 = vmatprep.mubr.bf16.mxu0 0
        %1382 = vmatmul.mubr.bf16.gmra.mrb[0].mxu0 %v1247
        %v1383 = vpop.f32.mrb[0].mxu0
        %v1384 = vadd.f32 %v736, %v1383
        %v1385 = vpop.f32.mrb[0].mxu0
        %v1386 = vadd.f32 %v737, %v1385
        %v1387 = vpop.f32.mrb[0].mxu0
        %v1388 = vadd.f32 %v738, %v1387
        %v1389 = vpop.f32.mrb[0].mxu0
        %v1390 = vadd.f32 %v739, %v1389
        %1391 = vmatprep.mubr.bf16.mxu0 0
        %1392 = vmatmul.mubr.bf16.gmra.mrb[0].mxu0 %v1250
        %v1393 = vpop.f32.mrb[0].mxu0
        %v1394 = vadd.f32 %v740, %v1393
        %v1395 = vpop.f32.mrb[0].mxu0
        %v1396 = vadd.f32 %v741, %v1395
        %v1397 = vpop.f32.mrb[0].mxu0
        %v1398 = vadd.f32 %v742, %v1397
        %v1399 = vpop.f32.mrb[0].mxu0
        %v1400 = vadd.f32 %v743, %v1399
        %1401 = vmatprep.mubr.bf16.mxu0 0
        %1402 = vmatmul.mubr.bf16.gmra.mrb[0].mxu0 %v1253
        %v1403 = vpop.f32.mrb[0].mxu0
        %v1404 = vadd.f32 %v744, %v1403
        %v1405 = vpop.f32.mrb[0].mxu0
        %v1406 = vadd.f32 %v745, %v1405
        %v1407 = vpop.f32.mrb[0].mxu0
        %v1408 = vadd.f32 %v746, %v1407
        %v1409 = vpop.f32.mrb[0].mxu0
        %v1410 = vadd.f32 %v747, %v1409
        %1411 = vmatprep.mubr.bf16.mxu0 0
        %1412 = vmatmul.mubr.bf16.gmra.mrb[0].mxu0 %v1256
        %v1413 = vpop.f32.mrb[0].mxu0
        %v1414 = vadd.f32 %v748, %v1413
        %v1415 = vpop.f32.mrb[0].mxu0
        %v1416 = vadd.f32 %v749, %v1415
        %v1417 = vpop.f32.mrb[0].mxu0
        %v1418 = vadd.f32 %v750, %v1417
        %v1419 = vpop.f32.mrb[0].mxu0
        %v1420 = vadd.f32 %v751, %v1419
        %1421 = vmatprep.mubr.bf16.mxu0 0
        %1422 = vmatmul.mubr.bf16.gmra.mrb[0].mxu0 %v1259
        %v1423 = vpop.f32.mrb[0].mxu0
        %v1424 = vadd.f32 %v752, %v1423
        %v1425 = vpop.f32.mrb[0].mxu0
        %v1426 = vadd.f32 %v753, %v1425
        %v1427 = vpop.f32.mrb[0].mxu0
        %v1428 = vadd.f32 %v754, %v1427
        %v1429 = vpop.f32.mrb[0].mxu0
        %v1430 = vadd.f32 %v755, %v1429
        %1431 = vmatprep.mubr.bf16.mxu0 0
        %1432 = vmatmul.mubr.bf16.gmra.mrb[0].mxu0 %v1262
        %v1433 = vpop.f32.mrb[0].mxu0
        %v1434 = vadd.f32 %v756, %v1433
        %v1435 = vpop.f32.mrb[0].mxu0
        %v1436 = vadd.f32 %v757, %v1435
        %v1437 = vpop.f32.mrb[0].mxu0
        %v1438 = vadd.f32 %v758, %v1437
        %v1439 = vpop.f32.mrb[0].mxu0
        %v1440 = vadd.f32 %v759, %v1439
        %1441 = vmatprep.mubr.bf16.mxu0 0
        %1442 = vmatmul.mubr.bf16.gmra.mrb[0].mxu0 %v1265
        %v1443 = vpop.f32.mrb[0].mxu0
        %v1444 = vadd.f32 %v760, %v1443
        %v1445 = vpop.f32.mrb[0].mxu0
        %v1446 = vadd.f32 %v761, %v1445
        %v1447 = vpop.f32.mrb[0].mxu0
        %v1448 = vadd.f32 %v762, %v1447
        %v1449 = vpop.f32.mrb[0].mxu0
        %v1450 = vadd.f32 %v763, %v1449
        %1451 = vmatprep.mubr.bf16.mxu0 0
        %1452 = vmatmul.mubr.bf16.gmra.mrb[0].mxu0 %v1268
        %v1453 = vpop.f32.mrb[0].mxu0
        %v1454 = vadd.f32 %v764, %v1453
        %v1455 = vpop.f32.mrb[0].mxu0
        %v1456 = vadd.f32 %v765, %v1455
        %v1457 = vpop.f32.mrb[0].mxu0
        %v1458 = vadd.f32 %v766, %v1457
        %v1459 = vpop.f32.mrb[0].mxu0
        %v1460 = vadd.f32 %v767, %v1459
        %1461 = vmatprep.mubr.bf16.mxu0 0
        %1462 = vmatmul.mubr.bf16.gmra.mrb[0].mxu0 %v1271
        %v1463 = vpop.f32.mrb[0].mxu0
        %v1464 = vadd.f32 %v768, %v1463
        %v1465 = vpop.f32.mrb[0].mxu0
        %v1466 = vadd.f32 %v769, %v1465
        %v1467 = vpop.f32.mrb[0].mxu0
        %v1468 = vadd.f32 %v770, %v1467
        %v1469 = vpop.f32.mrb[0].mxu0
        %v1470 = vadd.f32 %v771, %v1469
        %1471 = vdwg.mxu0
        %v1472 = vpack.c.b16 %v624, %v624
        %v1473 = vpack.c.b16 %v625, %v625
        %1476 = vxpose.xlu0.c.b16.start [1/8] %v1472, 128
        %1477 = vxpose.xlu0.c.b16.cont [2/8] 0, 128
        %1478 = vxpose.xlu0.c.b16.cont [3/8] 0, 128
        %1479 = vxpose.xlu0.c.b16.cont [4/8] 0, 128
        %1480 = vxpose.xlu0.c.b16.cont [5/8] 0, 128
        %1481 = vxpose.xlu0.c.b16.cont [6/8] 0, 128
        %1482 = vxpose.xlu0.c.b16.cont [7/8] 0, 128
        %1483 = vxpose.xlu0.c.b16.end [8/8] 0, 128
        %v1484 = vpop.trf.xlu0
        %v1485 = vpop.trf.xlu0
        %v1486 = vpop.trf.xlu0
        %v1487 = vpop.trf.xlu0
        %v1488 = vpop.trf.xlu0
        %v1489 = vpop.trf.xlu0
        %v1490 = vpop.trf.xlu0
        %v1491 = vpop.trf.xlu0
        %1492 = vxpose.xlu0.c.b16.start [1/8] %v1473, 128
        %1493 = vxpose.xlu0.c.b16.cont [2/8] 0, 128
        %1494 = vxpose.xlu0.c.b16.cont [3/8] 0, 128
        %1495 = vxpose.xlu0.c.b16.cont [4/8] 0, 128
        %1496 = vxpose.xlu0.c.b16.cont [5/8] 0, 128
        %1497 = vxpose.xlu0.c.b16.cont [6/8] 0, 128
        %1498 = vxpose.xlu0.c.b16.cont [7/8] 0, 128
        %1499 = vxpose.xlu0.c.b16.end [8/8] 0, 128
        %v1500 = vpop.trf.xlu0
        %v1501 = vpop.trf.xlu0
        %v1502 = vpop.trf.xlu0
        %v1503 = vpop.trf.xlu0
        %v1504 = vpop.trf.xlu0
        %v1505 = vpop.trf.xlu0
        %v1506 = vpop.trf.xlu0
        %v1507 = vpop.trf.xlu0
        %v1508 = vpack.c.b16 %v632, %v632
        %v1509 = vpack.c.b16 %v633, %v633
        %v1511 = vsel %vm938, %v1484, 0
        %v1514 = vsel %vm938, %v1485, 0
        %v1517 = vsel %vm938, %v1486, 0
        %v1520 = vsel %vm938, %v1487, 0
        %v1523 = vsel %vm938, %v1488, 0
        %v1526 = vsel %vm938, %v1489, 0
        %v1529 = vsel %vm938, %v1490, 0
        %v1532 = vsel %vm938, %v1491, 0
        %v1535 = vsel %vm938, %v1500, 0
        %v1538 = vsel %vm938, %v1501, 0
        %v1541 = vsel %vm938, %v1502, 0
        %v1544 = vsel %vm938, %v1503, 0
        %v1547 = vsel %vm938, %v1504, 0
        %v1550 = vsel %vm938, %v1505, 0
        %v1553 = vsel %vm938, %v1506, 0
        %v1556 = vsel %vm938, %v1507, 0
        %v1559 = vsel %vm987, %v1508, 0
        %v1562 = vsel %vm987, %v1509, 0
        %1564 = vmatprep.subr.bf16.mxu0 %v1562
        %1565 = vmatpush1.bf16.msra.mxu0 %v1559
        %1566 = vmatprep.subr.bf16.mxu0 0
        %1567 = vmatpush1.bf16.msra.mxu0 0
        %1568 = vmatprep.subr.bf16.mxu0 0
        %1569 = vmatpush1.bf16.msra.mxu0 0
        %1570 = vmatprep.subr.bf16.mxu0 0
        %1571 = vmatpush1.bf16.msra.mxu0 0
        %1572 = vmatprep.subr.bf16.mxu0 0
        %1573 = vmatpush1.bf16.msra.mxu0 0
        %1574 = vmatprep.subr.bf16.mxu0 0
        %1575 = vmatpush1.bf16.msra.mxu0 0
        %1576 = vmatprep.subr.bf16.mxu0 0
        %1577 = vmatpush1.bf16.msra.mxu0 0
        %1578 = vmatprep.subr.bf16.mxu0 0
        %1579 = vmatpush1.bf16.msra.mxu0 0
        %1580 = vmatprep.subr.bf16.mxu0 0
        %1581 = vmatpush1.bf16.msra.mxu0 0
        %1582 = vmatprep.subr.bf16.mxu0 0
        %1583 = vmatpush1.bf16.msra.mxu0 0
        %1584 = vmatprep.subr.bf16.mxu0 0
        %1585 = vmatpush1.bf16.msra.mxu0 0
        %1586 = vmatprep.subr.bf16.mxu0 0
        %1587 = vmatpush1.bf16.msra.mxu0 0
        %1588 = vmatprep.subr.bf16.mxu0 0
        %1589 = vmatpush1.bf16.msra.mxu0 0
        %1590 = vmatprep.subr.bf16.mxu0 0
        %1591 = vmatpush1.bf16.msra.mxu0 0
        %1592 = vmatprep.subr.bf16.mxu0 0
        %1593 = vmatpush1.bf16.msra.mxu0 0
        %1594 = vmatprep.subr.bf16.mxu0 0
        %1595 = vmatpush1.bf16.msra.mxu0 0
        %1596 = vmatprep.mubr.bf16.mxu0 0
        %1597 = vmatmul.mubr.bf16.gmra.mrb[0].mxu0 %v1511
        %v1598 = vpop.f32.mrb[0].mxu0
        %v1599 = vadd.f32 %v772, %v1598
        %v1600 = vpop.f32.mrb[0].mxu0
        %v1601 = vadd.f32 %v773, %v1600
        %v1602 = vpop.f32.mrb[0].mxu0
        %v1603 = vadd.f32 %v774, %v1602
        %v1604 = vpop.f32.mrb[0].mxu0
        %v1605 = vadd.f32 %v775, %v1604
        %1606 = vmatprep.mubr.bf16.mxu0 0
        %1607 = vmatmul.mubr.bf16.gmra.mrb[0].mxu0 %v1514
        %v1608 = vpop.f32.mrb[0].mxu0
        %v1609 = vadd.f32 %v776, %v1608
        %v1610 = vpop.f32.mrb[0].mxu0
        %v1611 = vadd.f32 %v777, %v1610
        %v1612 = vpop.f32.mrb[0].mxu0
        %v1613 = vadd.f32 %v778, %v1612
        %v1614 = vpop.f32.mrb[0].mxu0
        %v1615 = vadd.f32 %v779, %v1614
        %1616 = vmatprep.mubr.bf16.mxu0 0
        %1617 = vmatmul.mubr.bf16.gmra.mrb[0].mxu0 %v1517
        %v1618 = vpop.f32.mrb[0].mxu0
        %v1619 = vadd.f32 %v780, %v1618
        %v1620 = vpop.f32.mrb[0].mxu0
        %v1621 = vadd.f32 %v781, %v1620
        %v1622 = vpop.f32.mrb[0].mxu0
        %v1623 = vadd.f32 %v782, %v1622
        %v1624 = vpop.f32.mrb[0].mxu0
        %v1625 = vadd.f32 %v783, %v1624
        %1626 = vmatprep.mubr.bf16.mxu0 0
        %1627 = vmatmul.mubr.bf16.gmra.mrb[0].mxu0 %v1520
        %v1628 = vpop.f32.mrb[0].mxu0
        %v1629 = vadd.f32 %v784, %v1628
        %v1630 = vpop.f32.mrb[0].mxu0
        %v1631 = vadd.f32 %v785, %v1630
        %v1632 = vpop.f32.mrb[0].mxu0
        %v1633 = vadd.f32 %v786, %v1632
        %v1634 = vpop.f32.mrb[0].mxu0
        %v1635 = vadd.f32 %v787, %v1634
        %1636 = vmatprep.mubr.bf16.mxu0 0
        %1637 = vmatmul.mubr.bf16.gmra.mrb[0].mxu0 %v1523
        %v1638 = vpop.f32.mrb[0].mxu0
        %v1639 = vadd.f32 %v788, %v1638
        %v1640 = vpop.f32.mrb[0].mxu0
        %v1641 = vadd.f32 %v789, %v1640
        %v1642 = vpop.f32.mrb[0].mxu0
        %v1643 = vadd.f32 %v790, %v1642
        %v1644 = vpop.f32.mrb[0].mxu0
        %v1645 = vadd.f32 %v791, %v1644
        %1646 = vmatprep.mubr.bf16.mxu0 0
        %1647 = vmatmul.mubr.bf16.gmra.mrb[0].mxu0 %v1526
        %v1648 = vpop.f32.mrb[0].mxu0
        %v1649 = vadd.f32 %v792, %v1648
        %v1650 = vpop.f32.mrb[0].mxu0
        %v1651 = vadd.f32 %v793, %v1650
        %v1652 = vpop.f32.mrb[0].mxu0
        %v1653 = vadd.f32 %v794, %v1652
        %v1654 = vpop.f32.mrb[0].mxu0
        %v1655 = vadd.f32 %v795, %v1654
        %1656 = vmatprep.mubr.bf16.mxu0 0
        %1657 = vmatmul.mubr.bf16.gmra.mrb[0].mxu0 %v1529
        %v1658 = vpop.f32.mrb[0].mxu0
        %v1659 = vadd.f32 %v796, %v1658
        %v1660 = vpop.f32.mrb[0].mxu0
        %v1661 = vadd.f32 %v797, %v1660
        %v1662 = vpop.f32.mrb[0].mxu0
        %v1663 = vadd.f32 %v798, %v1662
        %v1664 = vpop.f32.mrb[0].mxu0
        %v1665 = vadd.f32 %v799, %v1664
        %1666 = vmatprep.mubr.bf16.mxu0 0
        %1667 = vmatmul.mubr.bf16.gmra.mrb[0].mxu0 %v1532
        %v1668 = vpop.f32.mrb[0].mxu0
        %v1669 = vadd.f32 %v800, %v1668
        %v1670 = vpop.f32.mrb[0].mxu0
        %v1671 = vadd.f32 %v801, %v1670
        %v1672 = vpop.f32.mrb[0].mxu0
        %v1673 = vadd.f32 %v802, %v1672
        %v1674 = vpop.f32.mrb[0].mxu0
        %v1675 = vadd.f32 %v803, %v1674
        %1676 = vmatprep.mubr.bf16.mxu0 0
        %1677 = vmatmul.mubr.bf16.gmra.mrb[0].mxu0 %v1535
        %v1678 = vpop.f32.mrb[0].mxu0
        %v1679 = vadd.f32 %v804, %v1678
        %v1680 = vpop.f32.mrb[0].mxu0
        %v1681 = vadd.f32 %v805, %v1680
        %v1682 = vpop.f32.mrb[0].mxu0
        %v1683 = vadd.f32 %v806, %v1682
        %v1684 = vpop.f32.mrb[0].mxu0
        %v1685 = vadd.f32 %v807, %v1684
        %1686 = vmatprep.mubr.bf16.mxu0 0
        %1687 = vmatmul.mubr.bf16.gmra.mrb[0].mxu0 %v1538
        %v1688 = vpop.f32.mrb[0].mxu0
        %v1689 = vadd.f32 %v808, %v1688
        %v1690 = vpop.f32.mrb[0].mxu0
        %v1691 = vadd.f32 %v809, %v1690
        %v1692 = vpop.f32.mrb[0].mxu0
        %v1693 = vadd.f32 %v810, %v1692
        %v1694 = vpop.f32.mrb[0].mxu0
        %v1695 = vadd.f32 %v811, %v1694
        %1696 = vmatprep.mubr.bf16.mxu0 0
        %1697 = vmatmul.mubr.bf16.gmra.mrb[0].mxu0 %v1541
        %v1698 = vpop.f32.mrb[0].mxu0
        %v1699 = vadd.f32 %v812, %v1698
        %v1700 = vpop.f32.mrb[0].mxu0
        %v1701 = vadd.f32 %v813, %v1700
        %v1702 = vpop.f32.mrb[0].mxu0
        %v1703 = vadd.f32 %v814, %v1702
        %v1704 = vpop.f32.mrb[0].mxu0
        %v1705 = vadd.f32 %v815, %v1704
        %1706 = vmatprep.mubr.bf16.mxu0 0
        %1707 = vmatmul.mubr.bf16.gmra.mrb[0].mxu0 %v1544
        %v1708 = vpop.f32.mrb[0].mxu0
        %v1709 = vadd.f32 %v816, %v1708
        %v1710 = vpop.f32.mrb[0].mxu0
        %v1711 = vadd.f32 %v817, %v1710
        %v1712 = vpop.f32.mrb[0].mxu0
        %v1713 = vadd.f32 %v818, %v1712
        %v1714 = vpop.f32.mrb[0].mxu0
        %v1715 = vadd.f32 %v819, %v1714
        %1716 = vmatprep.mubr.bf16.mxu0 0
        %1717 = vmatmul.mubr.bf16.gmra.mrb[0].mxu0 %v1547
        %v1718 = vpop.f32.mrb[0].mxu0
        %v1719 = vadd.f32 %v820, %v1718
        %v1720 = vpop.f32.mrb[0].mxu0
        %v1721 = vadd.f32 %v821, %v1720
        %v1722 = vpop.f32.mrb[0].mxu0
        %v1723 = vadd.f32 %v822, %v1722
        %v1724 = vpop.f32.mrb[0].mxu0
        %v1725 = vadd.f32 %v823, %v1724
        %1726 = vmatprep.mubr.bf16.mxu0 0
        %1727 = vmatmul.mubr.bf16.gmra.mrb[0].mxu0 %v1550
        %v1728 = vpop.f32.mrb[0].mxu0
        %v1729 = vadd.f32 %v824, %v1728
        %v1730 = vpop.f32.mrb[0].mxu0
        %v1731 = vadd.f32 %v825, %v1730
        %v1732 = vpop.f32.mrb[0].mxu0
        %v1733 = vadd.f32 %v826, %v1732
        %v1734 = vpop.f32.mrb[0].mxu0
        %v1735 = vadd.f32 %v827, %v1734
        %1736 = vmatprep.mubr.bf16.mxu0 0
        %1737 = vmatmul.mubr.bf16.gmra.mrb[0].mxu0 %v1553
        %v1738 = vpop.f32.mrb[0].mxu0
        %v1739 = vadd.f32 %v828, %v1738
        %v1740 = vpop.f32.mrb[0].mxu0
        %v1741 = vadd.f32 %v829, %v1740
        %v1742 = vpop.f32.mrb[0].mxu0
        %v1743 = vadd.f32 %v830, %v1742
        %v1744 = vpop.f32.mrb[0].mxu0
        %v1745 = vadd.f32 %v831, %v1744
        %1746 = vmatprep.mubr.bf16.mxu0 0
        %1747 = vmatmul.mubr.bf16.gmra.mrb[0].mxu0 %v1556
        %v1748 = vpop.f32.mrb[0].mxu0
        %v1749 = vadd.f32 %v832, %v1748
        %v1750 = vpop.f32.mrb[0].mxu0
        %v1751 = vadd.f32 %v833, %v1750
        %v1752 = vpop.f32.mrb[0].mxu0
        %v1753 = vadd.f32 %v834, %v1752
        %v1754 = vpop.f32.mrb[0].mxu0
        %v1755 = vadd.f32 %v835, %v1754
        %1756 = vdwg.mxu0
        %v1757 = vpack.c.b16 %v626, %v626
        %v1758 = vpack.c.b16 %v627, %v627
        %1761 = vxpose.xlu0.c.b16.start [1/8] %v1757, 128
        %1762 = vxpose.xlu0.c.b16.cont [2/8] 0, 128
        %1763 = vxpose.xlu0.c.b16.cont [3/8] 0, 128
        %1764 = vxpose.xlu0.c.b16.cont [4/8] 0, 128
        %1765 = vxpose.xlu0.c.b16.cont [5/8] 0, 128
        %1766 = vxpose.xlu0.c.b16.cont [6/8] 0, 128
        %1767 = vxpose.xlu0.c.b16.cont [7/8] 0, 128
        %1768 = vxpose.xlu0.c.b16.end [8/8] 0, 128
        %v1769 = vpop.trf.xlu0
        %v1770 = vpop.trf.xlu0
        %v1771 = vpop.trf.xlu0
        %v1772 = vpop.trf.xlu0
        %v1773 = vpop.trf.xlu0
        %v1774 = vpop.trf.xlu0
        %v1775 = vpop.trf.xlu0
        %v1776 = vpop.trf.xlu0
        %1777 = vxpose.xlu0.c.b16.start [1/8] %v1758, 128
        %1778 = vxpose.xlu0.c.b16.cont [2/8] 0, 128
        %1779 = vxpose.xlu0.c.b16.cont [3/8] 0, 128
        %1780 = vxpose.xlu0.c.b16.cont [4/8] 0, 128
        %1781 = vxpose.xlu0.c.b16.cont [5/8] 0, 128
        %1782 = vxpose.xlu0.c.b16.cont [6/8] 0, 128
        %1783 = vxpose.xlu0.c.b16.cont [7/8] 0, 128
        %1784 = vxpose.xlu0.c.b16.end [8/8] 0, 128
        %v1785 = vpop.trf.xlu0
        %v1786 = vpop.trf.xlu0
        %v1787 = vpop.trf.xlu0
        %v1788 = vpop.trf.xlu0
        %v1789 = vpop.trf.xlu0
        %v1790 = vpop.trf.xlu0
        %v1791 = vpop.trf.xlu0
        %v1792 = vpop.trf.xlu0
        %v1793 = vpack.c.b16 %v634, %v634
        %v1794 = vpack.c.b16 %v635, %v635
        %v1796 = vsel %vm938, %v1769, 0
        %v1799 = vsel %vm938, %v1770, 0
        %v1802 = vsel %vm938, %v1771, 0
        %v1805 = vsel %vm938, %v1772, 0
        %v1808 = vsel %vm938, %v1773, 0
        %v1811 = vsel %vm938, %v1774, 0
        %v1814 = vsel %vm938, %v1775, 0
        %v1817 = vsel %vm938, %v1776, 0
        %v1820 = vsel %vm938, %v1785, 0
        %v1823 = vsel %vm938, %v1786, 0
        %v1826 = vsel %vm938, %v1787, 0
        %v1829 = vsel %vm938, %v1788, 0
        %v1832 = vsel %vm938, %v1789, 0
        %v1835 = vsel %vm938, %v1790, 0
        %v1838 = vsel %vm938, %v1791, 0
        %v1841 = vsel %vm938, %v1792, 0
        %v1844 = vsel %vm987, %v1793, 0
        %v1847 = vsel %vm987, %v1794, 0
        %1849 = vmatprep.subr.bf16.mxu0 %v1847
        %1850 = vmatpush1.bf16.msra.mxu0 %v1844
        %1851 = vmatprep.subr.bf16.mxu0 0
        %1852 = vmatpush1.bf16.msra.mxu0 0
        %1853 = vmatprep.subr.bf16.mxu0 0
        %1854 = vmatpush1.bf16.msra.mxu0 0
        %1855 = vmatprep.subr.bf16.mxu0 0
        %1856 = vmatpush1.bf16.msra.mxu0 0
        %1857 = vmatprep.subr.bf16.mxu0 0
        %1858 = vmatpush1.bf16.msra.mxu0 0
        %1859 = vmatprep.subr.bf16.mxu0 0
        %1860 = vmatpush1.bf16.msra.mxu0 0
        %1861 = vmatprep.subr.bf16.mxu0 0
        %1862 = vmatpush1.bf16.msra.mxu0 0
        %1863 = vmatprep.subr.bf16.mxu0 0
        %1864 = vmatpush1.bf16.msra.mxu0 0
        %1865 = vmatprep.subr.bf16.mxu0 0
        %1866 = vmatpush1.bf16.msra.mxu0 0
        %1867 = vmatprep.subr.bf16.mxu0 0
        %1868 = vmatpush1.bf16.msra.mxu0 0
        %1869 = vmatprep.subr.bf16.mxu0 0
        %1870 = vmatpush1.bf16.msra.mxu0 0
        %1871 = vmatprep.subr.bf16.mxu0 0
        %1872 = vmatpush1.bf16.msra.mxu0 0
        %1873 = vmatprep.subr.bf16.mxu0 0
        %1874 = vmatpush1.bf16.msra.mxu0 0
        %1875 = vmatprep.subr.bf16.mxu0 0
        %1876 = vmatpush1.bf16.msra.mxu0 0
        %1877 = vmatprep.subr.bf16.mxu0 0
        %1878 = vmatpush1.bf16.msra.mxu0 0
        %1879 = vmatprep.subr.bf16.mxu0 0
        %1880 = vmatpush1.bf16.msra.mxu0 0
        %1881 = vmatprep.mubr.bf16.mxu0 0
        %1882 = vmatmul.mubr.bf16.gmra.mrb[0].mxu0 %v1796
        %v1883 = vpop.f32.mrb[0].mxu0
        %v1884 = vadd.f32 %v836, %v1883
        %v1885 = vpop.f32.mrb[0].mxu0
        %v1886 = vadd.f32 %v837, %v1885
        %v1887 = vpop.f32.mrb[0].mxu0
        %v1888 = vadd.f32 %v838, %v1887
        %v1889 = vpop.f32.mrb[0].mxu0
        %v1890 = vadd.f32 %v839, %v1889
        %1891 = vmatprep.mubr.bf16.mxu0 0
        %1892 = vmatmul.mubr.bf16.gmra.mrb[0].mxu0 %v1799
        %v1893 = vpop.f32.mrb[0].mxu0
        %v1894 = vadd.f32 %v840, %v1893
        %v1895 = vpop.f32.mrb[0].mxu0
        %v1896 = vadd.f32 %v841, %v1895
        %v1897 = vpop.f32.mrb[0].mxu0
        %v1898 = vadd.f32 %v842, %v1897
        %v1899 = vpop.f32.mrb[0].mxu0
        %v1900 = vadd.f32 %v843, %v1899
        %1901 = vmatprep.mubr.bf16.mxu0 0
        %1902 = vmatmul.mubr.bf16.gmra.mrb[0].mxu0 %v1802
        %v1903 = vpop.f32.mrb[0].mxu0
        %v1904 = vadd.f32 %v844, %v1903
        %v1905 = vpop.f32.mrb[0].mxu0
        %v1906 = vadd.f32 %v845, %v1905
        %v1907 = vpop.f32.mrb[0].mxu0
        %v1908 = vadd.f32 %v846, %v1907
        %v1909 = vpop.f32.mrb[0].mxu0
        %v1910 = vadd.f32 %v847, %v1909
        %1911 = vmatprep.mubr.bf16.mxu0 0
        %1912 = vmatmul.mubr.bf16.gmra.mrb[0].mxu0 %v1805
        %v1913 = vpop.f32.mrb[0].mxu0
        %v1914 = vadd.f32 %v848, %v1913
        %v1915 = vpop.f32.mrb[0].mxu0
        %v1916 = vadd.f32 %v849, %v1915
        %v1917 = vpop.f32.mrb[0].mxu0
        %v1918 = vadd.f32 %v850, %v1917
        %v1919 = vpop.f32.mrb[0].mxu0
        %v1920 = vadd.f32 %v851, %v1919
        %1921 = vmatprep.mubr.bf16.mxu0 0
        %1922 = vmatmul.mubr.bf16.gmra.mrb[0].mxu0 %v1808
        %v1923 = vpop.f32.mrb[0].mxu0
        %v1924 = vadd.f32 %v852, %v1923
        %v1925 = vpop.f32.mrb[0].mxu0
        %v1926 = vadd.f32 %v853, %v1925
        %v1927 = vpop.f32.mrb[0].mxu0
        %v1928 = vadd.f32 %v854, %v1927
        %v1929 = vpop.f32.mrb[0].mxu0
        %v1930 = vadd.f32 %v855, %v1929
        %1931 = vmatprep.mubr.bf16.mxu0 0
        %1932 = vmatmul.mubr.bf16.gmra.mrb[0].mxu0 %v1811
        %v1933 = vpop.f32.mrb[0].mxu0
        %v1934 = vadd.f32 %v856, %v1933
        %v1935 = vpop.f32.mrb[0].mxu0
        %v1936 = vadd.f32 %v857, %v1935
        %v1937 = vpop.f32.mrb[0].mxu0
        %v1938 = vadd.f32 %v858, %v1937
        %v1939 = vpop.f32.mrb[0].mxu0
        %v1940 = vadd.f32 %v859, %v1939
        %1941 = vmatprep.mubr.bf16.mxu0 0
        %1942 = vmatmul.mubr.bf16.gmra.mrb[0].mxu0 %v1814
        %v1943 = vpop.f32.mrb[0].mxu0
        %v1944 = vadd.f32 %v860, %v1943
        %v1945 = vpop.f32.mrb[0].mxu0
        %v1946 = vadd.f32 %v861, %v1945
        %v1947 = vpop.f32.mrb[0].mxu0
        %v1948 = vadd.f32 %v862, %v1947
        %v1949 = vpop.f32.mrb[0].mxu0
        %v1950 = vadd.f32 %v863, %v1949
        %1951 = vmatprep.mubr.bf16.mxu0 0
        %1952 = vmatmul.mubr.bf16.gmra.mrb[0].mxu0 %v1817
        %v1953 = vpop.f32.mrb[0].mxu0
        %v1954 = vadd.f32 %v864, %v1953
        %v1955 = vpop.f32.mrb[0].mxu0
        %v1956 = vadd.f32 %v865, %v1955
        %v1957 = vpop.f32.mrb[0].mxu0
        %v1958 = vadd.f32 %v866, %v1957
        %v1959 = vpop.f32.mrb[0].mxu0
        %v1960 = vadd.f32 %v867, %v1959
        %1961 = vmatprep.mubr.bf16.mxu0 0
        %1962 = vmatmul.mubr.bf16.gmra.mrb[0].mxu0 %v1820
        %v1963 = vpop.f32.mrb[0].mxu0
        %v1964 = vadd.f32 %v868, %v1963
        %v1965 = vpop.f32.mrb[0].mxu0
        %v1966 = vadd.f32 %v869, %v1965
        %v1967 = vpop.f32.mrb[0].mxu0
        %v1968 = vadd.f32 %v870, %v1967
        %v1969 = vpop.f32.mrb[0].mxu0
        %v1970 = vadd.f32 %v871, %v1969
        %1971 = vmatprep.mubr.bf16.mxu0 0
        %1972 = vmatmul.mubr.bf16.gmra.mrb[0].mxu0 %v1823
        %v1973 = vpop.f32.mrb[0].mxu0
        %v1974 = vadd.f32 %v872, %v1973
        %v1975 = vpop.f32.mrb[0].mxu0
        %v1976 = vadd.f32 %v873, %v1975
        %v1977 = vpop.f32.mrb[0].mxu0
        %v1978 = vadd.f32 %v874, %v1977
        %v1979 = vpop.f32.mrb[0].mxu0
        %v1980 = vadd.f32 %v875, %v1979
        %1981 = vmatprep.mubr.bf16.mxu0 0
        %1982 = vmatmul.mubr.bf16.gmra.mrb[0].mxu0 %v1826
        %v1983 = vpop.f32.mrb[0].mxu0
        %v1984 = vadd.f32 %v876, %v1983
        %v1985 = vpop.f32.mrb[0].mxu0
        %v1986 = vadd.f32 %v877, %v1985
        %v1987 = vpop.f32.mrb[0].mxu0
        %v1988 = vadd.f32 %v878, %v1987
        %v1989 = vpop.f32.mrb[0].mxu0
        %v1990 = vadd.f32 %v879, %v1989
        %1991 = vmatprep.mubr.bf16.mxu0 0
        %1992 = vmatmul.mubr.bf16.gmra.mrb[0].mxu0 %v1829
        %v1993 = vpop.f32.mrb[0].mxu0
        %v1994 = vadd.f32 %v880, %v1993
        %v1995 = vpop.f32.mrb[0].mxu0
        %v1996 = vadd.f32 %v881, %v1995
        %v1997 = vpop.f32.mrb[0].mxu0
        %v1998 = vadd.f32 %v882, %v1997
        %v1999 = vpop.f32.mrb[0].mxu0
        %v2000 = vadd.f32 %v883, %v1999
        %2001 = vmatprep.mubr.bf16.mxu0 0
        %2002 = vmatmul.mubr.bf16.gmra.mrb[0].mxu0 %v1832
        %v2003 = vpop.f32.mrb[0].mxu0
        %v2004 = vadd.f32 %v884, %v2003
        %v2005 = vpop.f32.mrb[0].mxu0
        %v2006 = vadd.f32 %v885, %v2005
        %v2007 = vpop.f32.mrb[0].mxu0
        %v2008 = vadd.f32 %v886, %v2007
        %v2009 = vpop.f32.mrb[0].mxu0
        %v2010 = vadd.f32 %v887, %v2009
        %2011 = vmatprep.mubr.bf16.mxu0 0
        %2012 = vmatmul.mubr.bf16.gmra.mrb[0].mxu0 %v1835
        %v2013 = vpop.f32.mrb[0].mxu0
        %v2014 = vadd.f32 %v888, %v2013
        %v2015 = vpop.f32.mrb[0].mxu0
        %v2016 = vadd.f32 %v889, %v2015
        %v2017 = vpop.f32.mrb[0].mxu0
        %v2018 = vadd.f32 %v890, %v2017
        %v2019 = vpop.f32.mrb[0].mxu0
        %v2020 = vadd.f32 %v891, %v2019
        %2021 = vmatprep.mubr.bf16.mxu0 0
        %2022 = vmatmul.mubr.bf16.gmra.mrb[0].mxu0 %v1838
        %v2023 = vpop.f32.mrb[0].mxu0
        %v2024 = vadd.f32 %v892, %v2023
        %v2025 = vpop.f32.mrb[0].mxu0
        %v2026 = vadd.f32 %v893, %v2025
        %v2027 = vpop.f32.mrb[0].mxu0
        %v2028 = vadd.f32 %v894, %v2027
        %v2029 = vpop.f32.mrb[0].mxu0
        %v2030 = vadd.f32 %v895, %v2029
        %2031 = vmatprep.mubr.bf16.mxu0 0
        %2032 = vmatmul.mubr.bf16.gmra.mrb[0].mxu0 %v1841
        %v2033 = vpop.f32.mrb[0].mxu0
        %v2034 = vadd.f32 %v896, %v2033
        %v2035 = vpop.f32.mrb[0].mxu0
        %v2036 = vadd.f32 %v897, %v2035
        %v2037 = vpop.f32.mrb[0].mxu0
        %v2038 = vadd.f32 %v898, %v2037
        %v2039 = vpop.f32.mrb[0].mxu0
        %v2040 = vadd.f32 %v899, %v2039
        %2041 = vdwg.mxu0
        %v2042 = vmax.f32 %v1029, %v1031
        %2043 = vmax.xlane.f32.xlu0 %v2042
        %v2044 = vpop.xlane.xlu0 %2043
        %v2045 = vmax.f32 %v1033, %v1035
        %2046 = vmax.xlane.f32.xlu0 %v2045
        %v2047 = vpop.xlane.xlu0 %2046
        %v2048 = vmax.f32 %v1039, %v1041
        %2049 = vmax.xlane.f32.xlu0 %v2048
        %v2050 = vpop.xlane.xlu0 %2049
        %v2051 = vmax.f32 %v1043, %v1045
        %2052 = vmax.xlane.f32.xlu0 %v2051
        %v2053 = vpop.xlane.xlu0 %2052
        %v2054 = vmax.f32 %v1049, %v1051
        %2055 = vmax.xlane.f32.xlu0 %v2054
        %v2056 = vpop.xlane.xlu0 %2055
        %v2057 = vmax.f32 %v1053, %v1055
        %2058 = vmax.xlane.f32.xlu0 %v2057
        %v2059 = vpop.xlane.xlu0 %2058
        %v2060 = vmax.f32 %v1059, %v1061
        %2061 = vmax.xlane.f32.xlu0 %v2060
        %v2062 = vpop.xlane.xlu0 %2061
        %v2063 = vmax.f32 %v1063, %v1065
        %2064 = vmax.xlane.f32.xlu0 %v2063
        %v2065 = vpop.xlane.xlu0 %2064
        %v2066 = vmax.f32 %v1069, %v1071
        %2067 = vmax.xlane.f32.xlu0 %v2066
        %v2068 = vpop.xlane.xlu0 %2067
        %v2069 = vmax.f32 %v1073, %v1075
        %2070 = vmax.xlane.f32.xlu0 %v2069
        %v2071 = vpop.xlane.xlu0 %2070
        %v2072 = vmax.f32 %v1079, %v1081
        %2073 = vmax.xlane.f32.xlu0 %v2072
        %v2074 = vpop.xlane.xlu0 %2073
        %v2075 = vmax.f32 %v1083, %v1085
        %2076 = vmax.xlane.f32.xlu0 %v2075
        %v2077 = vpop.xlane.xlu0 %2076
        %v2078 = vmax.f32 %v1089, %v1091
        %2079 = vmax.xlane.f32.xlu0 %v2078
        %v2080 = vpop.xlane.xlu0 %2079
        %v2081 = vmax.f32 %v1093, %v1095
        %2082 = vmax.xlane.f32.xlu0 %v2081
        %v2083 = vpop.xlane.xlu0 %2082
        %v2084 = vmax.f32 %v1099, %v1101
        %2085 = vmax.xlane.f32.xlu0 %v2084
        %v2086 = vpop.xlane.xlu0 %2085
        %v2087 = vmax.f32 %v1103, %v1105
        %2088 = vmax.xlane.f32.xlu0 %v2087
        %v2089 = vpop.xlane.xlu0 %2088
        %v2090 = vmax.f32 %v1109, %v1111
        %2091 = vmax.xlane.f32.xlu0 %v2090
        %v2092 = vpop.xlane.xlu0 %2091
        %v2093 = vmax.f32 %v1113, %v1115
        %2094 = vmax.xlane.f32.xlu0 %v2093
        %v2095 = vpop.xlane.xlu0 %2094
        %v2096 = vmax.f32 %v1119, %v1121
        %2097 = vmax.xlane.f32.xlu0 %v2096
        %v2098 = vpop.xlane.xlu0 %2097
        %v2099 = vmax.f32 %v1123, %v1125
        %2100 = vmax.xlane.f32.xlu0 %v2099
        %v2101 = vpop.xlane.xlu0 %2100
        %v2102 = vmax.f32 %v1129, %v1131
        %2103 = vmax.xlane.f32.xlu0 %v2102
        %v2104 = vpop.xlane.xlu0 %2103
        %v2105 = vmax.f32 %v1133, %v1135
        %2106 = vmax.xlane.f32.xlu0 %v2105
        %v2107 = vpop.xlane.xlu0 %2106
        %v2108 = vmax.f32 %v1139, %v1141
        %2109 = vmax.xlane.f32.xlu0 %v2108
        %v2110 = vpop.xlane.xlu0 %2109
        %v2111 = vmax.f32 %v1143, %v1145
        %2112 = vmax.xlane.f32.xlu0 %v2111
        %v2113 = vpop.xlane.xlu0 %2112
        %v2114 = vmax.f32 %v1149, %v1151
        %2115 = vmax.xlane.f32.xlu0 %v2114
        %v2116 = vpop.xlane.xlu0 %2115
        %v2117 = vmax.f32 %v1153, %v1155
        %2118 = vmax.xlane.f32.xlu0 %v2117
        %v2119 = vpop.xlane.xlu0 %2118
        %v2120 = vmax.f32 %v1159, %v1161
        %2121 = vmax.xlane.f32.xlu0 %v2120
        %v2122 = vpop.xlane.xlu0 %2121
        %v2123 = vmax.f32 %v1163, %v1165
        %2124 = vmax.xlane.f32.xlu0 %v2123
        %v2125 = vpop.xlane.xlu0 %2124
        %v2126 = vmax.f32 %v1169, %v1171
        %2127 = vmax.xlane.f32.xlu0 %v2126
        %v2128 = vpop.xlane.xlu0 %2127
        %v2129 = vmax.f32 %v1173, %v1175
        %2130 = vmax.xlane.f32.xlu0 %v2129
        %v2131 = vpop.xlane.xlu0 %2130
        %v2132 = vmax.f32 %v1179, %v1181
        %2133 = vmax.xlane.f32.xlu0 %v2132
        %v2134 = vpop.xlane.xlu0 %2133
        %v2135 = vmax.f32 %v1183, %v1185
        %2136 = vmax.xlane.f32.xlu0 %v2135
        %v2137 = vpop.xlane.xlu0 %2136
        %v2138 = vmax.f32 %v1314, %v1316
        %2139 = vmax.xlane.f32.xlu0 %v2138
        %v2140 = vpop.xlane.xlu0 %2139
        %v2141 = vmax.f32 %v1318, %v1320
        %2142 = vmax.xlane.f32.xlu0 %v2141
        %v2143 = vpop.xlane.xlu0 %2142
        %v2144 = vmax.f32 %v1324, %v1326
        %2145 = vmax.xlane.f32.xlu0 %v2144
        %v2146 = vpop.xlane.xlu0 %2145
        %v2147 = vmax.f32 %v1328, %v1330
        %2148 = vmax.xlane.f32.xlu0 %v2147
        %v2149 = vpop.xlane.xlu0 %2148
        %v2150 = vmax.f32 %v1334, %v1336
        %2151 = vmax.xlane.f32.xlu0 %v2150
        %v2152 = vpop.xlane.xlu0 %2151
        %v2153 = vmax.f32 %v1338, %v1340
        %2154 = vmax.xlane.f32.xlu0 %v2153
        %v2155 = vpop.xlane.xlu0 %2154
        %v2156 = vmax.f32 %v1344, %v1346
        %2157 = vmax.xlane.f32.xlu0 %v2156
        %v2158 = vpop.xlane.xlu0 %2157
        %v2159 = vmax.f32 %v1348, %v1350
        %2160 = vmax.xlane.f32.xlu0 %v2159
        %v2161 = vpop.xlane.xlu0 %2160
        %v2162 = vmax.f32 %v1354, %v1356
        %2163 = vmax.xlane.f32.xlu0 %v2162
        %v2164 = vpop.xlane.xlu0 %2163
        %v2165 = vmax.f32 %v1358, %v1360
        %2166 = vmax.xlane.f32.xlu0 %v2165
        %v2167 = vpop.xlane.xlu0 %2166
        %v2168 = vmax.f32 %v1364, %v1366
        %2169 = vmax.xlane.f32.xlu0 %v2168
        %v2170 = vpop.xlane.xlu0 %2169
        %v2171 = vmax.f32 %v1368, %v1370
        %2172 = vmax.xlane.f32.xlu0 %v2171
        %v2173 = vpop.xlane.xlu0 %2172
        %v2174 = vmax.f32 %v1374, %v1376
        %2175 = vmax.xlane.f32.xlu0 %v2174
        %v2176 = vpop.xlane.xlu0 %2175
        %v2177 = vmax.f32 %v1378, %v1380
        %2178 = vmax.xlane.f32.xlu0 %v2177
        %v2179 = vpop.xlane.xlu0 %2178
        %v2180 = vmax.f32 %v1384, %v1386
        %2181 = vmax.xlane.f32.xlu0 %v2180
        %v2182 = vpop.xlane.xlu0 %2181
        %v2183 = vmax.f32 %v1388, %v1390
        %2184 = vmax.xlane.f32.xlu0 %v2183
        %v2185 = vpop.xlane.xlu0 %2184
        %v2186 = vmax.f32 %v1394, %v1396
        %2187 = vmax.xlane.f32.xlu0 %v2186
        %v2188 = vpop.xlane.xlu0 %2187
        %v2189 = vmax.f32 %v1398, %v1400
        %2190 = vmax.xlane.f32.xlu0 %v2189
        %v2191 = vpop.xlane.xlu0 %2190
        %v2192 = vmax.f32 %v1404, %v1406
        %2193 = vmax.xlane.f32.xlu0 %v2192
        %v2194 = vpop.xlane.xlu0 %2193
        %v2195 = vmax.f32 %v1408, %v1410
        %2196 = vmax.xlane.f32.xlu0 %v2195
        %v2197 = vpop.xlane.xlu0 %2196
        %v2198 = vmax.f32 %v1414, %v1416
        %2199 = vmax.xlane.f32.xlu0 %v2198
        %v2200 = vpop.xlane.xlu0 %2199
        %v2201 = vmax.f32 %v1418, %v1420
        %2202 = vmax.xlane.f32.xlu0 %v2201
        %v2203 = vpop.xlane.xlu0 %2202
        %v2204 = vmax.f32 %v1424, %v1426
        %2205 = vmax.xlane.f32.xlu0 %v2204
        %v2206 = vpop.xlane.xlu0 %2205
        %v2207 = vmax.f32 %v1428, %v1430
        %2208 = vmax.xlane.f32.xlu0 %v2207
        %v2209 = vpop.xlane.xlu0 %2208
        %v2210 = vmax.f32 %v1434, %v1436
        %2211 = vmax.xlane.f32.xlu0 %v2210
        %v2212 = vpop.xlane.xlu0 %2211
        %v2213 = vmax.f32 %v1438, %v1440
        %2214 = vmax.xlane.f32.xlu0 %v2213
        %v2215 = vpop.xlane.xlu0 %2214
        %v2216 = vmax.f32 %v1444, %v1446
        %2217 = vmax.xlane.f32.xlu0 %v2216
        %v2218 = vpop.xlane.xlu0 %2217
        %v2219 = vmax.f32 %v1448, %v1450
        %2220 = vmax.xlane.f32.xlu0 %v2219
        %v2221 = vpop.xlane.xlu0 %2220
        %v2222 = vmax.f32 %v1454, %v1456
        %2223 = vmax.xlane.f32.xlu0 %v2222
        %v2224 = vpop.xlane.xlu0 %2223
        %v2225 = vmax.f32 %v1458, %v1460
        %2226 = vmax.xlane.f32.xlu0 %v2225
        %v2227 = vpop.xlane.xlu0 %2226
        %v2228 = vmax.f32 %v1464, %v1466
        %2229 = vmax.xlane.f32.xlu0 %v2228
        %v2230 = vpop.xlane.xlu0 %2229
        %v2231 = vmax.f32 %v1468, %v1470
        %2232 = vmax.xlane.f32.xlu0 %v2231
        %v2233 = vpop.xlane.xlu0 %2232
        %v2234 = vmax.f32 %v1599, %v1601
        %2235 = vmax.xlane.f32.xlu0 %v2234
        %v2236 = vpop.xlane.xlu0 %2235
        %v2237 = vmax.f32 %v1603, %v1605
        %2238 = vmax.xlane.f32.xlu0 %v2237
        %v2239 = vpop.xlane.xlu0 %2238
        %v2240 = vmax.f32 %v1609, %v1611
        %2241 = vmax.xlane.f32.xlu0 %v2240
        %v2242 = vpop.xlane.xlu0 %2241
        %v2243 = vmax.f32 %v1613, %v1615
        %2244 = vmax.xlane.f32.xlu0 %v2243
        %v2245 = vpop.xlane.xlu0 %2244
        %v2246 = vmax.f32 %v1619, %v1621
        %2247 = vmax.xlane.f32.xlu0 %v2246
        %v2248 = vpop.xlane.xlu0 %2247
        %v2249 = vmax.f32 %v1623, %v1625
        %2250 = vmax.xlane.f32.xlu0 %v2249
        %v2251 = vpop.xlane.xlu0 %2250
        %v2252 = vmax.f32 %v1629, %v1631
        %2253 = vmax.xlane.f32.xlu0 %v2252
        %v2254 = vpop.xlane.xlu0 %2253
        %v2255 = vmax.f32 %v1633, %v1635
        %2256 = vmax.xlane.f32.xlu0 %v2255
        %v2257 = vpop.xlane.xlu0 %2256
        %v2258 = vmax.f32 %v1639, %v1641
        %2259 = vmax.xlane.f32.xlu0 %v2258
        %v2260 = vpop.xlane.xlu0 %2259
        %v2261 = vmax.f32 %v1643, %v1645
        %2262 = vmax.xlane.f32.xlu0 %v2261
        %v2263 = vpop.xlane.xlu0 %2262
        %v2264 = vmax.f32 %v1649, %v1651
        %2265 = vmax.xlane.f32.xlu0 %v2264
        %v2266 = vpop.xlane.xlu0 %2265
        %v2267 = vmax.f32 %v1653, %v1655
        %2268 = vmax.xlane.f32.xlu0 %v2267
        %v2269 = vpop.xlane.xlu0 %2268
        %v2270 = vmax.f32 %v1659, %v1661
        %2271 = vmax.xlane.f32.xlu0 %v2270
        %v2272 = vpop.xlane.xlu0 %2271
        %v2273 = vmax.f32 %v1663, %v1665
        %2274 = vmax.xlane.f32.xlu0 %v2273
        %v2275 = vpop.xlane.xlu0 %2274
        %v2276 = vmax.f32 %v1669, %v1671
        %2277 = vmax.xlane.f32.xlu0 %v2276
        %v2278 = vpop.xlane.xlu0 %2277
        %v2279 = vmax.f32 %v1673, %v1675
        %2280 = vmax.xlane.f32.xlu0 %v2279
        %v2281 = vpop.xlane.xlu0 %2280
        %v2282 = vmax.f32 %v1679, %v1681
        %2283 = vmax.xlane.f32.xlu0 %v2282
        %v2284 = vpop.xlane.xlu0 %2283
        %v2285 = vmax.f32 %v1683, %v1685
        %2286 = vmax.xlane.f32.xlu0 %v2285
        %v2287 = vpop.xlane.xlu0 %2286
        %v2288 = vmax.f32 %v1689, %v1691
        %2289 = vmax.xlane.f32.xlu0 %v2288
        %v2290 = vpop.xlane.xlu0 %2289
        %v2291 = vmax.f32 %v1693, %v1695
        %2292 = vmax.xlane.f32.xlu0 %v2291
        %v2293 = vpop.xlane.xlu0 %2292
        %v2294 = vmax.f32 %v1699, %v1701
        %2295 = vmax.xlane.f32.xlu0 %v2294
        %v2296 = vpop.xlane.xlu0 %2295
        %v2297 = vmax.f32 %v1703, %v1705
        %2298 = vmax.xlane.f32.xlu0 %v2297
        %v2299 = vpop.xlane.xlu0 %2298
        %v2300 = vmax.f32 %v1709, %v1711
        %2301 = vmax.xlane.f32.xlu0 %v2300
        %v2302 = vpop.xlane.xlu0 %2301
        %v2303 = vmax.f32 %v1713, %v1715
        %2304 = vmax.xlane.f32.xlu0 %v2303
        %v2305 = vpop.xlane.xlu0 %2304
        %v2306 = vmax.f32 %v1719, %v1721
        %2307 = vmax.xlane.f32.xlu0 %v2306
        %v2308 = vpop.xlane.xlu0 %2307
        %v2309 = vmax.f32 %v1723, %v1725
        %2310 = vmax.xlane.f32.xlu0 %v2309
        %v2311 = vpop.xlane.xlu0 %2310
        %v2312 = vmax.f32 %v1729, %v1731
        %2313 = vmax.xlane.f32.xlu0 %v2312
        %v2314 = vpop.xlane.xlu0 %2313
        %v2315 = vmax.f32 %v1733, %v1735
        %2316 = vmax.xlane.f32.xlu0 %v2315
        %v2317 = vpop.xlane.xlu0 %2316
        %v2318 = vmax.f32 %v1739, %v1741
        %2319 = vmax.xlane.f32.xlu0 %v2318
        %v2320 = vpop.xlane.xlu0 %2319
        %v2321 = vmax.f32 %v1743, %v1745
        %2322 = vmax.xlane.f32.xlu0 %v2321
        %v2323 = vpop.xlane.xlu0 %2322
        %v2324 = vmax.f32 %v1749, %v1751
        %2325 = vmax.xlane.f32.xlu0 %v2324
        %v2326 = vpop.xlane.xlu0 %2325
        %v2327 = vmax.f32 %v1753, %v1755
        %2328 = vmax.xlane.f32.xlu0 %v2327
        %v2329 = vpop.xlane.xlu0 %2328
        %v2330 = vmax.f32 %v1884, %v1886
        %2331 = vmax.xlane.f32.xlu0 %v2330
        %v2332 = vpop.xlane.xlu0 %2331
        %v2333 = vmax.f32 %v1888, %v1890
        %2334 = vmax.xlane.f32.xlu0 %v2333
        %v2335 = vpop.xlane.xlu0 %2334
        %v2336 = vmax.f32 %v1894, %v1896
        %2337 = vmax.xlane.f32.xlu0 %v2336
        %v2338 = vpop.xlane.xlu0 %2337
        %v2339 = vmax.f32 %v1898, %v1900
        %2340 = vmax.xlane.f32.xlu0 %v2339
        %v2341 = vpop.xlane.xlu0 %2340
        %v2342 = vmax.f32 %v1904, %v1906
        %2343 = vmax.xlane.f32.xlu0 %v2342
        %v2344 = vpop.xlane.xlu0 %2343
        %v2345 = vmax.f32 %v1908, %v1910
        %2346 = vmax.xlane.f32.xlu0 %v2345
        %v2347 = vpop.xlane.xlu0 %2346
        %v2348 = vmax.f32 %v1914, %v1916
        %2349 = vmax.xlane.f32.xlu0 %v2348
        %v2350 = vpop.xlane.xlu0 %2349
        %v2351 = vmax.f32 %v1918, %v1920
        %2352 = vmax.xlane.f32.xlu0 %v2351
        %v2353 = vpop.xlane.xlu0 %2352
        %v2354 = vmax.f32 %v1924, %v1926
        %2355 = vmax.xlane.f32.xlu0 %v2354
        %v2356 = vpop.xlane.xlu0 %2355
        %v2357 = vmax.f32 %v1928, %v1930
        %2358 = vmax.xlane.f32.xlu0 %v2357
        %v2359 = vpop.xlane.xlu0 %2358
        %v2360 = vmax.f32 %v1934, %v1936
        %2361 = vmax.xlane.f32.xlu0 %v2360
        %v2362 = vpop.xlane.xlu0 %2361
        %v2363 = vmax.f32 %v1938, %v1940
        %2364 = vmax.xlane.f32.xlu0 %v2363
        %v2365 = vpop.xlane.xlu0 %2364
        %v2366 = vmax.f32 %v1944, %v1946
        %2367 = vmax.xlane.f32.xlu0 %v2366
        %v2368 = vpop.xlane.xlu0 %2367
        %v2369 = vmax.f32 %v1948, %v1950
        %2370 = vmax.xlane.f32.xlu0 %v2369
        %v2371 = vpop.xlane.xlu0 %2370
        %v2372 = vmax.f32 %v1954, %v1956
        %2373 = vmax.xlane.f32.xlu0 %v2372
        %v2374 = vpop.xlane.xlu0 %2373
        %v2375 = vmax.f32 %v1958, %v1960
        %2376 = vmax.xlane.f32.xlu0 %v2375
        %v2377 = vpop.xlane.xlu0 %2376
        %v2378 = vmax.f32 %v1964, %v1966
        %2379 = vmax.xlane.f32.xlu0 %v2378
        %v2380 = vpop.xlane.xlu0 %2379
        %v2381 = vmax.f32 %v1968, %v1970
        %2382 = vmax.xlane.f32.xlu0 %v2381
        %v2383 = vpop.xlane.xlu0 %2382
        %v2384 = vmax.f32 %v1974, %v1976
        %2385 = vmax.xlane.f32.xlu0 %v2384
        %v2386 = vpop.xlane.xlu0 %2385
        %v2387 = vmax.f32 %v1978, %v1980
        %2388 = vmax.xlane.f32.xlu0 %v2387
        %v2389 = vpop.xlane.xlu0 %2388
        %v2390 = vmax.f32 %v1984, %v1986
        %2391 = vmax.xlane.f32.xlu0 %v2390
        %v2392 = vpop.xlane.xlu0 %2391
        %v2393 = vmax.f32 %v1988, %v1990
        %2394 = vmax.xlane.f32.xlu0 %v2393
        %v2395 = vpop.xlane.xlu0 %2394
        %v2396 = vmax.f32 %v1994, %v1996
        %2397 = vmax.xlane.f32.xlu0 %v2396
        %v2398 = vpop.xlane.xlu0 %2397
        %v2399 = vmax.f32 %v1998, %v2000
        %2400 = vmax.xlane.f32.xlu0 %v2399
        %v2401 = vpop.xlane.xlu0 %2400
        %v2402 = vmax.f32 %v2004, %v2006
        %2403 = vmax.xlane.f32.xlu0 %v2402
        %v2404 = vpop.xlane.xlu0 %2403
        %v2405 = vmax.f32 %v2008, %v2010
        %2406 = vmax.xlane.f32.xlu0 %v2405
        %v2407 = vpop.xlane.xlu0 %2406
        %v2408 = vmax.f32 %v2014, %v2016
        %2409 = vmax.xlane.f32.xlu0 %v2408
        %v2410 = vpop.xlane.xlu0 %2409
        %v2411 = vmax.f32 %v2018, %v2020
        %2412 = vmax.xlane.f32.xlu0 %v2411
        %v2413 = vpop.xlane.xlu0 %2412
        %v2414 = vmax.f32 %v2024, %v2026
        %2415 = vmax.xlane.f32.xlu0 %v2414
        %v2416 = vpop.xlane.xlu0 %2415
        %v2417 = vmax.f32 %v2028, %v2030
        %2418 = vmax.xlane.f32.xlu0 %v2417
        %v2419 = vpop.xlane.xlu0 %2418
        %v2420 = vmax.f32 %v2034, %v2036
        %2421 = vmax.xlane.f32.xlu0 %v2420
        %v2422 = vpop.xlane.xlu0 %2421
        %v2423 = vmax.f32 %v2038, %v2040
        %2424 = vmax.xlane.f32.xlu0 %v2423
        %v2425 = vpop.xlane.xlu0 %2424
        %v2426 = vsub.f32 %v1029, %v2044
        %v2427 = vsub.f32 %v1031, %v2044
        %v2428 = vsub.f32 %v1033, %v2047
        %v2429 = vsub.f32 %v1035, %v2047
        %v2430 = vsub.f32 %v1039, %v2050
        %v2431 = vsub.f32 %v1041, %v2050
        %v2432 = vsub.f32 %v1043, %v2053
        %v2433 = vsub.f32 %v1045, %v2053
        %v2434 = vsub.f32 %v1049, %v2056
        %v2435 = vsub.f32 %v1051, %v2056
        %v2436 = vsub.f32 %v1053, %v2059
        %v2437 = vsub.f32 %v1055, %v2059
        %v2438 = vsub.f32 %v1059, %v2062
        %v2439 = vsub.f32 %v1061, %v2062
        %v2440 = vsub.f32 %v1063, %v2065
        %v2441 = vsub.f32 %v1065, %v2065
        %v2442 = vsub.f32 %v1069, %v2068
        %v2443 = vsub.f32 %v1071, %v2068
        %v2444 = vsub.f32 %v1073, %v2071
        %v2445 = vsub.f32 %v1075, %v2071
        %v2446 = vsub.f32 %v1079, %v2074
        %v2447 = vsub.f32 %v1081, %v2074
        %v2448 = vsub.f32 %v1083, %v2077
        %v2449 = vsub.f32 %v1085, %v2077
        %v2450 = vsub.f32 %v1089, %v2080
        %v2451 = vsub.f32 %v1091, %v2080
        %v2452 = vsub.f32 %v1093, %v2083
        %v2453 = vsub.f32 %v1095, %v2083
        %v2454 = vsub.f32 %v1099, %v2086
        %v2455 = vsub.f32 %v1101, %v2086
        %v2456 = vsub.f32 %v1103, %v2089
        %v2457 = vsub.f32 %v1105, %v2089
        %v2458 = vsub.f32 %v1109, %v2092
        %v2459 = vsub.f32 %v1111, %v2092
        %v2460 = vsub.f32 %v1113, %v2095
        %v2461 = vsub.f32 %v1115, %v2095
        %v2462 = vsub.f32 %v1119, %v2098
        %v2463 = vsub.f32 %v1121, %v2098
        %v2464 = vsub.f32 %v1123, %v2101
        %v2465 = vsub.f32 %v1125, %v2101
        %v2466 = vsub.f32 %v1129, %v2104
        %v2467 = vsub.f32 %v1131, %v2104
        %v2468 = vsub.f32 %v1133, %v2107
        %v2469 = vsub.f32 %v1135, %v2107
        %v2470 = vsub.f32 %v1139, %v2110
        %v2471 = vsub.f32 %v1141, %v2110
        %v2472 = vsub.f32 %v1143, %v2113
        %v2473 = vsub.f32 %v1145, %v2113
        %v2474 = vsub.f32 %v1149, %v2116
        %v2475 = vsub.f32 %v1151, %v2116
        %v2476 = vsub.f32 %v1153, %v2119
        %v2477 = vsub.f32 %v1155, %v2119
        %v2478 = vsub.f32 %v1159, %v2122
        %v2479 = vsub.f32 %v1161, %v2122
        %v2480 = vsub.f32 %v1163, %v2125
        %v2481 = vsub.f32 %v1165, %v2125
        %v2482 = vsub.f32 %v1169, %v2128
        %v2483 = vsub.f32 %v1171, %v2128
        %v2484 = vsub.f32 %v1173, %v2131
        %v2485 = vsub.f32 %v1175, %v2131
        %v2486 = vsub.f32 %v1179, %v2134
        %v2487 = vsub.f32 %v1181, %v2134
        %v2488 = vsub.f32 %v1183, %v2137
        %v2489 = vsub.f32 %v1185, %v2137
        %v2490 = vsub.f32 %v1314, %v2140
        %v2491 = vsub.f32 %v1316, %v2140
        %v2492 = vsub.f32 %v1318, %v2143
        %v2493 = vsub.f32 %v1320, %v2143
        %v2494 = vsub.f32 %v1324, %v2146
        %v2495 = vsub.f32 %v1326, %v2146
        %v2496 = vsub.f32 %v1328, %v2149
        %v2497 = vsub.f32 %v1330, %v2149
        %v2498 = vsub.f32 %v1334, %v2152
        %v2499 = vsub.f32 %v1336, %v2152
        %v2500 = vsub.f32 %v1338, %v2155
        %v2501 = vsub.f32 %v1340, %v2155
        %v2502 = vsub.f32 %v1344, %v2158
        %v2503 = vsub.f32 %v1346, %v2158
        %v2504 = vsub.f32 %v1348, %v2161
        %v2505 = vsub.f32 %v1350, %v2161
        %v2506 = vsub.f32 %v1354, %v2164
        %v2507 = vsub.f32 %v1356, %v2164
        %v2508 = vsub.f32 %v1358, %v2167
        %v2509 = vsub.f32 %v1360, %v2167
        %v2510 = vsub.f32 %v1364, %v2170
        %v2511 = vsub.f32 %v1366, %v2170
        %v2512 = vsub.f32 %v1368, %v2173
        %v2513 = vsub.f32 %v1370, %v2173
        %v2514 = vsub.f32 %v1374, %v2176
        %v2515 = vsub.f32 %v1376, %v2176
        %v2516 = vsub.f32 %v1378, %v2179
        %v2517 = vsub.f32 %v1380, %v2179
        %v2518 = vsub.f32 %v1384, %v2182
        %v2519 = vsub.f32 %v1386, %v2182
        %v2520 = vsub.f32 %v1388, %v2185
        %v2521 = vsub.f32 %v1390, %v2185
        %v2522 = vsub.f32 %v1394, %v2188
        %v2523 = vsub.f32 %v1396, %v2188
        %v2524 = vsub.f32 %v1398, %v2191
        %v2525 = vsub.f32 %v1400, %v2191
        %v2526 = vsub.f32 %v1404, %v2194
        %v2527 = vsub.f32 %v1406, %v2194
        %v2528 = vsub.f32 %v1408, %v2197
        %v2529 = vsub.f32 %v1410, %v2197
        %v2530 = vsub.f32 %v1414, %v2200
        %v2531 = vsub.f32 %v1416, %v2200
        %v2532 = vsub.f32 %v1418, %v2203
        %v2533 = vsub.f32 %v1420, %v2203
        %v2534 = vsub.f32 %v1424, %v2206
        %v2535 = vsub.f32 %v1426, %v2206
        %v2536 = vsub.f32 %v1428, %v2209
        %v2537 = vsub.f32 %v1430, %v2209
        %v2538 = vsub.f32 %v1434, %v2212
        %v2539 = vsub.f32 %v1436, %v2212
        %v2540 = vsub.f32 %v1438, %v2215
        %v2541 = vsub.f32 %v1440, %v2215
        %v2542 = vsub.f32 %v1444, %v2218
        %v2543 = vsub.f32 %v1446, %v2218
        %v2544 = vsub.f32 %v1448, %v2221
        %v2545 = vsub.f32 %v1450, %v2221
        %v2546 = vsub.f32 %v1454, %v2224
        %v2547 = vsub.f32 %v1456, %v2224
        %v2548 = vsub.f32 %v1458, %v2227
        %v2549 = vsub.f32 %v1460, %v2227
        %v2550 = vsub.f32 %v1464, %v2230
        %v2551 = vsub.f32 %v1466, %v2230
        %v2552 = vsub.f32 %v1468, %v2233
        %v2553 = vsub.f32 %v1470, %v2233
        %v2554 = vsub.f32 %v1599, %v2236
        %v2555 = vsub.f32 %v1601, %v2236
        %v2556 = vsub.f32 %v1603, %v2239
        %v2557 = vsub.f32 %v1605, %v2239
        %v2558 = vsub.f32 %v1609, %v2242
        %v2559 = vsub.f32 %v1611, %v2242
        %v2560 = vsub.f32 %v1613, %v2245
        %v2561 = vsub.f32 %v1615, %v2245
        %v2562 = vsub.f32 %v1619, %v2248
        %v2563 = vsub.f32 %v1621, %v2248
        %v2564 = vsub.f32 %v1623, %v2251
        %v2565 = vsub.f32 %v1625, %v2251
        %v2566 = vsub.f32 %v1629, %v2254
        %v2567 = vsub.f32 %v1631, %v2254
        %v2568 = vsub.f32 %v1633, %v2257
        %v2569 = vsub.f32 %v1635, %v2257
        %v2570 = vsub.f32 %v1639, %v2260
        %v2571 = vsub.f32 %v1641, %v2260
        %v2572 = vsub.f32 %v1643, %v2263
        %v2573 = vsub.f32 %v1645, %v2263
        %v2574 = vsub.f32 %v1649, %v2266
        %v2575 = vsub.f32 %v1651, %v2266
        %v2576 = vsub.f32 %v1653, %v2269
        %v2577 = vsub.f32 %v1655, %v2269
        %v2578 = vsub.f32 %v1659, %v2272
        %v2579 = vsub.f32 %v1661, %v2272
        %v2580 = vsub.f32 %v1663, %v2275
        %v2581 = vsub.f32 %v1665, %v2275
        %v2582 = vsub.f32 %v1669, %v2278
        %v2583 = vsub.f32 %v1671, %v2278
        %v2584 = vsub.f32 %v1673, %v2281
        %v2585 = vsub.f32 %v1675, %v2281
        %v2586 = vsub.f32 %v1679, %v2284
        %v2587 = vsub.f32 %v1681, %v2284
        %v2588 = vsub.f32 %v1683, %v2287
        %v2589 = vsub.f32 %v1685, %v2287
        %v2590 = vsub.f32 %v1689, %v2290
        %v2591 = vsub.f32 %v1691, %v2290
        %v2592 = vsub.f32 %v1693, %v2293
        %v2593 = vsub.f32 %v1695, %v2293
        %v2594 = vsub.f32 %v1699, %v2296
        %v2595 = vsub.f32 %v1701, %v2296
        %v2596 = vsub.f32 %v1703, %v2299
        %v2597 = vsub.f32 %v1705, %v2299
        %v2598 = vsub.f32 %v1709, %v2302
        %v2599 = vsub.f32 %v1711, %v2302
        %v2600 = vsub.f32 %v1713, %v2305
        %v2601 = vsub.f32 %v1715, %v2305
        %v2602 = vsub.f32 %v1719, %v2308
        %v2603 = vsub.f32 %v1721, %v2308
        %v2604 = vsub.f32 %v1723, %v2311
        %v2605 = vsub.f32 %v1725, %v2311
        %v2606 = vsub.f32 %v1729, %v2314
        %v2607 = vsub.f32 %v1731, %v2314
        %v2608 = vsub.f32 %v1733, %v2317
        %v2609 = vsub.f32 %v1735, %v2317
        %v2610 = vsub.f32 %v1739, %v2320
        %v2611 = vsub.f32 %v1741, %v2320
        %v2612 = vsub.f32 %v1743, %v2323
        %v2613 = vsub.f32 %v1745, %v2323
        %v2614 = vsub.f32 %v1749, %v2326
        %v2615 = vsub.f32 %v1751, %v2326
        %v2616 = vsub.f32 %v1753, %v2329
        %v2617 = vsub.f32 %v1755, %v2329
        %v2618 = vsub.f32 %v1884, %v2332
        %v2619 = vsub.f32 %v1886, %v2332
        %v2620 = vsub.f32 %v1888, %v2335
        %v2621 = vsub.f32 %v1890, %v2335
        %v2622 = vsub.f32 %v1894, %v2338
        %v2623 = vsub.f32 %v1896, %v2338
        %v2624 = vsub.f32 %v1898, %v2341
        %v2625 = vsub.f32 %v1900, %v2341
        %v2626 = vsub.f32 %v1904, %v2344
        %v2627 = vsub.f32 %v1906, %v2344
        %v2628 = vsub.f32 %v1908, %v2347
        %v2629 = vsub.f32 %v1910, %v2347
        %v2630 = vsub.f32 %v1914, %v2350
        %v2631 = vsub.f32 %v1916, %v2350
        %v2632 = vsub.f32 %v1918, %v2353
        %v2633 = vsub.f32 %v1920, %v2353
        %v2634 = vsub.f32 %v1924, %v2356
        %v2635 = vsub.f32 %v1926, %v2356
        %v2636 = vsub.f32 %v1928, %v2359
        %v2637 = vsub.f32 %v1930, %v2359
        %v2638 = vsub.f32 %v1934, %v2362
        %v2639 = vsub.f32 %v1936, %v2362
        %v2640 = vsub.f32 %v1938, %v2365
        %v2641 = vsub.f32 %v1940, %v2365
        %v2642 = vsub.f32 %v1944, %v2368
        %v2643 = vsub.f32 %v1946, %v2368
        %v2644 = vsub.f32 %v1948, %v2371
        %v2645 = vsub.f32 %v1950, %v2371
        %v2646 = vsub.f32 %v1954, %v2374
        %v2647 = vsub.f32 %v1956, %v2374
        %v2648 = vsub.f32 %v1958, %v2377
        %v2649 = vsub.f32 %v1960, %v2377
        %v2650 = vsub.f32 %v1964, %v2380
        %v2651 = vsub.f32 %v1966, %v2380
        %v2652 = vsub.f32 %v1968, %v2383
        %v2653 = vsub.f32 %v1970, %v2383
        %v2654 = vsub.f32 %v1974, %v2386
        %v2655 = vsub.f32 %v1976, %v2386
        %v2656 = vsub.f32 %v1978, %v2389
        %v2657 = vsub.f32 %v1980, %v2389
        %v2658 = vsub.f32 %v1984, %v2392
        %v2659 = vsub.f32 %v1986, %v2392
        %v2660 = vsub.f32 %v1988, %v2395
        %v2661 = vsub.f32 %v1990, %v2395
        %v2662 = vsub.f32 %v1994, %v2398
        %v2663 = vsub.f32 %v1996, %v2398
        %v2664 = vsub.f32 %v1998, %v2401
        %v2665 = vsub.f32 %v2000, %v2401
        %v2666 = vsub.f32 %v2004, %v2404
        %v2667 = vsub.f32 %v2006, %v2404
        %v2668 = vsub.f32 %v2008, %v2407
        %v2669 = vsub.f32 %v2010, %v2407
        %v2670 = vsub.f32 %v2014, %v2410
        %v2671 = vsub.f32 %v2016, %v2410
        %v2672 = vsub.f32 %v2018, %v2413
        %v2673 = vsub.f32 %v2020, %v2413
        %v2674 = vsub.f32 %v2024, %v2416
        %v2675 = vsub.f32 %v2026, %v2416
        %v2676 = vsub.f32 %v2028, %v2419
        %v2677 = vsub.f32 %v2030, %v2419
        %v2678 = vsub.f32 %v2034, %v2422
        %v2679 = vsub.f32 %v2036, %v2422
        %v2680 = vsub.f32 %v2038, %v2425
        %v2681 = vsub.f32 %v2040, %v2425
        %v2682 = vmul.f32 %v2426, 1.442695
        %v2683 = vpow.pop %v2682
        %v2684 = vmul.f32 %v2427, 1.442695
        %v2685 = vpow.pop %v2684
        %v2686 = vmul.f32 %v2428, 1.442695
        %v2687 = vpow.pop %v2686
        %v2688 = vmul.f32 %v2429, 1.442695
        %v2689 = vpow.pop %v2688
        %v2690 = vmul.f32 %v2430, 1.442695
        %v2691 = vpow.pop %v2690
        %v2692 = vmul.f32 %v2431, 1.442695
        %v2693 = vpow.pop %v2692
        %v2694 = vmul.f32 %v2432, 1.442695
        %v2695 = vpow.pop %v2694
        %v2696 = vmul.f32 %v2433, 1.442695
        %v2697 = vpow.pop %v2696
        %v2698 = vmul.f32 %v2434, 1.442695
        %v2699 = vpow.pop %v2698
        %v2700 = vmul.f32 %v2435, 1.442695
        %v2701 = vpow.pop %v2700
        %v2702 = vmul.f32 %v2436, 1.442695
        %v2703 = vpow.pop %v2702
        %v2704 = vmul.f32 %v2437, 1.442695
        %v2705 = vpow.pop %v2704
        %v2706 = vmul.f32 %v2438, 1.442695
        %v2707 = vpow.pop %v2706
        %v2708 = vmul.f32 %v2439, 1.442695
        %v2709 = vpow.pop %v2708
        %v2710 = vmul.f32 %v2440, 1.442695
        %v2711 = vpow.pop %v2710
        %v2712 = vmul.f32 %v2441, 1.442695
        %v2713 = vpow.pop %v2712
        %v2714 = vmul.f32 %v2442, 1.442695
        %v2715 = vpow.pop %v2714
        %v2716 = vmul.f32 %v2443, 1.442695
        %v2717 = vpow.pop %v2716
        %v2718 = vmul.f32 %v2444, 1.442695
        %v2719 = vpow.pop %v2718
        %v2720 = vmul.f32 %v2445, 1.442695
        %v2721 = vpow.pop %v2720
        %v2722 = vmul.f32 %v2446, 1.442695
        %v2723 = vpow.pop %v2722
        %v2724 = vmul.f32 %v2447, 1.442695
        %v2725 = vpow.pop %v2724
        %v2726 = vmul.f32 %v2448, 1.442695
        %v2727 = vpow.pop %v2726
        %v2728 = vmul.f32 %v2449, 1.442695
        %v2729 = vpow.pop %v2728
        %v2730 = vmul.f32 %v2450, 1.442695
        %v2731 = vpow.pop %v2730
        %v2732 = vmul.f32 %v2451, 1.442695
        %v2733 = vpow.pop %v2732
        %v2734 = vmul.f32 %v2452, 1.442695
        %v2735 = vpow.pop %v2734
        %v2736 = vmul.f32 %v2453, 1.442695
        %v2737 = vpow.pop %v2736
        %v2738 = vmul.f32 %v2454, 1.442695
        %v2739 = vpow.pop %v2738
        %v2740 = vmul.f32 %v2455, 1.442695
        %v2741 = vpow.pop %v2740
        %v2742 = vmul.f32 %v2456, 1.442695
        %v2743 = vpow.pop %v2742
        %v2744 = vmul.f32 %v2457, 1.442695
        %v2745 = vpow.pop %v2744
        %v2746 = vmul.f32 %v2458, 1.442695
        %v2747 = vpow.pop %v2746
        %v2748 = vmul.f32 %v2459, 1.442695
        %v2749 = vpow.pop %v2748
        %v2750 = vmul.f32 %v2460, 1.442695
        %v2751 = vpow.pop %v2750
        %v2752 = vmul.f32 %v2461, 1.442695
        %v2753 = vpow.pop %v2752
        %v2754 = vmul.f32 %v2462, 1.442695
        %v2755 = vpow.pop %v2754
        %v2756 = vmul.f32 %v2463, 1.442695
        %v2757 = vpow.pop %v2756
        %v2758 = vmul.f32 %v2464, 1.442695
        %v2759 = vpow.pop %v2758
        %v2760 = vmul.f32 %v2465, 1.442695
        %v2761 = vpow.pop %v2760
        %v2762 = vmul.f32 %v2466, 1.442695
        %v2763 = vpow.pop %v2762
        %v2764 = vmul.f32 %v2467, 1.442695
        %v2765 = vpow.pop %v2764
        %v2766 = vmul.f32 %v2468, 1.442695
        %v2767 = vpow.pop %v2766
        %v2768 = vmul.f32 %v2469, 1.442695
        %v2769 = vpow.pop %v2768
        %v2770 = vmul.f32 %v2470, 1.442695
        %v2771 = vpow.pop %v2770
        %v2772 = vmul.f32 %v2471, 1.442695
        %v2773 = vpow.pop %v2772
        %v2774 = vmul.f32 %v2472, 1.442695
        %v2775 = vpow.pop %v2774
        %v2776 = vmul.f32 %v2473, 1.442695
        %v2777 = vpow.pop %v2776
        %v2778 = vmul.f32 %v2474, 1.442695
        %v2779 = vpow.pop %v2778
        %v2780 = vmul.f32 %v2475, 1.442695
        %v2781 = vpow.pop %v2780
        %v2782 = vmul.f32 %v2476, 1.442695
        %v2783 = vpow.pop %v2782
        %v2784 = vmul.f32 %v2477, 1.442695
        %v2785 = vpow.pop %v2784
        %v2786 = vmul.f32 %v2478, 1.442695
        %v2787 = vpow.pop %v2786
        %v2788 = vmul.f32 %v2479, 1.442695
        %v2789 = vpow.pop %v2788
        %v2790 = vmul.f32 %v2480, 1.442695
        %v2791 = vpow.pop %v2790
        %v2792 = vmul.f32 %v2481, 1.442695
        %v2793 = vpow.pop %v2792
        %v2794 = vmul.f32 %v2482, 1.442695
        %v2795 = vpow.pop %v2794
        %v2796 = vmul.f32 %v2483, 1.442695
        %v2797 = vpow.pop %v2796
        %v2798 = vmul.f32 %v2484, 1.442695
        %v2799 = vpow.pop %v2798
        %v2800 = vmul.f32 %v2485, 1.442695
        %v2801 = vpow.pop %v2800
        %v2802 = vmul.f32 %v2486, 1.442695
        %v2803 = vpow.pop %v2802
        %v2804 = vmul.f32 %v2487, 1.442695
        %v2805 = vpow.pop %v2804
        %v2806 = vmul.f32 %v2488, 1.442695
        %v2807 = vpow.pop %v2806
        %v2808 = vmul.f32 %v2489, 1.442695
        %v2809 = vpow.pop %v2808
        %v2810 = vmul.f32 %v2490, 1.442695
        %v2811 = vpow.pop %v2810
        %v2812 = vmul.f32 %v2491, 1.442695
        %v2813 = vpow.pop %v2812
        %v2814 = vmul.f32 %v2492, 1.442695
        %v2815 = vpow.pop %v2814
        %v2816 = vmul.f32 %v2493, 1.442695
        %v2817 = vpow.pop %v2816
        %v2818 = vmul.f32 %v2494, 1.442695
        %v2819 = vpow.pop %v2818
        %v2820 = vmul.f32 %v2495, 1.442695
        %v2821 = vpow.pop %v2820
        %v2822 = vmul.f32 %v2496, 1.442695
        %v2823 = vpow.pop %v2822
        %v2824 = vmul.f32 %v2497, 1.442695
        %v2825 = vpow.pop %v2824
        %v2826 = vmul.f32 %v2498, 1.442695
        %v2827 = vpow.pop %v2826
        %v2828 = vmul.f32 %v2499, 1.442695
        %v2829 = vpow.pop %v2828
        %v2830 = vmul.f32 %v2500, 1.442695
        %v2831 = vpow.pop %v2830
        %v2832 = vmul.f32 %v2501, 1.442695
        %v2833 = vpow.pop %v2832
        %v2834 = vmul.f32 %v2502, 1.442695
        %v2835 = vpow.pop %v2834
        %v2836 = vmul.f32 %v2503, 1.442695
        %v2837 = vpow.pop %v2836
        %v2838 = vmul.f32 %v2504, 1.442695
        %v2839 = vpow.pop %v2838
        %v2840 = vmul.f32 %v2505, 1.442695
        %v2841 = vpow.pop %v2840
        %v2842 = vmul.f32 %v2506, 1.442695
        %v2843 = vpow.pop %v2842
        %v2844 = vmul.f32 %v2507, 1.442695
        %v2845 = vpow.pop %v2844
        %v2846 = vmul.f32 %v2508, 1.442695
        %v2847 = vpow.pop %v2846
        %v2848 = vmul.f32 %v2509, 1.442695
        %v2849 = vpow.pop %v2848
        %v2850 = vmul.f32 %v2510, 1.442695
        %v2851 = vpow.pop %v2850
        %v2852 = vmul.f32 %v2511, 1.442695
        %v2853 = vpow.pop %v2852
        %v2854 = vmul.f32 %v2512, 1.442695
        %v2855 = vpow.pop %v2854
        %v2856 = vmul.f32 %v2513, 1.442695
        %v2857 = vpow.pop %v2856
        %v2858 = vmul.f32 %v2514, 1.442695
        %v2859 = vpow.pop %v2858
        %v2860 = vmul.f32 %v2515, 1.442695
        %v2861 = vpow.pop %v2860
        %v2862 = vmul.f32 %v2516, 1.442695
        %v2863 = vpow.pop %v2862
        %v2864 = vmul.f32 %v2517, 1.442695
        %v2865 = vpow.pop %v2864
        %v2866 = vmul.f32 %v2518, 1.442695
        %v2867 = vpow.pop %v2866
        %v2868 = vmul.f32 %v2519, 1.442695
        %v2869 = vpow.pop %v2868
        %v2870 = vmul.f32 %v2520, 1.442695
        %v2871 = vpow.pop %v2870
        %v2872 = vmul.f32 %v2521, 1.442695
        %v2873 = vpow.pop %v2872
        %v2874 = vmul.f32 %v2522, 1.442695
        %v2875 = vpow.pop %v2874
        %v2876 = vmul.f32 %v2523, 1.442695
        %v2877 = vpow.pop %v2876
        %v2878 = vmul.f32 %v2524, 1.442695
        %v2879 = vpow.pop %v2878
        %v2880 = vmul.f32 %v2525, 1.442695
        %v2881 = vpow.pop %v2880
        %v2882 = vmul.f32 %v2526, 1.442695
        %v2883 = vpow.pop %v2882
        %v2884 = vmul.f32 %v2527, 1.442695
        %v2885 = vpow.pop %v2884
        %v2886 = vmul.f32 %v2528, 1.442695
        %v2887 = vpow.pop %v2886
        %v2888 = vmul.f32 %v2529, 1.442695
        %v2889 = vpow.pop %v2888
        %v2890 = vmul.f32 %v2530, 1.442695
        %v2891 = vpow.pop %v2890
        %v2892 = vmul.f32 %v2531, 1.442695
        %v2893 = vpow.pop %v2892
        %v2894 = vmul.f32 %v2532, 1.442695
        %v2895 = vpow.pop %v2894
        %v2896 = vmul.f32 %v2533, 1.442695
        %v2897 = vpow.pop %v2896
        %v2898 = vmul.f32 %v2534, 1.442695
        %v2899 = vpow.pop %v2898
        %v2900 = vmul.f32 %v2535, 1.442695
        %v2901 = vpow.pop %v2900
        %v2902 = vmul.f32 %v2536, 1.442695
        %v2903 = vpow.pop %v2902
        %v2904 = vmul.f32 %v2537, 1.442695
        %v2905 = vpow.pop %v2904
        %v2906 = vmul.f32 %v2538, 1.442695
        %v2907 = vpow.pop %v2906
        %v2908 = vmul.f32 %v2539, 1.442695
        %v2909 = vpow.pop %v2908
        %v2910 = vmul.f32 %v2540, 1.442695
        %v2911 = vpow.pop %v2910
        %v2912 = vmul.f32 %v2541, 1.442695
        %v2913 = vpow.pop %v2912
        %v2914 = vmul.f32 %v2542, 1.442695
        %v2915 = vpow.pop %v2914
        %v2916 = vmul.f32 %v2543, 1.442695
        %v2917 = vpow.pop %v2916
        %v2918 = vmul.f32 %v2544, 1.442695
        %v2919 = vpow.pop %v2918
        %v2920 = vmul.f32 %v2545, 1.442695
        %v2921 = vpow.pop %v2920
        %v2922 = vmul.f32 %v2546, 1.442695
        %v2923 = vpow.pop %v2922
        %v2924 = vmul.f32 %v2547, 1.442695
        %v2925 = vpow.pop %v2924
        %v2926 = vmul.f32 %v2548, 1.442695
        %v2927 = vpow.pop %v2926
        %v2928 = vmul.f32 %v2549, 1.442695
        %v2929 = vpow.pop %v2928
        %v2930 = vmul.f32 %v2550, 1.442695
        %v2931 = vpow.pop %v2930
        %v2932 = vmul.f32 %v2551, 1.442695
        %v2933 = vpow.pop %v2932
        %v2934 = vmul.f32 %v2552, 1.442695
        %v2935 = vpow.pop %v2934
        %v2936 = vmul.f32 %v2553, 1.442695
        %v2937 = vpow.pop %v2936
        %v2938 = vmul.f32 %v2554, 1.442695
        %v2939 = vpow.pop %v2938
        %v2940 = vmul.f32 %v2555, 1.442695
        %v2941 = vpow.pop %v2940
        %v2942 = vmul.f32 %v2556, 1.442695
        %v2943 = vpow.pop %v2942
        %v2944 = vmul.f32 %v2557, 1.442695
        %v2945 = vpow.pop %v2944
        %v2946 = vmul.f32 %v2558, 1.442695
        %v2947 = vpow.pop %v2946
        %v2948 = vmul.f32 %v2559, 1.442695
        %v2949 = vpow.pop %v2948
        %v2950 = vmul.f32 %v2560, 1.442695
        %v2951 = vpow.pop %v2950
        %v2952 = vmul.f32 %v2561, 1.442695
        %v2953 = vpow.pop %v2952
        %v2954 = vmul.f32 %v2562, 1.442695
        %v2955 = vpow.pop %v2954
        %v2956 = vmul.f32 %v2563, 1.442695
        %v2957 = vpow.pop %v2956
        %v2958 = vmul.f32 %v2564, 1.442695
        %v2959 = vpow.pop %v2958
        %v2960 = vmul.f32 %v2565, 1.442695
        %v2961 = vpow.pop %v2960
        %v2962 = vmul.f32 %v2566, 1.442695
        %v2963 = vpow.pop %v2962
        %v2964 = vmul.f32 %v2567, 1.442695
        %v2965 = vpow.pop %v2964
        %v2966 = vmul.f32 %v2568, 1.442695
        %v2967 = vpow.pop %v2966
        %v2968 = vmul.f32 %v2569, 1.442695
        %v2969 = vpow.pop %v2968
        %v2970 = vmul.f32 %v2570, 1.442695
        %v2971 = vpow.pop %v2970
        %v2972 = vmul.f32 %v2571, 1.442695
        %v2973 = vpow.pop %v2972
        %v2974 = vmul.f32 %v2572, 1.442695
        %v2975 = vpow.pop %v2974
        %v2976 = vmul.f32 %v2573, 1.442695
        %v2977 = vpow.pop %v2976
        %v2978 = vmul.f32 %v2574, 1.442695
        %v2979 = vpow.pop %v2978
        %v2980 = vmul.f32 %v2575, 1.442695
        %v2981 = vpow.pop %v2980
        %v2982 = vmul.f32 %v2576, 1.442695
        %v2983 = vpow.pop %v2982
        %v2984 = vmul.f32 %v2577, 1.442695
        %v2985 = vpow.pop %v2984
        %v2986 = vmul.f32 %v2578, 1.442695
        %v2987 = vpow.pop %v2986
        %v2988 = vmul.f32 %v2579, 1.442695
        %v2989 = vpow.pop %v2988
        %v2990 = vmul.f32 %v2580, 1.442695
        %v2991 = vpow.pop %v2990
        %v2992 = vmul.f32 %v2581, 1.442695
        %v2993 = vpow.pop %v2992
        %v2994 = vmul.f32 %v2582, 1.442695
        %v2995 = vpow.pop %v2994
        %v2996 = vmul.f32 %v2583, 1.442695
        %v2997 = vpow.pop %v2996
        %v2998 = vmul.f32 %v2584, 1.442695
        %v2999 = vpow.pop %v2998
        %v3000 = vmul.f32 %v2585, 1.442695
        %v3001 = vpow.pop %v3000
        %v3002 = vmul.f32 %v2586, 1.442695
        %v3003 = vpow.pop %v3002
        %v3004 = vmul.f32 %v2587, 1.442695
        %v3005 = vpow.pop %v3004
        %v3006 = vmul.f32 %v2588, 1.442695
        %v3007 = vpow.pop %v3006
        %v3008 = vmul.f32 %v2589, 1.442695
        %v3009 = vpow.pop %v3008
        %v3010 = vmul.f32 %v2590, 1.442695
        %v3011 = vpow.pop %v3010
        %v3012 = vmul.f32 %v2591, 1.442695
        %v3013 = vpow.pop %v3012
        %v3014 = vmul.f32 %v2592, 1.442695
        %v3015 = vpow.pop %v3014
        %v3016 = vmul.f32 %v2593, 1.442695
        %v3017 = vpow.pop %v3016
        %v3018 = vmul.f32 %v2594, 1.442695
        %v3019 = vpow.pop %v3018
        %v3020 = vmul.f32 %v2595, 1.442695
        %v3021 = vpow.pop %v3020
        %v3022 = vmul.f32 %v2596, 1.442695
        %v3023 = vpow.pop %v3022
        %v3024 = vmul.f32 %v2597, 1.442695
        %v3025 = vpow.pop %v3024
        %v3026 = vmul.f32 %v2598, 1.442695
        %v3027 = vpow.pop %v3026
        %v3028 = vmul.f32 %v2599, 1.442695
        %v3029 = vpow.pop %v3028
        %v3030 = vmul.f32 %v2600, 1.442695
        %v3031 = vpow.pop %v3030
        %v3032 = vmul.f32 %v2601, 1.442695
        %v3033 = vpow.pop %v3032
        %v3034 = vmul.f32 %v2602, 1.442695
        %v3035 = vpow.pop %v3034
        %v3036 = vmul.f32 %v2603, 1.442695
        %v3037 = vpow.pop %v3036
        %v3038 = vmul.f32 %v2604, 1.442695
        %v3039 = vpow.pop %v3038
        %v3040 = vmul.f32 %v2605, 1.442695
        %v3041 = vpow.pop %v3040
        %v3042 = vmul.f32 %v2606, 1.442695
        %v3043 = vpow.pop %v3042
        %v3044 = vmul.f32 %v2607, 1.442695
        %v3045 = vpow.pop %v3044
        %v3046 = vmul.f32 %v2608, 1.442695
        %v3047 = vpow.pop %v3046
        %v3048 = vmul.f32 %v2609, 1.442695
        %v3049 = vpow.pop %v3048
        %v3050 = vmul.f32 %v2610, 1.442695
        %v3051 = vpow.pop %v3050
        %v3052 = vmul.f32 %v2611, 1.442695
        %v3053 = vpow.pop %v3052
        %v3054 = vmul.f32 %v2612, 1.442695
        %v3055 = vpow.pop %v3054
        %v3056 = vmul.f32 %v2613, 1.442695
        %v3057 = vpow.pop %v3056
        %v3058 = vmul.f32 %v2614, 1.442695
        %v3059 = vpow.pop %v3058
        %v3060 = vmul.f32 %v2615, 1.442695
        %v3061 = vpow.pop %v3060
        %v3062 = vmul.f32 %v2616, 1.442695
        %v3063 = vpow.pop %v3062
        %v3064 = vmul.f32 %v2617, 1.442695
        %v3065 = vpow.pop %v3064
        %v3066 = vmul.f32 %v2618, 1.442695
        %v3067 = vpow.pop %v3066
        %v3068 = vmul.f32 %v2619, 1.442695
        %v3069 = vpow.pop %v3068
        %v3070 = vmul.f32 %v2620, 1.442695
        %v3071 = vpow.pop %v3070
        %v3072 = vmul.f32 %v2621, 1.442695
        %v3073 = vpow.pop %v3072
        %v3074 = vmul.f32 %v2622, 1.442695
        %v3075 = vpow.pop %v3074
        %v3076 = vmul.f32 %v2623, 1.442695
        %v3077 = vpow.pop %v3076
        %v3078 = vmul.f32 %v2624, 1.442695
        %v3079 = vpow.pop %v3078
        %v3080 = vmul.f32 %v2625, 1.442695
        %v3081 = vpow.pop %v3080
        %v3082 = vmul.f32 %v2626, 1.442695
        %v3083 = vpow.pop %v3082
        %v3084 = vmul.f32 %v2627, 1.442695
        %v3085 = vpow.pop %v3084
        %v3086 = vmul.f32 %v2628, 1.442695
        %v3087 = vpow.pop %v3086
        %v3088 = vmul.f32 %v2629, 1.442695
        %v3089 = vpow.pop %v3088
        %v3090 = vmul.f32 %v2630, 1.442695
        %v3091 = vpow.pop %v3090
        %v3092 = vmul.f32 %v2631, 1.442695
        %v3093 = vpow.pop %v3092
        %v3094 = vmul.f32 %v2632, 1.442695
        %v3095 = vpow.pop %v3094
        %v3096 = vmul.f32 %v2633, 1.442695
        %v3097 = vpow.pop %v3096
        %v3098 = vmul.f32 %v2634, 1.442695
        %v3099 = vpow.pop %v3098
        %v3100 = vmul.f32 %v2635, 1.442695
        %v3101 = vpow.pop %v3100
        %v3102 = vmul.f32 %v2636, 1.442695
        %v3103 = vpow.pop %v3102
        %v3104 = vmul.f32 %v2637, 1.442695
        %v3105 = vpow.pop %v3104
        %v3106 = vmul.f32 %v2638, 1.442695
        %v3107 = vpow.pop %v3106
        %v3108 = vmul.f32 %v2639, 1.442695
        %v3109 = vpow.pop %v3108
        %v3110 = vmul.f32 %v2640, 1.442695
        %v3111 = vpow.pop %v3110
        %v3112 = vmul.f32 %v2641, 1.442695
        %v3113 = vpow.pop %v3112
        %v3114 = vmul.f32 %v2642, 1.442695
        %v3115 = vpow.pop %v3114
        %v3116 = vmul.f32 %v2643, 1.442695
        %v3117 = vpow.pop %v3116
        %v3118 = vmul.f32 %v2644, 1.442695
        %v3119 = vpow.pop %v3118
        %v3120 = vmul.f32 %v2645, 1.442695
        %v3121 = vpow.pop %v3120
        %v3122 = vmul.f32 %v2646, 1.442695
        %v3123 = vpow.pop %v3122
        %v3124 = vmul.f32 %v2647, 1.442695
        %v3125 = vpow.pop %v3124
        %v3126 = vmul.f32 %v2648, 1.442695
        %v3127 = vpow.pop %v3126
        %v3128 = vmul.f32 %v2649, 1.442695
        %v3129 = vpow.pop %v3128
        %v3130 = vmul.f32 %v2650, 1.442695
        %v3131 = vpow.pop %v3130
        %v3132 = vmul.f32 %v2651, 1.442695
        %v3133 = vpow.pop %v3132
        %v3134 = vmul.f32 %v2652, 1.442695
        %v3135 = vpow.pop %v3134
        %v3136 = vmul.f32 %v2653, 1.442695
        %v3137 = vpow.pop %v3136
        %v3138 = vmul.f32 %v2654, 1.442695
        %v3139 = vpow.pop %v3138
        %v3140 = vmul.f32 %v2655, 1.442695
        %v3141 = vpow.pop %v3140
        %v3142 = vmul.f32 %v2656, 1.442695
        %v3143 = vpow.pop %v3142
        %v3144 = vmul.f32 %v2657, 1.442695
        %v3145 = vpow.pop %v3144
        %v3146 = vmul.f32 %v2658, 1.442695
        %v3147 = vpow.pop %v3146
        %v3148 = vmul.f32 %v2659, 1.442695
        %v3149 = vpow.pop %v3148
        %v3150 = vmul.f32 %v2660, 1.442695
        %v3151 = vpow.pop %v3150
        %v3152 = vmul.f32 %v2661, 1.442695
        %v3153 = vpow.pop %v3152
        %v3154 = vmul.f32 %v2662, 1.442695
        %v3155 = vpow.pop %v3154
        %v3156 = vmul.f32 %v2663, 1.442695
        %v3157 = vpow.pop %v3156
        %v3158 = vmul.f32 %v2664, 1.442695
        %v3159 = vpow.pop %v3158
        %v3160 = vmul.f32 %v2665, 1.442695
        %v3161 = vpow.pop %v3160
        %v3162 = vmul.f32 %v2666, 1.442695
        %v3163 = vpow.pop %v3162
        %v3164 = vmul.f32 %v2667, 1.442695
        %v3165 = vpow.pop %v3164
        %v3166 = vmul.f32 %v2668, 1.442695
        %v3167 = vpow.pop %v3166
        %v3168 = vmul.f32 %v2669, 1.442695
        %v3169 = vpow.pop %v3168
        %v3170 = vmul.f32 %v2670, 1.442695
        %v3171 = vpow.pop %v3170
        %v3172 = vmul.f32 %v2671, 1.442695
        %v3173 = vpow.pop %v3172
        %v3174 = vmul.f32 %v2672, 1.442695
        %v3175 = vpow.pop %v3174
        %v3176 = vmul.f32 %v2673, 1.442695
        %v3177 = vpow.pop %v3176
        %v3178 = vmul.f32 %v2674, 1.442695
        %v3179 = vpow.pop %v3178
        %v3180 = vmul.f32 %v2675, 1.442695
        %v3181 = vpow.pop %v3180
        %v3182 = vmul.f32 %v2676, 1.442695
        %v3183 = vpow.pop %v3182
        %v3184 = vmul.f32 %v2677, 1.442695
        %v3185 = vpow.pop %v3184
        %v3186 = vmul.f32 %v2678, 1.442695
        %v3187 = vpow.pop %v3186
        %v3188 = vmul.f32 %v2679, 1.442695
        %v3189 = vpow.pop %v3188
        %v3190 = vmul.f32 %v2680, 1.442695
        %v3191 = vpow.pop %v3190
        %v3192 = vmul.f32 %v2681, 1.442695
        %v3193 = vpow.pop %v3192
        %v3194 = vadd.f32 %v2683, %v2685
        %3195 = vadd.xlane.f32.xlu0 %v3194
        %v3196 = vpop.xlane.xlu0 %3195
        %v3197 = vadd.f32 %v2687, %v2689
        %3198 = vadd.xlane.f32.xlu0 %v3197
        %v3199 = vpop.xlane.xlu0 %3198
        %v3200 = vadd.f32 %v2691, %v2693
        %3201 = vadd.xlane.f32.xlu0 %v3200
        %v3202 = vpop.xlane.xlu0 %3201
        %v3203 = vadd.f32 %v2695, %v2697
        %3204 = vadd.xlane.f32.xlu0 %v3203
        %v3205 = vpop.xlane.xlu0 %3204
        %v3206 = vadd.f32 %v2699, %v2701
        %3207 = vadd.xlane.f32.xlu0 %v3206
        %v3208 = vpop.xlane.xlu0 %3207
        %v3209 = vadd.f32 %v2703, %v2705
        %3210 = vadd.xlane.f32.xlu0 %v3209
        %v3211 = vpop.xlane.xlu0 %3210
        %v3212 = vadd.f32 %v2707, %v2709
        %3213 = vadd.xlane.f32.xlu0 %v3212
        %v3214 = vpop.xlane.xlu0 %3213
        %v3215 = vadd.f32 %v2711, %v2713
        %3216 = vadd.xlane.f32.xlu0 %v3215
        %v3217 = vpop.xlane.xlu0 %3216
        %v3218 = vadd.f32 %v2715, %v2717
        %3219 = vadd.xlane.f32.xlu0 %v3218
        %v3220 = vpop.xlane.xlu0 %3219
        %v3221 = vadd.f32 %v2719, %v2721
        %3222 = vadd.xlane.f32.xlu0 %v3221
        %v3223 = vpop.xlane.xlu0 %3222
        %v3224 = vadd.f32 %v2723, %v2725
        %3225 = vadd.xlane.f32.xlu0 %v3224
        %v3226 = vpop.xlane.xlu0 %3225
        %v3227 = vadd.f32 %v2727, %v2729
        %3228 = vadd.xlane.f32.xlu0 %v3227
        %v3229 = vpop.xlane.xlu0 %3228
        %v3230 = vadd.f32 %v2731, %v2733
        %3231 = vadd.xlane.f32.xlu0 %v3230
        %v3232 = vpop.xlane.xlu0 %3231
        %v3233 = vadd.f32 %v2735, %v2737
        %3234 = vadd.xlane.f32.xlu0 %v3233
        %v3235 = vpop.xlane.xlu0 %3234
        %v3236 = vadd.f32 %v2739, %v2741
        %3237 = vadd.xlane.f32.xlu0 %v3236
        %v3238 = vpop.xlane.xlu0 %3237
        %v3239 = vadd.f32 %v2743, %v2745
        %3240 = vadd.xlane.f32.xlu0 %v3239
        %v3241 = vpop.xlane.xlu0 %3240
        %v3242 = vadd.f32 %v2747, %v2749
        %3243 = vadd.xlane.f32.xlu0 %v3242
        %v3244 = vpop.xlane.xlu0 %3243
        %v3245 = vadd.f32 %v2751, %v2753
        %3246 = vadd.xlane.f32.xlu0 %v3245
        %v3247 = vpop.xlane.xlu0 %3246
        %v3248 = vadd.f32 %v2755, %v2757
        %3249 = vadd.xlane.f32.xlu0 %v3248
        %v3250 = vpop.xlane.xlu0 %3249
        %v3251 = vadd.f32 %v2759, %v2761
        %3252 = vadd.xlane.f32.xlu0 %v3251
        %v3253 = vpop.xlane.xlu0 %3252
        %v3254 = vadd.f32 %v2763, %v2765
        %3255 = vadd.xlane.f32.xlu0 %v3254
        %v3256 = vpop.xlane.xlu0 %3255
        %v3257 = vadd.f32 %v2767, %v2769
        %3258 = vadd.xlane.f32.xlu0 %v3257
        %v3259 = vpop.xlane.xlu0 %3258
        %v3260 = vadd.f32 %v2771, %v2773
        %3261 = vadd.xlane.f32.xlu0 %v3260
        %v3262 = vpop.xlane.xlu0 %3261
        %v3263 = vadd.f32 %v2775, %v2777
        %3264 = vadd.xlane.f32.xlu0 %v3263
        %v3265 = vpop.xlane.xlu0 %3264
        %v3266 = vadd.f32 %v2779, %v2781
        %3267 = vadd.xlane.f32.xlu0 %v3266
        %v3268 = vpop.xlane.xlu0 %3267
        %v3269 = vadd.f32 %v2783, %v2785
        %3270 = vadd.xlane.f32.xlu0 %v3269
        %v3271 = vpop.xlane.xlu0 %3270
        %v3272 = vadd.f32 %v2787, %v2789
        %3273 = vadd.xlane.f32.xlu0 %v3272
        %v3274 = vpop.xlane.xlu0 %3273
        %v3275 = vadd.f32 %v2791, %v2793
        %3276 = vadd.xlane.f32.xlu0 %v3275
        %v3277 = vpop.xlane.xlu0 %3276
        %v3278 = vadd.f32 %v2795, %v2797
        %3279 = vadd.xlane.f32.xlu0 %v3278
        %v3280 = vpop.xlane.xlu0 %3279
        %v3281 = vadd.f32 %v2799, %v2801
        %3282 = vadd.xlane.f32.xlu0 %v3281
        %v3283 = vpop.xlane.xlu0 %3282
        %v3284 = vadd.f32 %v2803, %v2805
        %3285 = vadd.xlane.f32.xlu0 %v3284
        %v3286 = vpop.xlane.xlu0 %3285
        %v3287 = vadd.f32 %v2807, %v2809
        %3288 = vadd.xlane.f32.xlu0 %v3287
        %v3289 = vpop.xlane.xlu0 %3288
        %v3290 = vadd.f32 %v2811, %v2813
        %3291 = vadd.xlane.f32.xlu0 %v3290
        %v3292 = vpop.xlane.xlu0 %3291
        %v3293 = vadd.f32 %v2815, %v2817
        %3294 = vadd.xlane.f32.xlu0 %v3293
        %v3295 = vpop.xlane.xlu0 %3294
        %v3296 = vadd.f32 %v2819, %v2821
        %3297 = vadd.xlane.f32.xlu0 %v3296
        %v3298 = vpop.xlane.xlu0 %3297
        %v3299 = vadd.f32 %v2823, %v2825
        %3300 = vadd.xlane.f32.xlu0 %v3299
        %v3301 = vpop.xlane.xlu0 %3300
        %v3302 = vadd.f32 %v2827, %v2829
        %3303 = vadd.xlane.f32.xlu0 %v3302
        %v3304 = vpop.xlane.xlu0 %3303
        %v3305 = vadd.f32 %v2831, %v2833
        %3306 = vadd.xlane.f32.xlu0 %v3305
        %v3307 = vpop.xlane.xlu0 %3306
        %v3308 = vadd.f32 %v2835, %v2837
        %3309 = vadd.xlane.f32.xlu0 %v3308
        %v3310 = vpop.xlane.xlu0 %3309
        %v3311 = vadd.f32 %v2839, %v2841
        %3312 = vadd.xlane.f32.xlu0 %v3311
        %v3313 = vpop.xlane.xlu0 %3312
        %v3314 = vadd.f32 %v2843, %v2845
        %3315 = vadd.xlane.f32.xlu0 %v3314
        %v3316 = vpop.xlane.xlu0 %3315
        %v3317 = vadd.f32 %v2847, %v2849
        %3318 = vadd.xlane.f32.xlu0 %v3317
        %v3319 = vpop.xlane.xlu0 %3318
        %v3320 = vadd.f32 %v2851, %v2853
        %3321 = vadd.xlane.f32.xlu0 %v3320
        %v3322 = vpop.xlane.xlu0 %3321
        %v3323 = vadd.f32 %v2855, %v2857
        %3324 = vadd.xlane.f32.xlu0 %v3323
        %v3325 = vpop.xlane.xlu0 %3324
        %v3326 = vadd.f32 %v2859, %v2861
        %3327 = vadd.xlane.f32.xlu0 %v3326
        %v3328 = vpop.xlane.xlu0 %3327
        %v3329 = vadd.f32 %v2863, %v2865
        %3330 = vadd.xlane.f32.xlu0 %v3329
        %v3331 = vpop.xlane.xlu0 %3330
        %v3332 = vadd.f32 %v2867, %v2869
        %3333 = vadd.xlane.f32.xlu0 %v3332
        %v3334 = vpop.xlane.xlu0 %3333
        %v3335 = vadd.f32 %v2871, %v2873
        %3336 = vadd.xlane.f32.xlu0 %v3335
        %v3337 = vpop.xlane.xlu0 %3336
        %v3338 = vadd.f32 %v2875, %v2877
        %3339 = vadd.xlane.f32.xlu0 %v3338
        %v3340 = vpop.xlane.xlu0 %3339
        %v3341 = vadd.f32 %v2879, %v2881
        %3342 = vadd.xlane.f32.xlu0 %v3341
        %v3343 = vpop.xlane.xlu0 %3342
        %v3344 = vadd.f32 %v2883, %v2885
        %3345 = vadd.xlane.f32.xlu0 %v3344
        %v3346 = vpop.xlane.xlu0 %3345
        %v3347 = vadd.f32 %v2887, %v2889
        %3348 = vadd.xlane.f32.xlu0 %v3347
        %v3349 = vpop.xlane.xlu0 %3348
        %v3350 = vadd.f32 %v2891, %v2893
        %3351 = vadd.xlane.f32.xlu0 %v3350
        %v3352 = vpop.xlane.xlu0 %3351
        %v3353 = vadd.f32 %v2895, %v2897
        %3354 = vadd.xlane.f32.xlu0 %v3353
        %v3355 = vpop.xlane.xlu0 %3354
        %v3356 = vadd.f32 %v2899, %v2901
        %3357 = vadd.xlane.f32.xlu0 %v3356
        %v3358 = vpop.xlane.xlu0 %3357
        %v3359 = vadd.f32 %v2903, %v2905
        %3360 = vadd.xlane.f32.xlu0 %v3359
        %v3361 = vpop.xlane.xlu0 %3360
        %v3362 = vadd.f32 %v2907, %v2909
        %3363 = vadd.xlane.f32.xlu0 %v3362
        %v3364 = vpop.xlane.xlu0 %3363
        %v3365 = vadd.f32 %v2911, %v2913
        %3366 = vadd.xlane.f32.xlu0 %v3365
        %v3367 = vpop.xlane.xlu0 %3366
        %v3368 = vadd.f32 %v2915, %v2917
        %3369 = vadd.xlane.f32.xlu0 %v3368
        %v3370 = vpop.xlane.xlu0 %3369
        %v3371 = vadd.f32 %v2919, %v2921
        %3372 = vadd.xlane.f32.xlu0 %v3371
        %v3373 = vpop.xlane.xlu0 %3372
        %v3374 = vadd.f32 %v2923, %v2925
        %3375 = vadd.xlane.f32.xlu0 %v3374
        %v3376 = vpop.xlane.xlu0 %3375
        %v3377 = vadd.f32 %v2927, %v2929
        %3378 = vadd.xlane.f32.xlu0 %v3377
        %v3379 = vpop.xlane.xlu0 %3378
        %v3380 = vadd.f32 %v2931, %v2933
        %3381 = vadd.xlane.f32.xlu0 %v3380
        %v3382 = vpop.xlane.xlu0 %3381
        %v3383 = vadd.f32 %v2935, %v2937
        %3384 = vadd.xlane.f32.xlu0 %v3383
        %v3385 = vpop.xlane.xlu0 %3384
        %v3386 = vadd.f32 %v2939, %v2941
        %3387 = vadd.xlane.f32.xlu0 %v3386
        %v3388 = vpop.xlane.xlu0 %3387
        %v3389 = vadd.f32 %v2943, %v2945
        %3390 = vadd.xlane.f32.xlu0 %v3389
        %v3391 = vpop.xlane.xlu0 %3390
        %v3392 = vadd.f32 %v2947, %v2949
        %3393 = vadd.xlane.f32.xlu0 %v3392
        %v3394 = vpop.xlane.xlu0 %3393
        %v3395 = vadd.f32 %v2951, %v2953
        %3396 = vadd.xlane.f32.xlu0 %v3395
        %v3397 = vpop.xlane.xlu0 %3396
        %v3398 = vadd.f32 %v2955, %v2957
        %3399 = vadd.xlane.f32.xlu0 %v3398
        %v3400 = vpop.xlane.xlu0 %3399
        %v3401 = vadd.f32 %v2959, %v2961
        %3402 = vadd.xlane.f32.xlu0 %v3401
        %v3403 = vpop.xlane.xlu0 %3402
        %v3404 = vadd.f32 %v2963, %v2965
        %3405 = vadd.xlane.f32.xlu0 %v3404
        %v3406 = vpop.xlane.xlu0 %3405
        %v3407 = vadd.f32 %v2967, %v2969
        %3408 = vadd.xlane.f32.xlu0 %v3407
        %v3409 = vpop.xlane.xlu0 %3408
        %v3410 = vadd.f32 %v2971, %v2973
        %3411 = vadd.xlane.f32.xlu0 %v3410
        %v3412 = vpop.xlane.xlu0 %3411
        %v3413 = vadd.f32 %v2975, %v2977
        %3414 = vadd.xlane.f32.xlu0 %v3413
        %v3415 = vpop.xlane.xlu0 %3414
        %v3416 = vadd.f32 %v2979, %v2981
        %3417 = vadd.xlane.f32.xlu0 %v3416
        %v3418 = vpop.xlane.xlu0 %3417
        %v3419 = vadd.f32 %v2983, %v2985
        %3420 = vadd.xlane.f32.xlu0 %v3419
        %v3421 = vpop.xlane.xlu0 %3420
        %v3422 = vadd.f32 %v2987, %v2989
        %3423 = vadd.xlane.f32.xlu0 %v3422
        %v3424 = vpop.xlane.xlu0 %3423
        %v3425 = vadd.f32 %v2991, %v2993
        %3426 = vadd.xlane.f32.xlu0 %v3425
        %v3427 = vpop.xlane.xlu0 %3426
        %v3428 = vadd.f32 %v2995, %v2997
        %3429 = vadd.xlane.f32.xlu0 %v3428
        %v3430 = vpop.xlane.xlu0 %3429
        %v3431 = vadd.f32 %v2999, %v3001
        %3432 = vadd.xlane.f32.xlu0 %v3431
        %v3433 = vpop.xlane.xlu0 %3432
        %v3434 = vadd.f32 %v3003, %v3005
        %3435 = vadd.xlane.f32.xlu0 %v3434
        %v3436 = vpop.xlane.xlu0 %3435
        %v3437 = vadd.f32 %v3007, %v3009
        %3438 = vadd.xlane.f32.xlu0 %v3437
        %v3439 = vpop.xlane.xlu0 %3438
        %v3440 = vadd.f32 %v3011, %v3013
        %3441 = vadd.xlane.f32.xlu0 %v3440
        %v3442 = vpop.xlane.xlu0 %3441
        %v3443 = vadd.f32 %v3015, %v3017
        %3444 = vadd.xlane.f32.xlu0 %v3443
        %v3445 = vpop.xlane.xlu0 %3444
        %v3446 = vadd.f32 %v3019, %v3021
        %3447 = vadd.xlane.f32.xlu0 %v3446
        %v3448 = vpop.xlane.xlu0 %3447
        %v3449 = vadd.f32 %v3023, %v3025
        %3450 = vadd.xlane.f32.xlu0 %v3449
        %v3451 = vpop.xlane.xlu0 %3450
        %v3452 = vadd.f32 %v3027, %v3029
        %3453 = vadd.xlane.f32.xlu0 %v3452
        %v3454 = vpop.xlane.xlu0 %3453
        %v3455 = vadd.f32 %v3031, %v3033
        %3456 = vadd.xlane.f32.xlu0 %v3455
        %v3457 = vpop.xlane.xlu0 %3456
        %v3458 = vadd.f32 %v3035, %v3037
        %3459 = vadd.xlane.f32.xlu0 %v3458
        %v3460 = vpop.xlane.xlu0 %3459
        %v3461 = vadd.f32 %v3039, %v3041
        %3462 = vadd.xlane.f32.xlu0 %v3461
        %v3463 = vpop.xlane.xlu0 %3462
        %v3464 = vadd.f32 %v3043, %v3045
        %3465 = vadd.xlane.f32.xlu0 %v3464
        %v3466 = vpop.xlane.xlu0 %3465
        %v3467 = vadd.f32 %v3047, %v3049
        %3468 = vadd.xlane.f32.xlu0 %v3467
        %v3469 = vpop.xlane.xlu0 %3468
        %v3470 = vadd.f32 %v3051, %v3053
        %3471 = vadd.xlane.f32.xlu0 %v3470
        %v3472 = vpop.xlane.xlu0 %3471
        %v3473 = vadd.f32 %v3055, %v3057
        %3474 = vadd.xlane.f32.xlu0 %v3473
        %v3475 = vpop.xlane.xlu0 %3474
        %v3476 = vadd.f32 %v3059, %v3061
        %3477 = vadd.xlane.f32.xlu0 %v3476
        %v3478 = vpop.xlane.xlu0 %3477
        %v3479 = vadd.f32 %v3063, %v3065
        %3480 = vadd.xlane.f32.xlu0 %v3479
        %v3481 = vpop.xlane.xlu0 %3480
        %v3482 = vadd.f32 %v3067, %v3069
        %3483 = vadd.xlane.f32.xlu0 %v3482
        %v3484 = vpop.xlane.xlu0 %3483
        %v3485 = vadd.f32 %v3071, %v3073
        %3486 = vadd.xlane.f32.xlu0 %v3485
        %v3487 = vpop.xlane.xlu0 %3486
        %v3488 = vadd.f32 %v3075, %v3077
        %3489 = vadd.xlane.f32.xlu0 %v3488
        %v3490 = vpop.xlane.xlu0 %3489
        %v3491 = vadd.f32 %v3079, %v3081
        %3492 = vadd.xlane.f32.xlu0 %v3491
        %v3493 = vpop.xlane.xlu0 %3492
        %v3494 = vadd.f32 %v3083, %v3085
        %3495 = vadd.xlane.f32.xlu0 %v3494
        %v3496 = vpop.xlane.xlu0 %3495
        %v3497 = vadd.f32 %v3087, %v3089
        %3498 = vadd.xlane.f32.xlu0 %v3497
        %v3499 = vpop.xlane.xlu0 %3498
        %v3500 = vadd.f32 %v3091, %v3093
        %3501 = vadd.xlane.f32.xlu0 %v3500
        %v3502 = vpop.xlane.xlu0 %3501
        %v3503 = vadd.f32 %v3095, %v3097
        %3504 = vadd.xlane.f32.xlu0 %v3503
        %v3505 = vpop.xlane.xlu0 %3504
        %v3506 = vadd.f32 %v3099, %v3101
        %3507 = vadd.xlane.f32.xlu0 %v3506
        %v3508 = vpop.xlane.xlu0 %3507
        %v3509 = vadd.f32 %v3103, %v3105
        %3510 = vadd.xlane.f32.xlu0 %v3509
        %v3511 = vpop.xlane.xlu0 %3510
        %v3512 = vadd.f32 %v3107, %v3109
        %3513 = vadd.xlane.f32.xlu0 %v3512
        %v3514 = vpop.xlane.xlu0 %3513
        %v3515 = vadd.f32 %v3111, %v3113
        %3516 = vadd.xlane.f32.xlu0 %v3515
        %v3517 = vpop.xlane.xlu0 %3516
        %v3518 = vadd.f32 %v3115, %v3117
        %3519 = vadd.xlane.f32.xlu0 %v3518
        %v3520 = vpop.xlane.xlu0 %3519
        %v3521 = vadd.f32 %v3119, %v3121
        %3522 = vadd.xlane.f32.xlu0 %v3521
        %v3523 = vpop.xlane.xlu0 %3522
        %v3524 = vadd.f32 %v3123, %v3125
        %3525 = vadd.xlane.f32.xlu0 %v3524
        %v3526 = vpop.xlane.xlu0 %3525
        %v3527 = vadd.f32 %v3127, %v3129
        %3528 = vadd.xlane.f32.xlu0 %v3527
        %v3529 = vpop.xlane.xlu0 %3528
        %v3530 = vadd.f32 %v3131, %v3133
        %3531 = vadd.xlane.f32.xlu0 %v3530
        %v3532 = vpop.xlane.xlu0 %3531
        %v3533 = vadd.f32 %v3135, %v3137
        %3534 = vadd.xlane.f32.xlu0 %v3533
        %v3535 = vpop.xlane.xlu0 %3534
        %v3536 = vadd.f32 %v3139, %v3141
        %3537 = vadd.xlane.f32.xlu0 %v3536
        %v3538 = vpop.xlane.xlu0 %3537
        %v3539 = vadd.f32 %v3143, %v3145
        %3540 = vadd.xlane.f32.xlu0 %v3539
        %v3541 = vpop.xlane.xlu0 %3540
        %v3542 = vadd.f32 %v3147, %v3149
        %3543 = vadd.xlane.f32.xlu0 %v3542
        %v3544 = vpop.xlane.xlu0 %3543
        %v3545 = vadd.f32 %v3151, %v3153
        %3546 = vadd.xlane.f32.xlu0 %v3545
        %v3547 = vpop.xlane.xlu0 %3546
        %v3548 = vadd.f32 %v3155, %v3157
        %3549 = vadd.xlane.f32.xlu0 %v3548
        %v3550 = vpop.xlane.xlu0 %3549
        %v3551 = vadd.f32 %v3159, %v3161
        %3552 = vadd.xlane.f32.xlu0 %v3551
        %v3553 = vpop.xlane.xlu0 %3552
        %v3554 = vadd.f32 %v3163, %v3165
        %3555 = vadd.xlane.f32.xlu0 %v3554
        %v3556 = vpop.xlane.xlu0 %3555
        %v3557 = vadd.f32 %v3167, %v3169
        %3558 = vadd.xlane.f32.xlu0 %v3557
        %v3559 = vpop.xlane.xlu0 %3558
        %v3560 = vadd.f32 %v3171, %v3173
        %3561 = vadd.xlane.f32.xlu0 %v3560
        %v3562 = vpop.xlane.xlu0 %3561
        %v3563 = vadd.f32 %v3175, %v3177
        %3564 = vadd.xlane.f32.xlu0 %v3563
        %v3565 = vpop.xlane.xlu0 %3564
        %v3566 = vadd.f32 %v3179, %v3181
        %3567 = vadd.xlane.f32.xlu0 %v3566
        %v3568 = vpop.xlane.xlu0 %3567
        %v3569 = vadd.f32 %v3183, %v3185
        %3570 = vadd.xlane.f32.xlu0 %v3569
        %v3571 = vpop.xlane.xlu0 %3570
        %v3572 = vadd.f32 %v3187, %v3189
        %3573 = vadd.xlane.f32.xlu0 %v3572
        %v3574 = vpop.xlane.xlu0 %3573
        %v3575 = vadd.f32 %v3191, %v3193
        %3576 = vadd.xlane.f32.xlu0 %v3575
        %v3577 = vpop.xlane.xlu0 %3576
        %v3578 = vrcp.pop %v3196
        %v3579 = vrcp.pop %v3199
        %v3580 = vrcp.pop %v3202
        %v3581 = vrcp.pop %v3205
        %v3582 = vrcp.pop %v3208
        %v3583 = vrcp.pop %v3211
        %v3584 = vrcp.pop %v3214
        %v3585 = vrcp.pop %v3217
        %v3586 = vrcp.pop %v3220
        %v3587 = vrcp.pop %v3223
        %v3588 = vrcp.pop %v3226
        %v3589 = vrcp.pop %v3229
        %v3590 = vrcp.pop %v3232
        %v3591 = vrcp.pop %v3235
        %v3592 = vrcp.pop %v3238
        %v3593 = vrcp.pop %v3241
        %v3594 = vrcp.pop %v3244
        %v3595 = vrcp.pop %v3247
        %v3596 = vrcp.pop %v3250
        %v3597 = vrcp.pop %v3253
        %v3598 = vrcp.pop %v3256
        %v3599 = vrcp.pop %v3259
        %v3600 = vrcp.pop %v3262
        %v3601 = vrcp.pop %v3265
        %v3602 = vrcp.pop %v3268
        %v3603 = vrcp.pop %v3271
        %v3604 = vrcp.pop %v3274
        %v3605 = vrcp.pop %v3277
        %v3606 = vrcp.pop %v3280
        %v3607 = vrcp.pop %v3283
        %v3608 = vrcp.pop %v3286
        %v3609 = vrcp.pop %v3289
        %v3610 = vrcp.pop %v3292
        %v3611 = vrcp.pop %v3295
        %v3612 = vrcp.pop %v3298
        %v3613 = vrcp.pop %v3301
        %v3614 = vrcp.pop %v3304
        %v3615 = vrcp.pop %v3307
        %v3616 = vrcp.pop %v3310
        %v3617 = vrcp.pop %v3313
        %v3618 = vrcp.pop %v3316
        %v3619 = vrcp.pop %v3319
        %v3620 = vrcp.pop %v3322
        %v3621 = vrcp.pop %v3325
        %v3622 = vrcp.pop %v3328
        %v3623 = vrcp.pop %v3331
        %v3624 = vrcp.pop %v3334
        %v3625 = vrcp.pop %v3337
        %v3626 = vrcp.pop %v3340
        %v3627 = vrcp.pop %v3343
        %v3628 = vrcp.pop %v3346
        %v3629 = vrcp.pop %v3349
        %v3630 = vrcp.pop %v3352
        %v3631 = vrcp.pop %v3355
        %v3632 = vrcp.pop %v3358
        %v3633 = vrcp.pop %v3361
        %v3634 = vrcp.pop %v3364
        %v3635 = vrcp.pop %v3367
        %v3636 = vrcp.pop %v3370
        %v3637 = vrcp.pop %v3373
        %v3638 = vrcp.pop %v3376
        %v3639 = vrcp.pop %v3379
        %v3640 = vrcp.pop %v3382
        %v3641 = vrcp.pop %v3385
        %v3642 = vrcp.pop %v3388
        %v3643 = vrcp.pop %v3391
        %v3644 = vrcp.pop %v3394
        %v3645 = vrcp.pop %v3397
        %v3646 = vrcp.pop %v3400
        %v3647 = vrcp.pop %v3403
        %v3648 = vrcp.pop %v3406
        %v3649 = vrcp.pop %v3409
        %v3650 = vrcp.pop %v3412
        %v3651 = vrcp.pop %v3415
        %v3652 = vrcp.pop %v3418
        %v3653 = vrcp.pop %v3421
        %v3654 = vrcp.pop %v3424
        %v3655 = vrcp.pop %v3427
        %v3656 = vrcp.pop %v3430
        %v3657 = vrcp.pop %v3433
        %v3658 = vrcp.pop %v3436
        %v3659 = vrcp.pop %v3439
        %v3660 = vrcp.pop %v3442
        %v3661 = vrcp.pop %v3445
        %v3662 = vrcp.pop %v3448
        %v3663 = vrcp.pop %v3451
        %v3664 = vrcp.pop %v3454
        %v3665 = vrcp.pop %v3457
        %v3666 = vrcp.pop %v3460
        %v3667 = vrcp.pop %v3463
        %v3668 = vrcp.pop %v3466
        %v3669 = vrcp.pop %v3469
        %v3670 = vrcp.pop %v3472
        %v3671 = vrcp.pop %v3475
        %v3672 = vrcp.pop %v3478
        %v3673 = vrcp.pop %v3481
        %v3674 = vrcp.pop %v3484
        %v3675 = vrcp.pop %v3487
        %v3676 = vrcp.pop %v3490
        %v3677 = vrcp.pop %v3493
        %v3678 = vrcp.pop %v3496
        %v3679 = vrcp.pop %v3499
        %v3680 = vrcp.pop %v3502
        %v3681 = vrcp.pop %v3505
        %v3682 = vrcp.pop %v3508
        %v3683 = vrcp.pop %v3511
        %v3684 = vrcp.pop %v3514
        %v3685 = vrcp.pop %v3517
        %v3686 = vrcp.pop %v3520
        %v3687 = vrcp.pop %v3523
        %v3688 = vrcp.pop %v3526
        %v3689 = vrcp.pop %v3529
        %v3690 = vrcp.pop %v3532
        %v3691 = vrcp.pop %v3535
        %v3692 = vrcp.pop %v3538
        %v3693 = vrcp.pop %v3541
        %v3694 = vrcp.pop %v3544
        %v3695 = vrcp.pop %v3547
        %v3696 = vrcp.pop %v3550
        %v3697 = vrcp.pop %v3553
        %v3698 = vrcp.pop %v3556
        %v3699 = vrcp.pop %v3559
        %v3700 = vrcp.pop %v3562
        %v3701 = vrcp.pop %v3565
        %v3702 = vrcp.pop %v3568
        %v3703 = vrcp.pop %v3571
        %v3704 = vrcp.pop %v3574
        %v3705 = vrcp.pop %v3577
        %v3706 = vmul.f32 %v2683, %v3578
        %v3707 = vmul.f32 %v2685, %v3578
        %v3708 = vmul.f32 %v2687, %v3579
        %v3709 = vmul.f32 %v2689, %v3579
        %v3710 = vmul.f32 %v2691, %v3580
        %v3711 = vmul.f32 %v2693, %v3580
        %v3712 = vmul.f32 %v2695, %v3581
        %v3713 = vmul.f32 %v2697, %v3581
        %v3714 = vmul.f32 %v2699, %v3582
        %v3715 = vmul.f32 %v2701, %v3582
        %v3716 = vmul.f32 %v2703, %v3583
        %v3717 = vmul.f32 %v2705, %v3583
        %v3718 = vmul.f32 %v2707, %v3584
        %v3719 = vmul.f32 %v2709, %v3584
        %v3720 = vmul.f32 %v2711, %v3585
        %v3721 = vmul.f32 %v2713, %v3585
        %v3722 = vmul.f32 %v2715, %v3586
        %v3723 = vmul.f32 %v2717, %v3586
        %v3724 = vmul.f32 %v2719, %v3587
        %v3725 = vmul.f32 %v2721, %v3587
        %v3726 = vmul.f32 %v2723, %v3588
        %v3727 = vmul.f32 %v2725, %v3588
        %v3728 = vmul.f32 %v2727, %v3589
        %v3729 = vmul.f32 %v2729, %v3589
        %v3730 = vmul.f32 %v2731, %v3590
        %v3731 = vmul.f32 %v2733, %v3590
        %v3732 = vmul.f32 %v2735, %v3591
        %v3733 = vmul.f32 %v2737, %v3591
        %v3734 = vmul.f32 %v2739, %v3592
        %v3735 = vmul.f32 %v2741, %v3592
        %v3736 = vmul.f32 %v2743, %v3593
        %v3737 = vmul.f32 %v2745, %v3593
        %v3738 = vmul.f32 %v2747, %v3594
        %v3739 = vmul.f32 %v2749, %v3594
        %v3740 = vmul.f32 %v2751, %v3595
        %v3741 = vmul.f32 %v2753, %v3595
        %v3742 = vmul.f32 %v2755, %v3596
        %v3743 = vmul.f32 %v2757, %v3596
        %v3744 = vmul.f32 %v2759, %v3597
        %v3745 = vmul.f32 %v2761, %v3597
        %v3746 = vmul.f32 %v2763, %v3598
        %v3747 = vmul.f32 %v2765, %v3598
        %v3748 = vmul.f32 %v2767, %v3599
        %v3749 = vmul.f32 %v2769, %v3599
        %v3750 = vmul.f32 %v2771, %v3600
        %v3751 = vmul.f32 %v2773, %v3600
        %v3752 = vmul.f32 %v2775, %v3601
        %v3753 = vmul.f32 %v2777, %v3601
        %v3754 = vmul.f32 %v2779, %v3602
        %v3755 = vmul.f32 %v2781, %v3602
        %v3756 = vmul.f32 %v2783, %v3603
        %v3757 = vmul.f32 %v2785, %v3603
        %v3758 = vmul.f32 %v2787, %v3604
        %v3759 = vmul.f32 %v2789, %v3604
        %v3760 = vmul.f32 %v2791, %v3605
        %v3761 = vmul.f32 %v2793, %v3605
        %v3762 = vmul.f32 %v2795, %v3606
        %v3763 = vmul.f32 %v2797, %v3606
        %v3764 = vmul.f32 %v2799, %v3607
        %v3765 = vmul.f32 %v2801, %v3607
        %v3766 = vmul.f32 %v2803, %v3608
        %v3767 = vmul.f32 %v2805, %v3608
        %v3768 = vmul.f32 %v2807, %v3609
        %v3769 = vmul.f32 %v2809, %v3609
        %v3770 = vmul.f32 %v2811, %v3610
        %v3771 = vmul.f32 %v2813, %v3610
        %v3772 = vmul.f32 %v2815, %v3611
        %v3773 = vmul.f32 %v2817, %v3611
        %v3774 = vmul.f32 %v2819, %v3612
        %v3775 = vmul.f32 %v2821, %v3612
        %v3776 = vmul.f32 %v2823, %v3613
        %v3777 = vmul.f32 %v2825, %v3613
        %v3778 = vmul.f32 %v2827, %v3614
        %v3779 = vmul.f32 %v2829, %v3614
        %v3780 = vmul.f32 %v2831, %v3615
        %v3781 = vmul.f32 %v2833, %v3615
        %v3782 = vmul.f32 %v2835, %v3616
        %v3783 = vmul.f32 %v2837, %v3616
        %v3784 = vmul.f32 %v2839, %v3617
        %v3785 = vmul.f32 %v2841, %v3617
        %v3786 = vmul.f32 %v2843, %v3618
        %v3787 = vmul.f32 %v2845, %v3618
        %v3788 = vmul.f32 %v2847, %v3619
        %v3789 = vmul.f32 %v2849, %v3619
        %v3790 = vmul.f32 %v2851, %v3620
        %v3791 = vmul.f32 %v2853, %v3620
        %v3792 = vmul.f32 %v2855, %v3621
        %v3793 = vmul.f32 %v2857, %v3621
        %v3794 = vmul.f32 %v2859, %v3622
        %v3795 = vmul.f32 %v2861, %v3622
        %v3796 = vmul.f32 %v2863, %v3623
        %v3797 = vmul.f32 %v2865, %v3623
        %v3798 = vmul.f32 %v2867, %v3624
        %v3799 = vmul.f32 %v2869, %v3624
        %v3800 = vmul.f32 %v2871, %v3625
        %v3801 = vmul.f32 %v2873, %v3625
        %v3802 = vmul.f32 %v2875, %v3626
        %v3803 = vmul.f32 %v2877, %v3626
        %v3804 = vmul.f32 %v2879, %v3627
        %v3805 = vmul.f32 %v2881, %v3627
        %v3806 = vmul.f32 %v2883, %v3628
        %v3807 = vmul.f32 %v2885, %v3628
        %v3808 = vmul.f32 %v2887, %v3629
        %v3809 = vmul.f32 %v2889, %v3629
        %v3810 = vmul.f32 %v2891, %v3630
        %v3811 = vmul.f32 %v2893, %v3630
        %v3812 = vmul.f32 %v2895, %v3631
        %v3813 = vmul.f32 %v2897, %v3631
        %v3814 = vmul.f32 %v2899, %v3632
        %v3815 = vmul.f32 %v2901, %v3632
        %v3816 = vmul.f32 %v2903, %v3633
        %v3817 = vmul.f32 %v2905, %v3633
        %v3818 = vmul.f32 %v2907, %v3634
        %v3819 = vmul.f32 %v2909, %v3634
        %v3820 = vmul.f32 %v2911, %v3635
        %v3821 = vmul.f32 %v2913, %v3635
        %v3822 = vmul.f32 %v2915, %v3636
        %v3823 = vmul.f32 %v2917, %v3636
        %v3824 = vmul.f32 %v2919, %v3637
        %v3825 = vmul.f32 %v2921, %v3637
        %v3826 = vmul.f32 %v2923, %v3638
        %v3827 = vmul.f32 %v2925, %v3638
        %v3828 = vmul.f32 %v2927, %v3639
        %v3829 = vmul.f32 %v2929, %v3639
        %v3830 = vmul.f32 %v2931, %v3640
        %v3831 = vmul.f32 %v2933, %v3640
        %v3832 = vmul.f32 %v2935, %v3641
        %v3833 = vmul.f32 %v2937, %v3641
        %v3834 = vmul.f32 %v2939, %v3642
        %v3835 = vmul.f32 %v2941, %v3642
        %v3836 = vmul.f32 %v2943, %v3643
        %v3837 = vmul.f32 %v2945, %v3643
        %v3838 = vmul.f32 %v2947, %v3644
        %v3839 = vmul.f32 %v2949, %v3644
        %v3840 = vmul.f32 %v2951, %v3645
        %v3841 = vmul.f32 %v2953, %v3645
        %v3842 = vmul.f32 %v2955, %v3646
        %v3843 = vmul.f32 %v2957, %v3646
        %v3844 = vmul.f32 %v2959, %v3647
        %v3845 = vmul.f32 %v2961, %v3647
        %v3846 = vmul.f32 %v2963, %v3648
        %v3847 = vmul.f32 %v2965, %v3648
        %v3848 = vmul.f32 %v2967, %v3649
        %v3849 = vmul.f32 %v2969, %v3649
        %v3850 = vmul.f32 %v2971, %v3650
        %v3851 = vmul.f32 %v2973, %v3650
        %v3852 = vmul.f32 %v2975, %v3651
        %v3853 = vmul.f32 %v2977, %v3651
        %v3854 = vmul.f32 %v2979, %v3652
        %v3855 = vmul.f32 %v2981, %v3652
        %v3856 = vmul.f32 %v2983, %v3653
        %v3857 = vmul.f32 %v2985, %v3653
        %v3858 = vmul.f32 %v2987, %v3654
        %v3859 = vmul.f32 %v2989, %v3654
        %v3860 = vmul.f32 %v2991, %v3655
        %v3861 = vmul.f32 %v2993, %v3655
        %v3862 = vmul.f32 %v2995, %v3656
        %v3863 = vmul.f32 %v2997, %v3656
        %v3864 = vmul.f32 %v2999, %v3657
        %v3865 = vmul.f32 %v3001, %v3657
        %v3866 = vmul.f32 %v3003, %v3658
        %v3867 = vmul.f32 %v3005, %v3658
        %v3868 = vmul.f32 %v3007, %v3659
        %v3869 = vmul.f32 %v3009, %v3659
        %v3870 = vmul.f32 %v3011, %v3660
        %v3871 = vmul.f32 %v3013, %v3660
        %v3872 = vmul.f32 %v3015, %v3661
        %v3873 = vmul.f32 %v3017, %v3661
        %v3874 = vmul.f32 %v3019, %v3662
        %v3875 = vmul.f32 %v3021, %v3662
        %v3876 = vmul.f32 %v3023, %v3663
        %v3877 = vmul.f32 %v3025, %v3663
        %v3878 = vmul.f32 %v3027, %v3664
        %v3879 = vmul.f32 %v3029, %v3664
        %v3880 = vmul.f32 %v3031, %v3665
        %v3881 = vmul.f32 %v3033, %v3665
        %v3882 = vmul.f32 %v3035, %v3666
        %v3883 = vmul.f32 %v3037, %v3666
        %v3884 = vmul.f32 %v3039, %v3667
        %v3885 = vmul.f32 %v3041, %v3667
        %v3886 = vmul.f32 %v3043, %v3668
        %v3887 = vmul.f32 %v3045, %v3668
        %v3888 = vmul.f32 %v3047, %v3669
        %v3889 = vmul.f32 %v3049, %v3669
        %v3890 = vmul.f32 %v3051, %v3670
        %v3891 = vmul.f32 %v3053, %v3670
        %v3892 = vmul.f32 %v3055, %v3671
        %v3893 = vmul.f32 %v3057, %v3671
        %v3894 = vmul.f32 %v3059, %v3672
        %v3895 = vmul.f32 %v3061, %v3672
        %v3896 = vmul.f32 %v3063, %v3673
        %v3897 = vmul.f32 %v3065, %v3673
        %v3898 = vmul.f32 %v3067, %v3674
        %v3899 = vmul.f32 %v3069, %v3674
        %v3900 = vmul.f32 %v3071, %v3675
        %v3901 = vmul.f32 %v3073, %v3675
        %v3902 = vmul.f32 %v3075, %v3676
        %v3903 = vmul.f32 %v3077, %v3676
        %v3904 = vmul.f32 %v3079, %v3677
        %v3905 = vmul.f32 %v3081, %v3677
        %v3906 = vmul.f32 %v3083, %v3678
        %v3907 = vmul.f32 %v3085, %v3678
        %v3908 = vmul.f32 %v3087, %v3679
        %v3909 = vmul.f32 %v3089, %v3679
        %v3910 = vmul.f32 %v3091, %v3680
        %v3911 = vmul.f32 %v3093, %v3680
        %v3912 = vmul.f32 %v3095, %v3681
        %v3913 = vmul.f32 %v3097, %v3681
        %v3914 = vmul.f32 %v3099, %v3682
        %v3915 = vmul.f32 %v3101, %v3682
        %v3916 = vmul.f32 %v3103, %v3683
        %v3917 = vmul.f32 %v3105, %v3683
        %v3918 = vmul.f32 %v3107, %v3684
        %v3919 = vmul.f32 %v3109, %v3684
        %v3920 = vmul.f32 %v3111, %v3685
        %v3921 = vmul.f32 %v3113, %v3685
        %v3922 = vmul.f32 %v3115, %v3686
        %v3923 = vmul.f32 %v3117, %v3686
        %v3924 = vmul.f32 %v3119, %v3687
        %v3925 = vmul.f32 %v3121, %v3687
        %v3926 = vmul.f32 %v3123, %v3688
        %v3927 = vmul.f32 %v3125, %v3688
        %v3928 = vmul.f32 %v3127, %v3689
        %v3929 = vmul.f32 %v3129, %v3689
        %v3930 = vmul.f32 %v3131, %v3690
        %v3931 = vmul.f32 %v3133, %v3690
        %v3932 = vmul.f32 %v3135, %v3691
        %v3933 = vmul.f32 %v3137, %v3691
        %v3934 = vmul.f32 %v3139, %v3692
        %v3935 = vmul.f32 %v3141, %v3692
        %v3936 = vmul.f32 %v3143, %v3693
        %v3937 = vmul.f32 %v3145, %v3693
        %v3938 = vmul.f32 %v3147, %v3694
        %v3939 = vmul.f32 %v3149, %v3694
        %v3940 = vmul.f32 %v3151, %v3695
        %v3941 = vmul.f32 %v3153, %v3695
        %v3942 = vmul.f32 %v3155, %v3696
        %v3943 = vmul.f32 %v3157, %v3696
        %v3944 = vmul.f32 %v3159, %v3697
        %v3945 = vmul.f32 %v3161, %v3697
        %v3946 = vmul.f32 %v3163, %v3698
        %v3947 = vmul.f32 %v3165, %v3698
        %v3948 = vmul.f32 %v3167, %v3699
        %v3949 = vmul.f32 %v3169, %v3699
        %v3950 = vmul.f32 %v3171, %v3700
        %v3951 = vmul.f32 %v3173, %v3700
        %v3952 = vmul.f32 %v3175, %v3701
        %v3953 = vmul.f32 %v3177, %v3701
        %v3954 = vmul.f32 %v3179, %v3702
        %v3955 = vmul.f32 %v3181, %v3702
        %v3956 = vmul.f32 %v3183, %v3703
        %v3957 = vmul.f32 %v3185, %v3703
        %v3958 = vmul.f32 %v3187, %v3704
        %v3959 = vmul.f32 %v3189, %v3704
        %v3960 = vmul.f32 %v3191, %v3705
        %v3961 = vmul.f32 %v3193, %v3705
        %v3962 = vpack.c.bf16 %v3708, %v3706
        %v3963 = vpack.c.bf16 %v3709, %v3707
        %v3964 = vpack.c.bf16 %v3712, %v3710
        %v3965 = vpack.c.bf16 %v3713, %v3711
        %v3966 = vpack.c.bf16 %v3716, %v3714
        %v3967 = vpack.c.bf16 %v3717, %v3715
        %v3968 = vpack.c.bf16 %v3720, %v3718
        %v3969 = vpack.c.bf16 %v3721, %v3719
        %v3970 = vpack.c.bf16 %v3724, %v3722
        %v3971 = vpack.c.bf16 %v3725, %v3723
        %v3972 = vpack.c.bf16 %v3728, %v3726
        %v3973 = vpack.c.bf16 %v3729, %v3727
        %v3974 = vpack.c.bf16 %v3732, %v3730
        %v3975 = vpack.c.bf16 %v3733, %v3731
        %v3976 = vpack.c.bf16 %v3736, %v3734
        %v3977 = vpack.c.bf16 %v3737, %v3735
        %v3978 = vpack.c.bf16 %v3740, %v3738
        %v3979 = vpack.c.bf16 %v3741, %v3739
        %v3980 = vpack.c.bf16 %v3744, %v3742
        %v3981 = vpack.c.bf16 %v3745, %v3743
        %v3982 = vpack.c.bf16 %v3748, %v3746
        %v3983 = vpack.c.bf16 %v3749, %v3747
        %v3984 = vpack.c.bf16 %v3752, %v3750
        %v3985 = vpack.c.bf16 %v3753, %v3751
        %v3986 = vpack.c.bf16 %v3756, %v3754
        %v3987 = vpack.c.bf16 %v3757, %v3755
        %v3988 = vpack.c.bf16 %v3760, %v3758
        %v3989 = vpack.c.bf16 %v3761, %v3759
        %v3990 = vpack.c.bf16 %v3764, %v3762
        %v3991 = vpack.c.bf16 %v3765, %v3763
        %v3992 = vpack.c.bf16 %v3768, %v3766
        %v3993 = vpack.c.bf16 %v3769, %v3767
        %v3994 = vpack.c.bf16 %v3772, %v3770
        %v3995 = vpack.c.bf16 %v3773, %v3771
        %v3996 = vpack.c.bf16 %v3776, %v3774
        %v3997 = vpack.c.bf16 %v3777, %v3775
        %v3998 = vpack.c.bf16 %v3780, %v3778
        %v3999 = vpack.c.bf16 %v3781, %v3779
        %v4000 = vpack.c.bf16 %v3784, %v3782
        %v4001 = vpack.c.bf16 %v3785, %v3783
        %v4002 = vpack.c.bf16 %v3788, %v3786
        %v4003 = vpack.c.bf16 %v3789, %v3787
        %v4004 = vpack.c.bf16 %v3792, %v3790
        %v4005 = vpack.c.bf16 %v3793, %v3791
        %v4006 = vpack.c.bf16 %v3796, %v3794
        %v4007 = vpack.c.bf16 %v3797, %v3795
        %v4008 = vpack.c.bf16 %v3800, %v3798
        %v4009 = vpack.c.bf16 %v3801, %v3799
        %v4010 = vpack.c.bf16 %v3804, %v3802
        %v4011 = vpack.c.bf16 %v3805, %v3803
        %v4012 = vpack.c.bf16 %v3808, %v3806
        %v4013 = vpack.c.bf16 %v3809, %v3807
        %v4014 = vpack.c.bf16 %v3812, %v3810
        %v4015 = vpack.c.bf16 %v3813, %v3811
        %v4016 = vpack.c.bf16 %v3816, %v3814
        %v4017 = vpack.c.bf16 %v3817, %v3815
        %v4018 = vpack.c.bf16 %v3820, %v3818
        %v4019 = vpack.c.bf16 %v3821, %v3819
        %v4020 = vpack.c.bf16 %v3824, %v3822
        %v4021 = vpack.c.bf16 %v3825, %v3823
        %v4022 = vpack.c.bf16 %v3828, %v3826
        %v4023 = vpack.c.bf16 %v3829, %v3827
        %v4024 = vpack.c.bf16 %v3832, %v3830
        %v4025 = vpack.c.bf16 %v3833, %v3831
        %v4026 = vpack.c.bf16 %v3836, %v3834
        %v4027 = vpack.c.bf16 %v3837, %v3835
        %v4028 = vpack.c.bf16 %v3840, %v3838
        %v4029 = vpack.c.bf16 %v3841, %v3839
        %v4030 = vpack.c.bf16 %v3844, %v3842
        %v4031 = vpack.c.bf16 %v3845, %v3843
        %v4032 = vpack.c.bf16 %v3848, %v3846
        %v4033 = vpack.c.bf16 %v3849, %v3847
        %v4034 = vpack.c.bf16 %v3852, %v3850
        %v4035 = vpack.c.bf16 %v3853, %v3851
        %v4036 = vpack.c.bf16 %v3856, %v3854
        %v4037 = vpack.c.bf16 %v3857, %v3855
        %v4038 = vpack.c.bf16 %v3860, %v3858
        %v4039 = vpack.c.bf16 %v3861, %v3859
        %v4040 = vpack.c.bf16 %v3864, %v3862
        %v4041 = vpack.c.bf16 %v3865, %v3863
        %v4042 = vpack.c.bf16 %v3868, %v3866
        %v4043 = vpack.c.bf16 %v3869, %v3867
        %v4044 = vpack.c.bf16 %v3872, %v3870
        %v4045 = vpack.c.bf16 %v3873, %v3871
        %v4046 = vpack.c.bf16 %v3876, %v3874
        %v4047 = vpack.c.bf16 %v3877, %v3875
        %v4048 = vpack.c.bf16 %v3880, %v3878
        %v4049 = vpack.c.bf16 %v3881, %v3879
        %v4050 = vpack.c.bf16 %v3884, %v3882
        %v4051 = vpack.c.bf16 %v3885, %v3883
        %v4052 = vpack.c.bf16 %v3888, %v3886
        %v4053 = vpack.c.bf16 %v3889, %v3887
        %v4054 = vpack.c.bf16 %v3892, %v3890
        %v4055 = vpack.c.bf16 %v3893, %v3891
        %v4056 = vpack.c.bf16 %v3896, %v3894
        %v4057 = vpack.c.bf16 %v3897, %v3895
        %v4058 = vpack.c.bf16 %v3900, %v3898
        %v4059 = vpack.c.bf16 %v3901, %v3899
        %v4060 = vpack.c.bf16 %v3904, %v3902
        %v4061 = vpack.c.bf16 %v3905, %v3903
        %v4062 = vpack.c.bf16 %v3908, %v3906
        %v4063 = vpack.c.bf16 %v3909, %v3907
        %v4064 = vpack.c.bf16 %v3912, %v3910
        %v4065 = vpack.c.bf16 %v3913, %v3911
        %v4066 = vpack.c.bf16 %v3916, %v3914
        %v4067 = vpack.c.bf16 %v3917, %v3915
        %v4068 = vpack.c.bf16 %v3920, %v3918
        %v4069 = vpack.c.bf16 %v3921, %v3919
        %v4070 = vpack.c.bf16 %v3924, %v3922
        %v4071 = vpack.c.bf16 %v3925, %v3923
        %v4072 = vpack.c.bf16 %v3928, %v3926
        %v4073 = vpack.c.bf16 %v3929, %v3927
        %v4074 = vpack.c.bf16 %v3932, %v3930
        %v4075 = vpack.c.bf16 %v3933, %v3931
        %v4076 = vpack.c.bf16 %v3936, %v3934
        %v4077 = vpack.c.bf16 %v3937, %v3935
        %v4078 = vpack.c.bf16 %v3940, %v3938
        %v4079 = vpack.c.bf16 %v3941, %v3939
        %v4080 = vpack.c.bf16 %v3944, %v3942
        %v4081 = vpack.c.bf16 %v3945, %v3943
        %v4082 = vpack.c.bf16 %v3948, %v3946
        %v4083 = vpack.c.bf16 %v3949, %v3947
        %v4084 = vpack.c.bf16 %v3952, %v3950
        %v4085 = vpack.c.bf16 %v3953, %v3951
        %v4086 = vpack.c.bf16 %v3956, %v3954
        %v4087 = vpack.c.bf16 %v3957, %v3955
        %v4088 = vpack.c.bf16 %v3960, %v3958
        %v4089 = vpack.c.bf16 %v3961, %v3959
        %v4090 = vpack.c.b16 %v636, %v636
        %v4091 = vpack.c.b16 %v637, %v637
        %4094 = vmatprep.subr.bf16.mxu0 %v3963
        %4095 = vmatpush1.bf16.xpose.msra.mxu0 %v3962
        %4096 = vmatprep.subr.bf16.mxu0 %v3965
        %4097 = vmatpush1.bf16.xpose.msra.mxu0 %v3964
        %4098 = vmatprep.subr.bf16.mxu0 %v3967
        %4099 = vmatpush1.bf16.xpose.msra.mxu0 %v3966
        %4100 = vmatprep.subr.bf16.mxu0 %v3969
        %4101 = vmatpush1.bf16.xpose.msra.mxu0 %v3968
        %4102 = vmatprep.subr.bf16.mxu0 %v3971
        %4103 = vmatpush1.bf16.xpose.msra.mxu0 %v3970
        %4104 = vmatprep.subr.bf16.mxu0 %v3973
        %4105 = vmatpush1.bf16.xpose.msra.mxu0 %v3972
        %4106 = vmatprep.subr.bf16.mxu0 %v3975
        %4107 = vmatpush1.bf16.xpose.msra.mxu0 %v3974
        %4108 = vmatprep.subr.bf16.mxu0 %v3977
        %4109 = vmatpush1.bf16.xpose.msra.mxu0 %v3976
        %4110 = vmatprep.subr.bf16.mxu0 %v3979
        %4111 = vmatpush1.bf16.xpose.msra.mxu0 %v3978
        %4112 = vmatprep.subr.bf16.mxu0 %v3981
        %4113 = vmatpush1.bf16.xpose.msra.mxu0 %v3980
        %4114 = vmatprep.subr.bf16.mxu0 %v3983
        %4115 = vmatpush1.bf16.xpose.msra.mxu0 %v3982
        %4116 = vmatprep.subr.bf16.mxu0 %v3985
        %4117 = vmatpush1.bf16.xpose.msra.mxu0 %v3984
        %4118 = vmatprep.subr.bf16.mxu0 %v3987
        %4119 = vmatpush1.bf16.xpose.msra.mxu0 %v3986
        %4120 = vmatprep.subr.bf16.mxu0 %v3989
        %4121 = vmatpush1.bf16.xpose.msra.mxu0 %v3988
        %4122 = vmatprep.subr.bf16.mxu0 %v3991
        %4123 = vmatpush1.bf16.xpose.msra.mxu0 %v3990
        %4124 = vmatprep.subr.bf16.mxu0 %v3993
        %4125 = vmatpush1.bf16.xpose.msra.mxu0 %v3992
        %4126 = vmatprep.mubr.bf16.mxu0 %v4091
        %4127 = vmatmul.mubr.bf16.gmra.mrb[0].mxu0 %v4090
        %v4128 = vpop.f32.mrb[0].mxu0
        %v4129 = vadd.f32 0.0, %v4128
        %v4130 = vpop.f32.mrb[0].mxu0
        %v4131 = vadd.f32 0.0, %v4130
        %v4132 = vpop.f32.mrb[0].mxu0
        %v4133 = vpop.f32.mrb[0].mxu0
        %4134 = vdwg.mxu0
        %v4135 = vpack.c.b16 %v638, %v638
        %v4136 = vpack.c.b16 %v639, %v639
        %4139 = vmatprep.subr.bf16.mxu0 %v3995
        %4140 = vmatpush1.bf16.xpose.msra.mxu0 %v3994
        %4141 = vmatprep.subr.bf16.mxu0 %v3997
        %4142 = vmatpush1.bf16.xpose.msra.mxu0 %v3996
        %4143 = vmatprep.subr.bf16.mxu0 %v3999
        %4144 = vmatpush1.bf16.xpose.msra.mxu0 %v3998
        %4145 = vmatprep.subr.bf16.mxu0 %v4001
        %4146 = vmatpush1.bf16.xpose.msra.mxu0 %v4000
        %4147 = vmatprep.subr.bf16.mxu0 %v4003
        %4148 = vmatpush1.bf16.xpose.msra.mxu0 %v4002
        %4149 = vmatprep.subr.bf16.mxu0 %v4005
        %4150 = vmatpush1.bf16.xpose.msra.mxu0 %v4004
        %4151 = vmatprep.subr.bf16.mxu0 %v4007
        %4152 = vmatpush1.bf16.xpose.msra.mxu0 %v4006
        %4153 = vmatprep.subr.bf16.mxu0 %v4009
        %4154 = vmatpush1.bf16.xpose.msra.mxu0 %v4008
        %4155 = vmatprep.subr.bf16.mxu0 %v4011
        %4156 = vmatpush1.bf16.xpose.msra.mxu0 %v4010
        %4157 = vmatprep.subr.bf16.mxu0 %v4013
        %4158 = vmatpush1.bf16.xpose.msra.mxu0 %v4012
        %4159 = vmatprep.subr.bf16.mxu0 %v4015
        %4160 = vmatpush1.bf16.xpose.msra.mxu0 %v4014
        %4161 = vmatprep.subr.bf16.mxu0 %v4017
        %4162 = vmatpush1.bf16.xpose.msra.mxu0 %v4016
        %4163 = vmatprep.subr.bf16.mxu0 %v4019
        %4164 = vmatpush1.bf16.xpose.msra.mxu0 %v4018
        %4165 = vmatprep.subr.bf16.mxu0 %v4021
        %4166 = vmatpush1.bf16.xpose.msra.mxu0 %v4020
        %4167 = vmatprep.subr.bf16.mxu0 %v4023
        %4168 = vmatpush1.bf16.xpose.msra.mxu0 %v4022
        %4169 = vmatprep.subr.bf16.mxu0 %v4025
        %4170 = vmatpush1.bf16.xpose.msra.mxu0 %v4024
        %4171 = vmatprep.mubr.bf16.mxu0 %v4136
        %4172 = vmatmul.mubr.bf16.gmra.mrb[0].mxu0 %v4135
        %v4173 = vpop.f32.mrb[0].mxu0
        %v4174 = vadd.f32 0.0, %v4173
        %v4175 = vpop.f32.mrb[0].mxu0
        %v4176 = vadd.f32 0.0, %v4175
        %v4177 = vpop.f32.mrb[0].mxu0
        %v4178 = vpop.f32.mrb[0].mxu0
        %4179 = vdwg.mxu0
        %v4180 = vpack.c.b16 %v640, %v640
        %v4181 = vpack.c.b16 %v641, %v641
        %4184 = vmatprep.subr.bf16.mxu0 %v4027
        %4185 = vmatpush1.bf16.xpose.msra.mxu0 %v4026
        %4186 = vmatprep.subr.bf16.mxu0 %v4029
        %4187 = vmatpush1.bf16.xpose.msra.mxu0 %v4028
        %4188 = vmatprep.subr.bf16.mxu0 %v4031
        %4189 = vmatpush1.bf16.xpose.msra.mxu0 %v4030
        %4190 = vmatprep.subr.bf16.mxu0 %v4033
        %4191 = vmatpush1.bf16.xpose.msra.mxu0 %v4032
        %4192 = vmatprep.subr.bf16.mxu0 %v4035
        %4193 = vmatpush1.bf16.xpose.msra.mxu0 %v4034
        %4194 = vmatprep.subr.bf16.mxu0 %v4037
        %4195 = vmatpush1.bf16.xpose.msra.mxu0 %v4036
        %4196 = vmatprep.subr.bf16.mxu0 %v4039
        %4197 = vmatpush1.bf16.xpose.msra.mxu0 %v4038
        %4198 = vmatprep.subr.bf16.mxu0 %v4041
        %4199 = vmatpush1.bf16.xpose.msra.mxu0 %v4040
        %4200 = vmatprep.subr.bf16.mxu0 %v4043
        %4201 = vmatpush1.bf16.xpose.msra.mxu0 %v4042
        %4202 = vmatprep.subr.bf16.mxu0 %v4045
        %4203 = vmatpush1.bf16.xpose.msra.mxu0 %v4044
        %4204 = vmatprep.subr.bf16.mxu0 %v4047
        %4205 = vmatpush1.bf16.xpose.msra.mxu0 %v4046
        %4206 = vmatprep.subr.bf16.mxu0 %v4049
        %4207 = vmatpush1.bf16.xpose.msra.mxu0 %v4048
        %4208 = vmatprep.subr.bf16.mxu0 %v4051
        %4209 = vmatpush1.bf16.xpose.msra.mxu0 %v4050
        %4210 = vmatprep.subr.bf16.mxu0 %v4053
        %4211 = vmatpush1.bf16.xpose.msra.mxu0 %v4052
        %4212 = vmatprep.subr.bf16.mxu0 %v4055
        %4213 = vmatpush1.bf16.xpose.msra.mxu0 %v4054
        %4214 = vmatprep.subr.bf16.mxu0 %v4057
        %4215 = vmatpush1.bf16.xpose.msra.mxu0 %v4056
        %4216 = vmatprep.mubr.bf16.mxu0 %v4181
        %4217 = vmatmul.mubr.bf16.gmra.mrb[0].mxu0 %v4180
        %v4218 = vpop.f32.mrb[0].mxu0
        %v4219 = vadd.f32 0.0, %v4218
        %v4220 = vpop.f32.mrb[0].mxu0
        %v4221 = vadd.f32 0.0, %v4220
        %v4222 = vpop.f32.mrb[0].mxu0
        %v4223 = vpop.f32.mrb[0].mxu0
        %4224 = vdwg.mxu0
        %v4225 = vpack.c.b16 %v642, %v642
        %v4226 = vpack.c.b16 %v643, %v643
        %4229 = vmatprep.subr.bf16.mxu0 %v4059
        %4230 = vmatpush1.bf16.xpose.msra.mxu0 %v4058
        %4231 = vmatprep.subr.bf16.mxu0 %v4061
        %4232 = vmatpush1.bf16.xpose.msra.mxu0 %v4060
        %4233 = vmatprep.subr.bf16.mxu0 %v4063
        %4234 = vmatpush1.bf16.xpose.msra.mxu0 %v4062
        %4235 = vmatprep.subr.bf16.mxu0 %v4065
        %4236 = vmatpush1.bf16.xpose.msra.mxu0 %v4064
        %4237 = vmatprep.subr.bf16.mxu0 %v4067
        %4238 = vmatpush1.bf16.xpose.msra.mxu0 %v4066
        %4239 = vmatprep.subr.bf16.mxu0 %v4069
        %4240 = vmatpush1.bf16.xpose.msra.mxu0 %v4068
        %4241 = vmatprep.subr.bf16.mxu0 %v4071
        %4242 = vmatpush1.bf16.xpose.msra.mxu0 %v4070
        %4243 = vmatprep.subr.bf16.mxu0 %v4073
        %4244 = vmatpush1.bf16.xpose.msra.mxu0 %v4072
        %4245 = vmatprep.subr.bf16.mxu0 %v4075
        %4246 = vmatpush1.bf16.xpose.msra.mxu0 %v4074
        %4247 = vmatprep.subr.bf16.mxu0 %v4077
        %4248 = vmatpush1.bf16.xpose.msra.mxu0 %v4076
        %4249 = vmatprep.subr.bf16.mxu0 %v4079
        %4250 = vmatpush1.bf16.xpose.msra.mxu0 %v4078
        %4251 = vmatprep.subr.bf16.mxu0 %v4081
        %4252 = vmatpush1.bf16.xpose.msra.mxu0 %v4080
        %4253 = vmatprep.subr.bf16.mxu0 %v4083
        %4254 = vmatpush1.bf16.xpose.msra.mxu0 %v4082
        %4255 = vmatprep.subr.bf16.mxu0 %v4085
        %4256 = vmatpush1.bf16.xpose.msra.mxu0 %v4084
        %4257 = vmatprep.subr.bf16.mxu0 %v4087
        %4258 = vmatpush1.bf16.xpose.msra.mxu0 %v4086
        %4259 = vmatprep.subr.bf16.mxu0 %v4089
        %4260 = vmatpush1.bf16.xpose.msra.mxu0 %v4088
        %4261 = vmatprep.mubr.bf16.mxu0 %v4226
        %4262 = vmatmul.mubr.bf16.gmra.mrb[0].mxu0 %v4225
        %v4263 = vpop.f32.mrb[0].mxu0
        %v4264 = vadd.f32 0.0, %v4263
        %v4265 = vpop.f32.mrb[0].mxu0
        %v4266 = vadd.f32 0.0, %v4265
        %v4267 = vpop.f32.mrb[0].mxu0
        %v4268 = vpop.f32.mrb[0].mxu0
        %4269 = vdwg.mxu0
        %v4270 = vld [vmem:[#allocation10] sm:$0xf]
        %v4271 = vld [vmem:[#allocation10 + $0x4] sm:$0xf]
        %v4272 = vld [vmem:[#allocation10 + $0x8] sm:$0xf]
        %v4273 = vld [vmem:[#allocation10 + $0xc] sm:$0xf]
        %v4274 = vpack.c.bf16 %v4174, %v4129
        %v4275 = vpack.c.bf16 %v4176, %v4131
        %v4276 = vpack.c.bf16 %v4264, %v4219
        %v4277 = vpack.c.bf16 %v4266, %v4221
        %v4278 = vld [vmem:[#allocation11] sm:$0xff]
        %v4279 = vld [vmem:[#allocation11 + $0x8] sm:$0xff]
        %v4280 = vld [vmem:[#allocation11 + $0x10] sm:$0xff]
        %v4281 = vld [vmem:[#allocation11 + $0x18] sm:$0xff]
        %4283 = vset.pattern.permute.xlu0 0
        %4284 = vperm.xlu0 %4283, %v4278
        %v4285 = vpop.permute.xlu0 %4284
        %4288 = vset.pattern.permute.xlu0 0
        %4289 = vperm.xlu0 %4288, %v4279
        %v4290 = vpop.permute.xlu0 %4289
        %4293 = vset.pattern.permute.xlu0 0
        %4294 = vperm.xlu0 %4293, %v4280
        %v4295 = vpop.permute.xlu0 %4294
        %4298 = vset.pattern.permute.xlu0 0
        %4299 = vperm.xlu0 %4298, %v4281
        %v4300 = vpop.permute.xlu0 %4299
        %v4306 = vunpack.c.l.b16 %v4270
        %v4307 = vunpack.c.l.b16 %v4271
        %v4308 = vunpack.c.l.b16 %v4272
        %v4309 = vunpack.c.l.b16 %v4273
        %v4310 = vpack.c.b16 %v4307, %v4306
        %v4311 = vpack.c.b16 %v4309, %v4308
        %v4313 = vsel %vm484, %v4310, 0
        %v4316 = vsel %vm484, %v4311, 0
        %4318 = vmatprep.subr.bf16.mxu0 %v4275
        %4319 = vmatpush1.bf16.msra.mxu0 %v4274
        %4320 = vmatprep.subr.bf16.mxu0 %v4277
        %4321 = vmatpush1.bf16.msra.mxu0 %v4276
        %4322 = vmatprep.subr.bf16.mxu0 0
        %4323 = vmatpush1.bf16.msra.mxu0 0
        %4324 = vmatprep.subr.bf16.mxu0 0
        %4325 = vmatpush1.bf16.msra.mxu0 0
        %4326 = vmatprep.subr.bf16.mxu0 0
        %4327 = vmatpush1.bf16.msra.mxu0 0
        %4328 = vmatprep.subr.bf16.mxu0 0
        %4329 = vmatpush1.bf16.msra.mxu0 0
        %4330 = vmatprep.subr.bf16.mxu0 0
        %4331 = vmatpush1.bf16.msra.mxu0 0
        %4332 = vmatprep.subr.bf16.mxu0 0
        %4333 = vmatpush1.bf16.msra.mxu0 0
        %4334 = vmatprep.subr.bf16.mxu0 0
        %4335 = vmatpush1.bf16.msra.mxu0 0
        %4336 = vmatprep.subr.bf16.mxu0 0
        %4337 = vmatpush1.bf16.msra.mxu0 0
        %4338 = vmatprep.subr.bf16.mxu0 0
        %4339 = vmatpush1.bf16.msra.mxu0 0
        %4340 = vmatprep.subr.bf16.mxu0 0
        %4341 = vmatpush1.bf16.msra.mxu0 0
        %4342 = vmatprep.subr.bf16.mxu0 0
        %4343 = vmatpush1.bf16.msra.mxu0 0
        %4344 = vmatprep.subr.bf16.mxu0 0
        %4345 = vmatpush1.bf16.msra.mxu0 0
        %4346 = vmatprep.subr.bf16.mxu0 0
        %4347 = vmatpush1.bf16.msra.mxu0 0
        %4348 = vmatprep.subr.bf16.mxu0 0
        %4349 = vmatpush1.bf16.msra.mxu0 0
        %4350 = vmatprep.mubr.bf16.mxu0 0
        %4351 = vmatmul.mubr.bf16.gmra.mrb[0].mxu0 %v4313
        %v4352 = vpop.f32.mrb[0].mxu0
        %v4353 = vadd.f32 %v4285, %v4352
        %v4354 = vpop.f32.mrb[0].mxu0
        %v4355 = vadd.f32 %v4285, %v4354
        %v4356 = vpop.f32.mrb[0].mxu0
        %v4357 = vadd.f32 %v4290, %v4356
        %v4358 = vpop.f32.mrb[0].mxu0
        %v4359 = vadd.f32 %v4290, %v4358
        %4360 = vmatprep.mubr.bf16.mxu0 0
        %4361 = vmatmul.mubr.bf16.gmra.mrb[0].mxu0 %v4316
        %v4362 = vpop.f32.mrb[0].mxu0
        %v4363 = vadd.f32 %v4295, %v4362
        %v4364 = vpop.f32.mrb[0].mxu0
        %v4365 = vadd.f32 %v4295, %v4364
        %v4366 = vpop.f32.mrb[0].mxu0
        %v4367 = vadd.f32 %v4300, %v4366
        %v4368 = vpop.f32.mrb[0].mxu0
        %v4369 = vadd.f32 %v4300, %v4368
        %4370 = vdwg.mxu0
        %4371 = vst [vmem:[%s342] sm:$0xff] %v4353
        %4372 = vst [vmem:[%s342 + $0x8] sm:$0xff] %v4355
        %4373 = vst [vmem:[%s342 + $0x10] sm:$0xff] %v4357
        %4374 = vst [vmem:[%s342 + $0x18] sm:$0xff] %v4359
        %4375 = vst [vmem:[%s342 + $0x20] sm:$0xff] %v4363
        %4376 = vst [vmem:[%s342 + $0x28] sm:$0xff] %v4365
        %4377 = vst [vmem:[%s342 + $0x30] sm:$0xff] %v4367
        %4378 = vst [vmem:[%s342 + $0x38] sm:$0xff] %v4369
        %s4379 = sand.u32 %s165, 1
        %s4380 = scalar_lea.sflag [#allocation4], %s4379
        %s4381 = sand.u32 %s165, 1
        %s4382 = smul.addr %s4381, 64
        %s4383 = scalar_lea.vmem [#allocation13], %s4382
        // Predicated region
        $region69: #{tpu_custom_call.1} parent=43 // pred_check
          %p4384 = pneg %p175
        $region70: #{tpu_custom_call.1} parent=43 // pred_check_branch
          %4386 = sbr.rel (%p4384) target = $region72
        $region71: #{tpu_custom_call.1} parent=43 // pred_region
          %s4387 = smul.u32 2, %s26
          %s4389 = ssub.s32 1024, 1024
          %4390 = vsyncadd %s4380, %s4389
          %s4391 = smul.addr %s4387, 128
          %s4392 = scalar_lea.hbm %s6, %s4391
          %s4393 = sshll.u32 %s4383, 4
          %s4394 = int_to_ptr.vmem [resolvable:$true] %s4393
          %4399 = dma.vmem_to_hbm [thread:$0]  %s4394, 1024, %s4392, %s4380, 256, 1024, 16
        $region72: #{tpu_custom_call.1} parent=43 // pred_fallthru
          _
      $region44: #{tpu_custom_call.1} parent=5 // pred_fallthru
        _
      %p4400 = scmp.le.s32.totalorder 2, %s21
      // Predicated region
      $region73: #{tpu_custom_call.1} parent=5 // pred_check
        %p4401 = pneg %p4400
      $region74: #{tpu_custom_call.1} parent=5 // pred_check_branch
        %4403 = sbr.rel (%p4401) target = $region76
      $region75: #{tpu_custom_call.1} parent=5 // pred_region
        %s4404 = ssub.s32 %s21, 2
        // Predicated region
        $region77: #{tpu_custom_call.1} parent=75 // pred_check
          %p4405 = pneg %p181
        $region78: #{tpu_custom_call.1} parent=75 // pred_check_branch
          %4407 = sbr.rel (%p4405) target = $region80
        $region79: #{tpu_custom_call.1} parent=75 // pred_region
          %s4408 = sand.u32 %s166, 1
          %s4409 = scalar_lea.sflag [#allocation4], %s4408
          %s4410 = sand.u32 %s166, 1
          %s4411 = smul.addr %s4410, 64
          %s4412 = scalar_lea.vmem [#allocation13], %s4411
          %4413 = dma.done %s4409, 1024
        $region80: #{tpu_custom_call.1} parent=75 // pred_fallthru
          _
      $region76: #{tpu_custom_call.1} parent=5 // pred_fallthru
        _
    $region6: #{tpu_custom_call.1} parent=1 // loop_footer
      %s25 = sadd.s32 1, %s21
    $region7: #{tpu_custom_call.1} parent=1 // loop_footer_branch
      %20 = sbr.rel target = $region3
    $region8: #{tpu_custom_call.1} parent=1 // loop_exit
      _
    %4414 = vsyncpa [#allocation3], 1
    %s4415 = scalar_lea.sflag [#allocation3], 1
    %4416 = vsyncpa %s4415, 1
    %4417 = vsyncpa [#allocation6], 1
    %4418 = vsyncpa [#allocation9], 1
    %4419 = vsyncpa [#allocation12], 1
    %4420 = vsyncpa [#allocation4], 1
    %s4421 = scalar_lea.sflag [#allocation4], 1
    %4422 = vsyncpa %s4421, 1

// kernel: tpu_custom_call.1
$region0: #{tpu_custom_call.1}
  #allocation0 [shape = 'u32[]', space=smem, size = 0x4, offset = 0x4, fixed_abs, tag = 'smem constant byte address 0x4 - core index']
  #allocation1 [shape = 'u32[144,128]{1,0:T(1,128)}', space=vmem, size = 0x12000, scoped, tag = 'internal scratch']
  %s0 = inlined_call_operand.hbm [shape: bf16[32,1024], index: 0, kind: input, shape index: {}]
  %s1 = inlined_call_operand.hbm [shape: bf16[96,32], index: 1, kind: input, shape index: {}]
  %s2 = inlined_call_operand.hbm [shape: f32[96,1], index: 2, kind: input, shape index: {}]
  %s3 = inlined_call_operand.hbm [shape: f32[4,256,256], index: 3, kind: input, shape index: {}]
  %s4 = inlined_call_operand.hbm [shape: bf16[32,32], index: 4, kind: input, shape index: {}]
  %s5 = inlined_call_operand.hbm [shape: f32[32,1], index: 5, kind: input, shape index: {}]
  %s6 = inlined_call_operand.hbm [shape: f32[32,1024], index: 6, kind: output, shape index: {}]
  %s7 = sld [smem:[#allocation0]]
  $region81: #{tpu_custom_call.1} parent=0
    _
  %s9 = ssub.s32 1, %s7
  %s10 = scalar_select 0, %s9, %s7
  $region1: #{tpu_custom_call.1} parent=0
    #allocation2 [shape = 'u8[32768]{0}', space=vmem, size = 0x8000, scoped, tag = 'input window, operand 0']
    #allocation3 [shape = 's32[2]{0}', space=sflag, size = 0x8, scoped, tag = 'scoped memory for tpu_custom_call.1']
    #allocation4 [shape = 's32[2]{0}', space=sflag, size = 0x8, scoped, tag = 'scoped memory for tpu_custom_call.1']
    #allocation5 [shape = 'u8[24576]{0}', space=vmem, size = 0x6000, scoped, tag = 'input window, operand 1, single buffered']
    #allocation6 [shape = 's32[1]{0}', space=sflag, size = 0x4, scoped, tag = 'scoped memory for tpu_custom_call.1']
    #allocation7 [shape = 'u8[49152]{0}', space=vmem, size = 0xc000, scoped, tag = 'input window, operand 2, single buffered']
    #allocation8 [shape = 'u8[1048576]{0}', space=vmem, size = 0x100000, scoped, tag = 'input window, operand 3, single buffered']
    #allocation9 [shape = 's32[1]{0}', space=sflag, size = 0x4, scoped, tag = 'scoped memory for tpu_custom_call.1']
    #allocation10 [shape = 'u8[8192]{0}', space=vmem, size = 0x2000, scoped, tag = 'input window, operand 4, single buffered']
    #allocation11 [shape = 'u8[16384]{0}', space=vmem, size = 0x4000, scoped, tag = 'input window, operand 5, single buffered']
    #allocation12 [shape = 's32[1]{0}', space=sflag, size = 0x4, scoped, tag = 'scoped memory for tpu_custom_call.1']
    #allocation13 [shape = 'u8[65536]{0}', space=vmem, size = 0x10000, scoped, tag = 'output window, operand 0']
    %11 = vsyncpa [#allocation3], 0
    %s12 = scalar_lea.sflag [#allocation3], 1
    %13 = vsyncpa %s12, 0
    %14 = vsyncpa [#allocation6], 0
    %15 = vsyncpa [#allocation9], 0
    %16 = vsyncpa [#allocation12], 0
    %17 = vsyncpa [#allocation4], 0
    %s18 = scalar_lea.sflag [#allocation4], 1
    %19 = vsyncpa %s18, 0
    loop: start=0, step=1, limit=6
    $region2: #{tpu_custom_call.1} parent=1 // loop_pre_header
      _
    $region3: #{tpu_custom_call.1} parent=1 // loop_header
      %s21 = sphi 0, %s25
      %p22 = scmp.ge.s32.totalorder %s21, 6
      %s31 = sphi 0, %s33
      %s34 = sphi 0, %s31
      %s35 = sphi 0, %s34
      %s51 = sphi 0, %s35
      %s55 = sphi 0, %s55
      %s57 = sphi 0, %s55
      %s58 = sphi 0, %s57
      %s72 = sphi 0, %s58
      %s76 = sphi 0, %s76
      %s78 = sphi 0, %s76
      %s79 = sphi 0, %s78
      %s93 = sphi 0, %s79
      %s97 = sphi 0, %s97
      %s99 = sphi 0, %s97
      %s100 = sphi 0, %s99
      %s114 = sphi 0, %s100
      %s118 = sphi 0, %s118
      %s120 = sphi 0, %s118
      %s121 = sphi 0, %s120
      %s135 = sphi 0, %s121
      %s139 = sphi 0, %s139
      %s141 = sphi 0, %s139
      %s142 = sphi 0, %s141
      %s156 = sphi 0, %s142
      %s162 = sphi 0, %s164
      %s165 = sphi 0, %s162
      %s166 = sphi 0, %s165
      %s182 = sphi 0, %s166
    $region4: #{tpu_custom_call.1} parent=1 // loop_header_branch
      %24 = sbr.rel (%p22) target = $region8
    $region5: #{tpu_custom_call.1} parent=1 // loop_body
      %s26 = ssub.s32 %s21, 1
      %s27 = ssub.s32 %s21, 2
      %s28 = sadd.s32 %s21, 1
      %s29 = ssub.s32 %s21, %s28
      %p30 = scmp.eq.s32.totalorder %s29, 0
      %s32 = sadd.s32 %s31, 1
      %s33 = scalar_select %p30, %s31, %s32
      %p36 = pneg %p30
      %p37 = scmp.eq.s32.totalorder %s21, 3
      %p38 = por %p36, %p37
      %p39 = scmp.ne.s32.totalorder %s31, %s34
      %p40 = scmp.eq.s32.totalorder %s21, 0
      %p41 = por %p39, %p40
      %p42 = scmp.ne.s32.totalorder %s31, %s34
      %p43 = scmp.eq.s32.totalorder %s26, 3
      %p44 = por %p42, %p43
      %p45 = scmp.ne.s32.totalorder %s34, %s35
      %p46 = scmp.eq.s32.totalorder %s26, 0
      %p47 = por %p45, %p46
      %p48 = scmp.ne.s32.totalorder %s34, %s35
      %p49 = scmp.eq.s32.totalorder %s27, 3
      %p50 = por %p48, %p49
      %p52 = scmp.ne.s32.totalorder %s35, %s51
      %p53 = scmp.eq.s32.totalorder %s27, 0
      %p54 = por %p52, %p53
      %s56 = sadd.s32 %s55, 1
      %p59 = scmp.eq.s32.totalorder %s21, 3
      %p60 = scmp.ne.s32.totalorder %s55, %s57
      %p61 = scmp.eq.s32.totalorder %s21, 0
      %p62 = por %p60, %p61
      %p63 = scmp.ne.s32.totalorder %s55, %s57
      %p64 = scmp.eq.s32.totalorder %s26, 3
      %p65 = por %p63, %p64
      %p66 = scmp.ne.s32.totalorder %s57, %s58
      %p67 = scmp.eq.s32.totalorder %s26, 0
      %p68 = por %p66, %p67
      %p69 = scmp.ne.s32.totalorder %s57, %s58
      %p70 = scmp.eq.s32.totalorder %s27, 3
      %p71 = por %p69, %p70
      %p73 = scmp.ne.s32.totalorder %s58, %s72
      %p74 = scmp.eq.s32.totalorder %s27, 0
      %p75 = por %p73, %p74
      %s77 = sadd.s32 %s76, 1
      %p80 = scmp.eq.s32.totalorder %s21, 3
      %p81 = scmp.ne.s32.totalorder %s76, %s78
      %p82 = scmp.eq.s32.totalorder %s21, 0
      %p83 = por %p81, %p82
      %p84 = scmp.ne.s32.totalorder %s76, %s78
      %p85 = scmp.eq.s32.totalorder %s26, 3
      %p86 = por %p84, %p85
      %p87 = scmp.ne.s32.totalorder %s78, %s79
      %p88 = scmp.eq.s32.totalorder %s26, 0
      %p89 = por %p87, %p88
      %p90 = scmp.ne.s32.totalorder %s78, %s79
      %p91 = scmp.eq.s32.totalorder %s27, 3
      %p92 = por %p90, %p91
      %p94 = scmp.ne.s32.totalorder %s79, %s93
      %p95 = scmp.eq.s32.totalorder %s27, 0
      %p96 = por %p94, %p95
      %s98 = sadd.s32 %s97, 1
      %p101 = scmp.eq.s32.totalorder %s21, 3
      %p102 = scmp.ne.s32.totalorder %s97, %s99
      %p103 = scmp.eq.s32.totalorder %s21, 0
      %p104 = por %p102, %p103
      %p105 = scmp.ne.s32.totalorder %s97, %s99
      %p106 = scmp.eq.s32.totalorder %s26, 3
      %p107 = por %p105, %p106
      %p108 = scmp.ne.s32.totalorder %s99, %s100
      %p109 = scmp.eq.s32.totalorder %s26, 0
      %p110 = por %p108, %p109
      %p111 = scmp.ne.s32.totalorder %s99, %s100
      %p112 = scmp.eq.s32.totalorder %s27, 3
      %p113 = por %p111, %p112
      %p115 = scmp.ne.s32.totalorder %s100, %s114
      %p116 = scmp.eq.s32.totalorder %s27, 0
      %p117 = por %p115, %p116
      %s119 = sadd.s32 %s118, 1
      %p122 = scmp.eq.s32.totalorder %s21, 3
      %p123 = scmp.ne.s32.totalorder %s118, %s120
      %p124 = scmp.eq.s32.totalorder %s21, 0
      %p125 = por %p123, %p124
      %p126 = scmp.ne.s32.totalorder %s118, %s120
      %p127 = scmp.eq.s32.totalorder %s26, 3
      %p128 = por %p126, %p127
      %p129 = scmp.ne.s32.totalorder %s120, %s121
      %p130 = scmp.eq.s32.totalorder %s26, 0
      %p131 = por %p129, %p130
      %p132 = scmp.ne.s32.totalorder %s120, %s121
      %p133 = scmp.eq.s32.totalorder %s27, 3
      %p134 = por %p132, %p133
      %p136 = scmp.ne.s32.totalorder %s121, %s135
      %p137 = scmp.eq.s32.totalorder %s27, 0
      %p138 = por %p136, %p137
      %s140 = sadd.s32 %s139, 1
      %p143 = scmp.eq.s32.totalorder %s21, 3
      %p144 = scmp.ne.s32.totalorder %s139, %s141
      %p145 = scmp.eq.s32.totalorder %s21, 0
      %p146 = por %p144, %p145
      %p147 = scmp.ne.s32.totalorder %s139, %s141
      %p148 = scmp.eq.s32.totalorder %s26, 3
      %p149 = por %p147, %p148
      %p150 = scmp.ne.s32.totalorder %s141, %s142
      %p151 = scmp.eq.s32.totalorder %s26, 0
      %p152 = por %p150, %p151
      %p153 = scmp.ne.s32.totalorder %s141, %s142
      %p154 = scmp.eq.s32.totalorder %s27, 3
      %p155 = por %p153, %p154
      %p157 = scmp.ne.s32.totalorder %s142, %s156
      %p158 = scmp.eq.s32.totalorder %s27, 0
      %p159 = por %p157, %p158
      %s160 = ssub.s32 %s21, %s28
      %p161 = scmp.eq.s32.totalorder %s160, 0
      %s163 = sadd.s32 %s162, 1
      %s164 = scalar_select %p161, %s162, %s163
      %p167 = pneg %p161
      %p168 = scmp.eq.s32.totalorder %s21, 3
      %p169 = por %p167, %p168
      %p170 = scmp.ne.s32.totalorder %s162, %s165
      %p171 = scmp.eq.s32.totalorder %s21, 0
      %p172 = por %p170, %p171
      %p173 = scmp.ne.s32.totalorder %s162, %s165
      %p174 = scmp.eq.s32.totalorder %s26, 3
      %p175 = por %p173, %p174
      %p176 = scmp.ne.s32.totalorder %s165, %s166
      %p177 = scmp.eq.s32.totalorder %s26, 0
      %p178 = por %p176, %p177
      %p179 = scmp.ne.s32.totalorder %s165, %s166
      %p180 = scmp.eq.s32.totalorder %s27, 3
      %p181 = por %p179, %p180
      %p183 = scmp.ne.s32.totalorder %s166, %s182
      %p184 = scmp.eq.s32.totalorder %s27, 0
      %p185 = por %p183, %p184
      %p186 = scmp.le.s32.totalorder 1, %s21
      %p187 = scmp.lt.s32.totalorder %s21, 5
      %p188 = pnand %p186, %p187
      %p189 = pneg %p188
      // Predicated region
      $region9: #{tpu_custom_call.1} parent=5 // pred_check
        _
      $region10: #{tpu_custom_call.1} parent=5 // pred_check_branch
        %191 = sbr.rel (%p188) target = $region12
      $region11: #{tpu_custom_call.1} parent=5 // pred_region
        %s192 = ssub.s32 %s21, 1
        // Predicated region
        $region13: #{tpu_custom_call.1} parent=11 // pred_check
          %p193 = pneg %p68
        $region14: #{tpu_custom_call.1} parent=11 // pred_check_branch
          %195 = sbr.rel (%p193) target = $region16
        $region15: #{tpu_custom_call.1} parent=11 // pred_region
          %s197 = ssub.s32 768, 768
          %198 = vsyncadd [#allocation6], %s197
          %s199 = sshll.u32 [#allocation5], 4
          %s200 = int_to_ptr.vmem [resolvable:$true] %s199
          %205 = dma.hbm_to_vmem [thread:$0]  %s1, 768, %s200, [#allocation6], 64, 64, 4
        $region16: #{tpu_custom_call.1} parent=11 // pred_fallthru
          _
        // Predicated region
        $region17: #{tpu_custom_call.1} parent=11 // pred_check
          %p206 = pneg %p89
        $region18: #{tpu_custom_call.1} parent=11 // pred_check_branch
          %208 = sbr.rel (%p206) target = $region20
        $region19: #{tpu_custom_call.1} parent=11 // pred_region
          %s210 = ssub.s32 1536, 1536
          %211 = vsyncadd [#allocation6], %s210
          %s212 = sshll.u32 [#allocation7], 4
          %s213 = int_to_ptr.vmem [resolvable:$true] %s212
          %218 = dma.hbm_to_vmem [thread:$0]  %s2, 1536, %s213, [#allocation6], 128, 128, 8
        $region20: #{tpu_custom_call.1} parent=11 // pred_fallthru
          _
        // Predicated region
        $region21: #{tpu_custom_call.1} parent=11 // pred_check
          %p219 = pneg %p110
        $region22: #{tpu_custom_call.1} parent=11 // pred_check_branch
          %221 = sbr.rel (%p219) target = $region24
        $region23: #{tpu_custom_call.1} parent=11 // pred_region
          %s223 = ssub.s32 32768, 32768
          %224 = vsyncadd [#allocation9], %s223
          %s225 = sshll.u32 [#allocation8], 4
          %s226 = int_to_ptr.vmem [resolvable:$true] %s225
          %231 = dma.hbm_to_vmem [thread:$0]  %s3, 32768, %s226, [#allocation9], 256, 256, 16
        $region24: #{tpu_custom_call.1} parent=11 // pred_fallthru
          _
        // Predicated region
        $region25: #{tpu_custom_call.1} parent=11 // pred_check
          %p232 = pneg %p131
        $region26: #{tpu_custom_call.1} parent=11 // pred_check_branch
          %234 = sbr.rel (%p232) target = $region28
        $region27: #{tpu_custom_call.1} parent=11 // pred_region
          %s236 = ssub.s32 256, 256
          %237 = vsyncadd [#allocation9], %s236
          %s238 = sshll.u32 [#allocation10], 4
          %s239 = int_to_ptr.vmem [resolvable:$true] %s238
          %244 = dma.hbm_to_vmem [thread:$0]  %s4, 256, %s239, [#allocation9], 64, 64, 4
        $region28: #{tpu_custom_call.1} parent=11 // pred_fallthru
          _
        // Predicated region
        $region29: #{tpu_custom_call.1} parent=11 // pred_check
          %p245 = pneg %p152
        $region30: #{tpu_custom_call.1} parent=11 // pred_check_branch
          %247 = sbr.rel (%p245) target = $region32
        $region31: #{tpu_custom_call.1} parent=11 // pred_region
          %s249 = ssub.s32 512, 512
          %250 = vsyncadd [#allocation12], %s249
          %s251 = sshll.u32 [#allocation11], 4
          %s252 = int_to_ptr.vmem [resolvable:$true] %s251
          %257 = dma.hbm_to_vmem [thread:$0]  %s5, 512, %s252, [#allocation12], 128, 128, 8
        $region32: #{tpu_custom_call.1} parent=11 // pred_fallthru
          _
      $region12: #{tpu_custom_call.1} parent=5 // pred_fallthru
        _
      %p258 = scmp.lt.s32.totalorder %s21, 4
      // Predicated region
      $region33: #{tpu_custom_call.1} parent=5 // pred_check
        %p259 = pneg %p258
      $region34: #{tpu_custom_call.1} parent=5 // pred_check_branch
        %261 = sbr.rel (%p259) target = $region36
      $region35: #{tpu_custom_call.1} parent=5 // pred_region
        // Predicated region
        $region37: #{tpu_custom_call.1} parent=35 // pred_check
          %p262 = pneg %p41
        $region38: #{tpu_custom_call.1} parent=35 // pred_check_branch
          %264 = sbr.rel (%p262) target = $region40
        $region39: #{tpu_custom_call.1} parent=35 // pred_region
          %s265 = sand.u32 %s31, 1
          %s266 = scalar_lea.sflag [#allocation3], %s265
          %s267 = sand.u32 %s31, 1
          %s268 = smul.addr %s267, 32
          %s269 = scalar_lea.vmem [#allocation2], %s268
          %s270 = smul.u32 2, %s21
          %s272 = ssub.s32 512, 512
          %273 = vsyncadd %s266, %s272
          %s274 = smul.addr %s270, 64
          %s275 = scalar_lea.hbm %s0, %s274
          %s276 = sshll.u32 %s269, 4
          %s277 = int_to_ptr.vmem [resolvable:$true] %s276
          %282 = dma.hbm_to_vmem [thread:$0]  %s275, 512, %s277, %s266, 512, 128, 8
        $region40: #{tpu_custom_call.1} parent=35 // pred_fallthru
          _
      $region36: #{tpu_custom_call.1} parent=5 // pred_fallthru
        _
      %p283 = scmp.le.s32.totalorder 1, %s21
      %p284 = scmp.lt.s32.totalorder %s21, 5
      %p285 = pnand %p283, %p284
      %p286 = pneg %p285
      // Predicated region
      $region41: #{tpu_custom_call.1} parent=5 // pred_check
        _
      $region42: #{tpu_custom_call.1} parent=5 // pred_check_branch
        %288 = sbr.rel (%p285) target = $region44
      $region43: #{tpu_custom_call.1} parent=5 // pred_region
        %s289 = ssub.s32 %s21, 1
        %s290 = sand.u32 %s34, 1
        %s291 = scalar_lea.sflag [#allocation3], %s290
        %s292 = sand.u32 %s34, 1
        %s293 = smul.addr %s292, 32
        %s294 = scalar_lea.vmem [#allocation2], %s293
        // Predicated region
        $region45: #{tpu_custom_call.1} parent=43 // pred_check
          %p295 = pneg %p47
        $region46: #{tpu_custom_call.1} parent=43 // pred_check_branch
          %297 = sbr.rel (%p295) target = $region48
        $region47: #{tpu_custom_call.1} parent=43 // pred_region
          %298 = dma.done %s291, 512
        $region48: #{tpu_custom_call.1} parent=43 // pred_fallthru
          _
        // Predicated region
        $region49: #{tpu_custom_call.1} parent=43 // pred_check
          %p299 = pneg %p68
        $region50: #{tpu_custom_call.1} parent=43 // pred_check_branch
          %301 = sbr.rel (%p299) target = $region52
        $region51: #{tpu_custom_call.1} parent=43 // pred_region
          %302 = dma.done [#allocation6], 768
        $region52: #{tpu_custom_call.1} parent=43 // pred_fallthru
          _
        // Predicated region
        $region53: #{tpu_custom_call.1} parent=43 // pred_check
          %p303 = pneg %p89
        $region54: #{tpu_custom_call.1} parent=43 // pred_check_branch
          %305 = sbr.rel (%p303) target = $region56
        $region55: #{tpu_custom_call.1} parent=43 // pred_region
          %306 = dma.done [#allocation6], 1536
        $region56: #{tpu_custom_call.1} parent=43 // pred_fallthru
          _
        // Predicated region
        $region57: #{tpu_custom_call.1} parent=43 // pred_check
          %p307 = pneg %p110
        $region58: #{tpu_custom_call.1} parent=43 // pred_check_branch
          %309 = sbr.rel (%p307) target = $region60
        $region59: #{tpu_custom_call.1} parent=43 // pred_region
          %310 = dma.done [#allocation9], 32768
        $region60: #{tpu_custom_call.1} parent=43 // pred_fallthru
          _
        // Predicated region
        $region61: #{tpu_custom_call.1} parent=43 // pred_check
          %p311 = pneg %p131
        $region62: #{tpu_custom_call.1} parent=43 // pred_check_branch
          %313 = sbr.rel (%p311) target = $region64
        $region63: #{tpu_custom_call.1} parent=43 // pred_region
          %314 = dma.done [#allocation9], 256
        $region64: #{tpu_custom_call.1} parent=43 // pred_fallthru
          _
        // Predicated region
        $region65: #{tpu_custom_call.1} parent=43 // pred_check
          %p315 = pneg %p152
        $region66: #{tpu_custom_call.1} parent=43 // pred_check_branch
          %317 = sbr.rel (%p315) target = $region68
        $region67: #{tpu_custom_call.1} parent=43 // pred_region
          %318 = dma.done [#allocation12], 512
        $region68: #{tpu_custom_call.1} parent=43 // pred_fallthru
          _
        %s319 = sand.u32 %s34, 1
        %s320 = scalar_lea.sflag [#allocation3], %s319
        %s321 = sand.u32 %s34, 1
        %s322 = smul.addr %s321, 32
        %s323 = scalar_lea.vmem [#allocation2], %s322
        %p324 = pneg %p47
        %p325 = pneg %p44
        %p326 = pneg %p68
        %p327 = pneg %p65
        %p328 = pneg %p89
        %p329 = pneg %p86
        %p330 = pneg %p110
        %p331 = pneg %p107
        %p332 = pneg %p131
        %p333 = pneg %p128
        %p334 = pneg %p152
        %p335 = pneg %p149
        %p336 = pneg %p178
        %p337 = pneg %p175
        %s338 = sand.u32 %s165, 1
        %s339 = scalar_lea.sflag [#allocation4], %s338
        %s340 = sand.u32 %s165, 1
        %s341 = smul.addr %s340, 64
        %s342 = scalar_lea.vmem [#allocation13], %s341
        %s343 = smul.u32 2, %s26
        %s344 = smul.u32 2, %s26
        %v346 = vld [vmem:[#allocation5] sm:$0xf]
        %v347 = vld [vmem:[#allocation5 + $0x4] sm:$0xf]
        %v348 = vld [vmem:[#allocation5 + $0x8] sm:$0xf]
        %v349 = vld [vmem:[#allocation5 + $0xc] sm:$0xf]
        %v350 = vld [vmem:[#allocation5 + $0x10] sm:$0xf]
        %v351 = vld [vmem:[#allocation5 + $0x14] sm:$0xf]
        %v352 = vld [vmem:[#allocation5 + $0x18] sm:$0xf]
        %v353 = vld [vmem:[#allocation5 + $0x1c] sm:$0xf]
        %v354 = vld [vmem:[#allocation5 + $0x20] sm:$0xf]
        %v355 = vld [vmem:[#allocation5 + $0x24] sm:$0xf]
        %v356 = vld [vmem:[#allocation5 + $0x28] sm:$0xf]
        %v357 = vld [vmem:[#allocation5 + $0x2c] sm:$0xf]
        %v358 = vld [vmem:[%s294] sm:$0xff]
        %v359 = vld [vmem:[%s294 + $0x8] sm:$0xff]
        %v360 = vld [vmem:[%s294 + $0x10] sm:$0xff]
        %v361 = vld [vmem:[%s294 + $0x18] sm:$0xff]
        %v362 = vld [vmem:[#allocation7] sm:$0xff]
        %v363 = vld [vmem:[#allocation7 + $0x8] sm:$0xff]
        %v364 = vld [vmem:[#allocation7 + $0x10] sm:$0xff]
        %v365 = vld [vmem:[#allocation7 + $0x18] sm:$0xff]
        %v366 = vld [vmem:[#allocation7 + $0x20] sm:$0xff]
        %v367 = vld [vmem:[#allocation7 + $0x28] sm:$0xff]
        %v368 = vld [vmem:[#allocation7 + $0x30] sm:$0xff]
        %v369 = vld [vmem:[#allocation7 + $0x38] sm:$0xff]
        %v370 = vld [vmem:[#allocation7 + $0x40] sm:$0xff]
        %v371 = vld [vmem:[#allocation7 + $0x48] sm:$0xff]
        %v372 = vld [vmem:[#allocation7 + $0x50] sm:$0xff]
        %v373 = vld [vmem:[#allocation7 + $0x58] sm:$0xff]
        %375 = vset.pattern.permute.xlu0 0
        %376 = vperm.xlu0 %375, %v362
        %v377 = vpop.permute.xlu0 %376
        %380 = vset.pattern.permute.xlu0 0
        %381 = vperm.xlu0 %380, %v363
        %v382 = vpop.permute.xlu0 %381
        %385 = vset.pattern.permute.xlu0 0
        %386 = vperm.xlu0 %385, %v364
        %v387 = vpop.permute.xlu0 %386
        %390 = vset.pattern.permute.xlu0 0
        %391 = vperm.xlu0 %390, %v365
        %v392 = vpop.permute.xlu0 %391
        %395 = vset.pattern.permute.xlu0 0
        %396 = vperm.xlu0 %395, %v366
        %v397 = vpop.permute.xlu0 %396
        %400 = vset.pattern.permute.xlu0 0
        %401 = vperm.xlu0 %400, %v367
        %v402 = vpop.permute.xlu0 %401
        %405 = vset.pattern.permute.xlu0 0
        %406 = vperm.xlu0 %405, %v368
        %v407 = vpop.permute.xlu0 %406
        %410 = vset.pattern.permute.xlu0 0
        %411 = vperm.xlu0 %410, %v369
        %v412 = vpop.permute.xlu0 %411
        %415 = vset.pattern.permute.xlu0 0
        %416 = vperm.xlu0 %415, %v370
        %v417 = vpop.permute.xlu0 %416
        %420 = vset.pattern.permute.xlu0 0
        %421 = vperm.xlu0 %420, %v371
        %v422 = vpop.permute.xlu0 %421
        %425 = vset.pattern.permute.xlu0 0
        %426 = vperm.xlu0 %425, %v372
        %v427 = vpop.permute.xlu0 %426
        %430 = vset.pattern.permute.xlu0 0
        %431 = vperm.xlu0 %430, %v373
        %v432 = vpop.permute.xlu0 %431
        %v446 = vunpack.c.l.b16 %v346
        %v447 = vunpack.c.l.b16 %v347
        %v448 = vunpack.c.l.b16 %v348
        %v449 = vunpack.c.l.b16 %v349
        %v450 = vunpack.c.l.b16 %v350
        %v451 = vunpack.c.l.b16 %v351
        %v452 = vunpack.c.l.b16 %v352
        %v453 = vunpack.c.l.b16 %v353
        %v454 = vunpack.c.l.b16 %v354
        %v455 = vunpack.c.l.b16 %v355
        %v456 = vunpack.c.l.b16 %v356
        %v457 = vunpack.c.l.b16 %v357
        %v458 = vpack.c.b16 %v447, %v446
        %v459 = vpack.c.b16 %v449, %v448
        %v460 = vpack.c.b16 %v451, %v450
        %v461 = vpack.c.b16 %v453, %v452
        %v462 = vpack.c.b16 %v455, %v454
        %v463 = vpack.c.b16 %v457, %v456
        %v468 = vunpack.c.l.b16 %v358
        %v469 = vunpack.c.h.b16 %v358
        %v470 = vunpack.c.l.b16 %v359
        %v471 = vunpack.c.h.b16 %v359
        %v472 = vunpack.c.l.b16 %v360
        %v473 = vunpack.c.h.b16 %v360
        %v474 = vunpack.c.l.b16 %v361
        %v475 = vunpack.c.h.b16 %v361
        %v476 = vpack.c.b16 %v470, %v468
        %v477 = vpack.c.b16 %v471, %v469
        %v478 = vpack.c.b16 %v474, %v472
        %v479 = vpack.c.b16 %v475, %v473
        %vm484 = vcmask 261120
        %v486 = vsel %vm484, %v458, 0
        %v489 = vsel %vm484, %v459, 0
        %v492 = vsel %vm484, %v460, 0
        %v495 = vsel %vm484, %v461, 0
        %v498 = vsel %vm484, %v462, 0
        %v501 = vsel %vm484, %v463, 0
        %503 = vmatprep.subr.bf16.mxu0 %v477
        %504 = vmatpush1.bf16.msra.mxu0 %v476
        %505 = vmatprep.subr.bf16.mxu0 %v479
        %506 = vmatpush1.bf16.msra.mxu0 %v478
        %507 = vmatprep.subr.bf16.mxu0 0
        %508 = vmatpush1.bf16.msra.mxu0 0
        %509 = vmatprep.subr.bf16.mxu0 0
        %510 = vmatpush1.bf16.msra.mxu0 0
        %511 = vmatprep.subr.bf16.mxu0 0
        %512 = vmatpush1.bf16.msra.mxu0 0
        %513 = vmatprep.subr.bf16.mxu0 0
        %514 = vmatpush1.bf16.msra.mxu0 0
        %515 = vmatprep.subr.bf16.mxu0 0
        %516 = vmatpush1.bf16.msra.mxu0 0
        %517 = vmatprep.subr.bf16.mxu0 0
        %518 = vmatpush1.bf16.msra.mxu0 0
        %519 = vmatprep.subr.bf16.mxu0 0
        %520 = vmatpush1.bf16.msra.mxu0 0
        %521 = vmatprep.subr.bf16.mxu0 0
        %522 = vmatpush1.bf16.msra.mxu0 0
        %523 = vmatprep.subr.bf16.mxu0 0
        %524 = vmatpush1.bf16.msra.mxu0 0
        %525 = vmatprep.subr.bf16.mxu0 0
        %526 = vmatpush1.bf16.msra.mxu0 0
        %527 = vmatprep.subr.bf16.mxu0 0
        %528 = vmatpush1.bf16.msra.mxu0 0
        %529 = vmatprep.subr.bf16.mxu0 0
        %530 = vmatpush1.bf16.msra.mxu0 0
        %531 = vmatprep.subr.bf16.mxu0 0
        %532 = vmatpush1.bf16.msra.mxu0 0
        %533 = vmatprep.subr.bf16.mxu0 0
        %534 = vmatpush1.bf16.msra.mxu0 0
        %535 = vmatprep.mubr.bf16.mxu0 0
        %536 = vmatmul.mubr.bf16.gmra.mrb[0].mxu0 %v486
        %v537 = vpop.f32.mrb[0].mxu0
        %v538 = vadd.f32 %v377, %v537
        %v539 = vpop.f32.mrb[0].mxu0
        %v540 = vadd.f32 %v377, %v539
        %v541 = vpop.f32.mrb[0].mxu0
        %v542 = vadd.f32 %v382, %v541
        %v543 = vpop.f32.mrb[0].mxu0
        %v544 = vadd.f32 %v382, %v543
        %545 = vmatprep.mubr.bf16.mxu0 0
        %546 = vmatmul.mubr.bf16.gmra.mrb[0].mxu0 %v489
        %v547 = vpop.f32.mrb[0].mxu0
        %v548 = vadd.f32 %v387, %v547
        %v549 = vpop.f32.mrb[0].mxu0
        %v550 = vadd.f32 %v387, %v549
        %v551 = vpop.f32.mrb[0].mxu0
        %v552 = vadd.f32 %v392, %v551
        %v553 = vpop.f32.mrb[0].mxu0
        %v554 = vadd.f32 %v392, %v553
        %555 = vmatprep.mubr.bf16.mxu0 0
        %556 = vmatmul.mubr.bf16.gmra.mrb[0].mxu0 %v492
        %v557 = vpop.f32.mrb[0].mxu0
        %v558 = vadd.f32 %v397, %v557
        %v559 = vpop.f32.mrb[0].mxu0
        %v560 = vadd.f32 %v397, %v559
        %v561 = vpop.f32.mrb[0].mxu0
        %v562 = vadd.f32 %v402, %v561
        %v563 = vpop.f32.mrb[0].mxu0
        %v564 = vadd.f32 %v402, %v563
        %565 = vmatprep.mubr.bf16.mxu0 0
        %566 = vmatmul.mubr.bf16.gmra.mrb[0].mxu0 %v495
        %v567 = vpop.f32.mrb[0].mxu0
        %v568 = vadd.f32 %v407, %v567
        %v569 = vpop.f32.mrb[0].mxu0
        %v570 = vadd.f32 %v407, %v569
        %v571 = vpop.f32.mrb[0].mxu0
        %v572 = vadd.f32 %v412, %v571
        %v573 = vpop.f32.mrb[0].mxu0
        %v574 = vadd.f32 %v412, %v573
        %575 = vmatprep.mubr.bf16.mxu0 0
        %576 = vmatmul.mubr.bf16.gmra.mrb[0].mxu0 %v498
        %v577 = vpop.f32.mrb[0].mxu0
        %v578 = vadd.f32 %v417, %v577
        %v579 = vpop.f32.mrb[0].mxu0
        %v580 = vadd.f32 %v417, %v579
        %v581 = vpop.f32.mrb[0].mxu0
        %v582 = vadd.f32 %v422, %v581
        %v583 = vpop.f32.mrb[0].mxu0
        %v584 = vadd.f32 %v422, %v583
        %585 = vmatprep.mubr.bf16.mxu0 0
        %586 = vmatmul.mubr.bf16.gmra.mrb[0].mxu0 %v501
        %v587 = vpop.f32.mrb[0].mxu0
        %v588 = vadd.f32 %v427, %v587
        %v589 = vpop.f32.mrb[0].mxu0
        %v590 = vadd.f32 %v427, %v589
        %v591 = vpop.f32.mrb[0].mxu0
        %v592 = vadd.f32 %v432, %v591
        %v593 = vpop.f32.mrb[0].mxu0
        %v594 = vadd.f32 %v432, %v593
        %595 = vdwg.mxu0
        %v596 = vpack.c.bf16 %v542, %v538
        %v597 = vpack.c.bf16 %v544, %v540
        %v598 = vpack.c.bf16 %v552, %v548
        %v599 = vpack.c.bf16 %v554, %v550
        %v600 = vpack.c.bf16 %v562, %v558
        %v601 = vpack.c.bf16 %v564, %v560
        %v602 = vpack.c.bf16 %v572, %v568
        %v603 = vpack.c.bf16 %v574, %v570
        %v604 = vpack.c.bf16 %v582, %v578
        %v605 = vpack.c.bf16 %v584, %v580
        %v606 = vpack.c.bf16 %v592, %v588
        %v607 = vpack.c.bf16 %v594, %v590
        %v620 = vunpack.c.l.b16 %v596
        %v621 = vunpack.c.l.b16 %v597
        %v622 = vunpack.c.h.b16 %v596
        %v623 = vunpack.c.h.b16 %v597
        %v624 = vunpack.c.l.b16 %v598
        %v625 = vunpack.c.l.b16 %v599
        %v626 = vunpack.c.h.b16 %v598
        %v627 = vunpack.c.h.b16 %v599
        %v628 = vunpack.c.l.b16 %v600
        %v629 = vunpack.c.l.b16 %v601
        %v630 = vunpack.c.h.b16 %v600
        %v631 = vunpack.c.h.b16 %v601
        %v632 = vunpack.c.l.b16 %v602
        %v633 = vunpack.c.l.b16 %v603
        %v634 = vunpack.c.h.b16 %v602
        %v635 = vunpack.c.h.b16 %v603
        %v636 = vunpack.c.l.b16 %v604
        %v637 = vunpack.c.l.b16 %v605
        %v638 = vunpack.c.h.b16 %v604
        %v639 = vunpack.c.h.b16 %v605
        %v640 = vunpack.c.l.b16 %v606
        %v641 = vunpack.c.l.b16 %v607
        %v642 = vunpack.c.h.b16 %v606
        %v643 = vunpack.c.h.b16 %v607
        %v644 = vld [vmem:[#allocation8] sm:$0xff]
        %v645 = vld [vmem:[#allocation8 + $0x8] sm:$0xff]
        %v646 = vld [vmem:[#allocation8 + $0x10] sm:$0xff]
        %v647 = vld [vmem:[#allocation8 + $0x18] sm:$0xff]
        %v648 = vld [vmem:[#allocation8 + $0x20] sm:$0xff]
        %v649 = vld [vmem:[#allocation8 + $0x28] sm:$0xff]
        %v650 = vld [vmem:[#allocation8 + $0x30] sm:$0xff]
        %v651 = vld [vmem:[#allocation8 + $0x38] sm:$0xff]
        %v652 = vld [vmem:[#allocation8 + $0x40] sm:$0xff]
        %v653 = vld [vmem:[#allocation8 + $0x48] sm:$0xff]
        %v654 = vld [vmem:[#allocation8 + $0x50] sm:$0xff]
        %v655 = vld [vmem:[#allocation8 + $0x58] sm:$0xff]
        %v656 = vld [vmem:[#allocation8 + $0x60] sm:$0xff]
        %v657 = vld [vmem:[#allocation8 + $0x68] sm:$0xff]
        %v658 = vld [vmem:[#allocation8 + $0x70] sm:$0xff]
        %v659 = vld [vmem:[#allocation8 + $0x78] sm:$0xff]
        %v660 = vld [vmem:[#allocation8 + $0x80] sm:$0xff]
        %v661 = vld [vmem:[#allocation8 + $0x88] sm:$0xff]
        %v662 = vld [vmem:[#allocation8 + $0x90] sm:$0xff]
        %v663 = vld [vmem:[#allocation8 + $0x98] sm:$0xff]
        %v664 = vld [vmem:[#allocation8 + $0xa0] sm:$0xff]
        %v665 = vld [vmem:[#allocation8 + $0xa8] sm:$0xff]
        %v666 = vld [vmem:[#allocation8 + $0xb0] sm:$0xff]
        %v667 = vld [vmem:[#allocation8 + $0xb8] sm:$0xff]
        %v668 = vld [vmem:[#allocation8 + $0xc0] sm:$0xff]
        %v669 = vld [vmem:[#allocation8 + $0xc8] sm:$0xff]
        %v670 = vld [vmem:[#allocation8 + $0xd0] sm:$0xff]
        %v671 = vld [vmem:[#allocation8 + $0xd8] sm:$0xff]
        %v672 = vld [vmem:[#allocation8 + $0xe0] sm:$0xff]
        %v673 = vld [vmem:[#allocation8 + $0xe8] sm:$0xff]
        %v674 = vld [vmem:[#allocation8 + $0xf0] sm:$0xff]
        %v675 = vld [vmem:[#allocation8 + $0xf8] sm:$0xff]
        %v676 = vld [vmem:[#allocation8 + $0x100] sm:$0xff]
        %v677 = vld [vmem:[#allocation8 + $0x108] sm:$0xff]
        %v678 = vld [vmem:[#allocation8 + $0x110] sm:$0xff]
        %v679 = vld [vmem:[#allocation8 + $0x118] sm:$0xff]
        %v680 = vld [vmem:[#allocation8 + $0x120] sm:$0xff]
        %v681 = vld [vmem:[#allocation8 + $0x128] sm:$0xff]
        %v682 = vld [vmem:[#allocation8 + $0x130] sm:$0xff]
        %v683 = vld [vmem:[#allocation8 + $0x138] sm:$0xff]
        %v684 = vld [vmem:[#allocation8 + $0x140] sm:$0xff]
        %v685 = vld [vmem:[#allocation8 + $0x148] sm:$0xff]
        %v686 = vld [vmem:[#allocation8 + $0x150] sm:$0xff]
        %v687 = vld [vmem:[#allocation8 + $0x158] sm:$0xff]
        %v688 = vld [vmem:[#allocation8 + $0x160] sm:$0xff]
        %v689 = vld [vmem:[#allocation8 + $0x168] sm:$0xff]
        %v690 = vld [vmem:[#allocation8 + $0x170] sm:$0xff]
        %v691 = vld [vmem:[#allocation8 + $0x178] sm:$0xff]
        %v692 = vld [vmem:[#allocation8 + $0x180] sm:$0xff]
        %v693 = vld [vmem:[#allocation8 + $0x188] sm:$0xff]
        %v694 = vld [vmem:[#allocation8 + $0x190] sm:$0xff]
        %v695 = vld [vmem:[#allocation8 + $0x198] sm:$0xff]
        %v696 = vld [vmem:[#allocation8 + $0x1a0] sm:$0xff]
        %v697 = vld [vmem:[#allocation8 + $0x1a8] sm:$0xff]
        %v698 = vld [vmem:[#allocation8 + $0x1b0] sm:$0xff]
        %v699 = vld [vmem:[#allocation8 + $0x1b8] sm:$0xff]
        %v700 = vld [vmem:[#allocation8 + $0x1c0] sm:$0xff]
        %v701 = vld [vmem:[#allocation8 + $0x1c8] sm:$0xff]
        %v702 = vld [vmem:[#allocation8 + $0x1d0] sm:$0xff]
        %v703 = vld [vmem:[#allocation8 + $0x1d8] sm:$0xff]
        %v704 = vld [vmem:[#allocation8 + $0x1e0] sm:$0xff]
        %v705 = vld [vmem:[#allocation8 + $0x1e8] sm:$0xff]
        %v706 = vld [vmem:[#allocation8 + $0x1f0] sm:$0xff]
        %v707 = vld [vmem:[#allocation8 + $0x1f8] sm:$0xff]
        %v708 = vld [vmem:[#allocation8 + $0x200] sm:$0xff]
        %v709 = vld [vmem:[#allocation8 + $0x208] sm:$0xff]
        %v710 = vld [vmem:[#allocation8 + $0x210] sm:$0xff]
        %v711 = vld [vmem:[#allocation8 + $0x218] sm:$0xff]
        %v712 = vld [vmem:[#allocation8 + $0x220] sm:$0xff]
        %v713 = vld [vmem:[#allocation8 + $0x228] sm:$0xff]
        %v714 = vld [vmem:[#allocation8 + $0x230] sm:$0xff]
        %v715 = vld [vmem:[#allocation8 + $0x238] sm:$0xff]
        %v716 = vld [vmem:[#allocation8 + $0x240] sm:$0xff]
        %v717 = vld [vmem:[#allocation8 + $0x248] sm:$0xff]
        %v718 = vld [vmem:[#allocation8 + $0x250] sm:$0xff]
        %v719 = vld [vmem:[#allocation8 + $0x258] sm:$0xff]
        %v720 = vld [vmem:[#allocation8 + $0x260] sm:$0xff]
        %v721 = vld [vmem:[#allocation8 + $0x268] sm:$0xff]
        %v722 = vld [vmem:[#allocation8 + $0x270] sm:$0xff]
        %v723 = vld [vmem:[#allocation8 + $0x278] sm:$0xff]
        %v724 = vld [vmem:[#allocation8 + $0x280] sm:$0xff]
        %v725 = vld [vmem:[#allocation8 + $0x288] sm:$0xff]
        %v726 = vld [vmem:[#allocation8 + $0x290] sm:$0xff]
        %v727 = vld [vmem:[#allocation8 + $0x298] sm:$0xff]
        %v728 = vld [vmem:[#allocation8 + $0x2a0] sm:$0xff]
        %v729 = vld [vmem:[#allocation8 + $0x2a8] sm:$0xff]
        %v730 = vld [vmem:[#allocation8 + $0x2b0] sm:$0xff]
        %v731 = vld [vmem:[#allocation8 + $0x2b8] sm:$0xff]
        %v732 = vld [vmem:[#allocation8 + $0x2c0] sm:$0xff]
        %v733 = vld [vmem:[#allocation8 + $0x2c8] sm:$0xff]
        %v734 = vld [vmem:[#allocation8 + $0x2d0] sm:$0xff]
        %v735 = vld [vmem:[#allocation8 + $0x2d8] sm:$0xff]
        %v736 = vld [vmem:[#allocation8 + $0x2e0] sm:$0xff]
        %v737 = vld [vmem:[#allocation8 + $0x2e8] sm:$0xff]
        %v738 = vld [vmem:[#allocation8 + $0x2f0] sm:$0xff]
        %v739 = vld [vmem:[#allocation8 + $0x2f8] sm:$0xff]
        %v740 = vld [vmem:[#allocation8 + $0x300] sm:$0xff]
        %v741 = vld [vmem:[#allocation8 + $0x308] sm:$0xff]
        %v742 = vld [vmem:[#allocation8 + $0x310] sm:$0xff]
        %v743 = vld [vmem:[#allocation8 + $0x318] sm:$0xff]
        %v744 = vld [vmem:[#allocation8 + $0x320] sm:$0xff]
        %v745 = vld [vmem:[#allocation8 + $0x328] sm:$0xff]
        %v746 = vld [vmem:[#allocation8 + $0x330] sm:$0xff]
        %v747 = vld [vmem:[#allocation8 + $0x338] sm:$0xff]
        %v748 = vld [vmem:[#allocation8 + $0x340] sm:$0xff]
        %v749 = vld [vmem:[#allocation8 + $0x348] sm:$0xff]
        %v750 = vld [vmem:[#allocation8 + $0x350] sm:$0xff]
        %v751 = vld [vmem:[#allocation8 + $0x358] sm:$0xff]
        %v752 = vld [vmem:[#allocation8 + $0x360] sm:$0xff]
        %v753 = vld [vmem:[#allocation8 + $0x368] sm:$0xff]
        %v754 = vld [vmem:[#allocation8 + $0x370] sm:$0xff]
        %v755 = vld [vmem:[#allocation8 + $0x378] sm:$0xff]
        %v756 = vld [vmem:[#allocation8 + $0x380] sm:$0xff]
        %v757 = vld [vmem:[#allocation8 + $0x388] sm:$0xff]
        %v758 = vld [vmem:[#allocation8 + $0x390] sm:$0xff]
        %v759 = vld [vmem:[#allocation8 + $0x398] sm:$0xff]
        %v760 = vld [vmem:[#allocation8 + $0x3a0] sm:$0xff]
        %v761 = vld [vmem:[#allocation8 + $0x3a8] sm:$0xff]
        %v762 = vld [vmem:[#allocation8 + $0x3b0] sm:$0xff]
        %v763 = vld [vmem:[#allocation8 + $0x3b8] sm:$0xff]
        %v764 = vld [vmem:[#allocation8 + $0x3c0] sm:$0xff]
        %v765 = vld [vmem:[#allocation8 + $0x3c8] sm:$0xff]
        %v766 = vld [vmem:[#allocation8 + $0x3d0] sm:$0xff]
        %v767 = vld [vmem:[#allocation8 + $0x3d8] sm:$0xff]
        %v768 = vld [vmem:[#allocation8 + $0x3e0] sm:$0xff]
        %v769 = vld [vmem:[#allocation8 + $0x3e8] sm:$0xff]
        %v770 = vld [vmem:[#allocation8 + $0x3f0] sm:$0xff]
        %v771 = vld [vmem:[#allocation8 + $0x3f8] sm:$0xff]
        %v772 = vld [vmem:[#allocation8 + $0x400] sm:$0xff]
        %v773 = vld [vmem:[#allocation8 + $0x408] sm:$0xff]
        %v774 = vld [vmem:[#allocation8 + $0x410] sm:$0xff]
        %v775 = vld [vmem:[#allocation8 + $0x418] sm:$0xff]
        %v776 = vld [vmem:[#allocation8 + $0x420] sm:$0xff]
        %v777 = vld [vmem:[#allocation8 + $0x428] sm:$0xff]
        %v778 = vld [vmem:[#allocation8 + $0x430] sm:$0xff]
        %v779 = vld [vmem:[#allocation8 + $0x438] sm:$0xff]
        %v780 = vld [vmem:[#allocation8 + $0x440] sm:$0xff]
        %v781 = vld [vmem:[#allocation8 + $0x448] sm:$0xff]
        %v782 = vld [vmem:[#allocation8 + $0x450] sm:$0xff]
        %v783 = vld [vmem:[#allocation8 + $0x458] sm:$0xff]
        %v784 = vld [vmem:[#allocation8 + $0x460] sm:$0xff]
        %v785 = vld [vmem:[#allocation8 + $0x468] sm:$0xff]
        %v786 = vld [vmem:[#allocation8 + $0x470] sm:$0xff]
        %v787 = vld [vmem:[#allocation8 + $0x478] sm:$0xff]
        %v788 = vld [vmem:[#allocation8 + $0x480] sm:$0xff]
        %v789 = vld [vmem:[#allocation8 + $0x488] sm:$0xff]
        %v790 = vld [vmem:[#allocation8 + $0x490] sm:$0xff]
        %v791 = vld [vmem:[#allocation8 + $0x498] sm:$0xff]
        %v792 = vld [vmem:[#allocation8 + $0x4a0] sm:$0xff]
        %v793 = vld [vmem:[#allocation8 + $0x4a8] sm:$0xff]
        %v794 = vld [vmem:[#allocation8 + $0x4b0] sm:$0xff]
        %v795 = vld [vmem:[#allocation8 + $0x4b8] sm:$0xff]
        %v796 = vld [vmem:[#allocation8 + $0x4c0] sm:$0xff]
        %v797 = vld [vmem:[#allocation8 + $0x4c8] sm:$0xff]
        %v798 = vld [vmem:[#allocation8 + $0x4d0] sm:$0xff]
        %v799 = vld [vmem:[#allocation8 + $0x4d8] sm:$0xff]
        %v800 = vld [vmem:[#allocation8 + $0x4e0] sm:$0xff]
        %v801 = vld [vmem:[#allocation8 + $0x4e8] sm:$0xff]
        %v802 = vld [vmem:[#allocation8 + $0x4f0] sm:$0xff]
        %v803 = vld [vmem:[#allocation8 + $0x4f8] sm:$0xff]
        %v804 = vld [vmem:[#allocation8 + $0x500] sm:$0xff]
        %v805 = vld [vmem:[#allocation8 + $0x508] sm:$0xff]
        %v806 = vld [vmem:[#allocation8 + $0x510] sm:$0xff]
        %v807 = vld [vmem:[#allocation8 + $0x518] sm:$0xff]
        %v808 = vld [vmem:[#allocation8 + $0x520] sm:$0xff]
        %v809 = vld [vmem:[#allocation8 + $0x528] sm:$0xff]
        %v810 = vld [vmem:[#allocation8 + $0x530] sm:$0xff]
        %v811 = vld [vmem:[#allocation8 + $0x538] sm:$0xff]
        %v812 = vld [vmem:[#allocation8 + $0x540] sm:$0xff]
        %v813 = vld [vmem:[#allocation8 + $0x548] sm:$0xff]
        %v814 = vld [vmem:[#allocation8 + $0x550] sm:$0xff]
        %v815 = vld [vmem:[#allocation8 + $0x558] sm:$0xff]
        %v816 = vld [vmem:[#allocation8 + $0x560] sm:$0xff]
        %v817 = vld [vmem:[#allocation8 + $0x568] sm:$0xff]
        %v818 = vld [vmem:[#allocation8 + $0x570] sm:$0xff]
        %v819 = vld [vmem:[#allocation8 + $0x578] sm:$0xff]
        %v820 = vld [vmem:[#allocation8 + $0x580] sm:$0xff]
        %v821 = vld [vmem:[#allocation8 + $0x588] sm:$0xff]
        %v822 = vld [vmem:[#allocation8 + $0x590] sm:$0xff]
        %v823 = vld [vmem:[#allocation8 + $0x598] sm:$0xff]
        %v824 = vld [vmem:[#allocation8 + $0x5a0] sm:$0xff]
        %v825 = vld [vmem:[#allocation8 + $0x5a8] sm:$0xff]
        %v826 = vld [vmem:[#allocation8 + $0x5b0] sm:$0xff]
        %v827 = vld [vmem:[#allocation8 + $0x5b8] sm:$0xff]
        %v828 = vld [vmem:[#allocation8 + $0x5c0] sm:$0xff]
        %v829 = vld [vmem:[#allocation8 + $0x5c8] sm:$0xff]
        %v830 = vld [vmem:[#allocation8 + $0x5d0] sm:$0xff]
        %v831 = vld [vmem:[#allocation8 + $0x5d8] sm:$0xff]
        %v832 = vld [vmem:[#allocation8 + $0x5e0] sm:$0xff]
        %v833 = vld [vmem:[#allocation8 + $0x5e8] sm:$0xff]
        %v834 = vld [vmem:[#allocation8 + $0x5f0] sm:$0xff]
        %v835 = vld [vmem:[#allocation8 + $0x5f8] sm:$0xff]
        %v836 = vld [vmem:[#allocation8 + $0x600] sm:$0xff]
        %v837 = vld [vmem:[#allocation8 + $0x608] sm:$0xff]
        %v838 = vld [vmem:[#allocation8 + $0x610] sm:$0xff]
        %v839 = vld [vmem:[#allocation8 + $0x618] sm:$0xff]
        %v840 = vld [vmem:[#allocation8 + $0x620] sm:$0xff]
        %v841 = vld [vmem:[#allocation8 + $0x628] sm:$0xff]
        %v842 = vld [vmem:[#allocation8 + $0x630] sm:$0xff]
        %v843 = vld [vmem:[#allocation8 + $0x638] sm:$0xff]
        %v844 = vld [vmem:[#allocation8 + $0x640] sm:$0xff]
        %v845 = vld [vmem:[#allocation8 + $0x648] sm:$0xff]
        %v846 = vld [vmem:[#allocation8 + $0x650] sm:$0xff]
        %v847 = vld [vmem:[#allocation8 + $0x658] sm:$0xff]
        %v848 = vld [vmem:[#allocation8 + $0x660] sm:$0xff]
        %v849 = vld [vmem:[#allocation8 + $0x668] sm:$0xff]
        %v850 = vld [vmem:[#allocation8 + $0x670] sm:$0xff]
        %v851 = vld [vmem:[#allocation8 + $0x678] sm:$0xff]
        %v852 = vld [vmem:[#allocation8 + $0x680] sm:$0xff]
        %v853 = vld [vmem:[#allocation8 + $0x688] sm:$0xff]
        %v854 = vld [vmem:[#allocation8 + $0x690] sm:$0xff]
        %v855 = vld [vmem:[#allocation8 + $0x698] sm:$0xff]
        %v856 = vld [vmem:[#allocation8 + $0x6a0] sm:$0xff]
        %v857 = vld [vmem:[#allocation8 + $0x6a8] sm:$0xff]
        %v858 = vld [vmem:[#allocation8 + $0x6b0] sm:$0xff]
        %v859 = vld [vmem:[#allocation8 + $0x6b8] sm:$0xff]
        %v860 = vld [vmem:[#allocation8 + $0x6c0] sm:$0xff]
        %v861 = vld [vmem:[#allocation8 + $0x6c8] sm:$0xff]
        %v862 = vld [vmem:[#allocation8 + $0x6d0] sm:$0xff]
        %v863 = vld [vmem:[#allocation8 + $0x6d8] sm:$0xff]
        %v864 = vld [vmem:[#allocation8 + $0x6e0] sm:$0xff]
        %v865 = vld [vmem:[#allocation8 + $0x6e8] sm:$0xff]
        %v866 = vld [vmem:[#allocation8 + $0x6f0] sm:$0xff]
        %v867 = vld [vmem:[#allocation8 + $0x6f8] sm:$0xff]
        %v868 = vld [vmem:[#allocation8 + $0x700] sm:$0xff]
        %v869 = vld [vmem:[#allocation8 + $0x708] sm:$0xff]
        %v870 = vld [vmem:[#allocation8 + $0x710] sm:$0xff]
        %v871 = vld [vmem:[#allocation8 + $0x718] sm:$0xff]
        %v872 = vld [vmem:[#allocation8 + $0x720] sm:$0xff]
        %v873 = vld [vmem:[#allocation8 + $0x728] sm:$0xff]
        %v874 = vld [vmem:[#allocation8 + $0x730] sm:$0xff]
        %v875 = vld [vmem:[#allocation8 + $0x738] sm:$0xff]
        %v876 = vld [vmem:[#allocation8 + $0x740] sm:$0xff]
        %v877 = vld [vmem:[#allocation8 + $0x748] sm:$0xff]
        %v878 = vld [vmem:[#allocation8 + $0x750] sm:$0xff]
        %v879 = vld [vmem:[#allocation8 + $0x758] sm:$0xff]
        %v880 = vld [vmem:[#allocation8 + $0x760] sm:$0xff]
        %v881 = vld [vmem:[#allocation8 + $0x768] sm:$0xff]
        %v882 = vld [vmem:[#allocation8 + $0x770] sm:$0xff]
        %v883 = vld [vmem:[#allocation8 + $0x778] sm:$0xff]
        %v884 = vld [vmem:[#allocation8 + $0x780] sm:$0xff]
        %v885 = vld [vmem:[#allocation8 + $0x788] sm:$0xff]
        %v886 = vld [vmem:[#allocation8 + $0x790] sm:$0xff]
        %v887 = vld [vmem:[#allocation8 + $0x798] sm:$0xff]
        %v888 = vld [vmem:[#allocation8 + $0x7a0] sm:$0xff]
        %v889 = vld [vmem:[#allocation8 + $0x7a8] sm:$0xff]
        %v890 = vld [vmem:[#allocation8 + $0x7b0] sm:$0xff]
        %v891 = vld [vmem:[#allocation8 + $0x7b8] sm:$0xff]
        %v892 = vld [vmem:[#allocation8 + $0x7c0] sm:$0xff]
        %v893 = vld [vmem:[#allocation8 + $0x7c8] sm:$0xff]
        %v894 = vld [vmem:[#allocation8 + $0x7d0] sm:$0xff]
        %v895 = vld [vmem:[#allocation8 + $0x7d8] sm:$0xff]
        %v896 = vld [vmem:[#allocation8 + $0x7e0] sm:$0xff]
        %v897 = vld [vmem:[#allocation8 + $0x7e8] sm:$0xff]
        %v898 = vld [vmem:[#allocation8 + $0x7f0] sm:$0xff]
        %v899 = vld [vmem:[#allocation8 + $0x7f8] sm:$0xff]
        %v900 = vpack.c.b16 %v620, %v620
        %v901 = vpack.c.b16 %v621, %v621
        %904 = vxpose.xlu0.c.b16.start [1/8] %v900, 128
        %905 = vxpose.xlu0.c.b16.cont [2/8] 0, 128
        %906 = vxpose.xlu0.c.b16.cont [3/8] 0, 128
        %907 = vxpose.xlu0.c.b16.cont [4/8] 0, 128
        %908 = vxpose.xlu0.c.b16.cont [5/8] 0, 128
        %909 = vxpose.xlu0.c.b16.cont [6/8] 0, 128
        %910 = vxpose.xlu0.c.b16.cont [7/8] 0, 128
        %911 = vxpose.xlu0.c.b16.end [8/8] 0, 128
        %v912 = vpop.trf.xlu0
        %v913 = vpop.trf.xlu0
        %v914 = vpop.trf.xlu0
        %v915 = vpop.trf.xlu0
        %v916 = vpop.trf.xlu0
        %v917 = vpop.trf.xlu0
        %v918 = vpop.trf.xlu0
        %v919 = vpop.trf.xlu0
        %920 = vxpose.xlu0.c.b16.start [1/8] %v901, 128
        %921 = vxpose.xlu0.c.b16.cont [2/8] 0, 128
        %922 = vxpose.xlu0.c.b16.cont [3/8] 0, 128
        %923 = vxpose.xlu0.c.b16.cont [4/8] 0, 128
        %924 = vxpose.xlu0.c.b16.cont [5/8] 0, 128
        %925 = vxpose.xlu0.c.b16.cont [6/8] 0, 128
        %926 = vxpose.xlu0.c.b16.cont [7/8] 0, 128
        %927 = vxpose.xlu0.c.b16.end [8/8] 0, 128
        %v928 = vpop.trf.xlu0
        %v929 = vpop.trf.xlu0
        %v930 = vpop.trf.xlu0
        %v931 = vpop.trf.xlu0
        %v932 = vpop.trf.xlu0
        %v933 = vpop.trf.xlu0
        %v934 = vpop.trf.xlu0
        %v935 = vpop.trf.xlu0
        %v936 = vpack.c.b16 %v628, %v628
        %v937 = vpack.c.b16 %v629, %v629
        %vm938 = vcmask 64512
        %v940 = vsel %vm938, %v912, 0
        %v943 = vsel %vm938, %v913, 0
        %v946 = vsel %vm938, %v914, 0
        %v949 = vsel %vm938, %v915, 0
        %v952 = vsel %vm938, %v916, 0
        %v955 = vsel %vm938, %v917, 0
        %v958 = vsel %vm938, %v918, 0
        %v961 = vsel %vm938, %v919, 0
        %v964 = vsel %vm938, %v928, 0
        %v967 = vsel %vm938, %v929, 0
        %v970 = vsel %vm938, %v930, 0
        %v973 = vsel %vm938, %v931, 0
        %v976 = vsel %vm938, %v932, 0
        %v979 = vsel %vm938, %v933, 0
        %v982 = vsel %vm938, %v934, 0
        %v985 = vsel %vm938, %v935, 0
        %vm987 = vcmask 1043456
        %v989 = vsel %vm987, %v936, 0
        %v992 = vsel %vm987, %v937, 0
        %994 = vmatprep.subr.bf16.mxu0 %v992
        %995 = vmatpush1.bf16.msra.mxu0 %v989
        %996 = vmatprep.subr.bf16.mxu0 0
        %997 = vmatpush1.bf16.msra.mxu0 0
        %998 = vmatprep.subr.bf16.mxu0 0
        %999 = vmatpush1.bf16.msra.mxu0 0
        %1000 = vmatprep.subr.bf16.mxu0 0
        %1001 = vmatpush1.bf16.msra.mxu0 0
        %1002 = vmatprep.subr.bf16.mxu0 0
        %1003 = vmatpush1.bf16.msra.mxu0 0
        %1004 = vmatprep.subr.bf16.mxu0 0
        %1005 = vmatpush1.bf16.msra.mxu0 0
        %1006 = vmatprep.subr.bf16.mxu0 0
        %1007 = vmatpush1.bf16.msra.mxu0 0
        %1008 = vmatprep.subr.bf16.mxu0 0
        %1009 = vmatpush1.bf16.msra.mxu0 0
        %1010 = vmatprep.subr.bf16.mxu0 0
        %1011 = vmatpush1.bf16.msra.mxu0 0
        %1012 = vmatprep.subr.bf16.mxu0 0
        %1013 = vmatpush1.bf16.msra.mxu0 0
        %1014 = vmatprep.subr.bf16.mxu0 0
        %1015 = vmatpush1.bf16.msra.mxu0 0
        %1016 = vmatprep.subr.bf16.mxu0 0
        %1017 = vmatpush1.bf16.msra.mxu0 0
        %1018 = vmatprep.subr.bf16.mxu0 0
        %1019 = vmatpush1.bf16.msra.mxu0 0
        %1020 = vmatprep.subr.bf16.mxu0 0
        %1021 = vmatpush1.bf16.msra.mxu0 0
        %1022 = vmatprep.subr.bf16.mxu0 0
        %1023 = vmatpush1.bf16.msra.mxu0 0
        %1024 = vmatprep.subr.bf16.mxu0 0
        %1025 = vmatpush1.bf16.msra.mxu0 0
        %1026 = vmatprep.mubr.bf16.mxu0 0
        %1027 = vmatmul.mubr.bf16.gmra.mrb[0].mxu0 %v940
        %v1028 = vpop.f32.mrb[0].mxu0
        %v1029 = vadd.f32 %v644, %v1028
        %v1030 = vpop.f32.mrb[0].mxu0
        %v1031 = vadd.f32 %v645, %v1030
        %v1032 = vpop.f32.mrb[0].mxu0
        %v1033 = vadd.f32 %v646, %v1032
        %v1034 = vpop.f32.mrb[0].mxu0
        %v1035 = vadd.f32 %v647, %v1034
        %1036 = vmatprep.mubr.bf16.mxu0 0
        %1037 = vmatmul.mubr.bf16.gmra.mrb[0].mxu0 %v943
        %v1038 = vpop.f32.mrb[0].mxu0
        %v1039 = vadd.f32 %v648, %v1038
        %v1040 = vpop.f32.mrb[0].mxu0
        %v1041 = vadd.f32 %v649, %v1040
        %v1042 = vpop.f32.mrb[0].mxu0
        %v1043 = vadd.f32 %v650, %v1042
        %v1044 = vpop.f32.mrb[0].mxu0
        %v1045 = vadd.f32 %v651, %v1044
        %1046 = vmatprep.mubr.bf16.mxu0 0
        %1047 = vmatmul.mubr.bf16.gmra.mrb[0].mxu0 %v946
        %v1048 = vpop.f32.mrb[0].mxu0
        %v1049 = vadd.f32 %v652, %v1048
        %v1050 = vpop.f32.mrb[0].mxu0
        %v1051 = vadd.f32 %v653, %v1050
        %v1052 = vpop.f32.mrb[0].mxu0
        %v1053 = vadd.f32 %v654, %v1052
        %v1054 = vpop.f32.mrb[0].mxu0
        %v1055 = vadd.f32 %v655, %v1054
        %1056 = vmatprep.mubr.bf16.mxu0 0
        %1057 = vmatmul.mubr.bf16.gmra.mrb[0].mxu0 %v949
        %v1058 = vpop.f32.mrb[0].mxu0
        %v1059 = vadd.f32 %v656, %v1058
        %v1060 = vpop.f32.mrb[0].mxu0
        %v1061 = vadd.f32 %v657, %v1060
        %v1062 = vpop.f32.mrb[0].mxu0
        %v1063 = vadd.f32 %v658, %v1062
        %v1064 = vpop.f32.mrb[0].mxu0
        %v1065 = vadd.f32 %v659, %v1064
        %1066 = vmatprep.mubr.bf16.mxu0 0
        %1067 = vmatmul.mubr.bf16.gmra.mrb[0].mxu0 %v952
        %v1068 = vpop.f32.mrb[0].mxu0
        %v1069 = vadd.f32 %v660, %v1068
        %v1070 = vpop.f32.mrb[0].mxu0
        %v1071 = vadd.f32 %v661, %v1070
        %v1072 = vpop.f32.mrb[0].mxu0
        %v1073 = vadd.f32 %v662, %v1072
        %v1074 = vpop.f32.mrb[0].mxu0
        %v1075 = vadd.f32 %v663, %v1074
        %1076 = vmatprep.mubr.bf16.mxu0 0
        %1077 = vmatmul.mubr.bf16.gmra.mrb[0].mxu0 %v955
        %v1078 = vpop.f32.mrb[0].mxu0
        %v1079 = vadd.f32 %v664, %v1078
        %v1080 = vpop.f32.mrb[0].mxu0
        %v1081 = vadd.f32 %v665, %v1080
        %v1082 = vpop.f32.mrb[0].mxu0
        %v1083 = vadd.f32 %v666, %v1082
        %v1084 = vpop.f32.mrb[0].mxu0
        %v1085 = vadd.f32 %v667, %v1084
        %1086 = vmatprep.mubr.bf16.mxu0 0
        %1087 = vmatmul.mubr.bf16.gmra.mrb[0].mxu0 %v958
        %v1088 = vpop.f32.mrb[0].mxu0
        %v1089 = vadd.f32 %v668, %v1088
        %v1090 = vpop.f32.mrb[0].mxu0
        %v1091 = vadd.f32 %v669, %v1090
        %v1092 = vpop.f32.mrb[0].mxu0
        %v1093 = vadd.f32 %v670, %v1092
        %v1094 = vpop.f32.mrb[0].mxu0
        %v1095 = vadd.f32 %v671, %v1094
        %1096 = vmatprep.mubr.bf16.mxu0 0
        %1097 = vmatmul.mubr.bf16.gmra.mrb[0].mxu0 %v961
        %v1098 = vpop.f32.mrb[0].mxu0
        %v1099 = vadd.f32 %v672, %v1098
        %v1100 = vpop.f32.mrb[0].mxu0
        %v1101 = vadd.f32 %v673, %v1100
        %v1102 = vpop.f32.mrb[0].mxu0
        %v1103 = vadd.f32 %v674, %v1102
        %v1104 = vpop.f32.mrb[0].mxu0
        %v1105 = vadd.f32 %v675, %v1104
        %1106 = vmatprep.mubr.bf16.mxu0 0
        %1107 = vmatmul.mubr.bf16.gmra.mrb[0].mxu0 %v964
        %v1108 = vpop.f32.mrb[0].mxu0
        %v1109 = vadd.f32 %v676, %v1108
        %v1110 = vpop.f32.mrb[0].mxu0
        %v1111 = vadd.f32 %v677, %v1110
        %v1112 = vpop.f32.mrb[0].mxu0
        %v1113 = vadd.f32 %v678, %v1112
        %v1114 = vpop.f32.mrb[0].mxu0
        %v1115 = vadd.f32 %v679, %v1114
        %1116 = vmatprep.mubr.bf16.mxu0 0
        %1117 = vmatmul.mubr.bf16.gmra.mrb[0].mxu0 %v967
        %v1118 = vpop.f32.mrb[0].mxu0
        %v1119 = vadd.f32 %v680, %v1118
        %v1120 = vpop.f32.mrb[0].mxu0
        %v1121 = vadd.f32 %v681, %v1120
        %v1122 = vpop.f32.mrb[0].mxu0
        %v1123 = vadd.f32 %v682, %v1122
        %v1124 = vpop.f32.mrb[0].mxu0
        %v1125 = vadd.f32 %v683, %v1124
        %1126 = vmatprep.mubr.bf16.mxu0 0
        %1127 = vmatmul.mubr.bf16.gmra.mrb[0].mxu0 %v970
        %v1128 = vpop.f32.mrb[0].mxu0
        %v1129 = vadd.f32 %v684, %v1128
        %v1130 = vpop.f32.mrb[0].mxu0
        %v1131 = vadd.f32 %v685, %v1130
        %v1132 = vpop.f32.mrb[0].mxu0
        %v1133 = vadd.f32 %v686, %v1132
        %v1134 = vpop.f32.mrb[0].mxu0
        %v1135 = vadd.f32 %v687, %v1134
        %1136 = vmatprep.mubr.bf16.mxu0 0
        %1137 = vmatmul.mubr.bf16.gmra.mrb[0].mxu0 %v973
        %v1138 = vpop.f32.mrb[0].mxu0
        %v1139 = vadd.f32 %v688, %v1138
        %v1140 = vpop.f32.mrb[0].mxu0
        %v1141 = vadd.f32 %v689, %v1140
        %v1142 = vpop.f32.mrb[0].mxu0
        %v1143 = vadd.f32 %v690, %v1142
        %v1144 = vpop.f32.mrb[0].mxu0
        %v1145 = vadd.f32 %v691, %v1144
        %1146 = vmatprep.mubr.bf16.mxu0 0
        %1147 = vmatmul.mubr.bf16.gmra.mrb[0].mxu0 %v976
        %v1148 = vpop.f32.mrb[0].mxu0
        %v1149 = vadd.f32 %v692, %v1148
        %v1150 = vpop.f32.mrb[0].mxu0
        %v1151 = vadd.f32 %v693, %v1150
        %v1152 = vpop.f32.mrb[0].mxu0
        %v1153 = vadd.f32 %v694, %v1152
        %v1154 = vpop.f32.mrb[0].mxu0
        %v1155 = vadd.f32 %v695, %v1154
        %1156 = vmatprep.mubr.bf16.mxu0 0
        %1157 = vmatmul.mubr.bf16.gmra.mrb[0].mxu0 %v979
        %v1158 = vpop.f32.mrb[0].mxu0
        %v1159 = vadd.f32 %v696, %v1158
        %v1160 = vpop.f32.mrb[0].mxu0
        %v1161 = vadd.f32 %v697, %v1160
        %v1162 = vpop.f32.mrb[0].mxu0
        %v1163 = vadd.f32 %v698, %v1162
        %v1164 = vpop.f32.mrb[0].mxu0
        %v1165 = vadd.f32 %v699, %v1164
        %1166 = vmatprep.mubr.bf16.mxu0 0
        %1167 = vmatmul.mubr.bf16.gmra.mrb[0].mxu0 %v982
        %v1168 = vpop.f32.mrb[0].mxu0
        %v1169 = vadd.f32 %v700, %v1168
        %v1170 = vpop.f32.mrb[0].mxu0
        %v1171 = vadd.f32 %v701, %v1170
        %v1172 = vpop.f32.mrb[0].mxu0
        %v1173 = vadd.f32 %v702, %v1172
        %v1174 = vpop.f32.mrb[0].mxu0
        %v1175 = vadd.f32 %v703, %v1174
        %1176 = vmatprep.mubr.bf16.mxu0 0
        %1177 = vmatmul.mubr.bf16.gmra.mrb[0].mxu0 %v985
        %v1178 = vpop.f32.mrb[0].mxu0
        %v1179 = vadd.f32 %v704, %v1178
        %v1180 = vpop.f32.mrb[0].mxu0
        %v1181 = vadd.f32 %v705, %v1180
        %v1182 = vpop.f32.mrb[0].mxu0
        %v1183 = vadd.f32 %v706, %v1182
        %v1184 = vpop.f32.mrb[0].mxu0
        %v1185 = vadd.f32 %v707, %v1184
        %1186 = vdwg.mxu0
        %v1187 = vpack.c.b16 %v622, %v622
        %v1188 = vpack.c.b16 %v623, %v623
        %1191 = vxpose.xlu0.c.b16.start [1/8] %v1187, 128
        %1192 = vxpose.xlu0.c.b16.cont [2/8] 0, 128
        %1193 = vxpose.xlu0.c.b16.cont [3/8] 0, 128
        %1194 = vxpose.xlu0.c.b16.cont [4/8] 0, 128
        %1195 = vxpose.xlu0.c.b16.cont [5/8] 0, 128
        %1196 = vxpose.xlu0.c.b16.cont [6/8] 0, 128
        %1197 = vxpose.xlu0.c.b16.cont [7/8] 0, 128
        %1198 = vxpose.xlu0.c.b16.end [8/8] 0, 128
        %v1199 = vpop.trf.xlu0
        %v1200 = vpop.trf.xlu0
        %v1201 = vpop.trf.xlu0
        %v1202 = vpop.trf.xlu0
        %v1203 = vpop.trf.xlu0
        %v1204 = vpop.trf.xlu0
        %v1205 = vpop.trf.xlu0
        %v1206 = vpop.trf.xlu0
        %1207 = vxpose.xlu0.c.b16.start [1/8] %v1188, 128
        %1208 = vxpose.xlu0.c.b16.cont [2/8] 0, 128
        %1209 = vxpose.xlu0.c.b16.cont [3/8] 0, 128
        %1210 = vxpose.xlu0.c.b16.cont [4/8] 0, 128
        %1211 = vxpose.xlu0.c.b16.cont [5/8] 0, 128
        %1212 = vxpose.xlu0.c.b16.cont [6/8] 0, 128
        %1213 = vxpose.xlu0.c.b16.cont [7/8] 0, 128
        %1214 = vxpose.xlu0.c.b16.end [8/8] 0, 128
        %v1215 = vpop.trf.xlu0
        %v1216 = vpop.trf.xlu0
        %v1217 = vpop.trf.xlu0
        %v1218 = vpop.trf.xlu0
        %v1219 = vpop.trf.xlu0
        %v1220 = vpop.trf.xlu0
        %v1221 = vpop.trf.xlu0
        %v1222 = vpop.trf.xlu0
        %v1223 = vpack.c.b16 %v630, %v630
        %v1224 = vpack.c.b16 %v631, %v631
        %v1226 = vsel %vm938, %v1199, 0
        %v1229 = vsel %vm938, %v1200, 0
        %v1232 = vsel %vm938, %v1201, 0
        %v1235 = vsel %vm938, %v1202, 0
        %v1238 = vsel %vm938, %v1203, 0
        %v1241 = vsel %vm938, %v1204, 0
        %v1244 = vsel %vm938, %v1205, 0
        %v1247 = vsel %vm938, %v1206, 0
        %v1250 = vsel %vm938, %v1215, 0
        %v1253 = vsel %vm938, %v1216, 0
        %v1256 = vsel %vm938, %v1217, 0
        %v1259 = vsel %vm938, %v1218, 0
        %v1262 = vsel %vm938, %v1219, 0
        %v1265 = vsel %vm938, %v1220, 0
        %v1268 = vsel %vm938, %v1221, 0
        %v1271 = vsel %vm938, %v1222, 0
        %v1274 = vsel %vm987, %v1223, 0
        %v1277 = vsel %vm987, %v1224, 0
        %1279 = vmatprep.subr.bf16.mxu0 %v1277
        %1280 = vmatpush1.bf16.msra.mxu0 %v1274
        %1281 = vmatprep.subr.bf16.mxu0 0
        %1282 = vmatpush1.bf16.msra.mxu0 0
        %1283 = vmatprep.subr.bf16.mxu0 0
        %1284 = vmatpush1.bf16.msra.mxu0 0
        %1285 = vmatprep.subr.bf16.mxu0 0
        %1286 = vmatpush1.bf16.msra.mxu0 0
        %1287 = vmatprep.subr.bf16.mxu0 0
        %1288 = vmatpush1.bf16.msra.mxu0 0
        %1289 = vmatprep.subr.bf16.mxu0 0
        %1290 = vmatpush1.bf16.msra.mxu0 0
        %1291 = vmatprep.subr.bf16.mxu0 0
        %1292 = vmatpush1.bf16.msra.mxu0 0
        %1293 = vmatprep.subr.bf16.mxu0 0
        %1294 = vmatpush1.bf16.msra.mxu0 0
        %1295 = vmatprep.subr.bf16.mxu0 0
        %1296 = vmatpush1.bf16.msra.mxu0 0
        %1297 = vmatprep.subr.bf16.mxu0 0
        %1298 = vmatpush1.bf16.msra.mxu0 0
        %1299 = vmatprep.subr.bf16.mxu0 0
        %1300 = vmatpush1.bf16.msra.mxu0 0
        %1301 = vmatprep.subr.bf16.mxu0 0
        %1302 = vmatpush1.bf16.msra.mxu0 0
        %1303 = vmatprep.subr.bf16.mxu0 0
        %1304 = vmatpush1.bf16.msra.mxu0 0
        %1305 = vmatprep.subr.bf16.mxu0 0
        %1306 = vmatpush1.bf16.msra.mxu0 0
        %1307 = vmatprep.subr.bf16.mxu0 0
        %1308 = vmatpush1.bf16.msra.mxu0 0
        %1309 = vmatprep.subr.bf16.mxu0 0
        %1310 = vmatpush1.bf16.msra.mxu0 0
        %1311 = vmatprep.mubr.bf16.mxu0 0
        %1312 = vmatmul.mubr.bf16.gmra.mrb[0].mxu0 %v1226
        %v1313 = vpop.f32.mrb[0].mxu0
        %v1314 = vadd.f32 %v708, %v1313
        %v1315 = vpop.f32.mrb[0].mxu0
        %v1316 = vadd.f32 %v709, %v1315
        %v1317 = vpop.f32.mrb[0].mxu0
        %v1318 = vadd.f32 %v710, %v1317
        %v1319 = vpop.f32.mrb[0].mxu0
        %v1320 = vadd.f32 %v711, %v1319
        %1321 = vmatprep.mubr.bf16.mxu0 0
        %1322 = vmatmul.mubr.bf16.gmra.mrb[0].mxu0 %v1229
        %v1323 = vpop.f32.mrb[0].mxu0
        %v1324 = vadd.f32 %v712, %v1323
        %v1325 = vpop.f32.mrb[0].mxu0
        %v1326 = vadd.f32 %v713, %v1325
        %v1327 = vpop.f32.mrb[0].mxu0
        %v1328 = vadd.f32 %v714, %v1327
        %v1329 = vpop.f32.mrb[0].mxu0
        %v1330 = vadd.f32 %v715, %v1329
        %1331 = vmatprep.mubr.bf16.mxu0 0
        %1332 = vmatmul.mubr.bf16.gmra.mrb[0].mxu0 %v1232
        %v1333 = vpop.f32.mrb[0].mxu0
        %v1334 = vadd.f32 %v716, %v1333
        %v1335 = vpop.f32.mrb[0].mxu0
        %v1336 = vadd.f32 %v717, %v1335
        %v1337 = vpop.f32.mrb[0].mxu0
        %v1338 = vadd.f32 %v718, %v1337
        %v1339 = vpop.f32.mrb[0].mxu0
        %v1340 = vadd.f32 %v719, %v1339
        %1341 = vmatprep.mubr.bf16.mxu0 0
        %1342 = vmatmul.mubr.bf16.gmra.mrb[0].mxu0 %v1235
        %v1343 = vpop.f32.mrb[0].mxu0
        %v1344 = vadd.f32 %v720, %v1343
        %v1345 = vpop.f32.mrb[0].mxu0
        %v1346 = vadd.f32 %v721, %v1345
        %v1347 = vpop.f32.mrb[0].mxu0
        %v1348 = vadd.f32 %v722, %v1347
        %v1349 = vpop.f32.mrb[0].mxu0
        %v1350 = vadd.f32 %v723, %v1349
        %1351 = vmatprep.mubr.bf16.mxu0 0
        %1352 = vmatmul.mubr.bf16.gmra.mrb[0].mxu0 %v1238
        %v1353 = vpop.f32.mrb[0].mxu0
        %v1354 = vadd.f32 %v724, %v1353
        %v1355 = vpop.f32.mrb[0].mxu0
        %v1356 = vadd.f32 %v725, %v1355
        %v1357 = vpop.f32.mrb[0].mxu0
        %v1358 = vadd.f32 %v726, %v1357
        %v1359 = vpop.f32.mrb[0].mxu0
        %v1360 = vadd.f32 %v727, %v1359
        %1361 = vmatprep.mubr.bf16.mxu0 0
        %1362 = vmatmul.mubr.bf16.gmra.mrb[0].mxu0 %v1241
        %v1363 = vpop.f32.mrb[0].mxu0
        %v1364 = vadd.f32 %v728, %v1363
        %v1365 = vpop.f32.mrb[0].mxu0
        %v1366 = vadd.f32 %v729, %v1365
        %v1367 = vpop.f32.mrb[0].mxu0
        %v1368 = vadd.f32 %v730, %v1367
        %v1369 = vpop.f32.mrb[0].mxu0
        %v1370 = vadd.f32 %v731, %v1369
        %1371 = vmatprep.mubr.bf16.mxu0 0
        %1372 = vmatmul.mubr.bf16.gmra.mrb[0].mxu0 %v1244
        %v1373 = vpop.f32.mrb[0].mxu0
        %v1374 = vadd.f32 %v732, %v1373
        %v1375 = vpop.f32.mrb[0].mxu0
        %v1376 = vadd.f32 %v733, %v1375
        %v1377 = vpop.f32.mrb[0].mxu0
        %v1378 = vadd.f32 %v734, %v1377
        %v1379 = vpop.f32.mrb[0].mxu0
        %v1380 = vadd.f32 %v735, %v1379
        %1381 = vmatprep.mubr.bf16.mxu0 0
        %1382 = vmatmul.mubr.bf16.gmra.mrb[0].mxu0 %v1247
        %v1383 = vpop.f32.mrb[0].mxu0
        %v1384 = vadd.f32 %v736, %v1383
        %v1385 = vpop.f32.mrb[0].mxu0
        %v1386 = vadd.f32 %v737, %v1385
        %v1387 = vpop.f32.mrb[0].mxu0
        %v1388 = vadd.f32 %v738, %v1387
        %v1389 = vpop.f32.mrb[0].mxu0
        %v1390 = vadd.f32 %v739, %v1389
        %1391 = vmatprep.mubr.bf16.mxu0 0
        %1392 = vmatmul.mubr.bf16.gmra.mrb[0].mxu0 %v1250
        %v1393 = vpop.f32.mrb[0].mxu0
        %v1394 = vadd.f32 %v740, %v1393
        %v1395 = vpop.f32.mrb[0].mxu0
        %v1396 = vadd.f32 %v741, %v1395
        %v1397 = vpop.f32.mrb[0].mxu0
        %v1398 = vadd.f32 %v742, %v1397
        %v1399 = vpop.f32.mrb[0].mxu0
        %v1400 = vadd.f32 %v743, %v1399
        %1401 = vmatprep.mubr.bf16.mxu0 0
        %1402 = vmatmul.mubr.bf16.gmra.mrb[0].mxu0 %v1253
        %v1403 = vpop.f32.mrb[0].mxu0
        %v1404 = vadd.f32 %v744, %v1403
        %v1405 = vpop.f32.mrb[0].mxu0
        %v1406 = vadd.f32 %v745, %v1405
        %v1407 = vpop.f32.mrb[0].mxu0
        %v1408 = vadd.f32 %v746, %v1407
        %v1409 = vpop.f32.mrb[0].mxu0
        %v1410 = vadd.f32 %v747, %v1409
        %1411 = vmatprep.mubr.bf16.mxu0 0
        %1412 = vmatmul.mubr.bf16.gmra.mrb[0].mxu0 %v1256
        %v1413 = vpop.f32.mrb[0].mxu0
        %v1414 = vadd.f32 %v748, %v1413
        %v1415 = vpop.f32.mrb[0].mxu0
        %v1416 = vadd.f32 %v749, %v1415
        %v1417 = vpop.f32.mrb[0].mxu0
        %v1418 = vadd.f32 %v750, %v1417
        %v1419 = vpop.f32.mrb[0].mxu0
        %v1420 = vadd.f32 %v751, %v1419
        %1421 = vmatprep.mubr.bf16.mxu0 0
        %1422 = vmatmul.mubr.bf16.gmra.mrb[0].mxu0 %v1259
        %v1423 = vpop.f32.mrb[0].mxu0
        %v1424 = vadd.f32 %v752, %v1423
        %v1425 = vpop.f32.mrb[0].mxu0
        %v1426 = vadd.f32 %v753, %v1425
        %v1427 = vpop.f32.mrb[0].mxu0
        %v1428 = vadd.f32 %v754, %v1427
        %v1429 = vpop.f32.mrb[0].mxu0
        %v1430 = vadd.f32 %v755, %v1429
        %1431 = vmatprep.mubr.bf16.mxu0 0
        %1432 = vmatmul.mubr.bf16.gmra.mrb[0].mxu0 %v1262
        %v1433 = vpop.f32.mrb[0].mxu0
        %v1434 = vadd.f32 %v756, %v1433
        %v1435 = vpop.f32.mrb[0].mxu0
        %v1436 = vadd.f32 %v757, %v1435
        %v1437 = vpop.f32.mrb[0].mxu0
        %v1438 = vadd.f32 %v758, %v1437
        %v1439 = vpop.f32.mrb[0].mxu0
        %v1440 = vadd.f32 %v759, %v1439
        %1441 = vmatprep.mubr.bf16.mxu0 0
        %1442 = vmatmul.mubr.bf16.gmra.mrb[0].mxu0 %v1265
        %v1443 = vpop.f32.mrb[0].mxu0
        %v1444 = vadd.f32 %v760, %v1443
        %v1445 = vpop.f32.mrb[0].mxu0
        %v1446 = vadd.f32 %v761, %v1445
        %v1447 = vpop.f32.mrb[0].mxu0
        %v1448 = vadd.f32 %v762, %v1447
        %v1449 = vpop.f32.mrb[0].mxu0
        %v1450 = vadd.f32 %v763, %v1449
        %1451 = vmatprep.mubr.bf16.mxu0 0
        %1452 = vmatmul.mubr.bf16.gmra.mrb[0].mxu0 %v1268
        %v1453 = vpop.f32.mrb[0].mxu0
        %v1454 = vadd.f32 %v764, %v1453
        %v1455 = vpop.f32.mrb[0].mxu0
        %v1456 = vadd.f32 %v765, %v1455
        %v1457 = vpop.f32.mrb[0].mxu0
        %v1458 = vadd.f32 %v766, %v1457
        %v1459 = vpop.f32.mrb[0].mxu0
        %v1460 = vadd.f32 %v767, %v1459
        %1461 = vmatprep.mubr.bf16.mxu0 0
        %1462 = vmatmul.mubr.bf16.gmra.mrb[0].mxu0 %v1271
        %v1463 = vpop.f32.mrb[0].mxu0
        %v1464 = vadd.f32 %v768, %v1463
        %v1465 = vpop.f32.mrb[0].mxu0
        %v1466 = vadd.f32 %v769, %v1465
        %v1467 = vpop.f32.mrb[0].mxu0
        %v1468 = vadd.f32 %v770, %v1467
        %v1469 = vpop.f32.mrb[0].mxu0
        %v1470 = vadd.f32 %v771, %v1469
        %1471 = vdwg.mxu0
        %v1472 = vpack.c.b16 %v624, %v624
        %v1473 = vpack.c.b16 %v625, %v625
        %1476 = vxpose.xlu0.c.b16.start [1/8] %v1472, 128
        %1477 = vxpose.xlu0.c.b16.cont [2/8] 0, 128
        %1478 = vxpose.xlu0.c.b16.cont [3/8] 0, 128
        %1479 = vxpose.xlu0.c.b16.cont [4/8] 0, 128
        %1480 = vxpose.xlu0.c.b16.cont [5/8] 0, 128
        %1481 = vxpose.xlu0.c.b16.cont [6/8] 0, 128
        %1482 = vxpose.xlu0.c.b16.cont [7/8] 0, 128
        %1483 = vxpose.xlu0.c.b16.end [8/8] 0, 128
        %v1484 = vpop.trf.xlu0
        %v1485 = vpop.trf.xlu0
        %v1486 = vpop.trf.xlu0
        %v1487 = vpop.trf.xlu0
        %v1488 = vpop.trf.xlu0
        %v1489 = vpop.trf.xlu0
        %v1490 = vpop.trf.xlu0
        %v1491 = vpop.trf.xlu0
        %1492 = vxpose.xlu0.c.b16.start [1/8] %v1473, 128
        %1493 = vxpose.xlu0.c.b16.cont [2/8] 0, 128
        %1494 = vxpose.xlu0.c.b16.cont [3/8] 0, 128
        %1495 = vxpose.xlu0.c.b16.cont [4/8] 0, 128
        %1496 = vxpose.xlu0.c.b16.cont [5/8] 0, 128
        %1497 = vxpose.xlu0.c.b16.cont [6/8] 0, 128
        %1498 = vxpose.xlu0.c.b16.cont [7/8] 0, 128
        %1499 = vxpose.xlu0.c.b16.end [8/8] 0, 128
        %v1500 = vpop.trf.xlu0
        %v1501 = vpop.trf.xlu0
        %v1502 = vpop.trf.xlu0
        %v1503 = vpop.trf.xlu0
        %v1504 = vpop.trf.xlu0
        %v1505 = vpop.trf.xlu0
        %v1506 = vpop.trf.xlu0
        %v1507 = vpop.trf.xlu0
        %v1508 = vpack.c.b16 %v632, %v632
        %v1509 = vpack.c.b16 %v633, %v633
        %v1511 = vsel %vm938, %v1484, 0
        %v1514 = vsel %vm938, %v1485, 0
        %v1517 = vsel %vm938, %v1486, 0
        %v1520 = vsel %vm938, %v1487, 0
        %v1523 = vsel %vm938, %v1488, 0
        %v1526 = vsel %vm938, %v1489, 0
        %v1529 = vsel %vm938, %v1490, 0
        %v1532 = vsel %vm938, %v1491, 0
        %v1535 = vsel %vm938, %v1500, 0
        %v1538 = vsel %vm938, %v1501, 0
        %v1541 = vsel %vm938, %v1502, 0
        %v1544 = vsel %vm938, %v1503, 0
        %v1547 = vsel %vm938, %v1504, 0
        %v1550 = vsel %vm938, %v1505, 0
        %v1553 = vsel %vm938, %v1506, 0
        %v1556 = vsel %vm938, %v1507, 0
        %v1559 = vsel %vm987, %v1508, 0
        %v1562 = vsel %vm987, %v1509, 0
        %1564 = vmatprep.subr.bf16.mxu0 %v1562
        %1565 = vmatpush1.bf16.msra.mxu0 %v1559
        %1566 = vmatprep.subr.bf16.mxu0 0
        %1567 = vmatpush1.bf16.msra.mxu0 0
        %1568 = vmatprep.subr.bf16.mxu0 0
        %1569 = vmatpush1.bf16.msra.mxu0 0
        %1570 = vmatprep.subr.bf16.mxu0 0
        %1571 = vmatpush1.bf16.msra.mxu0 0
        %1572 = vmatprep.subr.bf16.mxu0 0
        %1573 = vmatpush1.bf16.msra.mxu0 0
        %1574 = vmatprep.subr.bf16.mxu0 0
        %1575 = vmatpush1.bf16.msra.mxu0 0
        %1576 = vmatprep.subr.bf16.mxu0 0
        %1577 = vmatpush1.bf16.msra.mxu0 0
        %1578 = vmatprep.subr.bf16.mxu0 0
        %1579 = vmatpush1.bf16.msra.mxu0 0
        %1580 = vmatprep.subr.bf16.mxu0 0
        %1581 = vmatpush1.bf16.msra.mxu0 0
        %1582 = vmatprep.subr.bf16.mxu0 0
        %1583 = vmatpush1.bf16.msra.mxu0 0
        %1584 = vmatprep.subr.bf16.mxu0 0
        %1585 = vmatpush1.bf16.msra.mxu0 0
        %1586 = vmatprep.subr.bf16.mxu0 0
        %1587 = vmatpush1.bf16.msra.mxu0 0
        %1588 = vmatprep.subr.bf16.mxu0 0
        %1589 = vmatpush1.bf16.msra.mxu0 0
        %1590 = vmatprep.subr.bf16.mxu0 0
        %1591 = vmatpush1.bf16.msra.mxu0 0
        %1592 = vmatprep.subr.bf16.mxu0 0
        %1593 = vmatpush1.bf16.msra.mxu0 0
        %1594 = vmatprep.subr.bf16.mxu0 0
        %1595 = vmatpush1.bf16.msra.mxu0 0
        %1596 = vmatprep.mubr.bf16.mxu0 0
        %1597 = vmatmul.mubr.bf16.gmra.mrb[0].mxu0 %v1511
        %v1598 = vpop.f32.mrb[0].mxu0
        %v1599 = vadd.f32 %v772, %v1598
        %v1600 = vpop.f32.mrb[0].mxu0
        %v1601 = vadd.f32 %v773, %v1600
        %v1602 = vpop.f32.mrb[0].mxu0
        %v1603 = vadd.f32 %v774, %v1602
        %v1604 = vpop.f32.mrb[0].mxu0
        %v1605 = vadd.f32 %v775, %v1604
        %1606 = vmatprep.mubr.bf16.mxu0 0
        %1607 = vmatmul.mubr.bf16.gmra.mrb[0].mxu0 %v1514
        %v1608 = vpop.f32.mrb[0].mxu0
        %v1609 = vadd.f32 %v776, %v1608
        %v1610 = vpop.f32.mrb[0].mxu0
        %v1611 = vadd.f32 %v777, %v1610
        %v1612 = vpop.f32.mrb[0].mxu0
        %v1613 = vadd.f32 %v778, %v1612
        %v1614 = vpop.f32.mrb[0].mxu0
        %v1615 = vadd.f32 %v779, %v1614
        %1616 = vmatprep.mubr.bf16.mxu0 0
        %1617 = vmatmul.mubr.bf16.gmra.mrb[0].mxu0 %v1517
        %v1618 = vpop.f32.mrb[0].mxu0
        %v1619 = vadd.f32 %v780, %v1618
        %v1620 = vpop.f32.mrb[0].mxu0
        %v1621 = vadd.f32 %v781, %v1620
        %v1622 = vpop.f32.mrb[0].mxu0
        %v1623 = vadd.f32 %v782, %v1622
        %v1624 = vpop.f32.mrb[0].mxu0
        %v1625 = vadd.f32 %v783, %v1624
        %1626 = vmatprep.mubr.bf16.mxu0 0
        %1627 = vmatmul.mubr.bf16.gmra.mrb[0].mxu0 %v1520
        %v1628 = vpop.f32.mrb[0].mxu0
        %v1629 = vadd.f32 %v784, %v1628
        %v1630 = vpop.f32.mrb[0].mxu0
        %v1631 = vadd.f32 %v785, %v1630
        %v1632 = vpop.f32.mrb[0].mxu0
        %v1633 = vadd.f32 %v786, %v1632
        %v1634 = vpop.f32.mrb[0].mxu0
        %v1635 = vadd.f32 %v787, %v1634
        %1636 = vmatprep.mubr.bf16.mxu0 0
        %1637 = vmatmul.mubr.bf16.gmra.mrb[0].mxu0 %v1523
        %v1638 = vpop.f32.mrb[0].mxu0
        %v1639 = vadd.f32 %v788, %v1638
        %v1640 = vpop.f32.mrb[0].mxu0
        %v1641 = vadd.f32 %v789, %v1640
        %v1642 = vpop.f32.mrb[0].mxu0
        %v1643 = vadd.f32 %v790, %v1642
        %v1644 = vpop.f32.mrb[0].mxu0
        %v1645 = vadd.f32 %v791, %v1644
        %1646 = vmatprep.mubr.bf16.mxu0 0
        %1647 = vmatmul.mubr.bf16.gmra.mrb[0].mxu0 %v1526
        %v1648 = vpop.f32.mrb[0].mxu0
        %v1649 = vadd.f32 %v792, %v1648
        %v1650 = vpop.f32.mrb[0].mxu0
        %v1651 = vadd.f32 %v793, %v1650
        %v1652 = vpop.f32.mrb[0].mxu0
        %v1653 = vadd.f32 %v794, %v1652
        %v1654 = vpop.f32.mrb[0].mxu0
        %v1655 = vadd.f32 %v795, %v1654
        %1656 = vmatprep.mubr.bf16.mxu0 0
        %1657 = vmatmul.mubr.bf16.gmra.mrb[0].mxu0 %v1529
        %v1658 = vpop.f32.mrb[0].mxu0
        %v1659 = vadd.f32 %v796, %v1658
        %v1660 = vpop.f32.mrb[0].mxu0
        %v1661 = vadd.f32 %v797, %v1660
        %v1662 = vpop.f32.mrb[0].mxu0
        %v1663 = vadd.f32 %v798, %v1662
        %v1664 = vpop.f32.mrb[0].mxu0
        %v1665 = vadd.f32 %v799, %v1664
        %1666 = vmatprep.mubr.bf16.mxu0 0
        %1667 = vmatmul.mubr.bf16.gmra.mrb[0].mxu0 %v1532
        %v1668 = vpop.f32.mrb[0].mxu0
        %v1669 = vadd.f32 %v800, %v1668
        %v1670 = vpop.f32.mrb[0].mxu0
        %v1671 = vadd.f32 %v801, %v1670
        %v1672 = vpop.f32.mrb[0].mxu0
        %v1673 = vadd.f32 %v802, %v1672
        %v1674 = vpop.f32.mrb[0].mxu0
        %v1675 = vadd.f32 %v803, %v1674
        %1676 = vmatprep.mubr.bf16.mxu0 0
        %1677 = vmatmul.mubr.bf16.gmra.mrb[0].mxu0 %v1535
        %v1678 = vpop.f32.mrb[0].mxu0
        %v1679 = vadd.f32 %v804, %v1678
        %v1680 = vpop.f32.mrb[0].mxu0
        %v1681 = vadd.f32 %v805, %v1680
        %v1682 = vpop.f32.mrb[0].mxu0
        %v1683 = vadd.f32 %v806, %v1682
        %v1684 = vpop.f32.mrb[0].mxu0
        %v1685 = vadd.f32 %v807, %v1684
        %1686 = vmatprep.mubr.bf16.mxu0 0
        %1687 = vmatmul.mubr.bf16.gmra.mrb[0].mxu0 %v1538
        %v1688 = vpop.f32.mrb[0].mxu0
        %v1689 = vadd.f32 %v808, %v1688
        %v1690 = vpop.f32.mrb[0].mxu0
        %v1691 = vadd.f32 %v809, %v1690
        %v1692 = vpop.f32.mrb[0].mxu0
        %v1693 = vadd.f32 %v810, %v1692
        %v1694 = vpop.f32.mrb[0].mxu0
        %v1695 = vadd.f32 %v811, %v1694
        %1696 = vmatprep.mubr.bf16.mxu0 0
        %1697 = vmatmul.mubr.bf16.gmra.mrb[0].mxu0 %v1541
        %v1698 = vpop.f32.mrb[0].mxu0
        %v1699 = vadd.f32 %v812, %v1698
        %v1700 = vpop.f32.mrb[0].mxu0
        %v1701 = vadd.f32 %v813, %v1700
        %v1702 = vpop.f32.mrb[0].mxu0
        %v1703 = vadd.f32 %v814, %v1702
        %v1704 = vpop.f32.mrb[0].mxu0
        %v1705 = vadd.f32 %v815, %v1704
        %1706 = vmatprep.mubr.bf16.mxu0 0
        %1707 = vmatmul.mubr.bf16.gmra.mrb[0].mxu0 %v1544
        %v1708 = vpop.f32.mrb[0].mxu0
        %v1709 = vadd.f32 %v816, %v1708
        %v1710 = vpop.f32.mrb[0].mxu0
        %v1711 = vadd.f32 %v817, %v1710
        %v1712 = vpop.f32.mrb[0].mxu0
        %v1713 = vadd.f32 %v818, %v1712
        %v1714 = vpop.f32.mrb[0].mxu0
        %v1715 = vadd.f32 %v819, %v1714
        %1716 = vmatprep.mubr.bf16.mxu0 0
        %1717 = vmatmul.mubr.bf16.gmra.mrb[0].mxu0 %v1547
        %v1718 = vpop.f32.mrb[0].mxu0
        %v1719 = vadd.f32 %v820, %v1718
        %v1720 = vpop.f32.mrb[0].mxu0
        %v1721 = vadd.f32 %v821, %v1720
        %v1722 = vpop.f32.mrb[0].mxu0
        %v1723 = vadd.f32 %v822, %v1722
        %v1724 = vpop.f32.mrb[0].mxu0
        %v1725 = vadd.f32 %v823, %v1724
        %1726 = vmatprep.mubr.bf16.mxu0 0
        %1727 = vmatmul.mubr.bf16.gmra.mrb[0].mxu0 %v1550
        %v1728 = vpop.f32.mrb[0].mxu0
        %v1729 = vadd.f32 %v824, %v1728
        %v1730 = vpop.f32.mrb[0].mxu0
        %v1731 = vadd.f32 %v825, %v1730
        %v1732 = vpop.f32.mrb[0].mxu0
        %v1733 = vadd.f32 %v826, %v1732
        %v1734 = vpop.f32.mrb[0].mxu0
        %v1735 = vadd.f32 %v827, %v1734
        %1736 = vmatprep.mubr.bf16.mxu0 0
        %1737 = vmatmul.mubr.bf16.gmra.mrb[0].mxu0 %v1553
        %v1738 = vpop.f32.mrb[0].mxu0
        %v1739 = vadd.f32 %v828, %v1738
        %v1740 = vpop.f32.mrb[0].mxu0
        %v1741 = vadd.f32 %v829, %v1740
        %v1742 = vpop.f32.mrb[0].mxu0
        %v1743 = vadd.f32 %v830, %v1742
        %v1744 = vpop.f32.mrb[0].mxu0
        %v1745 = vadd.f32 %v831, %v1744
        %1746 = vmatprep.mubr.bf16.mxu0 0
        %1747 = vmatmul.mubr.bf16.gmra.mrb[0].mxu0 %v1556
        %v1748 = vpop.f32.mrb[0].mxu0
        %v1749 = vadd.f32 %v832, %v1748
        %v1750 = vpop.f32.mrb[0].mxu0
        %v1751 = vadd.f32 %v833, %v1750
        %v1752 = vpop.f32.mrb[0].mxu0
        %v1753 = vadd.f32 %v834, %v1752
        %v1754 = vpop.f32.mrb[0].mxu0
        %v1755 = vadd.f32 %v835, %v1754
        %1756 = vdwg.mxu0
        %v1757 = vpack.c.b16 %v626, %v626
        %v1758 = vpack.c.b16 %v627, %v627
        %1761 = vxpose.xlu0.c.b16.start [1/8] %v1757, 128
        %1762 = vxpose.xlu0.c.b16.cont [2/8] 0, 128
        %1763 = vxpose.xlu0.c.b16.cont [3/8] 0, 128
        %1764 = vxpose.xlu0.c.b16.cont [4/8] 0, 128
        %1765 = vxpose.xlu0.c.b16.cont [5/8] 0, 128
        %1766 = vxpose.xlu0.c.b16.cont [6/8] 0, 128
        %1767 = vxpose.xlu0.c.b16.cont [7/8] 0, 128
        %1768 = vxpose.xlu0.c.b16.end [8/8] 0, 128
        %v1769 = vpop.trf.xlu0
        %v1770 = vpop.trf.xlu0
        %v1771 = vpop.trf.xlu0
        %v1772 = vpop.trf.xlu0
        %v1773 = vpop.trf.xlu0
        %v1774 = vpop.trf.xlu0
        %v1775 = vpop.trf.xlu0
        %v1776 = vpop.trf.xlu0
        %1777 = vxpose.xlu0.c.b16.start [1/8] %v1758, 128
        %1778 = vxpose.xlu0.c.b16.cont [2/8] 0, 128
        %1779 = vxpose.xlu0.c.b16.cont [3/8] 0, 128
        %1780 = vxpose.xlu0.c.b16.cont [4/8] 0, 128
        %1781 = vxpose.xlu0.c.b16.cont [5/8] 0, 128
        %1782 = vxpose.xlu0.c.b16.cont [6/8] 0, 128
        %1783 = vxpose.xlu0.c.b16.cont [7/8] 0, 128
        %1784 = vxpose.xlu0.c.b16.end [8/8] 0, 128
        %v1785 = vpop.trf.xlu0
        %v1786 = vpop.trf.xlu0
        %v1787 = vpop.trf.xlu0
        %v1788 = vpop.trf.xlu0
        %v1789 = vpop.trf.xlu0
        %v1790 = vpop.trf.xlu0
        %v1791 = vpop.trf.xlu0
        %v1792 = vpop.trf.xlu0
        %v1793 = vpack.c.b16 %v634, %v634
        %v1794 = vpack.c.b16 %v635, %v635
        %v1796 = vsel %vm938, %v1769, 0
        %v1799 = vsel %vm938, %v1770, 0
        %v1802 = vsel %vm938, %v1771, 0
        %v1805 = vsel %vm938, %v1772, 0
        %v1808 = vsel %vm938, %v1773, 0
        %v1811 = vsel %vm938, %v1774, 0
        %v1814 = vsel %vm938, %v1775, 0
        %v1817 = vsel %vm938, %v1776, 0
        %v1820 = vsel %vm938, %v1785, 0
        %v1823 = vsel %vm938, %v1786, 0
        %v1826 = vsel %vm938, %v1787, 0
        %v1829 = vsel %vm938, %v1788, 0
        %v1832 = vsel %vm938, %v1789, 0
        %v1835 = vsel %vm938, %v1790, 0
        %v1838 = vsel %vm938, %v1791, 0
        %v1841 = vsel %vm938, %v1792, 0
        %v1844 = vsel %vm987, %v1793, 0
        %v1847 = vsel %vm987, %v1794, 0
        %1849 = vmatprep.subr.bf16.mxu0 %v1847
        %1850 = vmatpush1.bf16.msra.mxu0 %v1844
        %1851 = vmatprep.subr.bf16.mxu0 0
        %1852 = vmatpush1.bf16.msra.mxu0 0
        %1853 = vmatprep.subr.bf16.mxu0 0
        %1854 = vmatpush1.bf16.msra.mxu0 0
        %1855 = vmatprep.subr.bf16.mxu0 0
        %1856 = vmatpush1.bf16.msra.mxu0 0
        %1857 = vmatprep.subr.bf16.mxu0 0
        %1858 = vmatpush1.bf16.msra.mxu0 0
        %1859 = vmatprep.subr.bf16.mxu0 0
        %1860 = vmatpush1.bf16.msra.mxu0 0
        %1861 = vmatprep.subr.bf16.mxu0 0
        %1862 = vmatpush1.bf16.msra.mxu0 0
        %1863 = vmatprep.subr.bf16.mxu0 0
        %1864 = vmatpush1.bf16.msra.mxu0 0
        %1865 = vmatprep.subr.bf16.mxu0 0
        %1866 = vmatpush1.bf16.msra.mxu0 0
        %1867 = vmatprep.subr.bf16.mxu0 0
        %1868 = vmatpush1.bf16.msra.mxu0 0
        %1869 = vmatprep.subr.bf16.mxu0 0
        %1870 = vmatpush1.bf16.msra.mxu0 0
        %1871 = vmatprep.subr.bf16.mxu0 0
        %1872 = vmatpush1.bf16.msra.mxu0 0
        %1873 = vmatprep.subr.bf16.mxu0 0
        %1874 = vmatpush1.bf16.msra.mxu0 0
        %1875 = vmatprep.subr.bf16.mxu0 0
        %1876 = vmatpush1.bf16.msra.mxu0 0
        %1877 = vmatprep.subr.bf16.mxu0 0
        %1878 = vmatpush1.bf16.msra.mxu0 0
        %1879 = vmatprep.subr.bf16.mxu0 0
        %1880 = vmatpush1.bf16.msra.mxu0 0
        %1881 = vmatprep.mubr.bf16.mxu0 0
        %1882 = vmatmul.mubr.bf16.gmra.mrb[0].mxu0 %v1796
        %v1883 = vpop.f32.mrb[0].mxu0
        %v1884 = vadd.f32 %v836, %v1883
        %v1885 = vpop.f32.mrb[0].mxu0
        %v1886 = vadd.f32 %v837, %v1885
        %v1887 = vpop.f32.mrb[0].mxu0
        %v1888 = vadd.f32 %v838, %v1887
        %v1889 = vpop.f32.mrb[0].mxu0
        %v1890 = vadd.f32 %v839, %v1889
        %1891 = vmatprep.mubr.bf16.mxu0 0
        %1892 = vmatmul.mubr.bf16.gmra.mrb[0].mxu0 %v1799
        %v1893 = vpop.f32.mrb[0].mxu0
        %v1894 = vadd.f32 %v840, %v1893
        %v1895 = vpop.f32.mrb[0].mxu0
        %v1896 = vadd.f32 %v841, %v1895
        %v1897 = vpop.f32.mrb[0].mxu0
        %v1898 = vadd.f32 %v842, %v1897
        %v1899 = vpop.f32.mrb[0].mxu0
        %v1900 = vadd.f32 %v843, %v1899
        %1901 = vmatprep.mubr.bf16.mxu0 0
        %1902 = vmatmul.mubr.bf16.gmra.mrb[0].mxu0 %v1802
        %v1903 = vpop.f32.mrb[0].mxu0
        %v1904 = vadd.f32 %v844, %v1903
        %v1905 = vpop.f32.mrb[0].mxu0
        %v1906 = vadd.f32 %v845, %v1905
        %v1907 = vpop.f32.mrb[0].mxu0
        %v1908 = vadd.f32 %v846, %v1907
        %v1909 = vpop.f32.mrb[0].mxu0
        %v1910 = vadd.f32 %v847, %v1909
        %1911 = vmatprep.mubr.bf16.mxu0 0
        %1912 = vmatmul.mubr.bf16.gmra.mrb[0].mxu0 %v1805
        %v1913 = vpop.f32.mrb[0].mxu0
        %v1914 = vadd.f32 %v848, %v1913
        %v1915 = vpop.f32.mrb[0].mxu0
        %v1916 = vadd.f32 %v849, %v1915
        %v1917 = vpop.f32.mrb[0].mxu0
        %v1918 = vadd.f32 %v850, %v1917
        %v1919 = vpop.f32.mrb[0].mxu0
        %v1920 = vadd.f32 %v851, %v1919
        %1921 = vmatprep.mubr.bf16.mxu0 0
        %1922 = vmatmul.mubr.bf16.gmra.mrb[0].mxu0 %v1808
        %v1923 = vpop.f32.mrb[0].mxu0
        %v1924 = vadd.f32 %v852, %v1923
        %v1925 = vpop.f32.mrb[0].mxu0
        %v1926 = vadd.f32 %v853, %v1925
        %v1927 = vpop.f32.mrb[0].mxu0
        %v1928 = vadd.f32 %v854, %v1927
        %v1929 = vpop.f32.mrb[0].mxu0
        %v1930 = vadd.f32 %v855, %v1929
        %1931 = vmatprep.mubr.bf16.mxu0 0
        %1932 = vmatmul.mubr.bf16.gmra.mrb[0].mxu0 %v1811
        %v1933 = vpop.f32.mrb[0].mxu0
        %v1934 = vadd.f32 %v856, %v1933
        %v1935 = vpop.f32.mrb[0].mxu0
        %v1936 = vadd.f32 %v857, %v1935
        %v1937 = vpop.f32.mrb[0].mxu0
        %v1938 = vadd.f32 %v858, %v1937
        %v1939 = vpop.f32.mrb[0].mxu0
        %v1940 = vadd.f32 %v859, %v1939
        %1941 = vmatprep.mubr.bf16.mxu0 0
        %1942 = vmatmul.mubr.bf16.gmra.mrb[0].mxu0 %v1814
        %v1943 = vpop.f32.mrb[0].mxu0
        %v1944 = vadd.f32 %v860, %v1943
        %v1945 = vpop.f32.mrb[0].mxu0
        %v1946 = vadd.f32 %v861, %v1945
        %v1947 = vpop.f32.mrb[0].mxu0
        %v1948 = vadd.f32 %v862, %v1947
        %v1949 = vpop.f32.mrb[0].mxu0
        %v1950 = vadd.f32 %v863, %v1949
        %1951 = vmatprep.mubr.bf16.mxu0 0
        %1952 = vmatmul.mubr.bf16.gmra.mrb[0].mxu0 %v1817
        %v1953 = vpop.f32.mrb[0].mxu0
        %v1954 = vadd.f32 %v864, %v1953
        %v1955 = vpop.f32.mrb[0].mxu0
        %v1956 = vadd.f32 %v865, %v1955
        %v1957 = vpop.f32.mrb[0].mxu0
        %v1958 = vadd.f32 %v866, %v1957
        %v1959 = vpop.f32.mrb[0].mxu0
        %v1960 = vadd.f32 %v867, %v1959
        %1961 = vmatprep.mubr.bf16.mxu0 0
        %1962 = vmatmul.mubr.bf16.gmra.mrb[0].mxu0 %v1820
        %v1963 = vpop.f32.mrb[0].mxu0
        %v1964 = vadd.f32 %v868, %v1963
        %v1965 = vpop.f32.mrb[0].mxu0
        %v1966 = vadd.f32 %v869, %v1965
        %v1967 = vpop.f32.mrb[0].mxu0
        %v1968 = vadd.f32 %v870, %v1967
        %v1969 = vpop.f32.mrb[0].mxu0
        %v1970 = vadd.f32 %v871, %v1969
        %1971 = vmatprep.mubr.bf16.mxu0 0
        %1972 = vmatmul.mubr.bf16.gmra.mrb[0].mxu0 %v1823
        %v1973 = vpop.f32.mrb[0].mxu0
        %v1974 = vadd.f32 %v872, %v1973
        %v1975 = vpop.f32.mrb[0].mxu0
        %v1976 = vadd.f32 %v873, %v1975
        %v1977 = vpop.f32.mrb[0].mxu0
        %v1978 = vadd.f32 %v874, %v1977
        %v1979 = vpop.f32.mrb[0].mxu0
        %v1980 = vadd.f32 %v875, %v1979
        %1981 = vmatprep.mubr.bf16.mxu0 0
        %1982 = vmatmul.mubr.bf16.gmra.mrb[0].mxu0 %v1826
        %v1983 = vpop.f32.mrb[0].mxu0
        %v1984 = vadd.f32 %v876, %v1983
        %v1985 = vpop.f32.mrb[0].mxu0
        %v1986 = vadd.f32 %v877, %v1985
        %v1987 = vpop.f32.mrb[0].mxu0
        %v1988 = vadd.f32 %v878, %v1987
        %v1989 = vpop.f32.mrb[0].mxu0
        %v1990 = vadd.f32 %v879, %v1989
        %1991 = vmatprep.mubr.bf16.mxu0 0
        %1992 = vmatmul.mubr.bf16.gmra.mrb[0].mxu0 %v1829
        %v1993 = vpop.f32.mrb[0].mxu0
        %v1994 = vadd.f32 %v880, %v1993
        %v1995 = vpop.f32.mrb[0].mxu0
        %v1996 = vadd.f32 %v881, %v1995
        %v1997 = vpop.f32.mrb[0].mxu0
        %v1998 = vadd.f32 %v882, %v1997
        %v1999 = vpop.f32.mrb[0].mxu0
        %v2000 = vadd.f32 %v883, %v1999
        %2001 = vmatprep.mubr.bf16.mxu0 0
        %2002 = vmatmul.mubr.bf16.gmra.mrb[0].mxu0 %v1832
        %v2003 = vpop.f32.mrb[0].mxu0
        %v2004 = vadd.f32 %v884, %v2003
        %v2005 = vpop.f32.mrb[0].mxu0
        %v2006 = vadd.f32 %v885, %v2005
        %v2007 = vpop.f32.mrb[0].mxu0
        %v2008 = vadd.f32 %v886, %v2007
        %v2009 = vpop.f32.mrb[0].mxu0
        %v2010 = vadd.f32 %v887, %v2009
        %2011 = vmatprep.mubr.bf16.mxu0 0
        %2012 = vmatmul.mubr.bf16.gmra.mrb[0].mxu0 %v1835
        %v2013 = vpop.f32.mrb[0].mxu0
        %v2014 = vadd.f32 %v888, %v2013
        %v2015 = vpop.f32.mrb[0].mxu0
        %v2016 = vadd.f32 %v889, %v2015
        %v2017 = vpop.f32.mrb[0].mxu0
        %v2018 = vadd.f32 %v890, %v2017
        %v2019 = vpop.f32.mrb[0].mxu0
        %v2020 = vadd.f32 %v891, %v2019
        %2021 = vmatprep.mubr.bf16.mxu0 0
        %2022 = vmatmul.mubr.bf16.gmra.mrb[0].mxu0 %v1838
        %v2023 = vpop.f32.mrb[0].mxu0
        %v2024 = vadd.f32 %v892, %v2023
        %v2025 = vpop.f32.mrb[0].mxu0
        %v2026 = vadd.f32 %v893, %v2025
        %v2027 = vpop.f32.mrb[0].mxu0
        %v2028 = vadd.f32 %v894, %v2027
        %v2029 = vpop.f32.mrb[0].mxu0
        %v2030 = vadd.f32 %v895, %v2029
        %2031 = vmatprep.mubr.bf16.mxu0 0
        %2032 = vmatmul.mubr.bf16.gmra.mrb[0].mxu0 %v1841
        %v2033 = vpop.f32.mrb[0].mxu0
        %v2034 = vadd.f32 %v896, %v2033
        %v2035 = vpop.f32.mrb[0].mxu0
        %v2036 = vadd.f32 %v897, %v2035
        %v2037 = vpop.f32.mrb[0].mxu0
        %v2038 = vadd.f32 %v898, %v2037
        %v2039 = vpop.f32.mrb[0].mxu0
        %v2040 = vadd.f32 %v899, %v2039
        %2041 = vdwg.mxu0
        %v2042 = vmax.f32 %v1029, %v1031
        %2043 = vmax.xlane.f32.xlu0 %v2042
        %v2044 = vpop.xlane.xlu0 %2043
        %v2045 = vmax.f32 %v1033, %v1035
        %2046 = vmax.xlane.f32.xlu0 %v2045
        %v2047 = vpop.xlane.xlu0 %2046
        %v2048 = vmax.f32 %v1039, %v1041
        %2049 = vmax.xlane.f32.xlu0 %v2048
        %v2050 = vpop.xlane.xlu0 %2049
        %v2051 = vmax.f32 %v1043, %v1045
        %2052 = vmax.xlane.f32.xlu0 %v2051
        %v2053 = vpop.xlane.xlu0 %2052
        %v2054 = vmax.f32 %v1049, %v1051
        %2055 = vmax.xlane.f32.xlu0 %v2054
        %v2056 = vpop.xlane.xlu0 %2055
        %v2057 = vmax.f32 %v1053, %v1055
        %2058 = vmax.xlane.f32.xlu0 %v2057
        %v2059 = vpop.xlane.xlu0 %2058
        %v2060 = vmax.f32 %v1059, %v1061
        %2061 = vmax.xlane.f32.xlu0 %v2060
        %v2062 = vpop.xlane.xlu0 %2061
        %v2063 = vmax.f32 %v1063, %v1065
        %2064 = vmax.xlane.f32.xlu0 %v2063
        %v2065 = vpop.xlane.xlu0 %2064
        %v2066 = vmax.f32 %v1069, %v1071
        %2067 = vmax.xlane.f32.xlu0 %v2066
        %v2068 = vpop.xlane.xlu0 %2067
        %v2069 = vmax.f32 %v1073, %v1075
        %2070 = vmax.xlane.f32.xlu0 %v2069
        %v2071 = vpop.xlane.xlu0 %2070
        %v2072 = vmax.f32 %v1079, %v1081
        %2073 = vmax.xlane.f32.xlu0 %v2072
        %v2074 = vpop.xlane.xlu0 %2073
        %v2075 = vmax.f32 %v1083, %v1085
        %2076 = vmax.xlane.f32.xlu0 %v2075
        %v2077 = vpop.xlane.xlu0 %2076
        %v2078 = vmax.f32 %v1089, %v1091
        %2079 = vmax.xlane.f32.xlu0 %v2078
        %v2080 = vpop.xlane.xlu0 %2079
        %v2081 = vmax.f32 %v1093, %v1095
        %2082 = vmax.xlane.f32.xlu0 %v2081
        %v2083 = vpop.xlane.xlu0 %2082
        %v2084 = vmax.f32 %v1099, %v1101
        %2085 = vmax.xlane.f32.xlu0 %v2084
        %v2086 = vpop.xlane.xlu0 %2085
        %v2087 = vmax.f32 %v1103, %v1105
        %2088 = vmax.xlane.f32.xlu0 %v2087
        %v2089 = vpop.xlane.xlu0 %2088
        %v2090 = vmax.f32 %v1109, %v1111
        %2091 = vmax.xlane.f32.xlu0 %v2090
        %v2092 = vpop.xlane.xlu0 %2091
        %v2093 = vmax.f32 %v1113, %v1115
        %2094 = vmax.xlane.f32.xlu0 %v2093
        %v2095 = vpop.xlane.xlu0 %2094
        %v2096 = vmax.f32 %v1119, %v1121
        %2097 = vmax.xlane.f32.xlu0 %v2096
        %v2098 = vpop.xlane.xlu0 %2097
        %v2099 = vmax.f32 %v1123, %v1125
        %2100 = vmax.xlane.f32.xlu0 %v2099
        %v2101 = vpop.xlane.xlu0 %2100
        %v2102 = vmax.f32 %v1129, %v1131
        %2103 = vmax.xlane.f32.xlu0 %v2102
        %v2104 = vpop.xlane.xlu0 %2103
        %v2105 = vmax.f32 %v1133, %v1135
        %2106 = vmax.xlane.f32.xlu0 %v2105
        %v2107 = vpop.xlane.xlu0 %2106
        %v2108 = vmax.f32 %v1139, %v1141
        %2109 = vmax.xlane.f32.xlu0 %v2108
        %v2110 = vpop.xlane.xlu0 %2109
        %v2111 = vmax.f32 %v1143, %v1145
        %2112 = vmax.xlane.f32.xlu0 %v2111
        %v2113 = vpop.xlane.xlu0 %2112
        %v2114 = vmax.f32 %v1149, %v1151
        %2115 = vmax.xlane.f32.xlu0 %v2114
        %v2116 = vpop.xlane.xlu0 %2115
        %v2117 = vmax.f32 %v1153, %v1155
        %2118 = vmax.xlane.f32.xlu0 %v2117
        %v2119 = vpop.xlane.xlu0 %2118
        %v2120 = vmax.f32 %v1159, %v1161
        %2121 = vmax.xlane.f32.xlu0 %v2120
        %v2122 = vpop.xlane.xlu0 %2121
        %v2123 = vmax.f32 %v1163, %v1165
        %2124 = vmax.xlane.f32.xlu0 %v2123
        %v2125 = vpop.xlane.xlu0 %2124
        %v2126 = vmax.f32 %v1169, %v1171
        %2127 = vmax.xlane.f32.xlu0 %v2126
        %v2128 = vpop.xlane.xlu0 %2127
        %v2129 = vmax.f32 %v1173, %v1175
        %2130 = vmax.xlane.f32.xlu0 %v2129
        %v2131 = vpop.xlane.xlu0 %2130
        %v2132 = vmax.f32 %v1179, %v1181
        %2133 = vmax.xlane.f32.xlu0 %v2132
        %v2134 = vpop.xlane.xlu0 %2133
        %v2135 = vmax.f32 %v1183, %v1185
        %2136 = vmax.xlane.f32.xlu0 %v2135
        %v2137 = vpop.xlane.xlu0 %2136
        %v2138 = vmax.f32 %v1314, %v1316
        %2139 = vmax.xlane.f32.xlu0 %v2138
        %v2140 = vpop.xlane.xlu0 %2139
        %v2141 = vmax.f32 %v1318, %v1320
        %2142 = vmax.xlane.f32.xlu0 %v2141
        %v2143 = vpop.xlane.xlu0 %2142
        %v2144 = vmax.f32 %v1324, %v1326
        %2145 = vmax.xlane.f32.xlu0 %v2144
        %v2146 = vpop.xlane.xlu0 %2145
        %v2147 = vmax.f32 %v1328, %v1330
        %2148 = vmax.xlane.f32.xlu0 %v2147
        %v2149 = vpop.xlane.xlu0 %2148
        %v2150 = vmax.f32 %v1334, %v1336
        %2151 = vmax.xlane.f32.xlu0 %v2150
        %v2152 = vpop.xlane.xlu0 %2151
        %v2153 = vmax.f32 %v1338, %v1340
        %2154 = vmax.xlane.f32.xlu0 %v2153
        %v2155 = vpop.xlane.xlu0 %2154
        %v2156 = vmax.f32 %v1344, %v1346
        %2157 = vmax.xlane.f32.xlu0 %v2156
        %v2158 = vpop.xlane.xlu0 %2157
        %v2159 = vmax.f32 %v1348, %v1350
        %2160 = vmax.xlane.f32.xlu0 %v2159
        %v2161 = vpop.xlane.xlu0 %2160
        %v2162 = vmax.f32 %v1354, %v1356
        %2163 = vmax.xlane.f32.xlu0 %v2162
        %v2164 = vpop.xlane.xlu0 %2163
        %v2165 = vmax.f32 %v1358, %v1360
        %2166 = vmax.xlane.f32.xlu0 %v2165
        %v2167 = vpop.xlane.xlu0 %2166
        %v2168 = vmax.f32 %v1364, %v1366
        %2169 = vmax.xlane.f32.xlu0 %v2168
        %v2170 = vpop.xlane.xlu0 %2169
        %v2171 = vmax.f32 %v1368, %v1370
        %2172 = vmax.xlane.f32.xlu0 %v2171
        %v2173 = vpop.xlane.xlu0 %2172
        %v2174 = vmax.f32 %v1374, %v1376
        %2175 = vmax.xlane.f32.xlu0 %v2174
        %v2176 = vpop.xlane.xlu0 %2175
        %v2177 = vmax.f32 %v1378, %v1380
        %2178 = vmax.xlane.f32.xlu0 %v2177
        %v2179 = vpop.xlane.xlu0 %2178
        %v2180 = vmax.f32 %v1384, %v1386
        %2181 = vmax.xlane.f32.xlu0 %v2180
        %v2182 = vpop.xlane.xlu0 %2181
        %v2183 = vmax.f32 %v1388, %v1390
        %2184 = vmax.xlane.f32.xlu0 %v2183
        %v2185 = vpop.xlane.xlu0 %2184
        %v2186 = vmax.f32 %v1394, %v1396
        %2187 = vmax.xlane.f32.xlu0 %v2186
        %v2188 = vpop.xlane.xlu0 %2187
        %v2189 = vmax.f32 %v1398, %v1400
        %2190 = vmax.xlane.f32.xlu0 %v2189
        %v2191 = vpop.xlane.xlu0 %2190
        %v2192 = vmax.f32 %v1404, %v1406
        %2193 = vmax.xlane.f32.xlu0 %v2192
        %v2194 = vpop.xlane.xlu0 %2193
        %v2195 = vmax.f32 %v1408, %v1410
        %2196 = vmax.xlane.f32.xlu0 %v2195
        %v2197 = vpop.xlane.xlu0 %2196
        %v2198 = vmax.f32 %v1414, %v1416
        %2199 = vmax.xlane.f32.xlu0 %v2198
        %v2200 = vpop.xlane.xlu0 %2199
        %v2201 = vmax.f32 %v1418, %v1420
        %2202 = vmax.xlane.f32.xlu0 %v2201
        %v2203 = vpop.xlane.xlu0 %2202
        %v2204 = vmax.f32 %v1424, %v1426
        %2205 = vmax.xlane.f32.xlu0 %v2204
        %v2206 = vpop.xlane.xlu0 %2205
        %v2207 = vmax.f32 %v1428, %v1430
        %2208 = vmax.xlane.f32.xlu0 %v2207
        %v2209 = vpop.xlane.xlu0 %2208
        %v2210 = vmax.f32 %v1434, %v1436
        %2211 = vmax.xlane.f32.xlu0 %v2210
        %v2212 = vpop.xlane.xlu0 %2211
        %v2213 = vmax.f32 %v1438, %v1440
        %2214 = vmax.xlane.f32.xlu0 %v2213
        %v2215 = vpop.xlane.xlu0 %2214
        %v2216 = vmax.f32 %v1444, %v1446
        %2217 = vmax.xlane.f32.xlu0 %v2216
        %v2218 = vpop.xlane.xlu0 %2217
        %v2219 = vmax.f32 %v1448, %v1450
        %2220 = vmax.xlane.f32.xlu0 %v2219
        %v2221 = vpop.xlane.xlu0 %2220
        %v2222 = vmax.f32 %v1454, %v1456
        %2223 = vmax.xlane.f32.xlu0 %v2222
        %v2224 = vpop.xlane.xlu0 %2223
        %v2225 = vmax.f32 %v1458, %v1460
        %2226 = vmax.xlane.f32.xlu0 %v2225
        %v2227 = vpop.xlane.xlu0 %2226
        %v2228 = vmax.f32 %v1464, %v1466
        %2229 = vmax.xlane.f32.xlu0 %v2228
        %v2230 = vpop.xlane.xlu0 %2229
        %v2231 = vmax.f32 %v1468, %v1470
        %2232 = vmax.xlane.f32.xlu0 %v2231
        %v2233 = vpop.xlane.xlu0 %2232
        %v2234 = vmax.f32 %v1599, %v1601
        %2235 = vmax.xlane.f32.xlu0 %v2234
        %v2236 = vpop.xlane.xlu0 %2235
        %v2237 = vmax.f32 %v1603, %v1605
        %2238 = vmax.xlane.f32.xlu0 %v2237
        %v2239 = vpop.xlane.xlu0 %2238
        %v2240 = vmax.f32 %v1609, %v1611
        %2241 = vmax.xlane.f32.xlu0 %v2240
        %v2242 = vpop.xlane.xlu0 %2241
        %v2243 = vmax.f32 %v1613, %v1615
        %2244 = vmax.xlane.f32.xlu0 %v2243
        %v2245 = vpop.xlane.xlu0 %2244
        %v2246 = vmax.f32 %v1619, %v1621
        %2247 = vmax.xlane.f32.xlu0 %v2246
        %v2248 = vpop.xlane.xlu0 %2247
        %v2249 = vmax.f32 %v1623, %v1625
        %2250 = vmax.xlane.f32.xlu0 %v2249
        %v2251 = vpop.xlane.xlu0 %2250
        %v2252 = vmax.f32 %v1629, %v1631
        %2253 = vmax.xlane.f32.xlu0 %v2252
        %v2254 = vpop.xlane.xlu0 %2253
        %v2255 = vmax.f32 %v1633, %v1635
        %2256 = vmax.xlane.f32.xlu0 %v2255
        %v2257 = vpop.xlane.xlu0 %2256
        %v2258 = vmax.f32 %v1639, %v1641
        %2259 = vmax.xlane.f32.xlu0 %v2258
        %v2260 = vpop.xlane.xlu0 %2259
        %v2261 = vmax.f32 %v1643, %v1645
        %2262 = vmax.xlane.f32.xlu0 %v2261
        %v2263 = vpop.xlane.xlu0 %2262
        %v2264 = vmax.f32 %v1649, %v1651
        %2265 = vmax.xlane.f32.xlu0 %v2264
        %v2266 = vpop.xlane.xlu0 %2265
        %v2267 = vmax.f32 %v1653, %v1655
        %2268 = vmax.xlane.f32.xlu0 %v2267
        %v2269 = vpop.xlane.xlu0 %2268
        %v2270 = vmax.f32 %v1659, %v1661
        %2271 = vmax.xlane.f32.xlu0 %v2270
        %v2272 = vpop.xlane.xlu0 %2271
        %v2273 = vmax.f32 %v1663, %v1665
        %2274 = vmax.xlane.f32.xlu0 %v2273
        %v2275 = vpop.xlane.xlu0 %2274
        %v2276 = vmax.f32 %v1669, %v1671
        %2277 = vmax.xlane.f32.xlu0 %v2276
        %v2278 = vpop.xlane.xlu0 %2277
        %v2279 = vmax.f32 %v1673, %v1675
        %2280 = vmax.xlane.f32.xlu0 %v2279
        %v2281 = vpop.xlane.xlu0 %2280
        %v2282 = vmax.f32 %v1679, %v1681
        %2283 = vmax.xlane.f32.xlu0 %v2282
        %v2284 = vpop.xlane.xlu0 %2283
        %v2285 = vmax.f32 %v1683, %v1685
        %2286 = vmax.xlane.f32.xlu0 %v2285
        %v2287 = vpop.xlane.xlu0 %2286
        %v2288 = vmax.f32 %v1689, %v1691
        %2289 = vmax.xlane.f32.xlu0 %v2288
        %v2290 = vpop.xlane.xlu0 %2289
        %v2291 = vmax.f32 %v1693, %v1695
        %2292 = vmax.xlane.f32.xlu0 %v2291
        %v2293 = vpop.xlane.xlu0 %2292
        %v2294 = vmax.f32 %v1699, %v1701
        %2295 = vmax.xlane.f32.xlu0 %v2294
        %v2296 = vpop.xlane.xlu0 %2295
        %v2297 = vmax.f32 %v1703, %v1705
        %2298 = vmax.xlane.f32.xlu0 %v2297
        %v2299 = vpop.xlane.xlu0 %2298
        %v2300 = vmax.f32 %v1709, %v1711
        %2301 = vmax.xlane.f32.xlu0 %v2300
        %v2302 = vpop.xlane.xlu0 %2301
        %v2303 = vmax.f32 %v1713, %v1715
        %2304 = vmax.xlane.f32.xlu0 %v2303
        %v2305 = vpop.xlane.xlu0 %2304
        %v2306 = vmax.f32 %v1719, %v1721
        %2307 = vmax.xlane.f32.xlu0 %v2306
        %v2308 = vpop.xlane.xlu0 %2307
        %v2309 = vmax.f32 %v1723, %v1725
        %2310 = vmax.xlane.f32.xlu0 %v2309
        %v2311 = vpop.xlane.xlu0 %2310
        %v2312 = vmax.f32 %v1729, %v1731
        %2313 = vmax.xlane.f32.xlu0 %v2312
        %v2314 = vpop.xlane.xlu0 %2313
        %v2315 = vmax.f32 %v1733, %v1735
        %2316 = vmax.xlane.f32.xlu0 %v2315
        %v2317 = vpop.xlane.xlu0 %2316
        %v2318 = vmax.f32 %v1739, %v1741
        %2319 = vmax.xlane.f32.xlu0 %v2318
        %v2320 = vpop.xlane.xlu0 %2319
        %v2321 = vmax.f32 %v1743, %v1745
        %2322 = vmax.xlane.f32.xlu0 %v2321
        %v2323 = vpop.xlane.xlu0 %2322
        %v2324 = vmax.f32 %v1749, %v1751
        %2325 = vmax.xlane.f32.xlu0 %v2324
        %v2326 = vpop.xlane.xlu0 %2325
        %v2327 = vmax.f32 %v1753, %v1755
        %2328 = vmax.xlane.f32.xlu0 %v2327
        %v2329 = vpop.xlane.xlu0 %2328
        %v2330 = vmax.f32 %v1884, %v1886
        %2331 = vmax.xlane.f32.xlu0 %v2330
        %v2332 = vpop.xlane.xlu0 %2331
        %v2333 = vmax.f32 %v1888, %v1890
        %2334 = vmax.xlane.f32.xlu0 %v2333
        %v2335 = vpop.xlane.xlu0 %2334
        %v2336 = vmax.f32 %v1894, %v1896
        %2337 = vmax.xlane.f32.xlu0 %v2336
        %v2338 = vpop.xlane.xlu0 %2337
        %v2339 = vmax.f32 %v1898, %v1900
        %2340 = vmax.xlane.f32.xlu0 %v2339
        %v2341 = vpop.xlane.xlu0 %2340
        %v2342 = vmax.f32 %v1904, %v1906
        %2343 = vmax.xlane.f32.xlu0 %v2342
        %v2344 = vpop.xlane.xlu0 %2343
        %v2345 = vmax.f32 %v1908, %v1910
        %2346 = vmax.xlane.f32.xlu0 %v2345
        %v2347 = vpop.xlane.xlu0 %2346
        %v2348 = vmax.f32 %v1914, %v1916
        %2349 = vmax.xlane.f32.xlu0 %v2348
        %v2350 = vpop.xlane.xlu0 %2349
        %v2351 = vmax.f32 %v1918, %v1920
        %2352 = vmax.xlane.f32.xlu0 %v2351
        %v2353 = vpop.xlane.xlu0 %2352
        %v2354 = vmax.f32 %v1924, %v1926
        %2355 = vmax.xlane.f32.xlu0 %v2354
        %v2356 = vpop.xlane.xlu0 %2355
        %v2357 = vmax.f32 %v1928, %v1930
        %2358 = vmax.xlane.f32.xlu0 %v2357
        %v2359 = vpop.xlane.xlu0 %2358
        %v2360 = vmax.f32 %v1934, %v1936
        %2361 = vmax.xlane.f32.xlu0 %v2360
        %v2362 = vpop.xlane.xlu0 %2361
        %v2363 = vmax.f32 %v1938, %v1940
        %2364 = vmax.xlane.f32.xlu0 %v2363
        %v2365 = vpop.xlane.xlu0 %2364
        %v2366 = vmax.f32 %v1944, %v1946
        %2367 = vmax.xlane.f32.xlu0 %v2366
        %v2368 = vpop.xlane.xlu0 %2367
        %v2369 = vmax.f32 %v1948, %v1950
        %2370 = vmax.xlane.f32.xlu0 %v2369
        %v2371 = vpop.xlane.xlu0 %2370
        %v2372 = vmax.f32 %v1954, %v1956
        %2373 = vmax.xlane.f32.xlu0 %v2372
        %v2374 = vpop.xlane.xlu0 %2373
        %v2375 = vmax.f32 %v1958, %v1960
        %2376 = vmax.xlane.f32.xlu0 %v2375
        %v2377 = vpop.xlane.xlu0 %2376
        %v2378 = vmax.f32 %v1964, %v1966
        %2379 = vmax.xlane.f32.xlu0 %v2378
        %v2380 = vpop.xlane.xlu0 %2379
        %v2381 = vmax.f32 %v1968, %v1970
        %2382 = vmax.xlane.f32.xlu0 %v2381
        %v2383 = vpop.xlane.xlu0 %2382
        %v2384 = vmax.f32 %v1974, %v1976
        %2385 = vmax.xlane.f32.xlu0 %v2384
        %v2386 = vpop.xlane.xlu0 %2385
        %v2387 = vmax.f32 %v1978, %v1980
        %2388 = vmax.xlane.f32.xlu0 %v2387
        %v2389 = vpop.xlane.xlu0 %2388
        %v2390 = vmax.f32 %v1984, %v1986
        %2391 = vmax.xlane.f32.xlu0 %v2390
        %v2392 = vpop.xlane.xlu0 %2391
        %v2393 = vmax.f32 %v1988, %v1990
        %2394 = vmax.xlane.f32.xlu0 %v2393
        %v2395 = vpop.xlane.xlu0 %2394
        %v2396 = vmax.f32 %v1994, %v1996
        %2397 = vmax.xlane.f32.xlu0 %v2396
        %v2398 = vpop.xlane.xlu0 %2397
        %v2399 = vmax.f32 %v1998, %v2000
        %2400 = vmax.xlane.f32.xlu0 %v2399
        %v2401 = vpop.xlane.xlu0 %2400
        %v2402 = vmax.f32 %v2004, %v2006
        %2403 = vmax.xlane.f32.xlu0 %v2402
        %v2404 = vpop.xlane.xlu0 %2403
        %v2405 = vmax.f32 %v2008, %v2010
        %2406 = vmax.xlane.f32.xlu0 %v2405
        %v2407 = vpop.xlane.xlu0 %2406
        %v2408 = vmax.f32 %v2014, %v2016
        %2409 = vmax.xlane.f32.xlu0 %v2408
        %v2410 = vpop.xlane.xlu0 %2409
        %v2411 = vmax.f32 %v2018, %v2020
        %2412 = vmax.xlane.f32.xlu0 %v2411
        %v2413 = vpop.xlane.xlu0 %2412
        %v2414 = vmax.f32 %v2024, %v2026
        %2415 = vmax.xlane.f32.xlu0 %v2414
        %v2416 = vpop.xlane.xlu0 %2415
        %v2417 = vmax.f32 %v2028, %v2030
        %2418 = vmax.xlane.f32.xlu0 %v2417
        %v2419 = vpop.xlane.xlu0 %2418
        %v2420 = vmax.f32 %v2034, %v2036
        %2421 = vmax.xlane.f32.xlu0 %v2420
        %v2422 = vpop.xlane.xlu0 %2421
        %v2423 = vmax.f32 %v2038, %v2040
        %2424 = vmax.xlane.f32.xlu0 %v2423
        %v2425 = vpop.xlane.xlu0 %2424
        %v2426 = vsub.f32 %v1029, %v2044
        %v2427 = vsub.f32 %v1031, %v2044
        %v2428 = vsub.f32 %v1033, %v2047
        %v2429 = vsub.f32 %v1035, %v2047
        %v2430 = vsub.f32 %v1039, %v2050
        %v2431 = vsub.f32 %v1041, %v2050
        %v2432 = vsub.f32 %v1043, %v2053
        %v2433 = vsub.f32 %v1045, %v2053
        %v2434 = vsub.f32 %v1049, %v2056
        %v2435 = vsub.f32 %v1051, %v2056
        %v2436 = vsub.f32 %v1053, %v2059
        %v2437 = vsub.f32 %v1055, %v2059
        %v2438 = vsub.f32 %v1059, %v2062
        %v2439 = vsub.f32 %v1061, %v2062
        %v2440 = vsub.f32 %v1063, %v2065
        %v2441 = vsub.f32 %v1065, %v2065
        %v2442 = vsub.f32 %v1069, %v2068
        %v2443 = vsub.f32 %v1071, %v2068
        %v2444 = vsub.f32 %v1073, %v2071
        %v2445 = vsub.f32 %v1075, %v2071
        %v2446 = vsub.f32 %v1079, %v2074
        %v2447 = vsub.f32 %v1081, %v2074
        %v2448 = vsub.f32 %v1083, %v2077
        %v2449 = vsub.f32 %v1085, %v2077
        %v2450 = vsub.f32 %v1089, %v2080
        %v2451 = vsub.f32 %v1091, %v2080
        %v2452 = vsub.f32 %v1093, %v2083
        %v2453 = vsub.f32 %v1095, %v2083
        %v2454 = vsub.f32 %v1099, %v2086
        %v2455 = vsub.f32 %v1101, %v2086
        %v2456 = vsub.f32 %v1103, %v2089
        %v2457 = vsub.f32 %v1105, %v2089
        %v2458 = vsub.f32 %v1109, %v2092
        %v2459 = vsub.f32 %v1111, %v2092
        %v2460 = vsub.f32 %v1113, %v2095
        %v2461 = vsub.f32 %v1115, %v2095
        %v2462 = vsub.f32 %v1119, %v2098
        %v2463 = vsub.f32 %v1121, %v2098
        %v2464 = vsub.f32 %v1123, %v2101
        %v2465 = vsub.f32 %v1125, %v2101
        %v2466 = vsub.f32 %v1129, %v2104
        %v2467 = vsub.f32 %v1131, %v2104
        %v2468 = vsub.f32 %v1133, %v2107
        %v2469 = vsub.f32 %v1135, %v2107
        %v2470 = vsub.f32 %v1139, %v2110
        %v2471 = vsub.f32 %v1141, %v2110
        %v2472 = vsub.f32 %v1143, %v2113
        %v2473 = vsub.f32 %v1145, %v2113
        %v2474 = vsub.f32 %v1149, %v2116
        %v2475 = vsub.f32 %v1151, %v2116
        %v2476 = vsub.f32 %v1153, %v2119
        %v2477 = vsub.f32 %v1155, %v2119
        %v2478 = vsub.f32 %v1159, %v2122
        %v2479 = vsub.f32 %v1161, %v2122
        %v2480 = vsub.f32 %v1163, %v2125
        %v2481 = vsub.f32 %v1165, %v2125
        %v2482 = vsub.f32 %v1169, %v2128
        %v2483 = vsub.f32 %v1171, %v2128
        %v2484 = vsub.f32 %v1173, %v2131
        %v2485 = vsub.f32 %v1175, %v2131
        %v2486 = vsub.f32 %v1179, %v2134
        %v2487 = vsub.f32 %v1181, %v2134
        %v2488 = vsub.f32 %v1183, %v2137
        %v2489 = vsub.f32 %v1185, %v2137
        %v2490 = vsub.f32 %v1314, %v2140
        %v2491 = vsub.f32 %v1316, %v2140
        %v2492 = vsub.f32 %v1318, %v2143
        %v2493 = vsub.f32 %v1320, %v2143
        %v2494 = vsub.f32 %v1324, %v2146
        %v2495 = vsub.f32 %v1326, %v2146
        %v2496 = vsub.f32 %v1328, %v2149
        %v2497 = vsub.f32 %v1330, %v2149
        %v2498 = vsub.f32 %v1334, %v2152
        %v2499 = vsub.f32 %v1336, %v2152
        %v2500 = vsub.f32 %v1338, %v2155
        %v2501 = vsub.f32 %v1340, %v2155
        %v2502 = vsub.f32 %v1344, %v2158
        %v2503 = vsub.f32 %v1346, %v2158
        %v2504 = vsub.f32 %v1348, %v2161
        %v2505 = vsub.f32 %v1350, %v2161
        %v2506 = vsub.f32 %v1354, %v2164
        %v2507 = vsub.f32 %v1356, %v2164
        %v2508 = vsub.f32 %v1358, %v2167
        %v2509 = vsub.f32 %v1360, %v2167
        %v2510 = vsub.f32 %v1364, %v2170
        %v2511 = vsub.f32 %v1366, %v2170
        %v2512 = vsub.f32 %v1368, %v2173
        %v2513 = vsub.f32 %v1370, %v2173
        %v2514 = vsub.f32 %v1374, %v2176
        %v2515 = vsub.f32 %v1376, %v2176
        %v2516 = vsub.f32 %v1378, %v2179
        %v2517 = vsub.f32 %v1380, %v2179
        %v2518 = vsub.f32 %v1384, %v2182
        %v2519 = vsub.f32 %v1386, %v2182
        %v2520 = vsub.f32 %v1388, %v2185
        %v2521 = vsub.f32 %v1390, %v2185
        %v2522 = vsub.f32 %v1394, %v2188
        %v2523 = vsub.f32 %v1396, %v2188
        %v2524 = vsub.f32 %v1398, %v2191
        %v2525 = vsub.f32 %v1400, %v2191
        %v2526 = vsub.f32 %v1404, %v2194
        %v2527 = vsub.f32 %v1406, %v2194
        %v2528 = vsub.f32 %v1408, %v2197
        %v2529 = vsub.f32 %v1410, %v2197
        %v2530 = vsub.f32 %v1414, %v2200
        %v2531 = vsub.f32 %v1416, %v2200
        %v2532 = vsub.f32 %v1418, %v2203
        %v2533 = vsub.f32 %v1420, %v2203
        %v2534 = vsub.f32 %v1424, %v2206
        %v2535 = vsub.f32 %v1426, %v2206
        %v2536 = vsub.f32 %v1428, %v2209
        %v2537 = vsub.f32 %v1430, %v2209
        %v2538 = vsub.f32 %v1434, %v2212
        %v2539 = vsub.f32 %v1436, %v2212
        %v2540 = vsub.f32 %v1438, %v2215
        %v2541 = vsub.f32 %v1440, %v2215
        %v2542 = vsub.f32 %v1444, %v2218
        %v2543 = vsub.f32 %v1446, %v2218
        %v2544 = vsub.f32 %v1448, %v2221
        %v2545 = vsub.f32 %v1450, %v2221
        %v2546 = vsub.f32 %v1454, %v2224
        %v2547 = vsub.f32 %v1456, %v2224
        %v2548 = vsub.f32 %v1458, %v2227
        %v2549 = vsub.f32 %v1460, %v2227
        %v2550 = vsub.f32 %v1464, %v2230
        %v2551 = vsub.f32 %v1466, %v2230
        %v2552 = vsub.f32 %v1468, %v2233
        %v2553 = vsub.f32 %v1470, %v2233
        %v2554 = vsub.f32 %v1599, %v2236
        %v2555 = vsub.f32 %v1601, %v2236
        %v2556 = vsub.f32 %v1603, %v2239
        %v2557 = vsub.f32 %v1605, %v2239
        %v2558 = vsub.f32 %v1609, %v2242
        %v2559 = vsub.f32 %v1611, %v2242
        %v2560 = vsub.f32 %v1613, %v2245
        %v2561 = vsub.f32 %v1615, %v2245
        %v2562 = vsub.f32 %v1619, %v2248
        %v2563 = vsub.f32 %v1621, %v2248
        %v2564 = vsub.f32 %v1623, %v2251
        %v2565 = vsub.f32 %v1625, %v2251
        %v2566 = vsub.f32 %v1629, %v2254
        %v2567 = vsub.f32 %v1631, %v2254
        %v2568 = vsub.f32 %v1633, %v2257
        %v2569 = vsub.f32 %v1635, %v2257
        %v2570 = vsub.f32 %v1639, %v2260
        %v2571 = vsub.f32 %v1641, %v2260
        %v2572 = vsub.f32 %v1643, %v2263
        %v2573 = vsub.f32 %v1645, %v2263
        %v2574 = vsub.f32 %v1649, %v2266
        %v2575 = vsub.f32 %v1651, %v2266
        %v2576 = vsub.f32 %v1653, %v2269
        %v2577 = vsub.f32 %v1655, %v2269
        %v2578 = vsub.f32 %v1659, %v2272
        %v2579 = vsub.f32 %v1661, %v2272
        %v2580 = vsub.f32 %v1663, %v2275
        %v2581 = vsub.f32 %v1665, %v2275
        %v2582 = vsub.f32 %v1669, %v2278
        %v2583 = vsub.f32 %v1671, %v2278
        %v2584 = vsub.f32 %v1673, %v2281
        %v2585 = vsub.f32 %v1675, %v2281
        %v2586 = vsub.f32 %v1679, %v2284
        %v2587 = vsub.f32 %v1681, %v2284
        %v2588 = vsub.f32 %v1683, %v2287
        %v2589 = vsub.f32 %v1685, %v2287
        %v2590 = vsub.f32 %v1689, %v2290
        %v2591 = vsub.f32 %v1691, %v2290
        %v2592 = vsub.f32 %v1693, %v2293
        %v2593 = vsub.f32 %v1695, %v2293
        %v2594 = vsub.f32 %v1699, %v2296
        %v2595 = vsub.f32 %v1701, %v2296
        %v2596 = vsub.f32 %v1703, %v2299
        %v2597 = vsub.f32 %v1705, %v2299
        %v2598 = vsub.f32 %v1709, %v2302
        %v2599 = vsub.f32 %v1711, %v2302
        %v2600 = vsub.f32 %v1713, %v2305
        %v2601 = vsub.f32 %v1715, %v2305
        %v2602 = vsub.f32 %v1719, %v2308
        %v2603 = vsub.f32 %v1721, %v2308
        %v2604 = vsub.f32 %v1723, %v2311
        %v2605 = vsub.f32 %v1725, %v2311
        %v2606 = vsub.f32 %v1729, %v2314
        %v2607 = vsub.f32 %v1731, %v2314
        %v2608 = vsub.f32 %v1733, %v2317
        %v2609 = vsub.f32 %v1735, %v2317
        %v2610 = vsub.f32 %v1739, %v2320
        %v2611 = vsub.f32 %v1741, %v2320
        %v2612 = vsub.f32 %v1743, %v2323
        %v2613 = vsub.f32 %v1745, %v2323
        %v2614 = vsub.f32 %v1749, %v2326
        %v2615 = vsub.f32 %v1751, %v2326
        %v2616 = vsub.f32 %v1753, %v2329
        %v2617 = vsub.f32 %v1755, %v2329
        %v2618 = vsub.f32 %v1884, %v2332
        %v2619 = vsub.f32 %v1886, %v2332
        %v2620 = vsub.f32 %v1888, %v2335
        %v2621 = vsub.f32 %v1890, %v2335
        %v2622 = vsub.f32 %v1894, %v2338
        %v2623 = vsub.f32 %v1896, %v2338
        %v2624 = vsub.f32 %v1898, %v2341
        %v2625 = vsub.f32 %v1900, %v2341
        %v2626 = vsub.f32 %v1904, %v2344
        %v2627 = vsub.f32 %v1906, %v2344
        %v2628 = vsub.f32 %v1908, %v2347
        %v2629 = vsub.f32 %v1910, %v2347
        %v2630 = vsub.f32 %v1914, %v2350
        %v2631 = vsub.f32 %v1916, %v2350
        %v2632 = vsub.f32 %v1918, %v2353
        %v2633 = vsub.f32 %v1920, %v2353
        %v2634 = vsub.f32 %v1924, %v2356
        %v2635 = vsub.f32 %v1926, %v2356
        %v2636 = vsub.f32 %v1928, %v2359
        %v2637 = vsub.f32 %v1930, %v2359
        %v2638 = vsub.f32 %v1934, %v2362
        %v2639 = vsub.f32 %v1936, %v2362
        %v2640 = vsub.f32 %v1938, %v2365
        %v2641 = vsub.f32 %v1940, %v2365
        %v2642 = vsub.f32 %v1944, %v2368
        %v2643 = vsub.f32 %v1946, %v2368
        %v2644 = vsub.f32 %v1948, %v2371
        %v2645 = vsub.f32 %v1950, %v2371
        %v2646 = vsub.f32 %v1954, %v2374
        %v2647 = vsub.f32 %v1956, %v2374
        %v2648 = vsub.f32 %v1958, %v2377
        %v2649 = vsub.f32 %v1960, %v2377
        %v2650 = vsub.f32 %v1964, %v2380
        %v2651 = vsub.f32 %v1966, %v2380
        %v2652 = vsub.f32 %v1968, %v2383
        %v2653 = vsub.f32 %v1970, %v2383
        %v2654 = vsub.f32 %v1974, %v2386
        %v2655 = vsub.f32 %v1976, %v2386
        %v2656 = vsub.f32 %v1978, %v2389
        %v2657 = vsub.f32 %v1980, %v2389
        %v2658 = vsub.f32 %v1984, %v2392
        %v2659 = vsub.f32 %v1986, %v2392
        %v2660 = vsub.f32 %v1988, %v2395
        %v2661 = vsub.f32 %v1990, %v2395
        %v2662 = vsub.f32 %v1994, %v2398
        %v2663 = vsub.f32 %v1996, %v2398
        %v2664 = vsub.f32 %v1998, %v2401
        %v2665 = vsub.f32 %v2000, %v2401
        %v2666 = vsub.f32 %v2004, %v2404
        %v2667 = vsub.f32 %v2006, %v2404
        %v2668 = vsub.f32 %v2008, %v2407
        %v2669 = vsub.f32 %v2010, %v2407
        %v2670 = vsub.f32 %v2014, %v2410
        %v2671 = vsub.f32 %v2016, %v2410
        %v2672 = vsub.f32 %v2018, %v2413
        %v2673 = vsub.f32 %v2020, %v2413
        %v2674 = vsub.f32 %v2024, %v2416
        %v2675 = vsub.f32 %v2026, %v2416
        %v2676 = vsub.f32 %v2028, %v2419
        %v2677 = vsub.f32 %v2030, %v2419
        %v2678 = vsub.f32 %v2034, %v2422
        %v2679 = vsub.f32 %v2036, %v2422
        %v2680 = vsub.f32 %v2038, %v2425
        %v2681 = vsub.f32 %v2040, %v2425
        %v2682 = vmul.f32 %v2426, 1.442695
        %v2683 = vpow.pop %v2682
        %v2684 = vmul.f32 %v2427, 1.442695
        %v2685 = vpow.pop %v2684
        %v2686 = vmul.f32 %v2428, 1.442695
        %v2687 = vpow.pop %v2686
        %v2688 = vmul.f32 %v2429, 1.442695
        %v2689 = vpow.pop %v2688
        %v2690 = vmul.f32 %v2430, 1.442695
        %v2691 = vpow.pop %v2690
        %v2692 = vmul.f32 %v2431, 1.442695
        %v2693 = vpow.pop %v2692
        %v2694 = vmul.f32 %v2432, 1.442695
        %v2695 = vpow.pop %v2694
        %v2696 = vmul.f32 %v2433, 1.442695
        %v2697 = vpow.pop %v2696
        %v2698 = vmul.f32 %v2434, 1.442695
        %v2699 = vpow.pop %v2698
        %v2700 = vmul.f32 %v2435, 1.442695
        %v2701 = vpow.pop %v2700
        %v2702 = vmul.f32 %v2436, 1.442695
        %v2703 = vpow.pop %v2702
        %v2704 = vmul.f32 %v2437, 1.442695
        %v2705 = vpow.pop %v2704
        %v2706 = vmul.f32 %v2438, 1.442695
        %v2707 = vpow.pop %v2706
        %v2708 = vmul.f32 %v2439, 1.442695
        %v2709 = vpow.pop %v2708
        %v2710 = vmul.f32 %v2440, 1.442695
        %v2711 = vpow.pop %v2710
        %v2712 = vmul.f32 %v2441, 1.442695
        %v2713 = vpow.pop %v2712
        %v2714 = vmul.f32 %v2442, 1.442695
        %v2715 = vpow.pop %v2714
        %v2716 = vmul.f32 %v2443, 1.442695
        %v2717 = vpow.pop %v2716
        %v2718 = vmul.f32 %v2444, 1.442695
        %v2719 = vpow.pop %v2718
        %v2720 = vmul.f32 %v2445, 1.442695
        %v2721 = vpow.pop %v2720
        %v2722 = vmul.f32 %v2446, 1.442695
        %v2723 = vpow.pop %v2722
        %v2724 = vmul.f32 %v2447, 1.442695
        %v2725 = vpow.pop %v2724
        %v2726 = vmul.f32 %v2448, 1.442695
        %v2727 = vpow.pop %v2726
        %v2728 = vmul.f32 %v2449, 1.442695
        %v2729 = vpow.pop %v2728
        %v2730 = vmul.f32 %v2450, 1.442695
        %v2731 = vpow.pop %v2730
        %v2732 = vmul.f32 %v2451, 1.442695
        %v2733 = vpow.pop %v2732
        %v2734 = vmul.f32 %v2452, 1.442695
        %v2735 = vpow.pop %v2734
        %v2736 = vmul.f32 %v2453, 1.442695
        %v2737 = vpow.pop %v2736
        %v2738 = vmul.f32 %v2454, 1.442695
        %v2739 = vpow.pop %v2738
        %v2740 = vmul.f32 %v2455, 1.442695
        %v2741 = vpow.pop %v2740
        %v2742 = vmul.f32 %v2456, 1.442695
        %v2743 = vpow.pop %v2742
        %v2744 = vmul.f32 %v2457, 1.442695
        %v2745 = vpow.pop %v2744
        %v2746 = vmul.f32 %v2458, 1.442695
        %v2747 = vpow.pop %v2746
        %v2748 = vmul.f32 %v2459, 1.442695
        %v2749 = vpow.pop %v2748
        %v2750 = vmul.f32 %v2460, 1.442695
        %v2751 = vpow.pop %v2750
        %v2752 = vmul.f32 %v2461, 1.442695
        %v2753 = vpow.pop %v2752
        %v2754 = vmul.f32 %v2462, 1.442695
        %v2755 = vpow.pop %v2754
        %v2756 = vmul.f32 %v2463, 1.442695
        %v2757 = vpow.pop %v2756
        %v2758 = vmul.f32 %v2464, 1.442695
        %v2759 = vpow.pop %v2758
        %v2760 = vmul.f32 %v2465, 1.442695
        %v2761 = vpow.pop %v2760
        %v2762 = vmul.f32 %v2466, 1.442695
        %v2763 = vpow.pop %v2762
        %v2764 = vmul.f32 %v2467, 1.442695
        %v2765 = vpow.pop %v2764
        %v2766 = vmul.f32 %v2468, 1.442695
        %v2767 = vpow.pop %v2766
        %v2768 = vmul.f32 %v2469, 1.442695
        %v2769 = vpow.pop %v2768
        %v2770 = vmul.f32 %v2470, 1.442695
        %v2771 = vpow.pop %v2770
        %v2772 = vmul.f32 %v2471, 1.442695
        %v2773 = vpow.pop %v2772
        %v2774 = vmul.f32 %v2472, 1.442695
        %v2775 = vpow.pop %v2774
        %v2776 = vmul.f32 %v2473, 1.442695
        %v2777 = vpow.pop %v2776
        %v2778 = vmul.f32 %v2474, 1.442695
        %v2779 = vpow.pop %v2778
        %v2780 = vmul.f32 %v2475, 1.442695
        %v2781 = vpow.pop %v2780
        %v2782 = vmul.f32 %v2476, 1.442695
        %v2783 = vpow.pop %v2782
        %v2784 = vmul.f32 %v2477, 1.442695
        %v2785 = vpow.pop %v2784
        %v2786 = vmul.f32 %v2478, 1.442695
        %v2787 = vpow.pop %v2786
        %v2788 = vmul.f32 %v2479, 1.442695
        %v2789 = vpow.pop %v2788
        %v2790 = vmul.f32 %v2480, 1.442695
        %v2791 = vpow.pop %v2790
        %v2792 = vmul.f32 %v2481, 1.442695
        %v2793 = vpow.pop %v2792
        %v2794 = vmul.f32 %v2482, 1.442695
        %v2795 = vpow.pop %v2794
        %v2796 = vmul.f32 %v2483, 1.442695
        %v2797 = vpow.pop %v2796
        %v2798 = vmul.f32 %v2484, 1.442695
        %v2799 = vpow.pop %v2798
        %v2800 = vmul.f32 %v2485, 1.442695
        %v2801 = vpow.pop %v2800
        %v2802 = vmul.f32 %v2486, 1.442695
        %v2803 = vpow.pop %v2802
        %v2804 = vmul.f32 %v2487, 1.442695
        %v2805 = vpow.pop %v2804
        %v2806 = vmul.f32 %v2488, 1.442695
        %v2807 = vpow.pop %v2806
        %v2808 = vmul.f32 %v2489, 1.442695
        %v2809 = vpow.pop %v2808
        %v2810 = vmul.f32 %v2490, 1.442695
        %v2811 = vpow.pop %v2810
        %v2812 = vmul.f32 %v2491, 1.442695
        %v2813 = vpow.pop %v2812
        %v2814 = vmul.f32 %v2492, 1.442695
        %v2815 = vpow.pop %v2814
        %v2816 = vmul.f32 %v2493, 1.442695
        %v2817 = vpow.pop %v2816
        %v2818 = vmul.f32 %v2494, 1.442695
        %v2819 = vpow.pop %v2818
        %v2820 = vmul.f32 %v2495, 1.442695
        %v2821 = vpow.pop %v2820
        %v2822 = vmul.f32 %v2496, 1.442695
        %v2823 = vpow.pop %v2822
        %v2824 = vmul.f32 %v2497, 1.442695
        %v2825 = vpow.pop %v2824
        %v2826 = vmul.f32 %v2498, 1.442695
        %v2827 = vpow.pop %v2826
        %v2828 = vmul.f32 %v2499, 1.442695
        %v2829 = vpow.pop %v2828
        %v2830 = vmul.f32 %v2500, 1.442695
        %v2831 = vpow.pop %v2830
        %v2832 = vmul.f32 %v2501, 1.442695
        %v2833 = vpow.pop %v2832
        %v2834 = vmul.f32 %v2502, 1.442695
        %v2835 = vpow.pop %v2834
        %v2836 = vmul.f32 %v2503, 1.442695
        %v2837 = vpow.pop %v2836
        %v2838 = vmul.f32 %v2504, 1.442695
        %v2839 = vpow.pop %v2838
        %v2840 = vmul.f32 %v2505, 1.442695
        %v2841 = vpow.pop %v2840
        %v2842 = vmul.f32 %v2506, 1.442695
        %v2843 = vpow.pop %v2842
        %v2844 = vmul.f32 %v2507, 1.442695
        %v2845 = vpow.pop %v2844
        %v2846 = vmul.f32 %v2508, 1.442695
        %v2847 = vpow.pop %v2846
        %v2848 = vmul.f32 %v2509, 1.442695
        %v2849 = vpow.pop %v2848
        %v2850 = vmul.f32 %v2510, 1.442695
        %v2851 = vpow.pop %v2850
        %v2852 = vmul.f32 %v2511, 1.442695
        %v2853 = vpow.pop %v2852
        %v2854 = vmul.f32 %v2512, 1.442695
        %v2855 = vpow.pop %v2854
        %v2856 = vmul.f32 %v2513, 1.442695
        %v2857 = vpow.pop %v2856
        %v2858 = vmul.f32 %v2514, 1.442695
        %v2859 = vpow.pop %v2858
        %v2860 = vmul.f32 %v2515, 1.442695
        %v2861 = vpow.pop %v2860
        %v2862 = vmul.f32 %v2516, 1.442695
        %v2863 = vpow.pop %v2862
        %v2864 = vmul.f32 %v2517, 1.442695
        %v2865 = vpow.pop %v2864
        %v2866 = vmul.f32 %v2518, 1.442695
        %v2867 = vpow.pop %v2866
        %v2868 = vmul.f32 %v2519, 1.442695
        %v2869 = vpow.pop %v2868
        %v2870 = vmul.f32 %v2520, 1.442695
        %v2871 = vpow.pop %v2870
        %v2872 = vmul.f32 %v2521, 1.442695
        %v2873 = vpow.pop %v2872
        %v2874 = vmul.f32 %v2522, 1.442695
        %v2875 = vpow.pop %v2874
        %v2876 = vmul.f32 %v2523, 1.442695
        %v2877 = vpow.pop %v2876
        %v2878 = vmul.f32 %v2524, 1.442695
        %v2879 = vpow.pop %v2878
        %v2880 = vmul.f32 %v2525, 1.442695
        %v2881 = vpow.pop %v2880
        %v2882 = vmul.f32 %v2526, 1.442695
        %v2883 = vpow.pop %v2882
        %v2884 = vmul.f32 %v2527, 1.442695
        %v2885 = vpow.pop %v2884
        %v2886 = vmul.f32 %v2528, 1.442695
        %v2887 = vpow.pop %v2886
        %v2888 = vmul.f32 %v2529, 1.442695
        %v2889 = vpow.pop %v2888
        %v2890 = vmul.f32 %v2530, 1.442695
        %v2891 = vpow.pop %v2890
        %v2892 = vmul.f32 %v2531, 1.442695
        %v2893 = vpow.pop %v2892
        %v2894 = vmul.f32 %v2532, 1.442695
        %v2895 = vpow.pop %v2894
        %v2896 = vmul.f32 %v2533, 1.442695
        %v2897 = vpow.pop %v2896
        %v2898 = vmul.f32 %v2534, 1.442695
        %v2899 = vpow.pop %v2898
        %v2900 = vmul.f32 %v2535, 1.442695
        %v2901 = vpow.pop %v2900
        %v2902 = vmul.f32 %v2536, 1.442695
        %v2903 = vpow.pop %v2902
        %v2904 = vmul.f32 %v2537, 1.442695
        %v2905 = vpow.pop %v2904
        %v2906 = vmul.f32 %v2538, 1.442695
        %v2907 = vpow.pop %v2906
        %v2908 = vmul.f32 %v2539, 1.442695
        %v2909 = vpow.pop %v2908
        %v2910 = vmul.f32 %v2540, 1.442695
        %v2911 = vpow.pop %v2910
        %v2912 = vmul.f32 %v2541, 1.442695
        %v2913 = vpow.pop %v2912
        %v2914 = vmul.f32 %v2542, 1.442695
        %v2915 = vpow.pop %v2914
        %v2916 = vmul.f32 %v2543, 1.442695
        %v2917 = vpow.pop %v2916
        %v2918 = vmul.f32 %v2544, 1.442695
        %v2919 = vpow.pop %v2918
        %v2920 = vmul.f32 %v2545, 1.442695
        %v2921 = vpow.pop %v2920
        %v2922 = vmul.f32 %v2546, 1.442695
        %v2923 = vpow.pop %v2922
        %v2924 = vmul.f32 %v2547, 1.442695
        %v2925 = vpow.pop %v2924
        %v2926 = vmul.f32 %v2548, 1.442695
        %v2927 = vpow.pop %v2926
        %v2928 = vmul.f32 %v2549, 1.442695
        %v2929 = vpow.pop %v2928
        %v2930 = vmul.f32 %v2550, 1.442695
        %v2931 = vpow.pop %v2930
        %v2932 = vmul.f32 %v2551, 1.442695
        %v2933 = vpow.pop %v2932
        %v2934 = vmul.f32 %v2552, 1.442695
        %v2935 = vpow.pop %v2934
        %v2936 = vmul.f32 %v2553, 1.442695
        %v2937 = vpow.pop %v2936
        %v2938 = vmul.f32 %v2554, 1.442695
        %v2939 = vpow.pop %v2938
        %v2940 = vmul.f32 %v2555, 1.442695
        %v2941 = vpow.pop %v2940
        %v2942 = vmul.f32 %v2556, 1.442695
        %v2943 = vpow.pop %v2942
        %v2944 = vmul.f32 %v2557, 1.442695
        %v2945 = vpow.pop %v2944
        %v2946 = vmul.f32 %v2558, 1.442695
        %v2947 = vpow.pop %v2946
        %v2948 = vmul.f32 %v2559, 1.442695
        %v2949 = vpow.pop %v2948
        %v2950 = vmul.f32 %v2560, 1.442695
        %v2951 = vpow.pop %v2950
        %v2952 = vmul.f32 %v2561, 1.442695
        %v2953 = vpow.pop %v2952
        %v2954 = vmul.f32 %v2562, 1.442695
        %v2955 = vpow.pop %v2954
        %v2956 = vmul.f32 %v2563, 1.442695
        %v2957 = vpow.pop %v2956
        %v2958 = vmul.f32 %v2564, 1.442695
        %v2959 = vpow.pop %v2958
        %v2960 = vmul.f32 %v2565, 1.442695
        %v2961 = vpow.pop %v2960
        %v2962 = vmul.f32 %v2566, 1.442695
        %v2963 = vpow.pop %v2962
        %v2964 = vmul.f32 %v2567, 1.442695
        %v2965 = vpow.pop %v2964
        %v2966 = vmul.f32 %v2568, 1.442695
        %v2967 = vpow.pop %v2966
        %v2968 = vmul.f32 %v2569, 1.442695
        %v2969 = vpow.pop %v2968
        %v2970 = vmul.f32 %v2570, 1.442695
        %v2971 = vpow.pop %v2970
        %v2972 = vmul.f32 %v2571, 1.442695
        %v2973 = vpow.pop %v2972
        %v2974 = vmul.f32 %v2572, 1.442695
        %v2975 = vpow.pop %v2974
        %v2976 = vmul.f32 %v2573, 1.442695
        %v2977 = vpow.pop %v2976
        %v2978 = vmul.f32 %v2574, 1.442695
        %v2979 = vpow.pop %v2978
        %v2980 = vmul.f32 %v2575, 1.442695
        %v2981 = vpow.pop %v2980
        %v2982 = vmul.f32 %v2576, 1.442695
        %v2983 = vpow.pop %v2982
        %v2984 = vmul.f32 %v2577, 1.442695
        %v2985 = vpow.pop %v2984
        %v2986 = vmul.f32 %v2578, 1.442695
        %v2987 = vpow.pop %v2986
        %v2988 = vmul.f32 %v2579, 1.442695
        %v2989 = vpow.pop %v2988
        %v2990 = vmul.f32 %v2580, 1.442695
        %v2991 = vpow.pop %v2990
        %v2992 = vmul.f32 %v2581, 1.442695
        %v2993 = vpow.pop %v2992
        %v2994 = vmul.f32 %v2582, 1.442695
        %v2995 = vpow.pop %v2994
        %v2996 = vmul.f32 %v2583, 1.442695
        %v2997 = vpow.pop %v2996
        %v2998 = vmul.f32 %v2584, 1.442695
        %v2999 = vpow.pop %v2998
        %v3000 = vmul.f32 %v2585, 1.442695
        %v3001 = vpow.pop %v3000
        %v3002 = vmul.f32 %v2586, 1.442695
        %v3003 = vpow.pop %v3002
        %v3004 = vmul.f32 %v2587, 1.442695
        %v3005 = vpow.pop %v3004
        %v3006 = vmul.f32 %v2588, 1.442695
        %v3007 = vpow.pop %v3006
        %v3008 = vmul.f32 %v2589, 1.442695
        %v3009 = vpow.pop %v3008
        %v3010 = vmul.f32 %v2590, 1.442695
        %v3011 = vpow.pop %v3010
        %v3012 = vmul.f32 %v2591, 1.442695
        %v3013 = vpow.pop %v3012
        %v3014 = vmul.f32 %v2592, 1.442695
        %v3015 = vpow.pop %v3014
        %v3016 = vmul.f32 %v2593, 1.442695
        %v3017 = vpow.pop %v3016
        %v3018 = vmul.f32 %v2594, 1.442695
        %v3019 = vpow.pop %v3018
        %v3020 = vmul.f32 %v2595, 1.442695
        %v3021 = vpow.pop %v3020
        %v3022 = vmul.f32 %v2596, 1.442695
        %v3023 = vpow.pop %v3022
        %v3024 = vmul.f32 %v2597, 1.442695
        %v3025 = vpow.pop %v3024
        %v3026 = vmul.f32 %v2598, 1.442695
        %v3027 = vpow.pop %v3026
        %v3028 = vmul.f32 %v2599, 1.442695
        %v3029 = vpow.pop %v3028
        %v3030 = vmul.f32 %v2600, 1.442695
        %v3031 = vpow.pop %v3030
        %v3032 = vmul.f32 %v2601, 1.442695
        %v3033 = vpow.pop %v3032
        %v3034 = vmul.f32 %v2602, 1.442695
        %v3035 = vpow.pop %v3034
        %v3036 = vmul.f32 %v2603, 1.442695
        %v3037 = vpow.pop %v3036
        %v3038 = vmul.f32 %v2604, 1.442695
        %v3039 = vpow.pop %v3038
        %v3040 = vmul.f32 %v2605, 1.442695
        %v3041 = vpow.pop %v3040
        %v3042 = vmul.f32 %v2606, 1.442695
        %v3043 = vpow.pop %v3042
        %v3044 = vmul.f32 %v2607, 1.442695
        %v3045 = vpow.pop %v3044
        %v3046 = vmul.f32 %v2608, 1.442695
        %v3047 = vpow.pop %v3046
        %v3048 = vmul.f32 %v2609, 1.442695
        %v3049 = vpow.pop %v3048
        %v3050 = vmul.f32 %v2610, 1.442695
        %v3051 = vpow.pop %v3050
        %v3052 = vmul.f32 %v2611, 1.442695
        %v3053 = vpow.pop %v3052
        %v3054 = vmul.f32 %v2612, 1.442695
        %v3055 = vpow.pop %v3054
        %v3056 = vmul.f32 %v2613, 1.442695
        %v3057 = vpow.pop %v3056
        %v3058 = vmul.f32 %v2614, 1.442695
        %v3059 = vpow.pop %v3058
        %v3060 = vmul.f32 %v2615, 1.442695
        %v3061 = vpow.pop %v3060
        %v3062 = vmul.f32 %v2616, 1.442695
        %v3063 = vpow.pop %v3062
        %v3064 = vmul.f32 %v2617, 1.442695
        %v3065 = vpow.pop %v3064
        %v3066 = vmul.f32 %v2618, 1.442695
        %v3067 = vpow.pop %v3066
        %v3068 = vmul.f32 %v2619, 1.442695
        %v3069 = vpow.pop %v3068
        %v3070 = vmul.f32 %v2620, 1.442695
        %v3071 = vpow.pop %v3070
        %v3072 = vmul.f32 %v2621, 1.442695
        %v3073 = vpow.pop %v3072
        %v3074 = vmul.f32 %v2622, 1.442695
        %v3075 = vpow.pop %v3074
        %v3076 = vmul.f32 %v2623, 1.442695
        %v3077 = vpow.pop %v3076
        %v3078 = vmul.f32 %v2624, 1.442695
        %v3079 = vpow.pop %v3078
        %v3080 = vmul.f32 %v2625, 1.442695
        %v3081 = vpow.pop %v3080
        %v3082 = vmul.f32 %v2626, 1.442695
        %v3083 = vpow.pop %v3082
        %v3084 = vmul.f32 %v2627, 1.442695
        %v3085 = vpow.pop %v3084
        %v3086 = vmul.f32 %v2628, 1.442695
        %v3087 = vpow.pop %v3086
        %v3088 = vmul.f32 %v2629, 1.442695
        %v3089 = vpow.pop %v3088
        %v3090 = vmul.f32 %v2630, 1.442695
        %v3091 = vpow.pop %v3090
        %v3092 = vmul.f32 %v2631, 1.442695
        %v3093 = vpow.pop %v3092
        %v3094 = vmul.f32 %v2632, 1.442695
        %v3095 = vpow.pop %v3094
        %v3096 = vmul.f32 %v2633, 1.442695
        %v3097 = vpow.pop %v3096
        %v3098 = vmul.f32 %v2634, 1.442695
        %v3099 = vpow.pop %v3098
        %v3100 = vmul.f32 %v2635, 1.442695
        %v3101 = vpow.pop %v3100
        %v3102 = vmul.f32 %v2636, 1.442695
        %v3103 = vpow.pop %v3102
        %v3104 = vmul.f32 %v2637, 1.442695
        %v3105 = vpow.pop %v3104
        %v3106 = vmul.f32 %v2638, 1.442695
        %v3107 = vpow.pop %v3106
        %v3108 = vmul.f32 %v2639, 1.442695
        %v3109 = vpow.pop %v3108
        %v3110 = vmul.f32 %v2640, 1.442695
        %v3111 = vpow.pop %v3110
        %v3112 = vmul.f32 %v2641, 1.442695
        %v3113 = vpow.pop %v3112
        %v3114 = vmul.f32 %v2642, 1.442695
        %v3115 = vpow.pop %v3114
        %v3116 = vmul.f32 %v2643, 1.442695
        %v3117 = vpow.pop %v3116
        %v3118 = vmul.f32 %v2644, 1.442695
        %v3119 = vpow.pop %v3118
        %v3120 = vmul.f32 %v2645, 1.442695
        %v3121 = vpow.pop %v3120
        %v3122 = vmul.f32 %v2646, 1.442695
        %v3123 = vpow.pop %v3122
        %v3124 = vmul.f32 %v2647, 1.442695
        %v3125 = vpow.pop %v3124
        %v3126 = vmul.f32 %v2648, 1.442695
        %v3127 = vpow.pop %v3126
        %v3128 = vmul.f32 %v2649, 1.442695
        %v3129 = vpow.pop %v3128
        %v3130 = vmul.f32 %v2650, 1.442695
        %v3131 = vpow.pop %v3130
        %v3132 = vmul.f32 %v2651, 1.442695
        %v3133 = vpow.pop %v3132
        %v3134 = vmul.f32 %v2652, 1.442695
        %v3135 = vpow.pop %v3134
        %v3136 = vmul.f32 %v2653, 1.442695
        %v3137 = vpow.pop %v3136
        %v3138 = vmul.f32 %v2654, 1.442695
        %v3139 = vpow.pop %v3138
        %v3140 = vmul.f32 %v2655, 1.442695
        %v3141 = vpow.pop %v3140
        %v3142 = vmul.f32 %v2656, 1.442695
        %v3143 = vpow.pop %v3142
        %v3144 = vmul.f32 %v2657, 1.442695
        %v3145 = vpow.pop %v3144
        %v3146 = vmul.f32 %v2658, 1.442695
        %v3147 = vpow.pop %v3146
        %v3148 = vmul.f32 %v2659, 1.442695
        %v3149 = vpow.pop %v3148
        %v3150 = vmul.f32 %v2660, 1.442695
        %v3151 = vpow.pop %v3150
        %v3152 = vmul.f32 %v2661, 1.442695
        %v3153 = vpow.pop %v3152
        %v3154 = vmul.f32 %v2662, 1.442695
        %v3155 = vpow.pop %v3154
        %v3156 = vmul.f32 %v2663, 1.442695
        %v3157 = vpow.pop %v3156
        %v3158 = vmul.f32 %v2664, 1.442695
        %v3159 = vpow.pop %v3158
        %v3160 = vmul.f32 %v2665, 1.442695
        %v3161 = vpow.pop %v3160
        %v3162 = vmul.f32 %v2666, 1.442695
        %v3163 = vpow.pop %v3162
        %v3164 = vmul.f32 %v2667, 1.442695
        %v3165 = vpow.pop %v3164
        %v3166 = vmul.f32 %v2668, 1.442695
        %v3167 = vpow.pop %v3166
        %v3168 = vmul.f32 %v2669, 1.442695
        %v3169 = vpow.pop %v3168
        %v3170 = vmul.f32 %v2670, 1.442695
        %v3171 = vpow.pop %v3170
        %v3172 = vmul.f32 %v2671, 1.442695
        %v3173 = vpow.pop %v3172
        %v3174 = vmul.f32 %v2672, 1.442695
        %v3175 = vpow.pop %v3174
        %v3176 = vmul.f32 %v2673, 1.442695
        %v3177 = vpow.pop %v3176
        %v3178 = vmul.f32 %v2674, 1.442695
        %v3179 = vpow.pop %v3178
        %v3180 = vmul.f32 %v2675, 1.442695
        %v3181 = vpow.pop %v3180
        %v3182 = vmul.f32 %v2676, 1.442695
        %v3183 = vpow.pop %v3182
        %v3184 = vmul.f32 %v2677, 1.442695
        %v3185 = vpow.pop %v3184
        %v3186 = vmul.f32 %v2678, 1.442695
        %v3187 = vpow.pop %v3186
        %v3188 = vmul.f32 %v2679, 1.442695
        %v3189 = vpow.pop %v3188
        %v3190 = vmul.f32 %v2680, 1.442695
        %v3191 = vpow.pop %v3190
        %v3192 = vmul.f32 %v2681, 1.442695
        %v3193 = vpow.pop %v3192
        %v3194 = vadd.f32 %v2683, %v2685
        %3195 = vadd.xlane.f32.xlu0 %v3194
        %v3196 = vpop.xlane.xlu0 %3195
        %v3197 = vadd.f32 %v2687, %v2689
        %3198 = vadd.xlane.f32.xlu0 %v3197
        %v3199 = vpop.xlane.xlu0 %3198
        %v3200 = vadd.f32 %v2691, %v2693
        %3201 = vadd.xlane.f32.xlu0 %v3200
        %v3202 = vpop.xlane.xlu0 %3201
        %v3203 = vadd.f32 %v2695, %v2697
        %3204 = vadd.xlane.f32.xlu0 %v3203
        %v3205 = vpop.xlane.xlu0 %3204
        %v3206 = vadd.f32 %v2699, %v2701
        %3207 = vadd.xlane.f32.xlu0 %v3206
        %v3208 = vpop.xlane.xlu0 %3207
        %v3209 = vadd.f32 %v2703, %v2705
        %3210 = vadd.xlane.f32.xlu0 %v3209
        %v3211 = vpop.xlane.xlu0 %3210
        %v3212 = vadd.f32 %v2707, %v2709
        %3213 = vadd.xlane.f32.xlu0 %v3212
        %v3214 = vpop.xlane.xlu0 %3213
        %v3215 = vadd.f32 %v2711, %v2713
        %3216 = vadd.xlane.f32.xlu0 %v3215
        %v3217 = vpop.xlane.xlu0 %3216
        %v3218 = vadd.f32 %v2715, %v2717
        %3219 = vadd.xlane.f32.xlu0 %v3218
        %v3220 = vpop.xlane.xlu0 %3219
        %v3221 = vadd.f32 %v2719, %v2721
        %3222 = vadd.xlane.f32.xlu0 %v3221
        %v3223 = vpop.xlane.xlu0 %3222
        %v3224 = vadd.f32 %v2723, %v2725
        %3225 = vadd.xlane.f32.xlu0 %v3224
        %v3226 = vpop.xlane.xlu0 %3225
        %v3227 = vadd.f32 %v2727, %v2729
        %3228 = vadd.xlane.f32.xlu0 %v3227
        %v3229 = vpop.xlane.xlu0 %3228
        %v3230 = vadd.f32 %v2731, %v2733
        %3231 = vadd.xlane.f32.xlu0 %v3230
        %v3232 = vpop.xlane.xlu0 %3231
        %v3233 = vadd.f32 %v2735, %v2737
        %3234 = vadd.xlane.f32.xlu0 %v3233
        %v3235 = vpop.xlane.xlu0 %3234
        %v3236 = vadd.f32 %v2739, %v2741
        %3237 = vadd.xlane.f32.xlu0 %v3236
        %v3238 = vpop.xlane.xlu0 %3237
        %v3239 = vadd.f32 %v2743, %v2745
        %3240 = vadd.xlane.f32.xlu0 %v3239
        %v3241 = vpop.xlane.xlu0 %3240
        %v3242 = vadd.f32 %v2747, %v2749
        %3243 = vadd.xlane.f32.xlu0 %v3242
        %v3244 = vpop.xlane.xlu0 %3243
        %v3245 = vadd.f32 %v2751, %v2753
        %3246 = vadd.xlane.f32.xlu0 %v3245
        %v3247 = vpop.xlane.xlu0 %3246
        %v3248 = vadd.f32 %v2755, %v2757
        %3249 = vadd.xlane.f32.xlu0 %v3248
        %v3250 = vpop.xlane.xlu0 %3249
        %v3251 = vadd.f32 %v2759, %v2761
        %3252 = vadd.xlane.f32.xlu0 %v3251
        %v3253 = vpop.xlane.xlu0 %3252
        %v3254 = vadd.f32 %v2763, %v2765
        %3255 = vadd.xlane.f32.xlu0 %v3254
        %v3256 = vpop.xlane.xlu0 %3255
        %v3257 = vadd.f32 %v2767, %v2769
        %3258 = vadd.xlane.f32.xlu0 %v3257
        %v3259 = vpop.xlane.xlu0 %3258
        %v3260 = vadd.f32 %v2771, %v2773
        %3261 = vadd.xlane.f32.xlu0 %v3260
        %v3262 = vpop.xlane.xlu0 %3261
        %v3263 = vadd.f32 %v2775, %v2777
        %3264 = vadd.xlane.f32.xlu0 %v3263
        %v3265 = vpop.xlane.xlu0 %3264
        %v3266 = vadd.f32 %v2779, %v2781
        %3267 = vadd.xlane.f32.xlu0 %v3266
        %v3268 = vpop.xlane.xlu0 %3267
        %v3269 = vadd.f32 %v2783, %v2785
        %3270 = vadd.xlane.f32.xlu0 %v3269
        %v3271 = vpop.xlane.xlu0 %3270
        %v3272 = vadd.f32 %v2787, %v2789
        %3273 = vadd.xlane.f32.xlu0 %v3272
        %v3274 = vpop.xlane.xlu0 %3273
        %v3275 = vadd.f32 %v2791, %v2793
        %3276 = vadd.xlane.f32.xlu0 %v3275
        %v3277 = vpop.xlane.xlu0 %3276
        %v3278 = vadd.f32 %v2795, %v2797
        %3279 = vadd.xlane.f32.xlu0 %v3278
        %v3280 = vpop.xlane.xlu0 %3279
        %v3281 = vadd.f32 %v2799, %v2801
        %3282 = vadd.xlane.f32.xlu0 %v3281
        %v3283 = vpop.xlane.xlu0 %3282
        %v3284 = vadd.f32 %v2803, %v2805
        %3285 = vadd.xlane.f32.xlu0 %v3284
        %v3286 = vpop.xlane.xlu0 %3285
        %v3287 = vadd.f32 %v2807, %v2809
        %3288 = vadd.xlane.f32.xlu0 %v3287
        %v3289 = vpop.xlane.xlu0 %3288
        %v3290 = vadd.f32 %v2811, %v2813
        %3291 = vadd.xlane.f32.xlu0 %v3290
        %v3292 = vpop.xlane.xlu0 %3291
        %v3293 = vadd.f32 %v2815, %v2817
        %3294 = vadd.xlane.f32.xlu0 %v3293
        %v3295 = vpop.xlane.xlu0 %3294
        %v3296 = vadd.f32 %v2819, %v2821
        %3297 = vadd.xlane.f32.xlu0 %v3296
        %v3298 = vpop.xlane.xlu0 %3297
        %v3299 = vadd.f32 %v2823, %v2825
        %3300 = vadd.xlane.f32.xlu0 %v3299
        %v3301 = vpop.xlane.xlu0 %3300
        %v3302 = vadd.f32 %v2827, %v2829
        %3303 = vadd.xlane.f32.xlu0 %v3302
        %v3304 = vpop.xlane.xlu0 %3303
        %v3305 = vadd.f32 %v2831, %v2833
        %3306 = vadd.xlane.f32.xlu0 %v3305
        %v3307 = vpop.xlane.xlu0 %3306
        %v3308 = vadd.f32 %v2835, %v2837
        %3309 = vadd.xlane.f32.xlu0 %v3308
        %v3310 = vpop.xlane.xlu0 %3309
        %v3311 = vadd.f32 %v2839, %v2841
        %3312 = vadd.xlane.f32.xlu0 %v3311
        %v3313 = vpop.xlane.xlu0 %3312
        %v3314 = vadd.f32 %v2843, %v2845
        %3315 = vadd.xlane.f32.xlu0 %v3314
        %v3316 = vpop.xlane.xlu0 %3315
        %v3317 = vadd.f32 %v2847, %v2849
        %3318 = vadd.xlane.f32.xlu0 %v3317
        %v3319 = vpop.xlane.xlu0 %3318
        %v3320 = vadd.f32 %v2851, %v2853
        %3321 = vadd.xlane.f32.xlu0 %v3320
        %v3322 = vpop.xlane.xlu0 %3321
        %v3323 = vadd.f32 %v2855, %v2857
        %3324 = vadd.xlane.f32.xlu0 %v3323
        %v3325 = vpop.xlane.xlu0 %3324
        %v3326 = vadd.f32 %v2859, %v2861
        %3327 = vadd.xlane.f32.xlu0 %v3326
        %v3328 = vpop.xlane.xlu0 %3327
        %v3329 = vadd.f32 %v2863, %v2865
        %3330 = vadd.xlane.f32.xlu0 %v3329
        %v3331 = vpop.xlane.xlu0 %3330
        %v3332 = vadd.f32 %v2867, %v2869
        %3333 = vadd.xlane.f32.xlu0 %v3332
        %v3334 = vpop.xlane.xlu0 %3333
        %v3335 = vadd.f32 %v2871, %v2873
        %3336 = vadd.xlane.f32.xlu0 %v3335
        %v3337 = vpop.xlane.xlu0 %3336
        %v3338 = vadd.f32 %v2875, %v2877
        %3339 = vadd.xlane.f32.xlu0 %v3338
        %v3340 = vpop.xlane.xlu0 %3339
        %v3341 = vadd.f32 %v2879, %v2881
        %3342 = vadd.xlane.f32.xlu0 %v3341
        %v3343 = vpop.xlane.xlu0 %3342
        %v3344 = vadd.f32 %v2883, %v2885
        %3345 = vadd.xlane.f32.xlu0 %v3344
        %v3346 = vpop.xlane.xlu0 %3345
        %v3347 = vadd.f32 %v2887, %v2889
        %3348 = vadd.xlane.f32.xlu0 %v3347
        %v3349 = vpop.xlane.xlu0 %3348
        %v3350 = vadd.f32 %v2891, %v2893
        %3351 = vadd.xlane.f32.xlu0 %v3350
        %v3352 = vpop.xlane.xlu0 %3351
        %v3353 = vadd.f32 %v2895, %v2897
        %3354 = vadd.xlane.f32.xlu0 %v3353
        %v3355 = vpop.xlane.xlu0 %3354
        %v3356 = vadd.f32 %v2899, %v2901
        %3357 = vadd.xlane.f32.xlu0 %v3356
        %v3358 = vpop.xlane.xlu0 %3357
        %v3359 = vadd.f32 %v2903, %v2905
        %3360 = vadd.xlane.f32.xlu0 %v3359
        %v3361 = vpop.xlane.xlu0 %3360
        %v3362 = vadd.f32 %v2907, %v2909
        %3363 = vadd.xlane.f32.xlu0 %v3362
        %v3364 = vpop.xlane.xlu0 %3363
        %v3365 = vadd.f32 %v2911, %v2913
        %3366 = vadd.xlane.f32.xlu0 %v3365
        %v3367 = vpop.xlane.xlu0 %3366
        %v3368 = vadd.f32 %v2915, %v2917
        %3369 = vadd.xlane.f32.xlu0 %v3368
        %v3370 = vpop.xlane.xlu0 %3369
        %v3371 = vadd.f32 %v2919, %v2921
        %3372 = vadd.xlane.f32.xlu0 %v3371
        %v3373 = vpop.xlane.xlu0 %3372
        %v3374 = vadd.f32 %v2923, %v2925
        %3375 = vadd.xlane.f32.xlu0 %v3374
        %v3376 = vpop.xlane.xlu0 %3375
        %v3377 = vadd.f32 %v2927, %v2929
        %3378 = vadd.xlane.f32.xlu0 %v3377
        %v3379 = vpop.xlane.xlu0 %3378
        %v3380 = vadd.f32 %v2931, %v2933
        %3381 = vadd.xlane.f32.xlu0 %v3380
        %v3382 = vpop.xlane.xlu0 %3381
        %v3383 = vadd.f32 %v2935, %v2937
        %3384 = vadd.xlane.f32.xlu0 %v3383
        %v3385 = vpop.xlane.xlu0 %3384
        %v3386 = vadd.f32 %v2939, %v2941
        %3387 = vadd.xlane.f32.xlu0 %v3386
        %v3388 = vpop.xlane.xlu0 %3387
        %v3389 = vadd.f32 %v2943, %v2945
        %3390 = vadd.xlane.f32.xlu0 %v3389
        %v3391 = vpop.xlane.xlu0 %3390
        %v3392 = vadd.f32 %v2947, %v2949
        %3393 = vadd.xlane.f32.xlu0 %v3392
        %v3394 = vpop.xlane.xlu0 %3393
        %v3395 = vadd.f32 %v2951, %v2953
        %3396 = vadd.xlane.f32.xlu0 %v3395
        %v3397 = vpop.xlane.xlu0 %3396
        %v3398 = vadd.f32 %v2955, %v2957
        %3399 = vadd.xlane.f32.xlu0 %v3398
        %v3400 = vpop.xlane.xlu0 %3399
        %v3401 = vadd.f32 %v2959, %v2961
        %3402 = vadd.xlane.f32.xlu0 %v3401
        %v3403 = vpop.xlane.xlu0 %3402
        %v3404 = vadd.f32 %v2963, %v2965
        %3405 = vadd.xlane.f32.xlu0 %v3404
        %v3406 = vpop.xlane.xlu0 %3405
        %v3407 = vadd.f32 %v2967, %v2969
        %3408 = vadd.xlane.f32.xlu0 %v3407
        %v3409 = vpop.xlane.xlu0 %3408
        %v3410 = vadd.f32 %v2971, %v2973
        %3411 = vadd.xlane.f32.xlu0 %v3410
        %v3412 = vpop.xlane.xlu0 %3411
        %v3413 = vadd.f32 %v2975, %v2977
        %3414 = vadd.xlane.f32.xlu0 %v3413
        %v3415 = vpop.xlane.xlu0 %3414
        %v3416 = vadd.f32 %v2979, %v2981
        %3417 = vadd.xlane.f32.xlu0 %v3416
        %v3418 = vpop.xlane.xlu0 %3417
        %v3419 = vadd.f32 %v2983, %v2985
        %3420 = vadd.xlane.f32.xlu0 %v3419
        %v3421 = vpop.xlane.xlu0 %3420
        %v3422 = vadd.f32 %v2987, %v2989
        %3423 = vadd.xlane.f32.xlu0 %v3422
        %v3424 = vpop.xlane.xlu0 %3423
        %v3425 = vadd.f32 %v2991, %v2993
        %3426 = vadd.xlane.f32.xlu0 %v3425
        %v3427 = vpop.xlane.xlu0 %3426
        %v3428 = vadd.f32 %v2995, %v2997
        %3429 = vadd.xlane.f32.xlu0 %v3428
        %v3430 = vpop.xlane.xlu0 %3429
        %v3431 = vadd.f32 %v2999, %v3001
        %3432 = vadd.xlane.f32.xlu0 %v3431
        %v3433 = vpop.xlane.xlu0 %3432
        %v3434 = vadd.f32 %v3003, %v3005
        %3435 = vadd.xlane.f32.xlu0 %v3434
        %v3436 = vpop.xlane.xlu0 %3435
        %v3437 = vadd.f32 %v3007, %v3009
        %3438 = vadd.xlane.f32.xlu0 %v3437
        %v3439 = vpop.xlane.xlu0 %3438
        %v3440 = vadd.f32 %v3011, %v3013
        %3441 = vadd.xlane.f32.xlu0 %v3440
        %v3442 = vpop.xlane.xlu0 %3441
        %v3443 = vadd.f32 %v3015, %v3017
        %3444 = vadd.xlane.f32.xlu0 %v3443
        %v3445 = vpop.xlane.xlu0 %3444
        %v3446 = vadd.f32 %v3019, %v3021
        %3447 = vadd.xlane.f32.xlu0 %v3446
        %v3448 = vpop.xlane.xlu0 %3447
        %v3449 = vadd.f32 %v3023, %v3025
        %3450 = vadd.xlane.f32.xlu0 %v3449
        %v3451 = vpop.xlane.xlu0 %3450
        %v3452 = vadd.f32 %v3027, %v3029
        %3453 = vadd.xlane.f32.xlu0 %v3452
        %v3454 = vpop.xlane.xlu0 %3453
        %v3455 = vadd.f32 %v3031, %v3033
        %3456 = vadd.xlane.f32.xlu0 %v3455
        %v3457 = vpop.xlane.xlu0 %3456
        %v3458 = vadd.f32 %v3035, %v3037
        %3459 = vadd.xlane.f32.xlu0 %v3458
        %v3460 = vpop.xlane.xlu0 %3459
        %v3461 = vadd.f32 %v3039, %v3041
        %3462 = vadd.xlane.f32.xlu0 %v3461
        %v3463 = vpop.xlane.xlu0 %3462
        %v3464 = vadd.f32 %v3043, %v3045
        %3465 = vadd.xlane.f32.xlu0 %v3464
        %v3466 = vpop.xlane.xlu0 %3465
        %v3467 = vadd.f32 %v3047, %v3049
        %3468 = vadd.xlane.f32.xlu0 %v3467
        %v3469 = vpop.xlane.xlu0 %3468
        %v3470 = vadd.f32 %v3051, %v3053
        %3471 = vadd.xlane.f32.xlu0 %v3470
        %v3472 = vpop.xlane.xlu0 %3471
        %v3473 = vadd.f32 %v3055, %v3057
        %3474 = vadd.xlane.f32.xlu0 %v3473
        %v3475 = vpop.xlane.xlu0 %3474
        %v3476 = vadd.f32 %v3059, %v3061
        %3477 = vadd.xlane.f32.xlu0 %v3476
        %v3478 = vpop.xlane.xlu0 %3477
        %v3479 = vadd.f32 %v3063, %v3065
        %3480 = vadd.xlane.f32.xlu0 %v3479
        %v3481 = vpop.xlane.xlu0 %3480
        %v3482 = vadd.f32 %v3067, %v3069
        %3483 = vadd.xlane.f32.xlu0 %v3482
        %v3484 = vpop.xlane.xlu0 %3483
        %v3485 = vadd.f32 %v3071, %v3073
        %3486 = vadd.xlane.f32.xlu0 %v3485
        %v3487 = vpop.xlane.xlu0 %3486
        %v3488 = vadd.f32 %v3075, %v3077
        %3489 = vadd.xlane.f32.xlu0 %v3488
        %v3490 = vpop.xlane.xlu0 %3489
        %v3491 = vadd.f32 %v3079, %v3081
        %3492 = vadd.xlane.f32.xlu0 %v3491
        %v3493 = vpop.xlane.xlu0 %3492
        %v3494 = vadd.f32 %v3083, %v3085
        %3495 = vadd.xlane.f32.xlu0 %v3494
        %v3496 = vpop.xlane.xlu0 %3495
        %v3497 = vadd.f32 %v3087, %v3089
        %3498 = vadd.xlane.f32.xlu0 %v3497
        %v3499 = vpop.xlane.xlu0 %3498
        %v3500 = vadd.f32 %v3091, %v3093
        %3501 = vadd.xlane.f32.xlu0 %v3500
        %v3502 = vpop.xlane.xlu0 %3501
        %v3503 = vadd.f32 %v3095, %v3097
        %3504 = vadd.xlane.f32.xlu0 %v3503
        %v3505 = vpop.xlane.xlu0 %3504
        %v3506 = vadd.f32 %v3099, %v3101
        %3507 = vadd.xlane.f32.xlu0 %v3506
        %v3508 = vpop.xlane.xlu0 %3507
        %v3509 = vadd.f32 %v3103, %v3105
        %3510 = vadd.xlane.f32.xlu0 %v3509
        %v3511 = vpop.xlane.xlu0 %3510
        %v3512 = vadd.f32 %v3107, %v3109
        %3513 = vadd.xlane.f32.xlu0 %v3512
        %v3514 = vpop.xlane.xlu0 %3513
        %v3515 = vadd.f32 %v3111, %v3113
        %3516 = vadd.xlane.f32.xlu0 %v3515
        %v3517 = vpop.xlane.xlu0 %3516
        %v3518 = vadd.f32 %v3115, %v3117
        %3519 = vadd.xlane.f32.xlu0 %v3518
        %v3520 = vpop.xlane.xlu0 %3519
        %v3521 = vadd.f32 %v3119, %v3121
        %3522 = vadd.xlane.f32.xlu0 %v3521
        %v3523 = vpop.xlane.xlu0 %3522
        %v3524 = vadd.f32 %v3123, %v3125
        %3525 = vadd.xlane.f32.xlu0 %v3524
        %v3526 = vpop.xlane.xlu0 %3525
        %v3527 = vadd.f32 %v3127, %v3129
        %3528 = vadd.xlane.f32.xlu0 %v3527
        %v3529 = vpop.xlane.xlu0 %3528
        %v3530 = vadd.f32 %v3131, %v3133
        %3531 = vadd.xlane.f32.xlu0 %v3530
        %v3532 = vpop.xlane.xlu0 %3531
        %v3533 = vadd.f32 %v3135, %v3137
        %3534 = vadd.xlane.f32.xlu0 %v3533
        %v3535 = vpop.xlane.xlu0 %3534
        %v3536 = vadd.f32 %v3139, %v3141
        %3537 = vadd.xlane.f32.xlu0 %v3536
        %v3538 = vpop.xlane.xlu0 %3537
        %v3539 = vadd.f32 %v3143, %v3145
        %3540 = vadd.xlane.f32.xlu0 %v3539
        %v3541 = vpop.xlane.xlu0 %3540
        %v3542 = vadd.f32 %v3147, %v3149
        %3543 = vadd.xlane.f32.xlu0 %v3542
        %v3544 = vpop.xlane.xlu0 %3543
        %v3545 = vadd.f32 %v3151, %v3153
        %3546 = vadd.xlane.f32.xlu0 %v3545
        %v3547 = vpop.xlane.xlu0 %3546
        %v3548 = vadd.f32 %v3155, %v3157
        %3549 = vadd.xlane.f32.xlu0 %v3548
        %v3550 = vpop.xlane.xlu0 %3549
        %v3551 = vadd.f32 %v3159, %v3161
        %3552 = vadd.xlane.f32.xlu0 %v3551
        %v3553 = vpop.xlane.xlu0 %3552
        %v3554 = vadd.f32 %v3163, %v3165
        %3555 = vadd.xlane.f32.xlu0 %v3554
        %v3556 = vpop.xlane.xlu0 %3555
        %v3557 = vadd.f32 %v3167, %v3169
        %3558 = vadd.xlane.f32.xlu0 %v3557
        %v3559 = vpop.xlane.xlu0 %3558
        %v3560 = vadd.f32 %v3171, %v3173
        %3561 = vadd.xlane.f32.xlu0 %v3560
        %v3562 = vpop.xlane.xlu0 %3561
        %v3563 = vadd.f32 %v3175, %v3177
        %3564 = vadd.xlane.f32.xlu0 %v3563
        %v3565 = vpop.xlane.xlu0 %3564
        %v3566 = vadd.f32 %v3179, %v3181
        %3567 = vadd.xlane.f32.xlu0 %v3566
        %v3568 = vpop.xlane.xlu0 %3567
        %v3569 = vadd.f32 %v3183, %v3185
        %3570 = vadd.xlane.f32.xlu0 %v3569
        %v3571 = vpop.xlane.xlu0 %3570
        %v3572 = vadd.f32 %v3187, %v3189
        %3573 = vadd.xlane.f32.xlu0 %v3572
        %v3574 = vpop.xlane.xlu0 %3573
        %v3575 = vadd.f32 %v3191, %v3193
        %3576 = vadd.xlane.f32.xlu0 %v3575
        %v3577 = vpop.xlane.xlu0 %3576
        %v3578 = vrcp.pop %v3196
        %v3579 = vrcp.pop %v3199
        %v3580 = vrcp.pop %v3202
        %v3581 = vrcp.pop %v3205
        %v3582 = vrcp.pop %v3208
        %v3583 = vrcp.pop %v3211
        %v3584 = vrcp.pop %v3214
        %v3585 = vrcp.pop %v3217
        %v3586 = vrcp.pop %v3220
        %v3587 = vrcp.pop %v3223
        %v3588 = vrcp.pop %v3226
        %v3589 = vrcp.pop %v3229
        %v3590 = vrcp.pop %v3232
        %v3591 = vrcp.pop %v3235
        %v3592 = vrcp.pop %v3238
        %v3593 = vrcp.pop %v3241
        %v3594 = vrcp.pop %v3244
        %v3595 = vrcp.pop %v3247
        %v3596 = vrcp.pop %v3250
        %v3597 = vrcp.pop %v3253
        %v3598 = vrcp.pop %v3256
        %v3599 = vrcp.pop %v3259
        %v3600 = vrcp.pop %v3262
        %v3601 = vrcp.pop %v3265
        %v3602 = vrcp.pop %v3268
        %v3603 = vrcp.pop %v3271
        %v3604 = vrcp.pop %v3274
        %v3605 = vrcp.pop %v3277
        %v3606 = vrcp.pop %v3280
        %v3607 = vrcp.pop %v3283
        %v3608 = vrcp.pop %v3286
        %v3609 = vrcp.pop %v3289
        %v3610 = vrcp.pop %v3292
        %v3611 = vrcp.pop %v3295
        %v3612 = vrcp.pop %v3298
        %v3613 = vrcp.pop %v3301
        %v3614 = vrcp.pop %v3304
        %v3615 = vrcp.pop %v3307
        %v3616 = vrcp.pop %v3310
        %v3617 = vrcp.pop %v3313
        %v3618 = vrcp.pop %v3316
        %v3619 = vrcp.pop %v3319
        %v3620 = vrcp.pop %v3322
        %v3621 = vrcp.pop %v3325
        %v3622 = vrcp.pop %v3328
        %v3623 = vrcp.pop %v3331
        %v3624 = vrcp.pop %v3334
        %v3625 = vrcp.pop %v3337
        %v3626 = vrcp.pop %v3340
        %v3627 = vrcp.pop %v3343
        %v3628 = vrcp.pop %v3346
        %v3629 = vrcp.pop %v3349
        %v3630 = vrcp.pop %v3352
        %v3631 = vrcp.pop %v3355
        %v3632 = vrcp.pop %v3358
        %v3633 = vrcp.pop %v3361
        %v3634 = vrcp.pop %v3364
        %v3635 = vrcp.pop %v3367
        %v3636 = vrcp.pop %v3370
        %v3637 = vrcp.pop %v3373
        %v3638 = vrcp.pop %v3376
        %v3639 = vrcp.pop %v3379
        %v3640 = vrcp.pop %v3382
        %v3641 = vrcp.pop %v3385
        %v3642 = vrcp.pop %v3388
        %v3643 = vrcp.pop %v3391
        %v3644 = vrcp.pop %v3394
        %v3645 = vrcp.pop %v3397
        %v3646 = vrcp.pop %v3400
        %v3647 = vrcp.pop %v3403
        %v3648 = vrcp.pop %v3406
        %v3649 = vrcp.pop %v3409
        %v3650 = vrcp.pop %v3412
        %v3651 = vrcp.pop %v3415
        %v3652 = vrcp.pop %v3418
        %v3653 = vrcp.pop %v3421
        %v3654 = vrcp.pop %v3424
        %v3655 = vrcp.pop %v3427
        %v3656 = vrcp.pop %v3430
        %v3657 = vrcp.pop %v3433
        %v3658 = vrcp.pop %v3436
        %v3659 = vrcp.pop %v3439
        %v3660 = vrcp.pop %v3442
        %v3661 = vrcp.pop %v3445
        %v3662 = vrcp.pop %v3448
        %v3663 = vrcp.pop %v3451
        %v3664 = vrcp.pop %v3454
        %v3665 = vrcp.pop %v3457
        %v3666 = vrcp.pop %v3460
        %v3667 = vrcp.pop %v3463
        %v3668 = vrcp.pop %v3466
        %v3669 = vrcp.pop %v3469
        %v3670 = vrcp.pop %v3472
        %v3671 = vrcp.pop %v3475
        %v3672 = vrcp.pop %v3478
        %v3673 = vrcp.pop %v3481
        %v3674 = vrcp.pop %v3484
        %v3675 = vrcp.pop %v3487
        %v3676 = vrcp.pop %v3490
        %v3677 = vrcp.pop %v3493
        %v3678 = vrcp.pop %v3496
        %v3679 = vrcp.pop %v3499
        %v3680 = vrcp.pop %v3502
        %v3681 = vrcp.pop %v3505
        %v3682 = vrcp.pop %v3508
        %v3683 = vrcp.pop %v3511
        %v3684 = vrcp.pop %v3514
        %v3685 = vrcp.pop %v3517
        %v3686 = vrcp.pop %v3520
        %v3687 = vrcp.pop %v3523
        %v3688 = vrcp.pop %v3526
        %v3689 = vrcp.pop %v3529
        %v3690 = vrcp.pop %v3532
        %v3691 = vrcp.pop %v3535
        %v3692 = vrcp.pop %v3538
        %v3693 = vrcp.pop %v3541
        %v3694 = vrcp.pop %v3544
        %v3695 = vrcp.pop %v3547
        %v3696 = vrcp.pop %v3550
        %v3697 = vrcp.pop %v3553
        %v3698 = vrcp.pop %v3556
        %v3699 = vrcp.pop %v3559
        %v3700 = vrcp.pop %v3562
        %v3701 = vrcp.pop %v3565
        %v3702 = vrcp.pop %v3568
        %v3703 = vrcp.pop %v3571
        %v3704 = vrcp.pop %v3574
        %v3705 = vrcp.pop %v3577
        %v3706 = vmul.f32 %v2683, %v3578
        %v3707 = vmul.f32 %v2685, %v3578
        %v3708 = vmul.f32 %v2687, %v3579
        %v3709 = vmul.f32 %v2689, %v3579
        %v3710 = vmul.f32 %v2691, %v3580
        %v3711 = vmul.f32 %v2693, %v3580
        %v3712 = vmul.f32 %v2695, %v3581
        %v3713 = vmul.f32 %v2697, %v3581
        %v3714 = vmul.f32 %v2699, %v3582
        %v3715 = vmul.f32 %v2701, %v3582
        %v3716 = vmul.f32 %v2703, %v3583
        %v3717 = vmul.f32 %v2705, %v3583
        %v3718 = vmul.f32 %v2707, %v3584
        %v3719 = vmul.f32 %v2709, %v3584
        %v3720 = vmul.f32 %v2711, %v3585
        %v3721 = vmul.f32 %v2713, %v3585
        %v3722 = vmul.f32 %v2715, %v3586
        %v3723 = vmul.f32 %v2717, %v3586
        %v3724 = vmul.f32 %v2719, %v3587
        %v3725 = vmul.f32 %v2721, %v3587
        %v3726 = vmul.f32 %v2723, %v3588
        %v3727 = vmul.f32 %v2725, %v3588
        %v3728 = vmul.f32 %v2727, %v3589
        %v3729 = vmul.f32 %v2729, %v3589
        %v3730 = vmul.f32 %v2731, %v3590
        %v3731 = vmul.f32 %v2733, %v3590
        %v3732 = vmul.f32 %v2735, %v3591
        %v3733 = vmul.f32 %v2737, %v3591
        %v3734 = vmul.f32 %v2739, %v3592
        %v3735 = vmul.f32 %v2741, %v3592
        %v3736 = vmul.f32 %v2743, %v3593
        %v3737 = vmul.f32 %v2745, %v3593
        %v3738 = vmul.f32 %v2747, %v3594
        %v3739 = vmul.f32 %v2749, %v3594
        %v3740 = vmul.f32 %v2751, %v3595
        %v3741 = vmul.f32 %v2753, %v3595
        %v3742 = vmul.f32 %v2755, %v3596
        %v3743 = vmul.f32 %v2757, %v3596
        %v3744 = vmul.f32 %v2759, %v3597
        %v3745 = vmul.f32 %v2761, %v3597
        %v3746 = vmul.f32 %v2763, %v3598
        %v3747 = vmul.f32 %v2765, %v3598
        %v3748 = vmul.f32 %v2767, %v3599
        %v3749 = vmul.f32 %v2769, %v3599
        %v3750 = vmul.f32 %v2771, %v3600
        %v3751 = vmul.f32 %v2773, %v3600
        %v3752 = vmul.f32 %v2775, %v3601
        %v3753 = vmul.f32 %v2777, %v3601
        %v3754 = vmul.f32 %v2779, %v3602
        %v3755 = vmul.f32 %v2781, %v3602
        %v3756 = vmul.f32 %v2783, %v3603
        %v3757 = vmul.f32 %v2785, %v3603
        %v3758 = vmul.f32 %v2787, %v3604
        %v3759 = vmul.f32 %v2789, %v3604
        %v3760 = vmul.f32 %v2791, %v3605
        %v3761 = vmul.f32 %v2793, %v3605
        %v3762 = vmul.f32 %v2795, %v3606
        %v3763 = vmul.f32 %v2797, %v3606
        %v3764 = vmul.f32 %v2799, %v3607
        %v3765 = vmul.f32 %v2801, %v3607
        %v3766 = vmul.f32 %v2803, %v3608
        %v3767 = vmul.f32 %v2805, %v3608
        %v3768 = vmul.f32 %v2807, %v3609
        %v3769 = vmul.f32 %v2809, %v3609
        %v3770 = vmul.f32 %v2811, %v3610
        %v3771 = vmul.f32 %v2813, %v3610
        %v3772 = vmul.f32 %v2815, %v3611
        %v3773 = vmul.f32 %v2817, %v3611
        %v3774 = vmul.f32 %v2819, %v3612
        %v3775 = vmul.f32 %v2821, %v3612
        %v3776 = vmul.f32 %v2823, %v3613
        %v3777 = vmul.f32 %v2825, %v3613
        %v3778 = vmul.f32 %v2827, %v3614
        %v3779 = vmul.f32 %v2829, %v3614
        %v3780 = vmul.f32 %v2831, %v3615
        %v3781 = vmul.f32 %v2833, %v3615
        %v3782 = vmul.f32 %v2835, %v3616
        %v3783 = vmul.f32 %v2837, %v3616
        %v3784 = vmul.f32 %v2839, %v3617
        %v3785 = vmul.f32 %v2841, %v3617
        %v3786 = vmul.f32 %v2843, %v3618
        %v3787 = vmul.f32 %v2845, %v3618
        %v3788 = vmul.f32 %v2847, %v3619
        %v3789 = vmul.f32 %v2849, %v3619
        %v3790 = vmul.f32 %v2851, %v3620
        %v3791 = vmul.f32 %v2853, %v3620
        %v3792 = vmul.f32 %v2855, %v3621
        %v3793 = vmul.f32 %v2857, %v3621
        %v3794 = vmul.f32 %v2859, %v3622
        %v3795 = vmul.f32 %v2861, %v3622
        %v3796 = vmul.f32 %v2863, %v3623
        %v3797 = vmul.f32 %v2865, %v3623
        %v3798 = vmul.f32 %v2867, %v3624
        %v3799 = vmul.f32 %v2869, %v3624
        %v3800 = vmul.f32 %v2871, %v3625
        %v3801 = vmul.f32 %v2873, %v3625
        %v3802 = vmul.f32 %v2875, %v3626
        %v3803 = vmul.f32 %v2877, %v3626
        %v3804 = vmul.f32 %v2879, %v3627
        %v3805 = vmul.f32 %v2881, %v3627
        %v3806 = vmul.f32 %v2883, %v3628
        %v3807 = vmul.f32 %v2885, %v3628
        %v3808 = vmul.f32 %v2887, %v3629
        %v3809 = vmul.f32 %v2889, %v3629
        %v3810 = vmul.f32 %v2891, %v3630
        %v3811 = vmul.f32 %v2893, %v3630
        %v3812 = vmul.f32 %v2895, %v3631
        %v3813 = vmul.f32 %v2897, %v3631
        %v3814 = vmul.f32 %v2899, %v3632
        %v3815 = vmul.f32 %v2901, %v3632
        %v3816 = vmul.f32 %v2903, %v3633
        %v3817 = vmul.f32 %v2905, %v3633
        %v3818 = vmul.f32 %v2907, %v3634
        %v3819 = vmul.f32 %v2909, %v3634
        %v3820 = vmul.f32 %v2911, %v3635
        %v3821 = vmul.f32 %v2913, %v3635
        %v3822 = vmul.f32 %v2915, %v3636
        %v3823 = vmul.f32 %v2917, %v3636
        %v3824 = vmul.f32 %v2919, %v3637
        %v3825 = vmul.f32 %v2921, %v3637
        %v3826 = vmul.f32 %v2923, %v3638
        %v3827 = vmul.f32 %v2925, %v3638
        %v3828 = vmul.f32 %v2927, %v3639
        %v3829 = vmul.f32 %v2929, %v3639
        %v3830 = vmul.f32 %v2931, %v3640
        %v3831 = vmul.f32 %v2933, %v3640
        %v3832 = vmul.f32 %v2935, %v3641
        %v3833 = vmul.f32 %v2937, %v3641
        %v3834 = vmul.f32 %v2939, %v3642
        %v3835 = vmul.f32 %v2941, %v3642
        %v3836 = vmul.f32 %v2943, %v3643
        %v3837 = vmul.f32 %v2945, %v3643
        %v3838 = vmul.f32 %v2947, %v3644
        %v3839 = vmul.f32 %v2949, %v3644
        %v3840 = vmul.f32 %v2951, %v3645
        %v3841 = vmul.f32 %v2953, %v3645
        %v3842 = vmul.f32 %v2955, %v3646
        %v3843 = vmul.f32 %v2957, %v3646
        %v3844 = vmul.f32 %v2959, %v3647
        %v3845 = vmul.f32 %v2961, %v3647
        %v3846 = vmul.f32 %v2963, %v3648
        %v3847 = vmul.f32 %v2965, %v3648
        %v3848 = vmul.f32 %v2967, %v3649
        %v3849 = vmul.f32 %v2969, %v3649
        %v3850 = vmul.f32 %v2971, %v3650
        %v3851 = vmul.f32 %v2973, %v3650
        %v3852 = vmul.f32 %v2975, %v3651
        %v3853 = vmul.f32 %v2977, %v3651
        %v3854 = vmul.f32 %v2979, %v3652
        %v3855 = vmul.f32 %v2981, %v3652
        %v3856 = vmul.f32 %v2983, %v3653
        %v3857 = vmul.f32 %v2985, %v3653
        %v3858 = vmul.f32 %v2987, %v3654
        %v3859 = vmul.f32 %v2989, %v3654
        %v3860 = vmul.f32 %v2991, %v3655
        %v3861 = vmul.f32 %v2993, %v3655
        %v3862 = vmul.f32 %v2995, %v3656
        %v3863 = vmul.f32 %v2997, %v3656
        %v3864 = vmul.f32 %v2999, %v3657
        %v3865 = vmul.f32 %v3001, %v3657
        %v3866 = vmul.f32 %v3003, %v3658
        %v3867 = vmul.f32 %v3005, %v3658
        %v3868 = vmul.f32 %v3007, %v3659
        %v3869 = vmul.f32 %v3009, %v3659
        %v3870 = vmul.f32 %v3011, %v3660
        %v3871 = vmul.f32 %v3013, %v3660
        %v3872 = vmul.f32 %v3015, %v3661
        %v3873 = vmul.f32 %v3017, %v3661
        %v3874 = vmul.f32 %v3019, %v3662
        %v3875 = vmul.f32 %v3021, %v3662
        %v3876 = vmul.f32 %v3023, %v3663
        %v3877 = vmul.f32 %v3025, %v3663
        %v3878 = vmul.f32 %v3027, %v3664
        %v3879 = vmul.f32 %v3029, %v3664
        %v3880 = vmul.f32 %v3031, %v3665
        %v3881 = vmul.f32 %v3033, %v3665
        %v3882 = vmul.f32 %v3035, %v3666
        %v3883 = vmul.f32 %v3037, %v3666
        %v3884 = vmul.f32 %v3039, %v3667
        %v3885 = vmul.f32 %v3041, %v3667
        %v3886 = vmul.f32 %v3043, %v3668
        %v3887 = vmul.f32 %v3045, %v3668
        %v3888 = vmul.f32 %v3047, %v3669
        %v3889 = vmul.f32 %v3049, %v3669
        %v3890 = vmul.f32 %v3051, %v3670
        %v3891 = vmul.f32 %v3053, %v3670
        %v3892 = vmul.f32 %v3055, %v3671
        %v3893 = vmul.f32 %v3057, %v3671
        %v3894 = vmul.f32 %v3059, %v3672
        %v3895 = vmul.f32 %v3061, %v3672
        %v3896 = vmul.f32 %v3063, %v3673
        %v3897 = vmul.f32 %v3065, %v3673
        %v3898 = vmul.f32 %v3067, %v3674
        %v3899 = vmul.f32 %v3069, %v3674
        %v3900 = vmul.f32 %v3071, %v3675
        %v3901 = vmul.f32 %v3073, %v3675
        %v3902 = vmul.f32 %v3075, %v3676
        %v3903 = vmul.f32 %v3077, %v3676
        %v3904 = vmul.f32 %v3079, %v3677
        %v3905 = vmul.f32 %v3081, %v3677
        %v3906 = vmul.f32 %v3083, %v3678
        %v3907 = vmul.f32 %v3085, %v3678
        %v3908 = vmul.f32 %v3087, %v3679
        %v3909 = vmul.f32 %v3089, %v3679
        %v3910 = vmul.f32 %v3091, %v3680
        %v3911 = vmul.f32 %v3093, %v3680
        %v3912 = vmul.f32 %v3095, %v3681
        %v3913 = vmul.f32 %v3097, %v3681
        %v3914 = vmul.f32 %v3099, %v3682
        %v3915 = vmul.f32 %v3101, %v3682
        %v3916 = vmul.f32 %v3103, %v3683
        %v3917 = vmul.f32 %v3105, %v3683
        %v3918 = vmul.f32 %v3107, %v3684
        %v3919 = vmul.f32 %v3109, %v3684
        %v3920 = vmul.f32 %v3111, %v3685
        %v3921 = vmul.f32 %v3113, %v3685
        %v3922 = vmul.f32 %v3115, %v3686
        %v3923 = vmul.f32 %v3117, %v3686
        %v3924 = vmul.f32 %v3119, %v3687
        %v3925 = vmul.f32 %v3121, %v3687
        %v3926 = vmul.f32 %v3123, %v3688
        %v3927 = vmul.f32 %v3125, %v3688
        %v3928 = vmul.f32 %v3127, %v3689
        %v3929 = vmul.f32 %v3129, %v3689
        %v3930 = vmul.f32 %v3131, %v3690
        %v3931 = vmul.f32 %v3133, %v3690
        %v3932 = vmul.f32 %v3135, %v3691
        %v3933 = vmul.f32 %v3137, %v3691
        %v3934 = vmul.f32 %v3139, %v3692
        %v3935 = vmul.f32 %v3141, %v3692
        %v3936 = vmul.f32 %v3143, %v3693
        %v3937 = vmul.f32 %v3145, %v3693
        %v3938 = vmul.f32 %v3147, %v3694
        %v3939 = vmul.f32 %v3149, %v3694
        %v3940 = vmul.f32 %v3151, %v3695
        %v3941 = vmul.f32 %v3153, %v3695
        %v3942 = vmul.f32 %v3155, %v3696
        %v3943 = vmul.f32 %v3157, %v3696
        %v3944 = vmul.f32 %v3159, %v3697
        %v3945 = vmul.f32 %v3161, %v3697
        %v3946 = vmul.f32 %v3163, %v3698
        %v3947 = vmul.f32 %v3165, %v3698
        %v3948 = vmul.f32 %v3167, %v3699
        %v3949 = vmul.f32 %v3169, %v3699
        %v3950 = vmul.f32 %v3171, %v3700
        %v3951 = vmul.f32 %v3173, %v3700
        %v3952 = vmul.f32 %v3175, %v3701
        %v3953 = vmul.f32 %v3177, %v3701
        %v3954 = vmul.f32 %v3179, %v3702
        %v3955 = vmul.f32 %v3181, %v3702
        %v3956 = vmul.f32 %v3183, %v3703
        %v3957 = vmul.f32 %v3185, %v3703
        %v3958 = vmul.f32 %v3187, %v3704
        %v3959 = vmul.f32 %v3189, %v3704
        %v3960 = vmul.f32 %v3191, %v3705
        %v3961 = vmul.f32 %v3193, %v3705
        %v3962 = vpack.c.bf16 %v3708, %v3706
        %v3963 = vpack.c.bf16 %v3709, %v3707
        %v3964 = vpack.c.bf16 %v3712, %v3710
        %v3965 = vpack.c.bf16 %v3713, %v3711
        %v3966 = vpack.c.bf16 %v3716, %v3714
        %v3967 = vpack.c.bf16 %v3717, %v3715
        %v3968 = vpack.c.bf16 %v3720, %v3718
        %v3969 = vpack.c.bf16 %v3721, %v3719
        %v3970 = vpack.c.bf16 %v3724, %v3722
        %v3971 = vpack.c.bf16 %v3725, %v3723
        %v3972 = vpack.c.bf16 %v3728, %v3726
        %v3973 = vpack.c.bf16 %v3729, %v3727
        %v3974 = vpack.c.bf16 %v3732, %v3730
        %v3975 = vpack.c.bf16 %v3733, %v3731
        %v3976 = vpack.c.bf16 %v3736, %v3734
        %v3977 = vpack.c.bf16 %v3737, %v3735
        %v3978 = vpack.c.bf16 %v3740, %v3738
        %v3979 = vpack.c.bf16 %v3741, %v3739
        %v3980 = vpack.c.bf16 %v3744, %v3742
        %v3981 = vpack.c.bf16 %v3745, %v3743
        %v3982 = vpack.c.bf16 %v3748, %v3746
        %v3983 = vpack.c.bf16 %v3749, %v3747
        %v3984 = vpack.c.bf16 %v3752, %v3750
        %v3985 = vpack.c.bf16 %v3753, %v3751
        %v3986 = vpack.c.bf16 %v3756, %v3754
        %v3987 = vpack.c.bf16 %v3757, %v3755
        %v3988 = vpack.c.bf16 %v3760, %v3758
        %v3989 = vpack.c.bf16 %v3761, %v3759
        %v3990 = vpack.c.bf16 %v3764, %v3762
        %v3991 = vpack.c.bf16 %v3765, %v3763
        %v3992 = vpack.c.bf16 %v3768, %v3766
        %v3993 = vpack.c.bf16 %v3769, %v3767
        %v3994 = vpack.c.bf16 %v3772, %v3770
        %v3995 = vpack.c.bf16 %v3773, %v3771
        %v3996 = vpack.c.bf16 %v3776, %v3774
        %v3997 = vpack.c.bf16 %v3777, %v3775
        %v3998 = vpack.c.bf16 %v3780, %v3778
        %v3999 = vpack.c.bf16 %v3781, %v3779
        %v4000 = vpack.c.bf16 %v3784, %v3782
        %v4001 = vpack.c.bf16 %v3785, %v3783
        %v4002 = vpack.c.bf16 %v3788, %v3786
        %v4003 = vpack.c.bf16 %v3789, %v3787
        %v4004 = vpack.c.bf16 %v3792, %v3790
        %v4005 = vpack.c.bf16 %v3793, %v3791
        %v4006 = vpack.c.bf16 %v3796, %v3794
        %v4007 = vpack.c.bf16 %v3797, %v3795
        %v4008 = vpack.c.bf16 %v3800, %v3798
        %v4009 = vpack.c.bf16 %v3801, %v3799
        %v4010 = vpack.c.bf16 %v3804, %v3802
        %v4011 = vpack.c.bf16 %v3805, %v3803
        %v4012 = vpack.c.bf16 %v3808, %v3806
        %v4013 = vpack.c.bf16 %v3809, %v3807
        %v4014 = vpack.c.bf16 %v3812, %v3810
        %v4015 = vpack.c.bf16 %v3813, %v3811
        %v4016 = vpack.c.bf16 %v3816, %v3814
        %v4017 = vpack.c.bf16 %v3817, %v3815
        %v4018 = vpack.c.bf16 %v3820, %v3818
        %v4019 = vpack.c.bf16 %v3821, %v3819
        %v4020 = vpack.c.bf16 %v3824, %v3822
        %v4021 = vpack.c.bf16 %v3825, %v3823
        %v4022 = vpack.c.bf16 %v3828, %v3826
        %v4023 = vpack.c.bf16 %v3829, %v3827
        %v4024 = vpack.c.bf16 %v3832, %v3830
        %v4025 = vpack.c.bf16 %v3833, %v3831
        %v4026 = vpack.c.bf16 %v3836, %v3834
        %v4027 = vpack.c.bf16 %v3837, %v3835
        %v4028 = vpack.c.bf16 %v3840, %v3838
        %v4029 = vpack.c.bf16 %v3841, %v3839
        %v4030 = vpack.c.bf16 %v3844, %v3842
        %v4031 = vpack.c.bf16 %v3845, %v3843
        %v4032 = vpack.c.bf16 %v3848, %v3846
        %v4033 = vpack.c.bf16 %v3849, %v3847
        %v4034 = vpack.c.bf16 %v3852, %v3850
        %v4035 = vpack.c.bf16 %v3853, %v3851
        %v4036 = vpack.c.bf16 %v3856, %v3854
        %v4037 = vpack.c.bf16 %v3857, %v3855
        %v4038 = vpack.c.bf16 %v3860, %v3858
        %v4039 = vpack.c.bf16 %v3861, %v3859
        %v4040 = vpack.c.bf16 %v3864, %v3862
        %v4041 = vpack.c.bf16 %v3865, %v3863
        %v4042 = vpack.c.bf16 %v3868, %v3866
        %v4043 = vpack.c.bf16 %v3869, %v3867
        %v4044 = vpack.c.bf16 %v3872, %v3870
        %v4045 = vpack.c.bf16 %v3873, %v3871
        %v4046 = vpack.c.bf16 %v3876, %v3874
        %v4047 = vpack.c.bf16 %v3877, %v3875
        %v4048 = vpack.c.bf16 %v3880, %v3878
        %v4049 = vpack.c.bf16 %v3881, %v3879
        %v4050 = vpack.c.bf16 %v3884, %v3882
        %v4051 = vpack.c.bf16 %v3885, %v3883
        %v4052 = vpack.c.bf16 %v3888, %v3886
        %v4053 = vpack.c.bf16 %v3889, %v3887
        %v4054 = vpack.c.bf16 %v3892, %v3890
        %v4055 = vpack.c.bf16 %v3893, %v3891
        %v4056 = vpack.c.bf16 %v3896, %v3894
        %v4057 = vpack.c.bf16 %v3897, %v3895
        %v4058 = vpack.c.bf16 %v3900, %v3898
        %v4059 = vpack.c.bf16 %v3901, %v3899
        %v4060 = vpack.c.bf16 %v3904, %v3902
        %v4061 = vpack.c.bf16 %v3905, %v3903
        %v4062 = vpack.c.bf16 %v3908, %v3906
        %v4063 = vpack.c.bf16 %v3909, %v3907
        %v4064 = vpack.c.bf16 %v3912, %v3910
        %v4065 = vpack.c.bf16 %v3913, %v3911
        %v4066 = vpack.c.bf16 %v3916, %v3914
        %v4067 = vpack.c.bf16 %v3917, %v3915
        %v4068 = vpack.c.bf16 %v3920, %v3918
        %v4069 = vpack.c.bf16 %v3921, %v3919
        %v4070 = vpack.c.bf16 %v3924, %v3922
        %v4071 = vpack.c.bf16 %v3925, %v3923
        %v4072 = vpack.c.bf16 %v3928, %v3926
        %v4073 = vpack.c.bf16 %v3929, %v3927
        %v4074 = vpack.c.bf16 %v3932, %v3930
        %v4075 = vpack.c.bf16 %v3933, %v3931
        %v4076 = vpack.c.bf16 %v3936, %v3934
        %v4077 = vpack.c.bf16 %v3937, %v3935
        %v4078 = vpack.c.bf16 %v3940, %v3938
        %v4079 = vpack.c.bf16 %v3941, %v3939
        %v4080 = vpack.c.bf16 %v3944, %v3942
        %v4081 = vpack.c.bf16 %v3945, %v3943
        %v4082 = vpack.c.bf16 %v3948, %v3946
        %v4083 = vpack.c.bf16 %v3949, %v3947
        %v4084 = vpack.c.bf16 %v3952, %v3950
        %v4085 = vpack.c.bf16 %v3953, %v3951
        %v4086 = vpack.c.bf16 %v3956, %v3954
        %v4087 = vpack.c.bf16 %v3957, %v3955
        %v4088 = vpack.c.bf16 %v3960, %v3958
        %v4089 = vpack.c.bf16 %v3961, %v3959
        %v4090 = vpack.c.b16 %v636, %v636
        %v4091 = vpack.c.b16 %v637, %v637
        %4094 = vmatprep.subr.bf16.mxu0 %v3963
        %4095 = vmatpush1.bf16.xpose.msra.mxu0 %v3962
        %4096 = vmatprep.subr.bf16.mxu0 %v3965
        %4097 = vmatpush1.bf16.xpose.msra.mxu0 %v3964
        %4098 = vmatprep.subr.bf16.mxu0 %v3967
        %4099 = vmatpush1.bf16.xpose.msra.mxu0 %v3966
        %4100 = vmatprep.subr.bf16.mxu0 %v3969
        %4101 = vmatpush1.bf16.xpose.msra.mxu0 %v3968
        %4102 = vmatprep.subr.bf16.mxu0 %v3971
        %4103 = vmatpush1.bf16.xpose.msra.mxu0 %v3970
        %4104 = vmatprep.subr.bf16.mxu0 %v3973
        %4105 = vmatpush1.bf16.xpose.msra.mxu0 %v3972
        %4106 = vmatprep.subr.bf16.mxu0 %v3975
        %4107 = vmatpush1.bf16.xpose.msra.mxu0 %v3974
        %4108 = vmatprep.subr.bf16.mxu0 %v3977
        %4109 = vmatpush1.bf16.xpose.msra.mxu0 %v3976
        %4110 = vmatprep.subr.bf16.mxu0 %v3979
        %4111 = vmatpush1.bf16.xpose.msra.mxu0 %v3978
        %4112 = vmatprep.subr.bf16.mxu0 %v3981
        %4113 = vmatpush1.bf16.xpose.msra.mxu0 %v3980
        %4114 = vmatprep.subr.bf16.mxu0 %v3983
        %4115 = vmatpush1.bf16.xpose.msra.mxu0 %v3982
        %4116 = vmatprep.subr.bf16.mxu0 %v3985
        %4117 = vmatpush1.bf16.xpose.msra.mxu0 %v3984
        %4118 = vmatprep.subr.bf16.mxu0 %v3987
        %4119 = vmatpush1.bf16.xpose.msra.mxu0 %v3986
        %4120 = vmatprep.subr.bf16.mxu0 %v3989
        %4121 = vmatpush1.bf16.xpose.msra.mxu0 %v3988
        %4122 = vmatprep.subr.bf16.mxu0 %v3991
        %4123 = vmatpush1.bf16.xpose.msra.mxu0 %v3990
        %4124 = vmatprep.subr.bf16.mxu0 %v3993
        %4125 = vmatpush1.bf16.xpose.msra.mxu0 %v3992
        %4126 = vmatprep.mubr.bf16.mxu0 %v4091
        %4127 = vmatmul.mubr.bf16.gmra.mrb[0].mxu0 %v4090
        %v4128 = vpop.f32.mrb[0].mxu0
        %v4129 = vadd.f32 0.0, %v4128
        %v4130 = vpop.f32.mrb[0].mxu0
        %v4131 = vadd.f32 0.0, %v4130
        %v4132 = vpop.f32.mrb[0].mxu0
        %v4133 = vpop.f32.mrb[0].mxu0
        %4134 = vdwg.mxu0
        %v4135 = vpack.c.b16 %v638, %v638
        %v4136 = vpack.c.b16 %v639, %v639
        %4139 = vmatprep.subr.bf16.mxu0 %v3995
        %4140 = vmatpush1.bf16.xpose.msra.mxu0 %v3994
        %4141 = vmatprep.subr.bf16.mxu0 %v3997
        %4142 = vmatpush1.bf16.xpose.msra.mxu0 %v3996
        %4143 = vmatprep.subr.bf16.mxu0 %v3999
        %4144 = vmatpush1.bf16.xpose.msra.mxu0 %v3998
        %4145 = vmatprep.subr.bf16.mxu0 %v4001
        %4146 = vmatpush1.bf16.xpose.msra.mxu0 %v4000
        %4147 = vmatprep.subr.bf16.mxu0 %v4003
        %4148 = vmatpush1.bf16.xpose.msra.mxu0 %v4002
        %4149 = vmatprep.subr.bf16.mxu0 %v4005
        %4150 = vmatpush1.bf16.xpose.msra.mxu0 %v4004
        %4151 = vmatprep.subr.bf16.mxu0 %v4007
        %4152 = vmatpush1.bf16.xpose.msra.mxu0 %v4006
        %4153 = vmatprep.subr.bf16.mxu0 %v4009
        %4154 = vmatpush1.bf16.xpose.msra.mxu0 %v4008
        %4155 = vmatprep.subr.bf16.mxu0 %v4011
        %4156 = vmatpush1.bf16.xpose.msra.mxu0 %v4010
        %4157 = vmatprep.subr.bf16.mxu0 %v4013
        %4158 = vmatpush1.bf16.xpose.msra.mxu0 %v4012
        %4159 = vmatprep.subr.bf16.mxu0 %v4015
        %4160 = vmatpush1.bf16.xpose.msra.mxu0 %v4014
        %4161 = vmatprep.subr.bf16.mxu0 %v4017
        %4162 = vmatpush1.bf16.xpose.msra.mxu0 %v4016
        %4163 = vmatprep.subr.bf16.mxu0 %v4019
        %4164 = vmatpush1.bf16.xpose.msra.mxu0 %v4018
        %4165 = vmatprep.subr.bf16.mxu0 %v4021
        %4166 = vmatpush1.bf16.xpose.msra.mxu0 %v4020
        %4167 = vmatprep.subr.bf16.mxu0 %v4023
        %4168 = vmatpush1.bf16.xpose.msra.mxu0 %v4022
        %4169 = vmatprep.subr.bf16.mxu0 %v4025
        %4170 = vmatpush1.bf16.xpose.msra.mxu0 %v4024
        %4171 = vmatprep.mubr.bf16.mxu0 %v4136
        %4172 = vmatmul.mubr.bf16.gmra.mrb[0].mxu0 %v4135
        %v4173 = vpop.f32.mrb[0].mxu0
        %v4174 = vadd.f32 0.0, %v4173
        %v4175 = vpop.f32.mrb[0].mxu0
        %v4176 = vadd.f32 0.0, %v4175
        %v4177 = vpop.f32.mrb[0].mxu0
        %v4178 = vpop.f32.mrb[0].mxu0
        %4179 = vdwg.mxu0
        %v4180 = vpack.c.b16 %v640, %v640
        %v4181 = vpack.c.b16 %v641, %v641
        %4184 = vmatprep.subr.bf16.mxu0 %v4027
        %4185 = vmatpush1.bf16.xpose.msra.mxu0 %v4026
        %4186 = vmatprep.subr.bf16.mxu0 %v4029
        %4187 = vmatpush1.bf16.xpose.msra.mxu0 %v4028
        %4188 = vmatprep.subr.bf16.mxu0 %v4031
        %4189 = vmatpush1.bf16.xpose.msra.mxu0 %v4030
        %4190 = vmatprep.subr.bf16.mxu0 %v4033
        %4191 = vmatpush1.bf16.xpose.msra.mxu0 %v4032
        %4192 = vmatprep.subr.bf16.mxu0 %v4035
        %4193 = vmatpush1.bf16.xpose.msra.mxu0 %v4034
        %4194 = vmatprep.subr.bf16.mxu0 %v4037
        %4195 = vmatpush1.bf16.xpose.msra.mxu0 %v4036
        %4196 = vmatprep.subr.bf16.mxu0 %v4039
        %4197 = vmatpush1.bf16.xpose.msra.mxu0 %v4038
        %4198 = vmatprep.subr.bf16.mxu0 %v4041
        %4199 = vmatpush1.bf16.xpose.msra.mxu0 %v4040
        %4200 = vmatprep.subr.bf16.mxu0 %v4043
        %4201 = vmatpush1.bf16.xpose.msra.mxu0 %v4042
        %4202 = vmatprep.subr.bf16.mxu0 %v4045
        %4203 = vmatpush1.bf16.xpose.msra.mxu0 %v4044
        %4204 = vmatprep.subr.bf16.mxu0 %v4047
        %4205 = vmatpush1.bf16.xpose.msra.mxu0 %v4046
        %4206 = vmatprep.subr.bf16.mxu0 %v4049
        %4207 = vmatpush1.bf16.xpose.msra.mxu0 %v4048
        %4208 = vmatprep.subr.bf16.mxu0 %v4051
        %4209 = vmatpush1.bf16.xpose.msra.mxu0 %v4050
        %4210 = vmatprep.subr.bf16.mxu0 %v4053
        %4211 = vmatpush1.bf16.xpose.msra.mxu0 %v4052
        %4212 = vmatprep.subr.bf16.mxu0 %v4055
        %4213 = vmatpush1.bf16.xpose.msra.mxu0 %v4054
        %4214 = vmatprep.subr.bf16.mxu0 %v4057
        %4215 = vmatpush1.bf16.xpose.msra.mxu0 %v4056
        %4216 = vmatprep.mubr.bf16.mxu0 %v4181
        %4217 = vmatmul.mubr.bf16.gmra.mrb[0].mxu0 %v4180
        %v4218 = vpop.f32.mrb[0].mxu0
        %v4219 = vadd.f32 0.0, %v4218
        %v4220 = vpop.f32.mrb[0].mxu0
        %v4221 = vadd.f32 0.0, %v4220
        %v4222 = vpop.f32.mrb[0].mxu0
        %v4223 = vpop.f32.mrb[0].mxu0
        %4224 = vdwg.mxu0
        %v4225 = vpack.c.b16 %v642, %v642
        %v4226 = vpack.c.b16 %v643, %v643
        %4229 = vmatprep.subr.bf16.mxu0 %v4059
        %4230 = vmatpush1.bf16.xpose.msra.mxu0 %v4058
        %4231 = vmatprep.subr.bf16.mxu0 %v4061
        %4232 = vmatpush1.bf16.xpose.msra.mxu0 %v4060
        %4233 = vmatprep.subr.bf16.mxu0 %v4063
        %4234 = vmatpush1.bf16.xpose.msra.mxu0 %v4062
        %4235 = vmatprep.subr.bf16.mxu0 %v4065
        %4236 = vmatpush1.bf16.xpose.msra.mxu0 %v4064
        %4237 = vmatprep.subr.bf16.mxu0 %v4067
        %4238 = vmatpush1.bf16.xpose.msra.mxu0 %v4066
        %4239 = vmatprep.subr.bf16.mxu0 %v4069
        %4240 = vmatpush1.bf16.xpose.msra.mxu0 %v4068
        %4241 = vmatprep.subr.bf16.mxu0 %v4071
        %4242 = vmatpush1.bf16.xpose.msra.mxu0 %v4070
        %4243 = vmatprep.subr.bf16.mxu0 %v4073
        %4244 = vmatpush1.bf16.xpose.msra.mxu0 %v4072
        %4245 = vmatprep.subr.bf16.mxu0 %v4075
        %4246 = vmatpush1.bf16.xpose.msra.mxu0 %v4074
        %4247 = vmatprep.subr.bf16.mxu0 %v4077
        %4248 = vmatpush1.bf16.xpose.msra.mxu0 %v4076
        %4249 = vmatprep.subr.bf16.mxu0 %v4079
        %4250 = vmatpush1.bf16.xpose.msra.mxu0 %v4078
        %4251 = vmatprep.subr.bf16.mxu0 %v4081
        %4252 = vmatpush1.bf16.xpose.msra.mxu0 %v4080
        %4253 = vmatprep.subr.bf16.mxu0 %v4083
        %4254 = vmatpush1.bf16.xpose.msra.mxu0 %v4082
        %4255 = vmatprep.subr.bf16.mxu0 %v4085
        %4256 = vmatpush1.bf16.xpose.msra.mxu0 %v4084
        %4257 = vmatprep.subr.bf16.mxu0 %v4087
        %4258 = vmatpush1.bf16.xpose.msra.mxu0 %v4086
        %4259 = vmatprep.subr.bf16.mxu0 %v4089
        %4260 = vmatpush1.bf16.xpose.msra.mxu0 %v4088
        %4261 = vmatprep.mubr.bf16.mxu0 %v4226
        %4262 = vmatmul.mubr.bf16.gmra.mrb[0].mxu0 %v4225
        %v4263 = vpop.f32.mrb[0].mxu0
        %v4264 = vadd.f32 0.0, %v4263
        %v4265 = vpop.f32.mrb[0].mxu0
        %v4266 = vadd.f32 0.0, %v4265
        %v4267 = vpop.f32.mrb[0].mxu0
        %v4268 = vpop.f32.mrb[0].mxu0
        %4269 = vdwg.mxu0
        %v4270 = vld [vmem:[#allocation10] sm:$0xf]
        %v4271 = vld [vmem:[#allocation10 + $0x4] sm:$0xf]
        %v4272 = vld [vmem:[#allocation10 + $0x8] sm:$0xf]
        %v4273 = vld [vmem:[#allocation10 + $0xc] sm:$0xf]
        %v4274 = vpack.c.bf16 %v4174, %v4129
        %v4275 = vpack.c.bf16 %v4176, %v4131
        %v4276 = vpack.c.bf16 %v4264, %v4219
        %v4277 = vpack.c.bf16 %v4266, %v4221
        %v4278 = vld [vmem:[#allocation11] sm:$0xff]
        %v4279 = vld [vmem:[#allocation11 + $0x8] sm:$0xff]
        %v4280 = vld [vmem:[#allocation11 + $0x10] sm:$0xff]
        %v4281 = vld [vmem:[#allocation11 + $0x18] sm:$0xff]
        %4283 = vset.pattern.permute.xlu0 0
        %4284 = vperm.xlu0 %4283, %v4278
        %v4285 = vpop.permute.xlu0 %4284
        %4288 = vset.pattern.permute.xlu0 0
        %4289 = vperm.xlu0 %4288, %v4279
        %v4290 = vpop.permute.xlu0 %4289
        %4293 = vset.pattern.permute.xlu0 0
        %4294 = vperm.xlu0 %4293, %v4280
        %v4295 = vpop.permute.xlu0 %4294
        %4298 = vset.pattern.permute.xlu0 0
        %4299 = vperm.xlu0 %4298, %v4281
        %v4300 = vpop.permute.xlu0 %4299
        %v4306 = vunpack.c.l.b16 %v4270
        %v4307 = vunpack.c.l.b16 %v4271
        %v4308 = vunpack.c.l.b16 %v4272
        %v4309 = vunpack.c.l.b16 %v4273
        %v4310 = vpack.c.b16 %v4307, %v4306
        %v4311 = vpack.c.b16 %v4309, %v4308
        %v4313 = vsel %vm484, %v4310, 0
        %v4316 = vsel %vm484, %v4311, 0
        %4318 = vmatprep.subr.bf16.mxu0 %v4275
        %4319 = vmatpush1.bf16.msra.mxu0 %v4274
        %4320 = vmatprep.subr.bf16.mxu0 %v4277
        %4321 = vmatpush1.bf16.msra.mxu0 %v4276
        %4322 = vmatprep.subr.bf16.mxu0 0
        %4323 = vmatpush1.bf16.msra.mxu0 0
        %4324 = vmatprep.subr.bf16.mxu0 0
        %4325 = vmatpush1.bf16.msra.mxu0 0
        %4326 = vmatprep.subr.bf16.mxu0 0
        %4327 = vmatpush1.bf16.msra.mxu0 0
        %4328 = vmatprep.subr.bf16.mxu0 0
        %4329 = vmatpush1.bf16.msra.mxu0 0
        %4330 = vmatprep.subr.bf16.mxu0 0
        %4331 = vmatpush1.bf16.msra.mxu0 0
        %4332 = vmatprep.subr.bf16.mxu0 0
        %4333 = vmatpush1.bf16.msra.mxu0 0
        %4334 = vmatprep.subr.bf16.mxu0 0
        %4335 = vmatpush1.bf16.msra.mxu0 0
        %4336 = vmatprep.subr.bf16.mxu0 0
        %4337 = vmatpush1.bf16.msra.mxu0 0
        %4338 = vmatprep.subr.bf16.mxu0 0
        %4339 = vmatpush1.bf16.msra.mxu0 0
        %4340 = vmatprep.subr.bf16.mxu0 0
        %4341 = vmatpush1.bf16.msra.mxu0 0
        %4342 = vmatprep.subr.bf16.mxu0 0
        %4343 = vmatpush1.bf16.msra.mxu0 0
        %4344 = vmatprep.subr.bf16.mxu0 0
        %4345 = vmatpush1.bf16.msra.mxu0 0
        %4346 = vmatprep.subr.bf16.mxu0 0
        %4347 = vmatpush1.bf16.msra.mxu0 0
        %4348 = vmatprep.subr.bf16.mxu0 0
        %4349 = vmatpush1.bf16.msra.mxu0 0
        %4350 = vmatprep.mubr.bf16.mxu0 0
        %4351 = vmatmul.mubr.bf16.gmra.mrb[0].mxu0 %v4313
        %v4352 = vpop.f32.mrb[0].mxu0
        %v4353 = vadd.f32 %v4285, %v4352
        %v4354 = vpop.f32.mrb[0].mxu0
        %v4355 = vadd.f32 %v4285, %v4354
        %v4356 = vpop.f32.mrb[0].mxu0
        %v4357 = vadd.f32 %v4290, %v4356
        %v4358 = vpop.f32.mrb[0].mxu0
        %v4359 = vadd.f32 %v4290, %v4358
        %4360 = vmatprep.mubr.bf16.mxu0 0
        %4361 = vmatmul.mubr.bf16.gmra.mrb[0].mxu0 %v4316
        %v4362 = vpop.f32.mrb[0].mxu0
        %v4363 = vadd.f32 %v4295, %v4362
        %v4364 = vpop.f32.mrb[0].mxu0
        %v4365 = vadd.f32 %v4295, %v4364
        %v4366 = vpop.f32.mrb[0].mxu0
        %v4367 = vadd.f32 %v4300, %v4366
        %v4368 = vpop.f32.mrb[0].mxu0
        %v4369 = vadd.f32 %v4300, %v4368
        %4370 = vdwg.mxu0
        %4371 = vst [vmem:[%s342] sm:$0xff] %v4353
        %4372 = vst [vmem:[%s342 + $0x8] sm:$0xff] %v4355
        %4373 = vst [vmem:[%s342 + $0x10] sm:$0xff] %v4357
        %4374 = vst [vmem:[%s342 + $0x18] sm:$0xff] %v4359
        %4375 = vst [vmem:[%s342 + $0x20] sm:$0xff] %v4363
        %4376 = vst [vmem:[%s342 + $0x28] sm:$0xff] %v4365
        %4377 = vst [vmem:[%s342 + $0x30] sm:$0xff] %v4367
        %4378 = vst [vmem:[%s342 + $0x38] sm:$0xff] %v4369
        %s4379 = sand.u32 %s165, 1
        %s4380 = scalar_lea.sflag [#allocation4], %s4379
        %s4381 = sand.u32 %s165, 1
        %s4382 = smul.addr %s4381, 64
        %s4383 = scalar_lea.vmem [#allocation13], %s4382
        // Predicated region
        $region69: #{tpu_custom_call.1} parent=43 // pred_check
          %p4384 = pneg %p175
        $region70: #{tpu_custom_call.1} parent=43 // pred_check_branch
          %4386 = sbr.rel (%p4384) target = $region72
        $region71: #{tpu_custom_call.1} parent=43 // pred_region
          %s4387 = smul.u32 2, %s26
          %s4389 = ssub.s32 1024, 1024
          %4390 = vsyncadd %s4380, %s4389
          %s4391 = smul.addr %s4387, 128
          %s4392 = scalar_lea.hbm %s6, %s4391
          %s4393 = sshll.u32 %s4383, 4
          %s4394 = int_to_ptr.vmem [resolvable:$true] %s4393
          %4399 = dma.vmem_to_hbm [thread:$0]  %s4394, 1024, %s4392, %s4380, 256, 1024, 16
        $region72: #{tpu_custom_call.1} parent=43 // pred_fallthru
          _
      $region44: #{tpu_custom_call.1} parent=5 // pred_fallthru
        _
      %p4400 = scmp.le.s32.totalorder 2, %s21
      // Predicated region
      $region73: #{tpu_custom_call.1} parent=5 // pred_check
        %p4401 = pneg %p4400
      $region74: #{tpu_custom_call.1} parent=5 // pred_check_branch
        %4403 = sbr.rel (%p4401) target = $region76
      $region75: #{tpu_custom_call.1} parent=5 // pred_region
        %s4404 = ssub.s32 %s21, 2
        // Predicated region
        $region77: #{tpu_custom_call.1} parent=75 // pred_check
          %p4405 = pneg %p181
        $region78: #{tpu_custom_call.1} parent=75 // pred_check_branch
          %4407 = sbr.rel (%p4405) target = $region80
        $region79: #{tpu_custom_call.1} parent=75 // pred_region
          %s4408 = sand.u32 %s166, 1
          %s4409 = scalar_lea.sflag [#allocation4], %s4408
          %s4410 = sand.u32 %s166, 1
          %s4411 = smul.addr %s4410, 64
          %s4412 = scalar_lea.vmem [#allocation13], %s4411
          %4413 = dma.done %s4409, 1024
        $region80: #{tpu_custom_call.1} parent=75 // pred_fallthru
          _
      $region76: #{tpu_custom_call.1} parent=5 // pred_fallthru
        _
    $region6: #{tpu_custom_call.1} parent=1 // loop_footer
      %s25 = sadd.s32 1, %s21
    $region7: #{tpu_custom_call.1} parent=1 // loop_footer_branch
      %20 = sbr.rel target = $region3
    $region8: #{tpu_custom_call.1} parent=1 // loop_exit
      _
    %4414 = vsyncpa [#allocation3], 1
    %s4415 = scalar_lea.sflag [#allocation3], 1
    %4416 = vsyncpa %s4415, 1
    %4417 = vsyncpa [#allocation6], 1
    %4418 = vsyncpa [#allocation9], 1
    %4419 = vsyncpa [#allocation12], 1
    %4420 = vsyncpa [#allocation4], 1
    %s4421 = scalar_lea.sflag [#allocation4], 1
    %4422 = vsyncpa %s4421, 1

</llo_original>
